<compile_context>
chip_gen: v6e
topology: v6e:2x2x1
jax: 0.10.0
libtpu: 0.0.40
codegen_flags: <defaults>
</compile_context>

<pallas_src>
import numpy as np
import jax
import jax.numpy as jnp
from jax.experimental import pallas as pl
from jax.experimental.pallas import tpu as pltpu

OUT_K = 256           # `output` arg of PointNetInpainting
BN_EPS = 1e-5

# Indices (within the 26-entry params list) of the large fc weights that stay
# in HBM (memory_space=pl.ANY) and are manually prefetched inside the kernel:
#   sf1w, sf2w, hf1w, hf2w, hf3w, hf4w
HBM_PARAM_IDX = (6, 8, 18, 20, 22, 24)


# ----------------------------------------------------------------------------
# Parameter setup (deterministic, BN folded into weights) — plain JAX glue.
# ----------------------------------------------------------------------------
def make_params(key):
    keys = iter(jax.random.split(key, 128))

    def linear(cin, cout):
        s = 1.0 / np.sqrt(cin)
        w = jax.random.uniform(next(keys), (cin, cout), jnp.float32, -s, s)
        b = jax.random.uniform(next(keys), (cout,), jnp.float32, -s, s)
        return w, b

    def bn_fold(w, b, c):
        gamma = 1.0 + 0.1 * jax.random.normal(next(keys), (c,), jnp.float32)
        beta = 0.1 * jax.random.normal(next(keys), (c,), jnp.float32)
        mean = 0.1 * jax.random.normal(next(keys), (c,), jnp.float32)
        var = 0.5 + jax.random.uniform(next(keys), (c,), jnp.float32)
        scale = gamma / jnp.sqrt(var + BN_EPS)
        return w * scale[None, :], b * scale + beta - mean * scale

    def layer(cin, cout, bn=True):
        w, b = linear(cin, cout)
        if bn:
            w, b = bn_fold(w, b, cout)
        if cin > 3:  # big matmul weights feed the MXU in bf16 (f32 accumulate)
            w = w.astype(jnp.bfloat16)
        return [w, b.reshape(1, cout)]

    params = []
    # STN3d: conv1/2/3 + fc1/2/3 (fc3 has no BN)
    for ci, co, bn in [(3, 64, True), (64, 128, True), (128, 1024, True),
                       (1024, 512, True), (512, 256, True), (256, 9, False)]:
        params += layer(ci, co, bn)
    # PointNetfeat: conv1/2/3 (conv3 has BN but no ReLU — handled in kernel)
    for ci, co, bn in [(3, 64, True), (64, 128, True), (128, 1024, True)]:
        params += layer(ci, co, bn)
    # Head: fc1/2/3 (+BN, ReLU), fc4 (no BN) -> tanh
    for ci, co, bn in [(1024, 512, True), (512, 256, True), (256, 256, True),
                       (256, 3 * OUT_K, False)]:
        params += layer(ci, co, bn)
    return params  # 26 arrays


# ----------------------------------------------------------------------------
# Pallas kernel
# ----------------------------------------------------------------------------
def pointnet_kernel(*refs):
    (pts_ref,
     sc1w, sc1b, sc2w, sc2b, sc3w, sc3b,
     sf1w_hbm, sf1b, sf2w_hbm, sf2b, sf3w, sf3b,
     fc1w, fc1b, fc2w, fc2b, fc3w, fc3b,
     hf1w_hbm, hf1b, hf2w_hbm, hf2b, hf3w_hbm, hf3b, hf4w_hbm, hf4b,
     out_ref, trans_ref,
     sf1w_v, sf2w_v, hf1w_v, hf2w_v, hf3w_v, hf4w_v, dma_sem) = refs

    B, N, _ = pts_ref.shape
    BN = B * N

    # --- Kick off the big fc-weight DMAs (HBM -> VMEM scratch) immediately so
    # they stream behind the two per-point conv stacks.
    stn_cps = [pltpu.make_async_copy(sf1w_hbm, sf1w_v, dma_sem.at[0]),
               pltpu.make_async_copy(sf2w_hbm, sf2w_v, dma_sem.at[1])]
    head_cps = [pltpu.make_async_copy(hf1w_hbm, hf1w_v, dma_sem.at[2]),
                pltpu.make_async_copy(hf2w_hbm, hf2w_v, dma_sem.at[3]),
                pltpu.make_async_copy(hf3w_hbm, hf3w_v, dma_sem.at[4]),
                pltpu.make_async_copy(hf4w_hbm, hf4w_v, dma_sem.at[5])]
    for cp in stn_cps + head_cps:
        cp.start()

    def dense(x, w_ref, b_ref, relu=False, out_dtype=jnp.bfloat16):
        # bf16 x bf16 -> f32 accumulate on the MXU; bias/ReLU in f32 on the
        # VPU; result stored in bf16 (halves slab/spill bytes & vreg pressure).
        w = w_ref[...]
        y = jnp.dot(x.astype(w.dtype), w,
                    preferred_element_type=jnp.float32) + b_ref[...]
        if relu:
            y = jnp.maximum(y, 0.0)
        return y.astype(out_dtype)

    def dense3(x, w_ref, b_ref):
        # K == 3: three VPU broadcast-MACs in f32 instead of a near-empty MXU
        # push.  (Review note: on v6e/v7x a zero-padded K=8 MXU matmul may be
        # marginally cheaper; kept on the VPU — the MXU path is not the
        # bottleneck for these layers.)
        w = w_ref[...]
        y = (x[:, 0:1] * w[0:1, :] + x[:, 1:2] * w[1:2, :]
             + x[:, 2:3] * w[2:3, :]) + b_ref[...]
        return jnp.maximum(y, 0.0).astype(jnp.bfloat16)

    def batched_max(h):
        # Per-batch global max-pool over points via static slices — guaranteed
        # copy-free (no reshape that could materialize a VMEM copy).
        rows = [jnp.max(h[b * N:(b + 1) * N, :], axis=0, keepdims=True)
                for b in range(B)]
        return rows[0] if B == 1 else jnp.concatenate(rows, axis=0)

    x3 = pts_ref[...]                                    # (B, N, 3)  f32
    x = x3.reshape(BN, 3)                                # fold batch into M

    # ---------------- STN3d ----------------
    h = dense3(x, sc1w, sc1b)                            # (BN, 64)   bf16
    h = dense(h, sc2w, sc2b, relu=True)                  # (BN, 128)  bf16
    h = dense(h, sc3w, sc3b, relu=True)                  # (BN, 1024) bf16
    g = batched_max(h)                                   # (B, 1024)  bf16

    for cp in stn_cps:                                   # STN fc weights ready
        cp.wait()
    f = dense(g, sf1w_v, sf1b, relu=True)                # (B, 512)
    f = dense(f, sf2w_v, sf2b, relu=True)                # (B, 256)
    lane = jax.lax.broadcasted_iota(jnp.int32, (1, 9), 1)
    iden = (lane % 4 == 0).astype(jnp.float32)           # [1,0,0,0,1,0,0,0,1]
    t9 = dense(f, sf3w, sf3b, out_dtype=jnp.float32) + iden   # (B, 9) f32
    trans_ref[...] = t9

    # apply per-batch 3x3 transform: xt[b,:,j] = sum_i x[b,:,i] * t9[b, 3*i+j]
    xt = (x3[:, :, 0:1] * t9[:, None, 0:3]
          + x3[:, :, 1:2] * t9[:, None, 3:6]
          + x3[:, :, 2:3] * t9[:, None, 6:9])            # (B, N, 3)  f32
    xt = xt.reshape(BN, 3)

    # ---------------- PointNetfeat ----------------
    h1 = dense3(xt, fc1w, fc1b)                          # (BN, 64)   bf16
    h2 = dense(h1, fc2w, fc2b, relu=True)                # (BN, 128)  bf16
    h3 = dense(h2, fc3w, fc3b)                           # (BN, 1024) bf16, BN folded, no ReLU
    gf = batched_max(h3)                                 # (B, 1024)  global feature

    # ---------------- fc head ----------------
    for cp in head_cps:                                  # head fc weights ready
        cp.wait()
    y = dense(gf, hf1w_v, hf1b, relu=True)               # (B, 512)
    y = dense(y, hf2w_v, hf2b, relu=True)                # (B, 256)
    y = dense(y, hf3w_v, hf3b, relu=True)                # (B, 256)
    out_ref[...] = jnp.tanh(dense(y, hf4w_v, hf4b, out_dtype=jnp.float32))  # (B, 768)


def pointnet_inpainting(pts, params):
    """pts: (B, 3, N) float32 — PyTorch NCL convention."""
    B, C, N = pts.shape
    assert C == 3
    x = jnp.transpose(pts, (0, 2, 1)).astype(jnp.float32)   # -> (B, N, 3)

    def nbytes(a):
        return int(np.prod(a.shape)) * a.dtype.itemsize

    # in_specs: small conv-stack params + biases live in VMEM (needed first);
    # the big fc weights stay in HBM (pl.ANY) and are prefetched in-kernel.
    in_specs = [pl.BlockSpec(memory_space=pltpu.MemorySpace.VMEM)]  # points
    for i, _ in enumerate(params):
        space = pl.ANY if i in HBM_PARAM_IDX else pltpu.MemorySpace.VMEM
        in_specs.append(pl.BlockSpec(memory_space=space))

    scratch_shapes = [pltpu.VMEM(params[i].shape, params[i].dtype)
                      for i in HBM_PARAM_IDX]
    scratch_shapes.append(pltpu.SemaphoreType.DMA((len(HBM_PARAM_IDX),)))

    # VMEM budget: resident params + prefetch scratch + a few (B*N, 1024)
    # activation slabs (stored bf16), with 2x headroom, clamped to the
    # v7x-safe ceiling (<= ~56 MiB usable of 64 MiB physical).
    vmem_param_bytes = sum(nbytes(p) for i, p in enumerate(params)
                           if i not in HBM_PARAM_IDX)
    scratch_bytes = sum(nbytes(params[i]) for i in HBM_PARAM_IDX)
    act_bytes = 4 * B * N * 1024 * 2 + 2 * B * N * 1024 * 4
    vmem_limit = int(min(56 * 1024 * 1024,
                         max(32 * 1024 * 1024,
                             2 * (vmem_param_bytes + scratch_bytes + act_bytes))))

    BN = B * N
    mm_dims = [(BN, 3, 64), (BN, 64, 128), (BN, 128, 1024),
               (B, 1024, 512), (B, 512, 256), (B, 256, 9),
               (BN, 3, 3),
               (BN, 3, 64), (BN, 64, 128), (BN, 128, 1024),
               (B, 1024, 512), (B, 512, 256), (B, 256, 256), (B, 256, 3 * OUT_K)]
    total_param_bytes = sum(nbytes(p) for p in params)
    cost = pl.CostEstimate(
        flops=int(sum(2 * m * k * n for m, k, n in mm_dims)),
        transcendentals=int(B * 3 * OUT_K),
        bytes_accessed=int(x.size * 4 + total_param_bytes
                           + (B * 3 * OUT_K + B * 9) * 4))

    out, trans9 = pl.pallas_call(
        pointnet_kernel,
        out_shape=(jax.ShapeDtypeStruct((B, 3 * OUT_K), jnp.float32),
                   jax.ShapeDtypeStruct((B, 9), jnp.float32)),
        in_specs=in_specs,
        out_specs=(pl.BlockSpec(memory_space=pltpu.MemorySpace.VMEM),
                   pl.BlockSpec(memory_space=pltpu.MemorySpace.VMEM)),
        scratch_shapes=scratch_shapes,
        compiler_params=pltpu.CompilerParams(vmem_limit_bytes=vmem_limit),
        cost_estimate=cost,
    )(x, *params)

    coarse = out.reshape(B, 3, OUT_K)     # == x.view(-1, 3, 256), tanh applied in kernel
    trans = trans9.reshape(B, 3, 3)
    trans_feat = None                     # feature_transform=False
    return coarse, trans, trans_feat


# ----------------------------------------------------------------------------
# Pure-JAX reference (same folded params, same bf16-storage convention).
# ----------------------------------------------------------------------------
def reference(pts, params):
    (sc1w, sc1b, sc2w, sc2b, sc3w, sc3b,
     sf1w, sf1b, sf2w, sf2b, sf3w, sf3b,
     fc1w, fc1b, fc2w, fc2b, fc3w, fc3b,
     hf1w, hf1b, hf2w, hf2b, hf3w, hf3b, hf4w, hf4b) = params

    def dn(xv, w, b, relu=False, out_dtype=jnp.bfloat16):
        y = jnp.dot(xv.astype(w.dtype), w,
                    preferred_element_type=jnp.float32) + b
        if relu:
            y = jnp.maximum(y, 0.0)
        return y.astype(out_dtype)

    def d3(xv, w, b):
        y = (xv[:, 0:1] * w[0:1, :] + xv[:, 1:2] * w[1:2, :]
             + xv[:, 2:3] * w[2:3, :]) + b
        return jnp.maximum(y, 0.0).astype(jnp.bfloat16)

    iden = jnp.eye(3, dtype=jnp.float32).reshape(1, 9)

    def single(xb):  # xb: (N, 3) f32
        h = d3(xb, sc1w, sc1b)
        h = dn(h, sc2w, sc2b, relu=True)
        h = dn(h, sc3w, sc3b, relu=True)
        g = jnp.max(h, axis=0, keepdims=True)
        f = dn(g, sf1w, sf1b, relu=True)
        f = dn(f, sf2w, sf2b, relu=True)
        t9 = dn(f, sf3w, sf3b, out_dtype=jnp.float32) + iden
        trans = t9.reshape(3, 3)
        xt = jnp.dot(xb, trans, precision=jax.lax.Precision.HIGHEST)
        h1 = d3(xt, fc1w, fc1b)
        h2 = dn(h1, fc2w, fc2b, relu=True)
        h3 = dn(h2, fc3w, fc3b)
        gf = jnp.max(h3, axis=0, keepdims=True)
        y = dn(gf, hf1w, hf1b, relu=True)
        y = dn(y, hf2w, hf2b, relu=True)
        y = dn(y, hf3w, hf3b, relu=True)
        y = jnp.tanh(dn(y, hf4w, hf4b, out_dtype=jnp.float32))
        return y.reshape(3, OUT_K), trans

    x = jnp.transpose(pts, (0, 2, 1)).astype(jnp.float32)
    return jax.vmap(single)(x)


if __name__ == "__main__":
    key = jax.random.PRNGKey(0)
    kp, kx = jax.random.split(key)
    params = make_params(kp)

    B, N = 2, 128
    pts = jax.random.normal(kx, (B, 3, N), jnp.float32)   # (batch, 3, n_points)

    coarse, trans, trans_feat = pointnet_inpainting(pts, params)
    coarse = jax.block_until_ready(coarse)
    trans = jax.block_until_ready(trans)

    ref_coarse, ref_trans = reference(pts, params)
    assert coarse.shape == (B, 3, OUT_K) and trans.shape == (B, 3, 3)
    assert jnp.max(jnp.abs(coarse - ref_coarse)) < 1e-2, "coarse mismatch"
    assert jnp.max(jnp.abs(trans - ref_trans)) < 1e-2, "trans mismatch"

    print("KERNEL_OK")
</pallas_src>

<mosaic_0001>
module attributes {stable_mosaic.version = 11 : i64} {
  func.func @pointnet_kernel(%arg0: memref<2x128x3xf32, #tpu.memory_space<vmem>>, %arg1: memref<3x64xf32, #tpu.memory_space<vmem>>, %arg2: memref<1x64xf32, #tpu.memory_space<vmem>>, %arg3: memref<64x128xbf16, #tpu.memory_space<vmem>>, %arg4: memref<1x128xf32, #tpu.memory_space<vmem>>, %arg5: memref<128x1024xbf16, #tpu.memory_space<vmem>>, %arg6: memref<1x1024xf32, #tpu.memory_space<vmem>>, %arg7: memref<1024x512xbf16, #tpu.memory_space<any>>, %arg8: memref<1x512xf32, #tpu.memory_space<vmem>>, %arg9: memref<512x256xbf16, #tpu.memory_space<any>>, %arg10: memref<1x256xf32, #tpu.memory_space<vmem>>, %arg11: memref<256x9xbf16, #tpu.memory_space<vmem>>, %arg12: memref<1x9xf32, #tpu.memory_space<vmem>>, %arg13: memref<3x64xf32, #tpu.memory_space<vmem>>, %arg14: memref<1x64xf32, #tpu.memory_space<vmem>>, %arg15: memref<64x128xbf16, #tpu.memory_space<vmem>>, %arg16: memref<1x128xf32, #tpu.memory_space<vmem>>, %arg17: memref<128x1024xbf16, #tpu.memory_space<vmem>>, %arg18: memref<1x1024xf32, #tpu.memory_space<vmem>>, %arg19: memref<1024x512xbf16, #tpu.memory_space<any>>, %arg20: memref<1x512xf32, #tpu.memory_space<vmem>>, %arg21: memref<512x256xbf16, #tpu.memory_space<any>>, %arg22: memref<1x256xf32, #tpu.memory_space<vmem>>, %arg23: memref<256x256xbf16, #tpu.memory_space<any>>, %arg24: memref<1x256xf32, #tpu.memory_space<vmem>>, %arg25: memref<256x768xbf16, #tpu.memory_space<any>>, %arg26: memref<1x768xf32, #tpu.memory_space<vmem>>, %arg27: memref<2x768xf32, #tpu.memory_space<vmem>>, %arg28: memref<2x9xf32, #tpu.memory_space<vmem>>, %arg29: memref<1024x512xbf16, #tpu.memory_space<vmem>>, %arg30: memref<512x256xbf16, #tpu.memory_space<vmem>>, %arg31: memref<1024x512xbf16, #tpu.memory_space<vmem>>, %arg32: memref<512x256xbf16, #tpu.memory_space<vmem>>, %arg33: memref<256x256xbf16, #tpu.memory_space<vmem>>, %arg34: memref<256x768xbf16, #tpu.memory_space<vmem>>, %arg35: memref<6x!tpu.dma_semaphore, #tpu.memory_space<semaphore_mem>>) attributes {dimension_semantics = [], scalar_prefetch = 0 : i64, scratch_operands = 7 : i64, tpu.core_type = #tpu.core_type<tc>} {
    %c0_i32 = arith.constant 0 : i32
    %0 = tpu.memref_slice %arg35[%c0_i32] : memref<6x!tpu.dma_semaphore, #tpu.memory_space<semaphore_mem>> -> memref<1x!tpu.dma_semaphore, #tpu.memory_space<semaphore_mem>>
    %1 = tpu.memref_squeeze %0 : memref<1x!tpu.dma_semaphore, #tpu.memory_space<semaphore_mem>> -> memref<!tpu.dma_semaphore, #tpu.memory_space<semaphore_mem>>
    tpu.enqueue_dma source(%arg7 : memref<1024x512xbf16, #tpu.memory_space<any>>) target(%arg29 : memref<1024x512xbf16, #tpu.memory_space<vmem>>) target_semaphore(%1 : memref<!tpu.dma_semaphore, #tpu.memory_space<semaphore_mem>>)
    %c1_i32 = arith.constant 1 : i32
    %2 = tpu.memref_slice %arg35[%c1_i32] : memref<6x!tpu.dma_semaphore, #tpu.memory_space<semaphore_mem>> -> memref<1x!tpu.dma_semaphore, #tpu.memory_space<semaphore_mem>>
    %3 = tpu.memref_squeeze %2 : memref<1x!tpu.dma_semaphore, #tpu.memory_space<semaphore_mem>> -> memref<!tpu.dma_semaphore, #tpu.memory_space<semaphore_mem>>
    tpu.enqueue_dma source(%arg9 : memref<512x256xbf16, #tpu.memory_space<any>>) target(%arg30 : memref<512x256xbf16, #tpu.memory_space<vmem>>) target_semaphore(%3 : memref<!tpu.dma_semaphore, #tpu.memory_space<semaphore_mem>>)
    %c2_i32 = arith.constant 2 : i32
    %4 = tpu.memref_slice %arg35[%c2_i32] : memref<6x!tpu.dma_semaphore, #tpu.memory_space<semaphore_mem>> -> memref<1x!tpu.dma_semaphore, #tpu.memory_space<semaphore_mem>>
    %5 = tpu.memref_squeeze %4 : memref<1x!tpu.dma_semaphore, #tpu.memory_space<semaphore_mem>> -> memref<!tpu.dma_semaphore, #tpu.memory_space<semaphore_mem>>
    tpu.enqueue_dma source(%arg19 : memref<1024x512xbf16, #tpu.memory_space<any>>) target(%arg31 : memref<1024x512xbf16, #tpu.memory_space<vmem>>) target_semaphore(%5 : memref<!tpu.dma_semaphore, #tpu.memory_space<semaphore_mem>>)
    %c3_i32 = arith.constant 3 : i32
    %6 = tpu.memref_slice %arg35[%c3_i32] : memref<6x!tpu.dma_semaphore, #tpu.memory_space<semaphore_mem>> -> memref<1x!tpu.dma_semaphore, #tpu.memory_space<semaphore_mem>>
    %7 = tpu.memref_squeeze %6 : memref<1x!tpu.dma_semaphore, #tpu.memory_space<semaphore_mem>> -> memref<!tpu.dma_semaphore, #tpu.memory_space<semaphore_mem>>
    tpu.enqueue_dma source(%arg21 : memref<512x256xbf16, #tpu.memory_space<any>>) target(%arg32 : memref<512x256xbf16, #tpu.memory_space<vmem>>) target_semaphore(%7 : memref<!tpu.dma_semaphore, #tpu.memory_space<semaphore_mem>>)
    %c4_i32 = arith.constant 4 : i32
    %8 = tpu.memref_slice %arg35[%c4_i32] : memref<6x!tpu.dma_semaphore, #tpu.memory_space<semaphore_mem>> -> memref<1x!tpu.dma_semaphore, #tpu.memory_space<semaphore_mem>>
    %9 = tpu.memref_squeeze %8 : memref<1x!tpu.dma_semaphore, #tpu.memory_space<semaphore_mem>> -> memref<!tpu.dma_semaphore, #tpu.memory_space<semaphore_mem>>
    tpu.enqueue_dma source(%arg23 : memref<256x256xbf16, #tpu.memory_space<any>>) target(%arg33 : memref<256x256xbf16, #tpu.memory_space<vmem>>) target_semaphore(%9 : memref<!tpu.dma_semaphore, #tpu.memory_space<semaphore_mem>>)
    %c5_i32 = arith.constant 5 : i32
    %10 = tpu.memref_slice %arg35[%c5_i32] : memref<6x!tpu.dma_semaphore, #tpu.memory_space<semaphore_mem>> -> memref<1x!tpu.dma_semaphore, #tpu.memory_space<semaphore_mem>>
    %11 = tpu.memref_squeeze %10 : memref<1x!tpu.dma_semaphore, #tpu.memory_space<semaphore_mem>> -> memref<!tpu.dma_semaphore, #tpu.memory_space<semaphore_mem>>
    tpu.enqueue_dma source(%arg25 : memref<256x768xbf16, #tpu.memory_space<any>>) target(%arg34 : memref<256x768xbf16, #tpu.memory_space<vmem>>) target_semaphore(%11 : memref<!tpu.dma_semaphore, #tpu.memory_space<semaphore_mem>>)
    %c0 = arith.constant 0 : index
    %c0_0 = arith.constant 0 : index
    %c0_1 = arith.constant 0 : index
    %12 = vector.load %arg0[%c0, %c0_0, %c0_1] : memref<2x128x3xf32, #tpu.memory_space<vmem>>, vector<2x128x3xf32>
    %13 = vector.shape_cast %12 : vector<2x128x3xf32> to vector<256x3xf32>
    %c0_2 = arith.constant 0 : index
    %c0_3 = arith.constant 0 : index
    %14 = vector.load %arg1[%c0_2, %c0_3] : memref<3x64xf32, #tpu.memory_space<vmem>>, vector<3x64xf32>
    %15 = vector.extract_strided_slice %13 {offsets = [0, 0], sizes = [256, 1], strides = [1, 1]} : vector<256x3xf32> to vector<256x1xf32>
    %16 = vector.extract_strided_slice %14 {offsets = [0, 0], sizes = [1, 64], strides = [1, 1]} : vector<3x64xf32> to vector<1x64xf32>
    %17 = vector.broadcast %15 : vector<256x1xf32> to vector<256x64xf32>
    %18 = vector.broadcast %16 : vector<1x64xf32> to vector<256x64xf32>
    %19 = arith.mulf %17, %18 : vector<256x64xf32>
    %20 = vector.extract_strided_slice %13 {offsets = [0, 1], sizes = [256, 1], strides = [1, 1]} : vector<256x3xf32> to vector<256x1xf32>
    %21 = vector.extract_strided_slice %14 {offsets = [1, 0], sizes = [1, 64], strides = [1, 1]} : vector<3x64xf32> to vector<1x64xf32>
    %22 = vector.broadcast %20 : vector<256x1xf32> to vector<256x64xf32>
    %23 = vector.broadcast %21 : vector<1x64xf32> to vector<256x64xf32>
    %24 = arith.mulf %22, %23 : vector<256x64xf32>
    %25 = arith.addf %19, %24 : vector<256x64xf32>
    %26 = vector.extract_strided_slice %13 {offsets = [0, 2], sizes = [256, 1], strides = [1, 1]} : vector<256x3xf32> to vector<256x1xf32>
    %27 = vector.extract_strided_slice %14 {offsets = [2, 0], sizes = [1, 64], strides = [1, 1]} : vector<3x64xf32> to vector<1x64xf32>
    %28 = vector.broadcast %26 : vector<256x1xf32> to vector<256x64xf32>
    %29 = vector.broadcast %27 : vector<1x64xf32> to vector<256x64xf32>
    %30 = arith.mulf %28, %29 : vector<256x64xf32>
    %31 = arith.addf %25, %30 : vector<256x64xf32>
    %c0_4 = arith.constant 0 : index
    %c0_5 = arith.constant 0 : index
    %32 = vector.load %arg2[%c0_4, %c0_5] : memref<1x64xf32, #tpu.memory_space<vmem>>, vector<1x64xf32>
    %33 = vector.broadcast %32 : vector<1x64xf32> to vector<256x64xf32>
    %34 = arith.addf %31, %33 : vector<256x64xf32>
    %cst = arith.constant 0.000000e+00 : f32
    %35 = vector.broadcast %cst : f32 to vector<256x64xf32>
    %36 = arith.maximumf %34, %35 : vector<256x64xf32>
    %37 = arith.truncf %36 : vector<256x64xf32> to vector<256x64xbf16>
    %c0_6 = arith.constant 0 : index
    %c0_7 = arith.constant 0 : index
    %38 = vector.load %arg3[%c0_6, %c0_7] : memref<64x128xbf16, #tpu.memory_space<vmem>>, vector<64x128xbf16>
    %cst_8 = arith.constant dense<0.000000e+00> : vector<256x128xf32>
    %39 = tpu.matmul %37, %38, %cst_8 {dimension_numbers = #tpu.dot_dimension_numbers<[1], [0], [0], [1], [0, 0, 1, 1], [], []>} : vector<256x64xbf16>, vector<64x128xbf16>, vector<256x128xf32> -> vector<256x128xf32>
    %c0_9 = arith.constant 0 : index
    %c0_10 = arith.constant 0 : index
    %40 = vector.load %arg4[%c0_9, %c0_10] : memref<1x128xf32, #tpu.memory_space<vmem>>, vector<1x128xf32>
    %41 = vector.broadcast %40 : vector<1x128xf32> to vector<256x128xf32>
    %42 = arith.addf %39, %41 : vector<256x128xf32>
    %cst_11 = arith.constant 0.000000e+00 : f32
    %43 = vector.broadcast %cst_11 : f32 to vector<256x128xf32>
    %44 = arith.maximumf %42, %43 : vector<256x128xf32>
    %45 = arith.truncf %44 : vector<256x128xf32> to vector<256x128xbf16>
    %c0_12 = arith.constant 0 : index
    %c0_13 = arith.constant 0 : index
    %46 = vector.load %arg5[%c0_12, %c0_13] : memref<128x1024xbf16, #tpu.memory_space<vmem>>, vector<128x1024xbf16>
    %cst_14 = arith.constant dense<0.000000e+00> : vector<256x1024xf32>
    %47 = tpu.matmul %45, %46, %cst_14 {dimension_numbers = #tpu.dot_dimension_numbers<[1], [0], [0], [1], [0, 0, 1, 1], [], []>} : vector<256x128xbf16>, vector<128x1024xbf16>, vector<256x1024xf32> -> vector<256x1024xf32>
    %c0_15 = arith.constant 0 : index
    %c0_16 = arith.constant 0 : index
    %48 = vector.load %arg6[%c0_15, %c0_16] : memref<1x1024xf32, #tpu.memory_space<vmem>>, vector<1x1024xf32>
    %49 = vector.broadcast %48 : vector<1x1024xf32> to vector<256x1024xf32>
    %50 = arith.addf %47, %49 : vector<256x1024xf32>
    %cst_17 = arith.constant 0.000000e+00 : f32
    %51 = vector.broadcast %cst_17 : f32 to vector<256x1024xf32>
    %52 = arith.maximumf %50, %51 : vector<256x1024xf32>
    %53 = arith.truncf %52 : vector<256x1024xf32> to vector<256x1024xbf16>
    %54 = vector.extract_strided_slice %53 {offsets = [0, 0], sizes = [128, 1024], strides = [1, 1]} : vector<256x1024xbf16> to vector<128x1024xbf16>
    %cst_18 = arith.constant dense<0xFF80> : vector<1024xbf16>
    %55 = vector.multi_reduction <maximumf>, %54, %cst_18 [0] : vector<128x1024xbf16> to vector<1024xbf16>
    %56 = vector.shape_cast %55 : vector<1024xbf16> to vector<1x1024xbf16>
    %57 = vector.extract_strided_slice %53 {offsets = [128, 0], sizes = [128, 1024], strides = [1, 1]} : vector<256x1024xbf16> to vector<128x1024xbf16>
    %cst_19 = arith.constant dense<0xFF80> : vector<1024xbf16>
    %58 = vector.multi_reduction <maximumf>, %57, %cst_19 [0] : vector<128x1024xbf16> to vector<1024xbf16>
    %59 = vector.shape_cast %58 : vector<1024xbf16> to vector<1x1024xbf16>
    %60 = tpu.concatenate %56, %59 in 0 : vector<1x1024xbf16>, vector<1x1024xbf16> -> vector<2x1024xbf16>
    %c0_i32_20 = arith.constant 0 : i32
    %61 = tpu.memref_slice %arg35[%c0_i32_20] : memref<6x!tpu.dma_semaphore, #tpu.memory_space<semaphore_mem>> -> memref<1x!tpu.dma_semaphore, #tpu.memory_space<semaphore_mem>>
    %62 = tpu.memref_squeeze %61 : memref<1x!tpu.dma_semaphore, #tpu.memory_space<semaphore_mem>> -> memref<!tpu.dma_semaphore, #tpu.memory_space<semaphore_mem>>
    tpu.wait_dma2 semaphore(%62 : memref<!tpu.dma_semaphore, #tpu.memory_space<semaphore_mem>>) src(%arg7 : memref<1024x512xbf16, #tpu.memory_space<any>>) dst(%arg29 : memref<1024x512xbf16, #tpu.memory_space<vmem>>)
    %c1_i32_21 = arith.constant 1 : i32
    %63 = tpu.memref_slice %arg35[%c1_i32_21] : memref<6x!tpu.dma_semaphore, #tpu.memory_space<semaphore_mem>> -> memref<1x!tpu.dma_semaphore, #tpu.memory_space<semaphore_mem>>
    %64 = tpu.memref_squeeze %63 : memref<1x!tpu.dma_semaphore, #tpu.memory_space<semaphore_mem>> -> memref<!tpu.dma_semaphore, #tpu.memory_space<semaphore_mem>>
    tpu.wait_dma2 semaphore(%64 : memref<!tpu.dma_semaphore, #tpu.memory_space<semaphore_mem>>) src(%arg9 : memref<512x256xbf16, #tpu.memory_space<any>>) dst(%arg30 : memref<512x256xbf16, #tpu.memory_space<vmem>>)
    %c0_22 = arith.constant 0 : index
    %c0_23 = arith.constant 0 : index
    %65 = vector.load %arg29[%c0_22, %c0_23] : memref<1024x512xbf16, #tpu.memory_space<vmem>>, vector<1024x512xbf16>
    %cst_24 = arith.constant dense<0.000000e+00> : vector<2x512xf32>
    %66 = tpu.matmul %60, %65, %cst_24 {dimension_numbers = #tpu.dot_dimension_numbers<[1], [0], [0], [1], [0, 0, 1, 1], [], []>} : vector<2x1024xbf16>, vector<1024x512xbf16>, vector<2x512xf32> -> vector<2x512xf32>
    %c0_25 = arith.constant 0 : index
    %c0_26 = arith.constant 0 : index
    %67 = vector.load %arg8[%c0_25, %c0_26] : memref<1x512xf32, #tpu.memory_space<vmem>>, vector<1x512xf32>
    %68 = vector.broadcast %67 : vector<1x512xf32> to vector<2x512xf32>
    %69 = arith.addf %66, %68 : vector<2x512xf32>
    %cst_27 = arith.constant 0.000000e+00 : f32
    %70 = vector.broadcast %cst_27 : f32 to vector<2x512xf32>
    %71 = arith.maximumf %69, %70 : vector<2x512xf32>
    %72 = arith.truncf %71 : vector<2x512xf32> to vector<2x512xbf16>
    %c0_28 = arith.constant 0 : index
    %c0_29 = arith.constant 0 : index
    %73 = vector.load %arg30[%c0_28, %c0_29] : memref<512x256xbf16, #tpu.memory_space<vmem>>, vector<512x256xbf16>
    %cst_30 = arith.constant dense<0.000000e+00> : vector<2x256xf32>
    %74 = tpu.matmul %72, %73, %cst_30 {dimension_numbers = #tpu.dot_dimension_numbers<[1], [0], [0], [1], [0, 0, 1, 1], [], []>} : vector<2x512xbf16>, vector<512x256xbf16>, vector<2x256xf32> -> vector<2x256xf32>
    %c0_31 = arith.constant 0 : index
    %c0_32 = arith.constant 0 : index
    %75 = vector.load %arg10[%c0_31, %c0_32] : memref<1x256xf32, #tpu.memory_space<vmem>>, vector<1x256xf32>
    %76 = vector.broadcast %75 : vector<1x256xf32> to vector<2x256xf32>
    %77 = arith.addf %74, %76 : vector<2x256xf32>
    %cst_33 = arith.constant 0.000000e+00 : f32
    %78 = vector.broadcast %cst_33 : f32 to vector<2x256xf32>
    %79 = arith.maximumf %77, %78 : vector<2x256xf32>
    %80 = arith.truncf %79 : vector<2x256xf32> to vector<2x256xbf16>
    %81 = tpu.iota {dimensions = array<i32: 1>} : vector<1x9xi32>
    %c4_i32_34 = arith.constant 4 : i32
    %c0_i32_35 = arith.constant 0 : i32
    %82 = arith.cmpi eq, %c4_i32_34, %c0_i32_35 : i32
    %c1_i32_36 = arith.constant 1 : i32
    %83 = arith.select %82, %c1_i32_36, %c4_i32_34 : i32
    %84 = vector.broadcast %83 : i32 to vector<1x9xi32>
    %85 = arith.remsi %81, %84 : vector<1x9xi32>
    %c0_i32_37 = arith.constant 0 : i32
    %86 = vector.broadcast %c0_i32_37 : i32 to vector<1x9xi32>
    %87 = arith.cmpi ne, %85, %86 : vector<1x9xi32>
    %c0_i32_38 = arith.constant 0 : i32
    %88 = vector.broadcast %c0_i32_38 : i32 to vector<1x9xi32>
    %89 = arith.cmpi slt, %85, %88 : vector<1x9xi32>
    %c0_i32_39 = arith.constant 0 : i32
    %90 = arith.cmpi slt, %83, %c0_i32_39 : i32
    %91 = vector.broadcast %90 : i1 to vector<1x9xi1>
    %92 = vector.broadcast %91 : vector<1x9xi1> to vector<1x9xi1>
    %93 = arith.xori %89, %92 : vector<1x9xi1>
    %94 = arith.andi %93, %87 : vector<1x9xi1>
    %95 = vector.broadcast %83 : i32 to vector<1x9xi32>
    %96 = arith.addi %85, %95 : vector<1x9xi32>
    %97 = arith.select %94, %96, %85 : vector<1x9xi1>, vector<1x9xi32>
    %c0_i32_40 = arith.constant 0 : i32
    %98 = vector.broadcast %c0_i32_40 : i32 to vector<1x9xi32>
    %99 = arith.cmpi eq, %97, %98 : vector<1x9xi32>
    %100 = arith.extui %99 : vector<1x9xi1> to vector<1x9xi32>
    %101 = arith.sitofp %100 : vector<1x9xi32> to vector<1x9xf32>
    %c0_41 = arith.constant 0 : index
    %c0_42 = arith.constant 0 : index
    %102 = vector.load %arg11[%c0_41, %c0_42] : memref<256x9xbf16, #tpu.memory_space<vmem>>, vector<256x9xbf16>
    %cst_43 = arith.constant dense<0.000000e+00> : vector<2x9xf32>
    %103 = tpu.matmul %80, %102, %cst_43 {dimension_numbers = #tpu.dot_dimension_numbers<[1], [0], [0], [1], [0, 0, 1, 1], [], []>} : vector<2x256xbf16>, vector<256x9xbf16>, vector<2x9xf32> -> vector<2x9xf32>
    %c0_44 = arith.constant 0 : index
    %c0_45 = arith.constant 0 : index
    %104 = vector.load %arg12[%c0_44, %c0_45] : memref<1x9xf32, #tpu.memory_space<vmem>>, vector<1x9xf32>
    %105 = vector.broadcast %104 : vector<1x9xf32> to vector<2x9xf32>
    %106 = arith.addf %103, %105 : vector<2x9xf32>
    %107 = vector.broadcast %101 : vector<1x9xf32> to vector<2x9xf32>
    %108 = arith.addf %106, %107 : vector<2x9xf32>
    %c0_46 = arith.constant 0 : index
    %c0_47 = arith.constant 0 : index
    %109 = vector.load %arg28[%c0_46, %c0_47] : memref<2x9xf32, #tpu.memory_space<vmem>>, vector<2x9xf32>
    tpu.vector_store %arg28[%c0_46, %c0_47], %108 {strides = array<i32>} : memref<2x9xf32, #tpu.memory_space<vmem>>, vector<2x9xf32>,
    %110 = vector.extract_strided_slice %12 {offsets = [0, 0, 0], sizes = [2, 128, 1], strides = [1, 1, 1]} : vector<2x128x3xf32> to vector<2x128x1xf32>
    %111 = vector.extract_strided_slice %108 {offsets = [0, 0], sizes = [2, 3], strides = [1, 1]} : vector<2x9xf32> to vector<2x3xf32>
    %112 = vector.shape_cast %111 : vector<2x3xf32> to vector<2x1x3xf32>
    %113 = vector.broadcast %110 : vector<2x128x1xf32> to vector<2x128x3xf32>
    %114 = vector.broadcast %112 : vector<2x1x3xf32> to vector<2x128x3xf32>
    %115 = arith.mulf %113, %114 : vector<2x128x3xf32>
    %116 = vector.extract_strided_slice %12 {offsets = [0, 0, 1], sizes = [2, 128, 1], strides = [1, 1, 1]} : vector<2x128x3xf32> to vector<2x128x1xf32>
    %117 = vector.extract_strided_slice %108 {offsets = [0, 3], sizes = [2, 3], strides = [1, 1]} : vector<2x9xf32> to vector<2x3xf32>
    %118 = vector.shape_cast %117 : vector<2x3xf32> to vector<2x1x3xf32>
    %119 = vector.broadcast %116 : vector<2x128x1xf32> to vector<2x128x3xf32>
    %120 = vector.broadcast %118 : vector<2x1x3xf32> to vector<2x128x3xf32>
    %121 = arith.mulf %119, %120 : vector<2x128x3xf32>
    %122 = arith.addf %115, %121 : vector<2x128x3xf32>
    %123 = vector.extract_strided_slice %12 {offsets = [0, 0, 2], sizes = [2, 128, 1], strides = [1, 1, 1]} : vector<2x128x3xf32> to vector<2x128x1xf32>
    %124 = vector.extract_strided_slice %108 {offsets = [0, 6], sizes = [2, 3], strides = [1, 1]} : vector<2x9xf32> to vector<2x3xf32>
    %125 = vector.shape_cast %124 : vector<2x3xf32> to vector<2x1x3xf32>
    %126 = vector.broadcast %123 : vector<2x128x1xf32> to vector<2x128x3xf32>
    %127 = vector.broadcast %125 : vector<2x1x3xf32> to vector<2x128x3xf32>
    %128 = arith.mulf %126, %127 : vector<2x128x3xf32>
    %129 = arith.addf %122, %128 : vector<2x128x3xf32>
    %130 = vector.shape_cast %129 : vector<2x128x3xf32> to vector<256x3xf32>
    %c0_48 = arith.constant 0 : index
    %c0_49 = arith.constant 0 : index
    %131 = vector.load %arg13[%c0_48, %c0_49] : memref<3x64xf32, #tpu.memory_space<vmem>>, vector<3x64xf32>
    %132 = vector.extract_strided_slice %130 {offsets = [0, 0], sizes = [256, 1], strides = [1, 1]} : vector<256x3xf32> to vector<256x1xf32>
    %133 = vector.extract_strided_slice %131 {offsets = [0, 0], sizes = [1, 64], strides = [1, 1]} : vector<3x64xf32> to vector<1x64xf32>
    %134 = vector.broadcast %132 : vector<256x1xf32> to vector<256x64xf32>
    %135 = vector.broadcast %133 : vector<1x64xf32> to vector<256x64xf32>
    %136 = arith.mulf %134, %135 : vector<256x64xf32>
    %137 = vector.extract_strided_slice %130 {offsets = [0, 1], sizes = [256, 1], strides = [1, 1]} : vector<256x3xf32> to vector<256x1xf32>
    %138 = vector.extract_strided_slice %131 {offsets = [1, 0], sizes = [1, 64], strides = [1, 1]} : vector<3x64xf32> to vector<1x64xf32>
    %139 = vector.broadcast %137 : vector<256x1xf32> to vector<256x64xf32>
    %140 = vector.broadcast %138 : vector<1x64xf32> to vector<256x64xf32>
    %141 = arith.mulf %139, %140 : vector<256x64xf32>
    %142 = arith.addf %136, %141 : vector<256x64xf32>
    %143 = vector.extract_strided_slice %130 {offsets = [0, 2], sizes = [256, 1], strides = [1, 1]} : vector<256x3xf32> to vector<256x1xf32>
    %144 = vector.extract_strided_slice %131 {offsets = [2, 0], sizes = [1, 64], strides = [1, 1]} : vector<3x64xf32> to vector<1x64xf32>
    %145 = vector.broadcast %143 : vector<256x1xf32> to vector<256x64xf32>
    %146 = vector.broadcast %144 : vector<1x64xf32> to vector<256x64xf32>
    %147 = arith.mulf %145, %146 : vector<256x64xf32>
    %148 = arith.addf %142, %147 : vector<256x64xf32>
    %c0_50 = arith.constant 0 : index
    %c0_51 = arith.constant 0 : index
    %149 = vector.load %arg14[%c0_50, %c0_51] : memref<1x64xf32, #tpu.memory_space<vmem>>, vector<1x64xf32>
    %150 = vector.broadcast %149 : vector<1x64xf32> to vector<256x64xf32>
    %151 = arith.addf %148, %150 : vector<256x64xf32>
    %cst_52 = arith.constant 0.000000e+00 : f32
    %152 = vector.broadcast %cst_52 : f32 to vector<256x64xf32>
    %153 = arith.maximumf %151, %152 : vector<256x64xf32>
    %154 = arith.truncf %153 : vector<256x64xf32> to vector<256x64xbf16>
    %c0_53 = arith.constant 0 : index
    %c0_54 = arith.constant 0 : index
    %155 = vector.load %arg15[%c0_53, %c0_54] : memref<64x128xbf16, #tpu.memory_space<vmem>>, vector<64x128xbf16>
    %cst_55 = arith.constant dense<0.000000e+00> : vector<256x128xf32>
    %156 = tpu.matmul %154, %155, %cst_55 {dimension_numbers = #tpu.dot_dimension_numbers<[1], [0], [0], [1], [0, 0, 1, 1], [], []>} : vector<256x64xbf16>, vector<64x128xbf16>, vector<256x128xf32> -> vector<256x128xf32>
    %c0_56 = arith.constant 0 : index
    %c0_57 = arith.constant 0 : index
    %157 = vector.load %arg16[%c0_56, %c0_57] : memref<1x128xf32, #tpu.memory_space<vmem>>, vector<1x128xf32>
    %158 = vector.broadcast %157 : vector<1x128xf32> to vector<256x128xf32>
    %159 = arith.addf %156, %158 : vector<256x128xf32>
    %cst_58 = arith.constant 0.000000e+00 : f32
    %160 = vector.broadcast %cst_58 : f32 to vector<256x128xf32>
    %161 = arith.maximumf %159, %160 : vector<256x128xf32>
    %162 = arith.truncf %161 : vector<256x128xf32> to vector<256x128xbf16>
    %c0_59 = arith.constant 0 : index
    %c0_60 = arith.constant 0 : index
    %163 = vector.load %arg17[%c0_59, %c0_60] : memref<128x1024xbf16, #tpu.memory_space<vmem>>, vector<128x1024xbf16>
    %cst_61 = arith.constant dense<0.000000e+00> : vector<256x1024xf32>
    %164 = tpu.matmul %162, %163, %cst_61 {dimension_numbers = #tpu.dot_dimension_numbers<[1], [0], [0], [1], [0, 0, 1, 1], [], []>} : vector<256x128xbf16>, vector<128x1024xbf16>, vector<256x1024xf32> -> vector<256x1024xf32>
    %c0_62 = arith.constant 0 : index
    %c0_63 = arith.constant 0 : index
    %165 = vector.load %arg18[%c0_62, %c0_63] : memref<1x1024xf32, #tpu.memory_space<vmem>>, vector<1x1024xf32>
    %166 = vector.broadcast %165 : vector<1x1024xf32> to vector<256x1024xf32>
    %167 = arith.addf %164, %166 : vector<256x1024xf32>
    %168 = arith.truncf %167 : vector<256x1024xf32> to vector<256x1024xbf16>
    %169 = vector.extract_strided_slice %168 {offsets = [0, 0], sizes = [128, 1024], strides = [1, 1]} : vector<256x1024xbf16> to vector<128x1024xbf16>
    %cst_64 = arith.constant dense<0xFF80> : vector<1024xbf16>
    %170 = vector.multi_reduction <maximumf>, %169, %cst_64 [0] : vector<128x1024xbf16> to vector<1024xbf16>
    %171 = vector.shape_cast %170 : vector<1024xbf16> to vector<1x1024xbf16>
    %172 = vector.extract_strided_slice %168 {offsets = [128, 0], sizes = [128, 1024], strides = [1, 1]} : vector<256x1024xbf16> to vector<128x1024xbf16>
    %cst_65 = arith.constant dense<0xFF80> : vector<1024xbf16>
    %173 = vector.multi_reduction <maximumf>, %172, %cst_65 [0] : vector<128x1024xbf16> to vector<1024xbf16>
    %174 = vector.shape_cast %173 : vector<1024xbf16> to vector<1x1024xbf16>
    %175 = tpu.concatenate %171, %174 in 0 : vector<1x1024xbf16>, vector<1x1024xbf16> -> vector<2x1024xbf16>
    %c2_i32_66 = arith.constant 2 : i32
    %176 = tpu.memref_slice %arg35[%c2_i32_66] : memref<6x!tpu.dma_semaphore, #tpu.memory_space<semaphore_mem>> -> memref<1x!tpu.dma_semaphore, #tpu.memory_space<semaphore_mem>>
    %177 = tpu.memref_squeeze %176 : memref<1x!tpu.dma_semaphore, #tpu.memory_space<semaphore_mem>> -> memref<!tpu.dma_semaphore, #tpu.memory_space<semaphore_mem>>
    tpu.wait_dma2 semaphore(%177 : memref<!tpu.dma_semaphore, #tpu.memory_space<semaphore_mem>>) src(%arg19 : memref<1024x512xbf16, #tpu.memory_space<any>>) dst(%arg31 : memref<1024x512xbf16, #tpu.memory_space<vmem>>)
    %c3_i32_67 = arith.constant 3 : i32
    %178 = tpu.memref_slice %arg35[%c3_i32_67] : memref<6x!tpu.dma_semaphore, #tpu.memory_space<semaphore_mem>> -> memref<1x!tpu.dma_semaphore, #tpu.memory_space<semaphore_mem>>
    %179 = tpu.memref_squeeze %178 : memref<1x!tpu.dma_semaphore, #tpu.memory_space<semaphore_mem>> -> memref<!tpu.dma_semaphore, #tpu.memory_space<semaphore_mem>>
    tpu.wait_dma2 semaphore(%179 : memref<!tpu.dma_semaphore, #tpu.memory_space<semaphore_mem>>) src(%arg21 : memref<512x256xbf16, #tpu.memory_space<any>>) dst(%arg32 : memref<512x256xbf16, #tpu.memory_space<vmem>>)
    %c4_i32_68 = arith.constant 4 : i32
    %180 = tpu.memref_slice %arg35[%c4_i32_68] : memref<6x!tpu.dma_semaphore, #tpu.memory_space<semaphore_mem>> -> memref<1x!tpu.dma_semaphore, #tpu.memory_space<semaphore_mem>>
    %181 = tpu.memref_squeeze %180 : memref<1x!tpu.dma_semaphore, #tpu.memory_space<semaphore_mem>> -> memref<!tpu.dma_semaphore, #tpu.memory_space<semaphore_mem>>
    tpu.wait_dma2 semaphore(%181 : memref<!tpu.dma_semaphore, #tpu.memory_space<semaphore_mem>>) src(%arg23 : memref<256x256xbf16, #tpu.memory_space<any>>) dst(%arg33 : memref<256x256xbf16, #tpu.memory_space<vmem>>)
    %c5_i32_69 = arith.constant 5 : i32
    %182 = tpu.memref_slice %arg35[%c5_i32_69] : memref<6x!tpu.dma_semaphore, #tpu.memory_space<semaphore_mem>> -> memref<1x!tpu.dma_semaphore, #tpu.memory_space<semaphore_mem>>
    %183 = tpu.memref_squeeze %182 : memref<1x!tpu.dma_semaphore, #tpu.memory_space<semaphore_mem>> -> memref<!tpu.dma_semaphore, #tpu.memory_space<semaphore_mem>>
    tpu.wait_dma2 semaphore(%183 : memref<!tpu.dma_semaphore, #tpu.memory_space<semaphore_mem>>) src(%arg25 : memref<256x768xbf16, #tpu.memory_space<any>>) dst(%arg34 : memref<256x768xbf16, #tpu.memory_space<vmem>>)
    %c0_70 = arith.constant 0 : index
    %c0_71 = arith.constant 0 : index
    %184 = vector.load %arg31[%c0_70, %c0_71] : memref<1024x512xbf16, #tpu.memory_space<vmem>>, vector<1024x512xbf16>
    %cst_72 = arith.constant dense<0.000000e+00> : vector<2x512xf32>
    %185 = tpu.matmul %175, %184, %cst_72 {dimension_numbers = #tpu.dot_dimension_numbers<[1], [0], [0], [1], [0, 0, 1, 1], [], []>} : vector<2x1024xbf16>, vector<1024x512xbf16>, vector<2x512xf32> -> vector<2x512xf32>
    %c0_73 = arith.constant 0 : index
    %c0_74 = arith.constant 0 : index
    %186 = vector.load %arg20[%c0_73, %c0_74] : memref<1x512xf32, #tpu.memory_space<vmem>>, vector<1x512xf32>
    %187 = vector.broadcast %186 : vector<1x512xf32> to vector<2x512xf32>
    %188 = arith.addf %185, %187 : vector<2x512xf32>
    %cst_75 = arith.constant 0.000000e+00 : f32
    %189 = vector.broadcast %cst_75 : f32 to vector<2x512xf32>
    %190 = arith.maximumf %188, %189 : vector<2x512xf32>
    %191 = arith.truncf %190 : vector<2x512xf32> to vector<2x512xbf16>
    %c0_76 = arith.constant 0 : index
    %c0_77 = arith.constant 0 : index
    %192 = vector.load %arg32[%c0_76, %c0_77] : memref<512x256xbf16, #tpu.memory_space<vmem>>, vector<512x256xbf16>
    %cst_78 = arith.constant dense<0.000000e+00> : vector<2x256xf32>
    %193 = tpu.matmul %191, %192, %cst_78 {dimension_numbers = #tpu.dot_dimension_numbers<[1], [0], [0], [1], [0, 0, 1, 1], [], []>} : vector<2x512xbf16>, vector<512x256xbf16>, vector<2x256xf32> -> vector<2x256xf32>
    %c0_79 = arith.constant 0 : index
    %c0_80 = arith.constant 0 : index
    %194 = vector.load %arg22[%c0_79, %c0_80] : memref<1x256xf32, #tpu.memory_space<vmem>>, vector<1x256xf32>
    %195 = vector.broadcast %194 : vector<1x256xf32> to vector<2x256xf32>
    %196 = arith.addf %193, %195 : vector<2x256xf32>
    %cst_81 = arith.constant 0.000000e+00 : f32
    %197 = vector.broadcast %cst_81 : f32 to vector<2x256xf32>
    %198 = arith.maximumf %196, %197 : vector<2x256xf32>
    %199 = arith.truncf %198 : vector<2x256xf32> to vector<2x256xbf16>
    %c0_82 = arith.constant 0 : index
    %c0_83 = arith.constant 0 : index
    %200 = vector.load %arg33[%c0_82, %c0_83] : memref<256x256xbf16, #tpu.memory_space<vmem>>, vector<256x256xbf16>
    %cst_84 = arith.constant dense<0.000000e+00> : vector<2x256xf32>
    %201 = tpu.matmul %199, %200, %cst_84 {dimension_numbers = #tpu.dot_dimension_numbers<[1], [0], [0], [1], [0, 0, 1, 1], [], []>} : vector<2x256xbf16>, vector<256x256xbf16>, vector<2x256xf32> -> vector<2x256xf32>
    %c0_85 = arith.constant 0 : index
    %c0_86 = arith.constant 0 : index
    %202 = vector.load %arg24[%c0_85, %c0_86] : memref<1x256xf32, #tpu.memory_space<vmem>>, vector<1x256xf32>
    %203 = vector.broadcast %202 : vector<1x256xf32> to vector<2x256xf32>
    %204 = arith.addf %201, %203 : vector<2x256xf32>
    %cst_87 = arith.constant 0.000000e+00 : f32
    %205 = vector.broadcast %cst_87 : f32 to vector<2x256xf32>
    %206 = arith.maximumf %204, %205 : vector<2x256xf32>
    %207 = arith.truncf %206 : vector<2x256xf32> to vector<2x256xbf16>
    %c0_88 = arith.constant 0 : index
    %c0_89 = arith.constant 0 : index
    %208 = vector.load %arg34[%c0_88, %c0_89] : memref<256x768xbf16, #tpu.memory_space<vmem>>, vector<256x768xbf16>
    %cst_90 = arith.constant dense<0.000000e+00> : vector<2x768xf32>
    %209 = tpu.matmul %207, %208, %cst_90 {dimension_numbers = #tpu.dot_dimension_numbers<[1], [0], [0], [1], [0, 0, 1, 1], [], []>} : vector<2x256xbf16>, vector<256x768xbf16>, vector<2x768xf32> -> vector<2x768xf32>
    %c0_91 = arith.constant 0 : index
    %c0_92 = arith.constant 0 : index
    %210 = vector.load %arg26[%c0_91, %c0_92] : memref<1x768xf32, #tpu.memory_space<vmem>>, vector<1x768xf32>
    %211 = vector.broadcast %210 : vector<1x768xf32> to vector<2x768xf32>
    %212 = arith.addf %209, %211 : vector<2x768xf32>
    %213 = math.tanh %212 : vector<2x768xf32>
    %c0_93 = arith.constant 0 : index
    %c0_94 = arith.constant 0 : index
    %214 = vector.load %arg27[%c0_93, %c0_94] : memref<2x768xf32, #tpu.memory_space<vmem>>, vector<2x768xf32>
    tpu.vector_store %arg27[%c0_93, %c0_94], %213 {strides = array<i32>} : memref<2x768xf32, #tpu.memory_space<vmem>>, vector<2x768xf32>,
    return
  }
}

</mosaic_0001>

<llo_original>
// kernel: tpu_custom_call.1
$region0: #{tpu_custom_call.1}
  #allocation0 [shape = 'u32[]', space=smem, size = 0x4, offset = 0x4, fixed_abs, tag = 'smem constant byte address 0x4 - core index']
  #allocation1 [shape = 'u32[144,128]{1,0:T(1,128)}', space=vmem, size = 0x12000, scoped, tag = 'internal scratch']
  #allocation2 [shape = 'bf16[1024,512]{1,0:T(8,128)(2,1)}', space=vmem, size = 0x100000, scoped, tag = 'scratch operand']
  #allocation3 [shape = 'bf16[512,256]{1,0:T(8,128)(2,1)}', space=vmem, size = 0x40000, scoped, tag = 'scratch operand']
  #allocation4 [shape = 'bf16[1024,512]{1,0:T(8,128)(2,1)}', space=vmem, size = 0x100000, scoped, tag = 'scratch operand']
  #allocation5 [shape = 'bf16[512,256]{1,0:T(8,128)(2,1)}', space=vmem, size = 0x40000, scoped, tag = 'scratch operand']
  #allocation6 [shape = 'bf16[256,256]{1,0:T(8,128)(2,1)}', space=vmem, size = 0x20000, scoped, tag = 'scratch operand']
  #allocation7 [shape = 'bf16[256,768]{1,0:T(8,128)(2,1)}', space=vmem, size = 0x60000, scoped, tag = 'scratch operand']
  #allocation8 [shape = 's32[6]{0}', space=sflag, size = 0x18, scoped, tag = 'scratch operand']
  #allocation17 [shape = 's32[]', space=sflag, size = 0x4, offset = 0, fixed_abs, tag = 'sflag constant byte address 0x0 - dummy sync flag']
  #allocation18 [shape = 's32[]', space=sflag, size = 0x4, offset = 0, fixed_abs, tag = 'sflag constant byte address 0x0 - dummy sync flag']
  #allocation19 [shape = 'u32[]', space=smem, size = 0x4, offset = 0x44, fixed_abs, tag = 'smem constant byte address 0x44 - assertion arg 0']
  #allocation20 [shape = 'u32[]', space=smem, size = 0x4, offset = 0x48, fixed_abs, tag = 'smem constant byte address 0x48 - assertion arg 1']
  #allocation21 [shape = 's32[]', space=sflag, size = 0x4, offset = 0, fixed_abs, tag = 'sflag constant byte address 0x0 - dummy sync flag']
  #allocation22 [shape = 's32[]', space=sflag, size = 0x4, offset = 0, fixed_abs, tag = 'sflag constant byte address 0x0 - dummy sync flag']
  #allocation23 [shape = 's32[]', space=sflag, size = 0x4, offset = 0, fixed_abs, tag = 'sflag constant byte address 0x0 - dummy sync flag']
  #allocation24 [shape = 's32[]', space=sflag, size = 0x4, offset = 0, fixed_abs, tag = 'sflag constant byte address 0x0 - dummy sync flag']
  #allocation25 [shape = 's32[]', space=sflag, size = 0x4, offset = 0, fixed_abs, tag = 'sflag constant byte address 0x0 - dummy sync flag']
  #allocation26 [shape = 's32[]', space=sflag, size = 0x4, offset = 0, fixed_abs, tag = 'sflag constant byte address 0x0 - dummy sync flag']
  #allocation27 [shape = 's32[]', space=sflag, size = 0x4, offset = 0, fixed_abs, tag = 'sflag constant byte address 0x0 - dummy sync flag']
  #allocation28 [shape = 's32[]', space=sflag, size = 0x4, offset = 0, fixed_abs, tag = 'sflag constant byte address 0x0 - dummy sync flag']
  #allocation29 [shape = 's32[]', space=sflag, size = 0x4, offset = 0, fixed_abs, tag = 'sflag constant byte address 0x0 - dummy sync flag']
  %s0 = inlined_call_operand.vmem [shape: f32[2,128,3], index: 0, kind: input, shape index: {}]
  %s1 = inlined_call_operand.vmem [shape: f32[3,64], index: 1, kind: input, shape index: {}]
  %s2 = inlined_call_operand.vmem [shape: f32[1,64], index: 2, kind: input, shape index: {}]
  %s3 = inlined_call_operand.vmem [shape: bf16[64,128], index: 3, kind: input, shape index: {}]
  %s4 = inlined_call_operand.vmem [shape: f32[1,128], index: 4, kind: input, shape index: {}]
  %s5 = inlined_call_operand.hbm [shape: bf16[128,1024], index: 5, kind: input, shape index: {}]
  %s6 = inlined_call_operand.vmem [shape: f32[1,1024], index: 6, kind: input, shape index: {}]
  %s7 = inlined_call_operand.hbm [shape: bf16[1024,512], index: 7, kind: input, shape index: {}]
  %s8 = inlined_call_operand.vmem [shape: f32[1,512], index: 8, kind: input, shape index: {}]
  %s9 = inlined_call_operand.hbm [shape: bf16[512,256], index: 9, kind: input, shape index: {}]
  %s10 = inlined_call_operand.vmem [shape: f32[1,256], index: 10, kind: input, shape index: {}]
  %s11 = inlined_call_operand.vmem [shape: bf16[256,9], index: 11, kind: input, shape index: {}]
  %s12 = inlined_call_operand.vmem [shape: f32[1,9], index: 12, kind: input, shape index: {}]
  %s13 = inlined_call_operand.vmem [shape: f32[3,64], index: 13, kind: input, shape index: {}]
  %s14 = inlined_call_operand.vmem [shape: f32[1,64], index: 14, kind: input, shape index: {}]
  %s15 = inlined_call_operand.vmem [shape: bf16[64,128], index: 15, kind: input, shape index: {}]
  %s16 = inlined_call_operand.vmem [shape: f32[1,128], index: 16, kind: input, shape index: {}]
  %s17 = inlined_call_operand.hbm [shape: bf16[128,1024], index: 17, kind: input, shape index: {}]
  %s18 = inlined_call_operand.vmem [shape: f32[1,1024], index: 18, kind: input, shape index: {}]
  %s19 = inlined_call_operand.hbm [shape: bf16[1024,512], index: 19, kind: input, shape index: {}]
  %s20 = inlined_call_operand.vmem [shape: f32[1,512], index: 20, kind: input, shape index: {}]
  %s21 = inlined_call_operand.hbm [shape: bf16[512,256], index: 21, kind: input, shape index: {}]
  %s22 = inlined_call_operand.vmem [shape: f32[1,256], index: 22, kind: input, shape index: {}]
  %s23 = inlined_call_operand.vmem [shape: bf16[256,256], index: 23, kind: input, shape index: {}]
  %s24 = inlined_call_operand.vmem [shape: f32[1,256], index: 24, kind: input, shape index: {}]
  %s25 = inlined_call_operand.hbm [shape: bf16[256,768], index: 25, kind: input, shape index: {}]
  %s26 = inlined_call_operand.vmem [shape: f32[1,768], index: 26, kind: input, shape index: {}]
  %s27 = inlined_call_operand.hbm [shape: f32[2,768], index: 27, kind: output, shape index: {0}]
  %s28 = inlined_call_operand.hbm [shape: f32[2,9], index: 28, kind: output, shape index: {1}]
  %29 = xla_tuple %s27, %s28
  %s30 = sld [smem:[#allocation0]]
  $region164: #{tpu_custom_call.1} parent=0
    _
  %s32 = ssub.s32 1, %s30
  %s33 = scalar_select 0, %s32, %s30
  $region1: #{tpu_custom_call.1} parent=0
    #allocation9 [shape = 'u8[262144]{0}', space=vmem, size = 0x40000, scoped, tag = 'input window, operand 5, single buffered']
    #allocation10 [shape = 's32[1]{0}', space=sflag, size = 0x4, scoped, tag = 'scoped memory for tpu_custom_call.1']
    #allocation11 [shape = 's32[1]{0}', space=sflag, size = 0x4, scoped, tag = 'scoped memory for tpu_custom_call.1']
    #allocation12 [shape = 'u8[262144]{0}', space=vmem, size = 0x40000, scoped, tag = 'input window, operand 17, single buffered']
    #allocation13 [shape = 's32[1]{0}', space=sflag, size = 0x4, scoped, tag = 'scoped memory for tpu_custom_call.1']
    #allocation14 [shape = 'u8[6144]{0}', space=vmem, size = 0x1800, scoped, tag = 'output window, operand 0, single buffered']
    #allocation15 [shape = 'u8[1024]{0}', space=vmem, size = 0x400, scoped, tag = 'output window, operand 1, single buffered']
    #allocation16 [shape = 's32[1]{0}', space=sflag, size = 0x4, scoped, tag = 'scoped memory for tpu_custom_call.1']
    %34 = vsyncpa [#allocation10], 0
    %35 = vsyncpa [#allocation13], 0
    %36 = vsyncpa [#allocation11], 0
    %37 = vsyncpa [#allocation16], 0
    // Predicated region
    $region2: #{tpu_custom_call.1} parent=1 // pred_check
      _
    $region3: #{tpu_custom_call.1} parent=1 // pred_check_branch
      %39 = sbr.rel (0) target = $region5
    $region4: #{tpu_custom_call.1} parent=1 // pred_region
      _
    $region5: #{tpu_custom_call.1} parent=1 // pred_fallthru
      _
    // Predicated region
    $region6: #{tpu_custom_call.1} parent=1 // pred_check
      _
    $region7: #{tpu_custom_call.1} parent=1 // pred_check_branch
      %41 = sbr.rel (0) target = $region9
    $region8: #{tpu_custom_call.1} parent=1 // pred_region
      _
    $region9: #{tpu_custom_call.1} parent=1 // pred_fallthru
      _
    // Predicated region
    $region10: #{tpu_custom_call.1} parent=1 // pred_check
      _
    $region11: #{tpu_custom_call.1} parent=1 // pred_check_branch
      %43 = sbr.rel (0) target = $region13
    $region12: #{tpu_custom_call.1} parent=1 // pred_region
      _
    $region13: #{tpu_custom_call.1} parent=1 // pred_fallthru
      _
    // Predicated region
    $region14: #{tpu_custom_call.1} parent=1 // pred_check
      _
    $region15: #{tpu_custom_call.1} parent=1 // pred_check_branch
      %45 = sbr.rel (0) target = $region17
    $region16: #{tpu_custom_call.1} parent=1 // pred_region
      _
    $region17: #{tpu_custom_call.1} parent=1 // pred_fallthru
      _
    // Predicated region
    $region18: #{tpu_custom_call.1} parent=1 // pred_check
      _
    $region19: #{tpu_custom_call.1} parent=1 // pred_check_branch
      %47 = sbr.rel (0) target = $region21
    $region20: #{tpu_custom_call.1} parent=1 // pred_region
      _
    $region21: #{tpu_custom_call.1} parent=1 // pred_fallthru
      _
    // Predicated region
    $region22: #{tpu_custom_call.1} parent=1 // pred_check
      _
    $region23: #{tpu_custom_call.1} parent=1 // pred_check_branch
      %49 = sbr.rel (0) target = $region25
    $region24: #{tpu_custom_call.1} parent=1 // pred_region
      %s51 = ssub.s32 8192, 8192
      %52 = vsyncadd [#allocation10], %s51
      %s53 = sshll.u32 [#allocation9], 4
      %s54 = int_to_ptr.vmem [resolvable:$true] %s53
      %59 = dma.hbm_to_vmem [thread:$0]  %s5, 8192, %s54, [#allocation10], 512, 512, 32
    $region25: #{tpu_custom_call.1} parent=1 // pred_fallthru
      _
    // Predicated region
    $region26: #{tpu_custom_call.1} parent=1 // pred_check
      _
    $region27: #{tpu_custom_call.1} parent=1 // pred_check_branch
      %61 = sbr.rel (0) target = $region29
    $region28: #{tpu_custom_call.1} parent=1 // pred_region
      _
    $region29: #{tpu_custom_call.1} parent=1 // pred_fallthru
      _
    // Predicated region
    $region30: #{tpu_custom_call.1} parent=1 // pred_check
      _
    $region31: #{tpu_custom_call.1} parent=1 // pred_check_branch
      %63 = sbr.rel (0) target = $region33
    $region32: #{tpu_custom_call.1} parent=1 // pred_region
      _
    $region33: #{tpu_custom_call.1} parent=1 // pred_fallthru
      _
    // Predicated region
    $region34: #{tpu_custom_call.1} parent=1 // pred_check
      _
    $region35: #{tpu_custom_call.1} parent=1 // pred_check_branch
      %65 = sbr.rel (0) target = $region37
    $region36: #{tpu_custom_call.1} parent=1 // pred_region
      _
    $region37: #{tpu_custom_call.1} parent=1 // pred_fallthru
      _
    // Predicated region
    $region38: #{tpu_custom_call.1} parent=1 // pred_check
      _
    $region39: #{tpu_custom_call.1} parent=1 // pred_check_branch
      %67 = sbr.rel (0) target = $region41
    $region40: #{tpu_custom_call.1} parent=1 // pred_region
      _
    $region41: #{tpu_custom_call.1} parent=1 // pred_fallthru
      _
    // Predicated region
    $region42: #{tpu_custom_call.1} parent=1 // pred_check
      _
    $region43: #{tpu_custom_call.1} parent=1 // pred_check_branch
      %69 = sbr.rel (0) target = $region45
    $region44: #{tpu_custom_call.1} parent=1 // pred_region
      _
    $region45: #{tpu_custom_call.1} parent=1 // pred_fallthru
      _
    // Predicated region
    $region46: #{tpu_custom_call.1} parent=1 // pred_check
      _
    $region47: #{tpu_custom_call.1} parent=1 // pred_check_branch
      %71 = sbr.rel (0) target = $region49
    $region48: #{tpu_custom_call.1} parent=1 // pred_region
      _
    $region49: #{tpu_custom_call.1} parent=1 // pred_fallthru
      _
    // Predicated region
    $region50: #{tpu_custom_call.1} parent=1 // pred_check
      _
    $region51: #{tpu_custom_call.1} parent=1 // pred_check_branch
      %73 = sbr.rel (0) target = $region53
    $region52: #{tpu_custom_call.1} parent=1 // pred_region
      _
    $region53: #{tpu_custom_call.1} parent=1 // pred_fallthru
      _
    // Predicated region
    $region54: #{tpu_custom_call.1} parent=1 // pred_check
      _
    $region55: #{tpu_custom_call.1} parent=1 // pred_check_branch
      %75 = sbr.rel (0) target = $region57
    $region56: #{tpu_custom_call.1} parent=1 // pred_region
      _
    $region57: #{tpu_custom_call.1} parent=1 // pred_fallthru
      _
    // Predicated region
    $region58: #{tpu_custom_call.1} parent=1 // pred_check
      _
    $region59: #{tpu_custom_call.1} parent=1 // pred_check_branch
      %77 = sbr.rel (0) target = $region61
    $region60: #{tpu_custom_call.1} parent=1 // pred_region
      _
    $region61: #{tpu_custom_call.1} parent=1 // pred_fallthru
      _
    // Predicated region
    $region62: #{tpu_custom_call.1} parent=1 // pred_check
      _
    $region63: #{tpu_custom_call.1} parent=1 // pred_check_branch
      %79 = sbr.rel (0) target = $region65
    $region64: #{tpu_custom_call.1} parent=1 // pred_region
      %s81 = ssub.s32 8192, 8192
      %82 = vsyncadd [#allocation13], %s81
      %s83 = sshll.u32 [#allocation12], 4
      %s84 = int_to_ptr.vmem [resolvable:$true] %s83
      %89 = dma.hbm_to_vmem [thread:$0]  %s17, 8192, %s84, [#allocation13], 512, 512, 32
    $region65: #{tpu_custom_call.1} parent=1 // pred_fallthru
      _
    // Predicated region
    $region66: #{tpu_custom_call.1} parent=1 // pred_check
      _
    $region67: #{tpu_custom_call.1} parent=1 // pred_check_branch
      %91 = sbr.rel (0) target = $region69
    $region68: #{tpu_custom_call.1} parent=1 // pred_region
      _
    $region69: #{tpu_custom_call.1} parent=1 // pred_fallthru
      _
    // Predicated region
    $region70: #{tpu_custom_call.1} parent=1 // pred_check
      _
    $region71: #{tpu_custom_call.1} parent=1 // pred_check_branch
      %93 = sbr.rel (0) target = $region73
    $region72: #{tpu_custom_call.1} parent=1 // pred_region
      _
    $region73: #{tpu_custom_call.1} parent=1 // pred_fallthru
      _
    // Predicated region
    $region74: #{tpu_custom_call.1} parent=1 // pred_check
      _
    $region75: #{tpu_custom_call.1} parent=1 // pred_check_branch
      %95 = sbr.rel (0) target = $region77
    $region76: #{tpu_custom_call.1} parent=1 // pred_region
      _
    $region77: #{tpu_custom_call.1} parent=1 // pred_fallthru
      _
    // Predicated region
    $region78: #{tpu_custom_call.1} parent=1 // pred_check
      _
    $region79: #{tpu_custom_call.1} parent=1 // pred_check_branch
      %97 = sbr.rel (0) target = $region81
    $region80: #{tpu_custom_call.1} parent=1 // pred_region
      _
    $region81: #{tpu_custom_call.1} parent=1 // pred_fallthru
      _
    // Predicated region
    $region82: #{tpu_custom_call.1} parent=1 // pred_check
      _
    $region83: #{tpu_custom_call.1} parent=1 // pred_check_branch
      %99 = sbr.rel (0) target = $region85
    $region84: #{tpu_custom_call.1} parent=1 // pred_region
      _
    $region85: #{tpu_custom_call.1} parent=1 // pred_fallthru
      _
    // Predicated region
    $region86: #{tpu_custom_call.1} parent=1 // pred_check
      _
    $region87: #{tpu_custom_call.1} parent=1 // pred_check_branch
      %101 = sbr.rel (0) target = $region89
    $region88: #{tpu_custom_call.1} parent=1 // pred_region
      %102 = dma.done [#allocation10], 8192
    $region89: #{tpu_custom_call.1} parent=1 // pred_fallthru
      _
    // Predicated region
    $region90: #{tpu_custom_call.1} parent=1 // pred_check
      _
    $region91: #{tpu_custom_call.1} parent=1 // pred_check_branch
      %104 = sbr.rel (0) target = $region93
    $region92: #{tpu_custom_call.1} parent=1 // pred_region
      %105 = dma.done [#allocation13], 8192
    $region93: #{tpu_custom_call.1} parent=1 // pred_fallthru
      _
    // Predicated region
    $region94: #{tpu_custom_call.1} parent=1 // pred_check
      _
    $region95: #{tpu_custom_call.1} parent=1 // pred_check_branch
      %108 = sbr.rel target = $region97
    $region96: #{tpu_custom_call.1} parent=1 // pred_region
      %109 = sst [smem:[#allocation19]] [#allocation18]
      %110 = sst [smem:[#allocation20]] [#allocation17]
    $region97: #{tpu_custom_call.1} parent=1 // pred_fallthru
      _
    %112 = shalt.err (0)
    %s114 = sshll.u32 [#allocation2], 4
    %s115 = int_to_ptr.vmem [resolvable:$true] %s114
    %117 = dma.hbm_to_vmem [thread:$0]  %s7, 32768, %s115, [#allocation8]
    %s118 = scalar_lea.sflag [#allocation8], 1
    // Predicated region
    $region98: #{tpu_custom_call.1} parent=1 // pred_check
      _
    $region99: #{tpu_custom_call.1} parent=1 // pred_check_branch
      %120 = sbr.rel target = $region101
    $region100: #{tpu_custom_call.1} parent=1 // pred_region
      %121 = sst [smem:[#allocation19]] [#allocation22]
      %122 = sst [smem:[#allocation20]] [#allocation21]
    $region101: #{tpu_custom_call.1} parent=1 // pred_fallthru
      _
    %124 = shalt.err (0)
    %s126 = sshll.u32 [#allocation3], 4
    %s127 = int_to_ptr.vmem [resolvable:$true] %s126
    %129 = dma.hbm_to_vmem [thread:$0]  %s9, 8192, %s127, %s118
    %s130 = scalar_lea.sflag [#allocation8], 2
    // Predicated region
    $region102: #{tpu_custom_call.1} parent=1 // pred_check
      _
    $region103: #{tpu_custom_call.1} parent=1 // pred_check_branch
      %132 = sbr.rel target = $region105
    $region104: #{tpu_custom_call.1} parent=1 // pred_region
      %133 = sst [smem:[#allocation19]] [#allocation24]
      %134 = sst [smem:[#allocation20]] [#allocation23]
    $region105: #{tpu_custom_call.1} parent=1 // pred_fallthru
      _
    %136 = shalt.err (0)
    %s138 = sshll.u32 [#allocation4], 4
    %s139 = int_to_ptr.vmem [resolvable:$true] %s138
    %141 = dma.hbm_to_vmem [thread:$0]  %s19, 32768, %s139, %s130
    %s142 = scalar_lea.sflag [#allocation8], 3
    // Predicated region
    $region106: #{tpu_custom_call.1} parent=1 // pred_check
      _
    $region107: #{tpu_custom_call.1} parent=1 // pred_check_branch
      %144 = sbr.rel target = $region109
    $region108: #{tpu_custom_call.1} parent=1 // pred_region
      %145 = sst [smem:[#allocation19]] [#allocation26]
      %146 = sst [smem:[#allocation20]] [#allocation25]
    $region109: #{tpu_custom_call.1} parent=1 // pred_fallthru
      _
    %148 = shalt.err (0)
    %s150 = sshll.u32 [#allocation5], 4
    %s151 = int_to_ptr.vmem [resolvable:$true] %s150
    %153 = dma.hbm_to_vmem [thread:$0]  %s21, 8192, %s151, %s142
    %s154 = scalar_lea.sflag [#allocation8], 4
    %p156 = scmp.lt.u32.totalorder 256, 8
    %p157 = pneg %p156
    // Predicated region
    $region110: #{tpu_custom_call.1} parent=1 // pred_check
      _
    $region111: #{tpu_custom_call.1} parent=1 // pred_check_branch
      %159 = sbr.rel (%p156) target = $region113
    $region112: #{tpu_custom_call.1} parent=1 // pred_region
      %s175 = sand.u32 256, 7
      %p176 = scmp.eq.s32.totalorder %s175, 0
      // Predicated region
      $region125: #{tpu_custom_call.1} parent=112 // pred_check
        %p177 = pneg %p176
      $region126: #{tpu_custom_call.1} parent=112 // pred_check_branch
        %179 = sbr.rel (%p177) target = $region128
      $region127: #{tpu_custom_call.1} parent=112 // pred_region
        loop: start=0, step=1, limit=1
        $region129: #{tpu_custom_call.1} parent=127 // loop_pre_header
          _
        $region130: #{tpu_custom_call.1} parent=127 // loop_header
          %s181 = sphi 0, %s185
          %p182 = scmp.ge.s32.totalorder %s181, 1
          %s186 = sphi %s23, %s23
          %s187 = sphi [#allocation6], [#allocation6]
        $region131: #{tpu_custom_call.1} parent=127 // loop_header_branch
          %184 = sbr.rel (%p182) target = $region135
        $region132: #{tpu_custom_call.1} parent=127 // loop_body
          %v188 = vld [vmem:[%s186] sm:$0xff]
          %189 = vst [vmem:[%s187] sm:$0xff] %v188
          %v190 = vld [vmem:[%s186 + $0x8] sm:$0xff]
          %191 = vst [vmem:[%s187 + $0x8] sm:$0xff] %v190
          %v192 = vld [vmem:[%s186 + $0x10] sm:$0xff]
          %193 = vst [vmem:[%s187 + $0x10] sm:$0xff] %v192
          %v194 = vld [vmem:[%s186 + $0x18] sm:$0xff]
          %195 = vst [vmem:[%s187 + $0x18] sm:$0xff] %v194
          %v196 = vld [vmem:[%s186 + $0x20] sm:$0xff]
          %197 = vst [vmem:[%s187 + $0x20] sm:$0xff] %v196
          %v198 = vld [vmem:[%s186 + $0x28] sm:$0xff]
          %199 = vst [vmem:[%s187 + $0x28] sm:$0xff] %v198
          %v200 = vld [vmem:[%s186 + $0x30] sm:$0xff]
          %201 = vst [vmem:[%s187 + $0x30] sm:$0xff] %v200
          %v202 = vld [vmem:[%s186 + $0x38] sm:$0xff]
          %203 = vst [vmem:[%s187 + $0x38] sm:$0xff] %v202
          %v204 = vld [vmem:[%s186 + $0x40] sm:$0xff]
          %205 = vst [vmem:[%s187 + $0x40] sm:$0xff] %v204
          %v206 = vld [vmem:[%s186 + $0x48] sm:$0xff]
          %207 = vst [vmem:[%s187 + $0x48] sm:$0xff] %v206
          %v208 = vld [vmem:[%s186 + $0x50] sm:$0xff]
          %209 = vst [vmem:[%s187 + $0x50] sm:$0xff] %v208
          %v210 = vld [vmem:[%s186 + $0x58] sm:$0xff]
          %211 = vst [vmem:[%s187 + $0x58] sm:$0xff] %v210
          %v212 = vld [vmem:[%s186 + $0x60] sm:$0xff]
          %213 = vst [vmem:[%s187 + $0x60] sm:$0xff] %v212
          %v214 = vld [vmem:[%s186 + $0x68] sm:$0xff]
          %215 = vst [vmem:[%s187 + $0x68] sm:$0xff] %v214
          %v216 = vld [vmem:[%s186 + $0x70] sm:$0xff]
          %217 = vst [vmem:[%s187 + $0x70] sm:$0xff] %v216
          %v218 = vld [vmem:[%s186 + $0x78] sm:$0xff]
          %219 = vst [vmem:[%s187 + $0x78] sm:$0xff] %v218
          %v220 = vld [vmem:[%s186 + $0x80] sm:$0xff]
          %221 = vst [vmem:[%s187 + $0x80] sm:$0xff] %v220
          %v222 = vld [vmem:[%s186 + $0x88] sm:$0xff]
          %223 = vst [vmem:[%s187 + $0x88] sm:$0xff] %v222
          %v224 = vld [vmem:[%s186 + $0x90] sm:$0xff]
          %225 = vst [vmem:[%s187 + $0x90] sm:$0xff] %v224
          %v226 = vld [vmem:[%s186 + $0x98] sm:$0xff]
          %227 = vst [vmem:[%s187 + $0x98] sm:$0xff] %v226
          %v228 = vld [vmem:[%s186 + $0xa0] sm:$0xff]
          %229 = vst [vmem:[%s187 + $0xa0] sm:$0xff] %v228
          %v230 = vld [vmem:[%s186 + $0xa8] sm:$0xff]
          %231 = vst [vmem:[%s187 + $0xa8] sm:$0xff] %v230
          %v232 = vld [vmem:[%s186 + $0xb0] sm:$0xff]
          %233 = vst [vmem:[%s187 + $0xb0] sm:$0xff] %v232
          %v234 = vld [vmem:[%s186 + $0xb8] sm:$0xff]
          %235 = vst [vmem:[%s187 + $0xb8] sm:$0xff] %v234
          %v236 = vld [vmem:[%s186 + $0xc0] sm:$0xff]
          %237 = vst [vmem:[%s187 + $0xc0] sm:$0xff] %v236
          %v238 = vld [vmem:[%s186 + $0xc8] sm:$0xff]
          %239 = vst [vmem:[%s187 + $0xc8] sm:$0xff] %v238
          %v240 = vld [vmem:[%s186 + $0xd0] sm:$0xff]
          %241 = vst [vmem:[%s187 + $0xd0] sm:$0xff] %v240
          %v242 = vld [vmem:[%s186 + $0xd8] sm:$0xff]
          %243 = vst [vmem:[%s187 + $0xd8] sm:$0xff] %v242
          %v244 = vld [vmem:[%s186 + $0xe0] sm:$0xff]
          %245 = vst [vmem:[%s187 + $0xe0] sm:$0xff] %v244
          %v246 = vld [vmem:[%s186 + $0xe8] sm:$0xff]
          %247 = vst [vmem:[%s187 + $0xe8] sm:$0xff] %v246
          %v248 = vld [vmem:[%s186 + $0xf0] sm:$0xff]
          %249 = vst [vmem:[%s187 + $0xf0] sm:$0xff] %v248
          %v250 = vld [vmem:[%s186 + $0xf8] sm:$0xff]
          %251 = vst [vmem:[%s187 + $0xf8] sm:$0xff] %v250
        $region133: #{tpu_custom_call.1} parent=127 // loop_footer
          %s185 = sadd.s32 1, %s181
        $region134: #{tpu_custom_call.1} parent=127 // loop_footer_branch
          %180 = sbr.rel target = $region130
        $region135: #{tpu_custom_call.1} parent=127 // loop_exit
          _
      $region128: #{tpu_custom_call.1} parent=112 // pred_fallthru
        _
      %p252 = pneg %p176
      // Predicated region
      $region136: #{tpu_custom_call.1} parent=112 // pred_check
        _
      $region137: #{tpu_custom_call.1} parent=112 // pred_check_branch
        %254 = sbr.rel (%p176) target = $region139
      $region138: #{tpu_custom_call.1} parent=112 // pred_region
        %s255 = sand.u32 256, 7
      $region139: #{tpu_custom_call.1} parent=112 // pred_fallthru
        _
    $region113: #{tpu_custom_call.1} parent=1 // pred_fallthru
      _
    // Predicated region
    $region114: #{tpu_custom_call.1} parent=1 // pred_check
      %p160 = pneg %p156
    $region115: #{tpu_custom_call.1} parent=1 // pred_check_branch
      %162 = sbr.rel (%p160) target = $region117
    $region116: #{tpu_custom_call.1} parent=1 // pred_region
      %s163 = sshll.u32 1, 256
      %s164 = ssub.s32 %s163, 1
      loop: start=0, step=1, limit=1
      $region118: #{tpu_custom_call.1} parent=116 // loop_pre_header
        _
      $region119: #{tpu_custom_call.1} parent=116 // loop_header
        %s166 = sphi 0, %s170
        %p167 = scmp.ge.s32.totalorder %s166, 1
        %s171 = sphi %s23, %s23
        %s172 = sphi [#allocation6], [#allocation6]
      $region120: #{tpu_custom_call.1} parent=116 // loop_header_branch
        %169 = sbr.rel (%p167) target = $region124
      $region121: #{tpu_custom_call.1} parent=116 // loop_body
        %v173 = vld [vmem:[%s171] sm:%s164]
        %174 = vst [vmem:[%s172] sm:%s164] %v173
      $region122: #{tpu_custom_call.1} parent=116 // loop_footer
        %s170 = sadd.s32 1, %s166
      $region123: #{tpu_custom_call.1} parent=116 // loop_footer_branch
        %165 = sbr.rel target = $region119
      $region124: #{tpu_custom_call.1} parent=116 // loop_exit
        _
    $region117: #{tpu_custom_call.1} parent=1 // pred_fallthru
      _
    // Predicated region
    $region140: #{tpu_custom_call.1} parent=1 // pred_check
      _
    $region141: #{tpu_custom_call.1} parent=1 // pred_check_branch
      %258 = sbr.rel (0) target = $region143
    $region142: #{tpu_custom_call.1} parent=1 // pred_region
      %259 = vsyncadd %s154, 4096
    $region143: #{tpu_custom_call.1} parent=1 // pred_fallthru
      _
    %s260 = scalar_lea.sflag [#allocation8], 5
    // Predicated region
    $region144: #{tpu_custom_call.1} parent=1 // pred_check
      _
    $region145: #{tpu_custom_call.1} parent=1 // pred_check_branch
      %262 = sbr.rel target = $region147
    $region146: #{tpu_custom_call.1} parent=1 // pred_region
      %263 = sst [smem:[#allocation19]] [#allocation29]
      %264 = sst [smem:[#allocation20]] [#allocation28]
    $region147: #{tpu_custom_call.1} parent=1 // pred_fallthru
      _
    %266 = shalt.err (0)
    %s268 = sshll.u32 [#allocation7], 4
    %s269 = int_to_ptr.vmem [resolvable:$true] %s268
    %271 = dma.hbm_to_vmem [thread:$0]  %s25, 12288, %s269, %s260
    %v272 = vld [vmem:[%s0] sm:$0xff]
    %v273 = vld [vmem:[%s0 + $0x8] sm:$0xff]
    %v274 = vld [vmem:[%s0 + $0x10] sm:$0xff]
    %v275 = vld [vmem:[%s0 + $0x18] sm:$0xff]
    %v276 = vld [vmem:[%s0 + $0x20] sm:$0xff]
    %v277 = vld [vmem:[%s0 + $0x28] sm:$0xff]
    %v278 = vld [vmem:[%s0 + $0x30] sm:$0xff]
    %v279 = vld [vmem:[%s0 + $0x38] sm:$0xff]
    %v280 = vld [vmem:[%s0 + $0x40] sm:$0xff]
    %v281 = vld [vmem:[%s0 + $0x48] sm:$0xff]
    %v282 = vld [vmem:[%s0 + $0x50] sm:$0xff]
    %v283 = vld [vmem:[%s0 + $0x58] sm:$0xff]
    %v284 = vld [vmem:[%s0 + $0x60] sm:$0xff]
    %v285 = vld [vmem:[%s0 + $0x68] sm:$0xff]
    %v286 = vld [vmem:[%s0 + $0x70] sm:$0xff]
    %v287 = vld [vmem:[%s0 + $0x78] sm:$0xff]
    %v288 = vld [vmem:[%s0 + $0x80] sm:$0xff]
    %v289 = vld [vmem:[%s0 + $0x88] sm:$0xff]
    %v290 = vld [vmem:[%s0 + $0x90] sm:$0xff]
    %v291 = vld [vmem:[%s0 + $0x98] sm:$0xff]
    %v292 = vld [vmem:[%s0 + $0xa0] sm:$0xff]
    %v293 = vld [vmem:[%s0 + $0xa8] sm:$0xff]
    %v294 = vld [vmem:[%s0 + $0xb0] sm:$0xff]
    %v295 = vld [vmem:[%s0 + $0xb8] sm:$0xff]
    %v296 = vld [vmem:[%s0 + $0xc0] sm:$0xff]
    %v297 = vld [vmem:[%s0 + $0xc8] sm:$0xff]
    %v298 = vld [vmem:[%s0 + $0xd0] sm:$0xff]
    %v299 = vld [vmem:[%s0 + $0xd8] sm:$0xff]
    %v300 = vld [vmem:[%s0 + $0xe0] sm:$0xff]
    %v301 = vld [vmem:[%s0 + $0xe8] sm:$0xff]
    %v302 = vld [vmem:[%s0 + $0xf0] sm:$0xff]
    %v303 = vld [vmem:[%s0 + $0xf8] sm:$0xff]
    %v304 = vld [vmem:[%s1] sm:$0x7]
    %306 = vset.pattern.permute.xlu0 0
    %307 = vperm.xlu0 %306, %v272
    %v308 = vpop.permute.xlu0 %307
    %311 = vset.pattern.permute.xlu0 0
    %312 = vperm.xlu0 %311, %v273
    %v313 = vpop.permute.xlu0 %312
    %316 = vset.pattern.permute.xlu0 0
    %317 = vperm.xlu0 %316, %v274
    %v318 = vpop.permute.xlu0 %317
    %321 = vset.pattern.permute.xlu0 0
    %322 = vperm.xlu0 %321, %v275
    %v323 = vpop.permute.xlu0 %322
    %326 = vset.pattern.permute.xlu0 0
    %327 = vperm.xlu0 %326, %v276
    %v328 = vpop.permute.xlu0 %327
    %331 = vset.pattern.permute.xlu0 0
    %332 = vperm.xlu0 %331, %v277
    %v333 = vpop.permute.xlu0 %332
    %336 = vset.pattern.permute.xlu0 0
    %337 = vperm.xlu0 %336, %v278
    %v338 = vpop.permute.xlu0 %337
    %341 = vset.pattern.permute.xlu0 0
    %342 = vperm.xlu0 %341, %v279
    %v343 = vpop.permute.xlu0 %342
    %346 = vset.pattern.permute.xlu0 0
    %347 = vperm.xlu0 %346, %v280
    %v348 = vpop.permute.xlu0 %347
    %351 = vset.pattern.permute.xlu0 0
    %352 = vperm.xlu0 %351, %v281
    %v353 = vpop.permute.xlu0 %352
    %356 = vset.pattern.permute.xlu0 0
    %357 = vperm.xlu0 %356, %v282
    %v358 = vpop.permute.xlu0 %357
    %361 = vset.pattern.permute.xlu0 0
    %362 = vperm.xlu0 %361, %v283
    %v363 = vpop.permute.xlu0 %362
    %366 = vset.pattern.permute.xlu0 0
    %367 = vperm.xlu0 %366, %v284
    %v368 = vpop.permute.xlu0 %367
    %371 = vset.pattern.permute.xlu0 0
    %372 = vperm.xlu0 %371, %v285
    %v373 = vpop.permute.xlu0 %372
    %376 = vset.pattern.permute.xlu0 0
    %377 = vperm.xlu0 %376, %v286
    %v378 = vpop.permute.xlu0 %377
    %381 = vset.pattern.permute.xlu0 0
    %382 = vperm.xlu0 %381, %v287
    %v383 = vpop.permute.xlu0 %382
    %386 = vset.pattern.permute.xlu0 0
    %387 = vperm.xlu0 %386, %v288
    %v388 = vpop.permute.xlu0 %387
    %391 = vset.pattern.permute.xlu0 0
    %392 = vperm.xlu0 %391, %v289
    %v393 = vpop.permute.xlu0 %392
    %396 = vset.pattern.permute.xlu0 0
    %397 = vperm.xlu0 %396, %v290
    %v398 = vpop.permute.xlu0 %397
    %401 = vset.pattern.permute.xlu0 0
    %402 = vperm.xlu0 %401, %v291
    %v403 = vpop.permute.xlu0 %402
    %406 = vset.pattern.permute.xlu0 0
    %407 = vperm.xlu0 %406, %v292
    %v408 = vpop.permute.xlu0 %407
    %411 = vset.pattern.permute.xlu0 0
    %412 = vperm.xlu0 %411, %v293
    %v413 = vpop.permute.xlu0 %412
    %416 = vset.pattern.permute.xlu0 0
    %417 = vperm.xlu0 %416, %v294
    %v418 = vpop.permute.xlu0 %417
    %421 = vset.pattern.permute.xlu0 0
    %422 = vperm.xlu0 %421, %v295
    %v423 = vpop.permute.xlu0 %422
    %426 = vset.pattern.permute.xlu0 0
    %427 = vperm.xlu0 %426, %v296
    %v428 = vpop.permute.xlu0 %427
    %431 = vset.pattern.permute.xlu0 0
    %432 = vperm.xlu0 %431, %v297
    %v433 = vpop.permute.xlu0 %432
    %436 = vset.pattern.permute.xlu0 0
    %437 = vperm.xlu0 %436, %v298
    %v438 = vpop.permute.xlu0 %437
    %441 = vset.pattern.permute.xlu0 0
    %442 = vperm.xlu0 %441, %v299
    %v443 = vpop.permute.xlu0 %442
    %446 = vset.pattern.permute.xlu0 0
    %447 = vperm.xlu0 %446, %v300
    %v448 = vpop.permute.xlu0 %447
    %451 = vset.pattern.permute.xlu0 0
    %452 = vperm.xlu0 %451, %v301
    %v453 = vpop.permute.xlu0 %452
    %456 = vset.pattern.permute.xlu0 0
    %457 = vperm.xlu0 %456, %v302
    %v458 = vpop.permute.xlu0 %457
    %461 = vset.pattern.permute.xlu0 0
    %462 = vperm.xlu0 %461, %v303
    %v463 = vpop.permute.xlu0 %462
    %v465 = vlaneseq
    %v466 = vshrl.u32 %v465, 7
    %v467 = vsub.s32 0, %v466
    %v468 = vrot.slane %v304, %v467
    %v469 = vmul.f32 %v308, %v468
    %v470 = vmul.f32 %v313, %v468
    %v471 = vmul.f32 %v318, %v468
    %v472 = vmul.f32 %v323, %v468
    %v473 = vmul.f32 %v328, %v468
    %v474 = vmul.f32 %v333, %v468
    %v475 = vmul.f32 %v338, %v468
    %v476 = vmul.f32 %v343, %v468
    %v477 = vmul.f32 %v348, %v468
    %v478 = vmul.f32 %v353, %v468
    %v479 = vmul.f32 %v358, %v468
    %v480 = vmul.f32 %v363, %v468
    %v481 = vmul.f32 %v368, %v468
    %v482 = vmul.f32 %v373, %v468
    %v483 = vmul.f32 %v378, %v468
    %v484 = vmul.f32 %v383, %v468
    %v485 = vmul.f32 %v388, %v468
    %v486 = vmul.f32 %v393, %v468
    %v487 = vmul.f32 %v398, %v468
    %v488 = vmul.f32 %v403, %v468
    %v489 = vmul.f32 %v408, %v468
    %v490 = vmul.f32 %v413, %v468
    %v491 = vmul.f32 %v418, %v468
    %v492 = vmul.f32 %v423, %v468
    %v493 = vmul.f32 %v428, %v468
    %v494 = vmul.f32 %v433, %v468
    %v495 = vmul.f32 %v438, %v468
    %v496 = vmul.f32 %v443, %v468
    %v497 = vmul.f32 %v448, %v468
    %v498 = vmul.f32 %v453, %v468
    %v499 = vmul.f32 %v458, %v468
    %v500 = vmul.f32 %v463, %v468
    %501 = vset.pattern.permute.xlu0 1
    %502 = vperm.xlu0 %501, %v272
    %v503 = vpop.permute.xlu0 %502
    %505 = vset.pattern.permute.xlu0 1
    %506 = vperm.xlu0 %505, %v273
    %v507 = vpop.permute.xlu0 %506
    %509 = vset.pattern.permute.xlu0 1
    %510 = vperm.xlu0 %509, %v274
    %v511 = vpop.permute.xlu0 %510
    %513 = vset.pattern.permute.xlu0 1
    %514 = vperm.xlu0 %513, %v275
    %v515 = vpop.permute.xlu0 %514
    %517 = vset.pattern.permute.xlu0 1
    %518 = vperm.xlu0 %517, %v276
    %v519 = vpop.permute.xlu0 %518
    %521 = vset.pattern.permute.xlu0 1
    %522 = vperm.xlu0 %521, %v277
    %v523 = vpop.permute.xlu0 %522
    %525 = vset.pattern.permute.xlu0 1
    %526 = vperm.xlu0 %525, %v278
    %v527 = vpop.permute.xlu0 %526
    %529 = vset.pattern.permute.xlu0 1
    %530 = vperm.xlu0 %529, %v279
    %v531 = vpop.permute.xlu0 %530
    %533 = vset.pattern.permute.xlu0 1
    %534 = vperm.xlu0 %533, %v280
    %v535 = vpop.permute.xlu0 %534
    %537 = vset.pattern.permute.xlu0 1
    %538 = vperm.xlu0 %537, %v281
    %v539 = vpop.permute.xlu0 %538
    %541 = vset.pattern.permute.xlu0 1
    %542 = vperm.xlu0 %541, %v282
    %v543 = vpop.permute.xlu0 %542
    %545 = vset.pattern.permute.xlu0 1
    %546 = vperm.xlu0 %545, %v283
    %v547 = vpop.permute.xlu0 %546
    %549 = vset.pattern.permute.xlu0 1
    %550 = vperm.xlu0 %549, %v284
    %v551 = vpop.permute.xlu0 %550
    %553 = vset.pattern.permute.xlu0 1
    %554 = vperm.xlu0 %553, %v285
    %v555 = vpop.permute.xlu0 %554
    %557 = vset.pattern.permute.xlu0 1
    %558 = vperm.xlu0 %557, %v286
    %v559 = vpop.permute.xlu0 %558
    %561 = vset.pattern.permute.xlu0 1
    %562 = vperm.xlu0 %561, %v287
    %v563 = vpop.permute.xlu0 %562
    %565 = vset.pattern.permute.xlu0 1
    %566 = vperm.xlu0 %565, %v288
    %v567 = vpop.permute.xlu0 %566
    %569 = vset.pattern.permute.xlu0 1
    %570 = vperm.xlu0 %569, %v289
    %v571 = vpop.permute.xlu0 %570
    %573 = vset.pattern.permute.xlu0 1
    %574 = vperm.xlu0 %573, %v290
    %v575 = vpop.permute.xlu0 %574
    %577 = vset.pattern.permute.xlu0 1
    %578 = vperm.xlu0 %577, %v291
    %v579 = vpop.permute.xlu0 %578
    %581 = vset.pattern.permute.xlu0 1
    %582 = vperm.xlu0 %581, %v292
    %v583 = vpop.permute.xlu0 %582
    %585 = vset.pattern.permute.xlu0 1
    %586 = vperm.xlu0 %585, %v293
    %v587 = vpop.permute.xlu0 %586
    %589 = vset.pattern.permute.xlu0 1
    %590 = vperm.xlu0 %589, %v294
    %v591 = vpop.permute.xlu0 %590
    %593 = vset.pattern.permute.xlu0 1
    %594 = vperm.xlu0 %593, %v295
    %v595 = vpop.permute.xlu0 %594
    %597 = vset.pattern.permute.xlu0 1
    %598 = vperm.xlu0 %597, %v296
    %v599 = vpop.permute.xlu0 %598
    %601 = vset.pattern.permute.xlu0 1
    %602 = vperm.xlu0 %601, %v297
    %v603 = vpop.permute.xlu0 %602
    %605 = vset.pattern.permute.xlu0 1
    %606 = vperm.xlu0 %605, %v298
    %v607 = vpop.permute.xlu0 %606
    %609 = vset.pattern.permute.xlu0 1
    %610 = vperm.xlu0 %609, %v299
    %v611 = vpop.permute.xlu0 %610
    %613 = vset.pattern.permute.xlu0 1
    %614 = vperm.xlu0 %613, %v300
    %v615 = vpop.permute.xlu0 %614
    %617 = vset.pattern.permute.xlu0 1
    %618 = vperm.xlu0 %617, %v301
    %v619 = vpop.permute.xlu0 %618
    %621 = vset.pattern.permute.xlu0 1
    %622 = vperm.xlu0 %621, %v302
    %v623 = vpop.permute.xlu0 %622
    %625 = vset.pattern.permute.xlu0 1
    %626 = vperm.xlu0 %625, %v303
    %v627 = vpop.permute.xlu0 %626
    %v629 = vlaneseq
    %v630 = vshrl.u32 %v629, 7
    %v631 = vsub.s32 1, %v630
    %v632 = vrot.slane %v304, %v631
    %v633 = vmul.f32 %v503, %v632
    %v634 = vmul.f32 %v507, %v632
    %v635 = vmul.f32 %v511, %v632
    %v636 = vmul.f32 %v515, %v632
    %v637 = vmul.f32 %v519, %v632
    %v638 = vmul.f32 %v523, %v632
    %v639 = vmul.f32 %v527, %v632
    %v640 = vmul.f32 %v531, %v632
    %v641 = vmul.f32 %v535, %v632
    %v642 = vmul.f32 %v539, %v632
    %v643 = vmul.f32 %v543, %v632
    %v644 = vmul.f32 %v547, %v632
    %v645 = vmul.f32 %v551, %v632
    %v646 = vmul.f32 %v555, %v632
    %v647 = vmul.f32 %v559, %v632
    %v648 = vmul.f32 %v563, %v632
    %v649 = vmul.f32 %v567, %v632
    %v650 = vmul.f32 %v571, %v632
    %v651 = vmul.f32 %v575, %v632
    %v652 = vmul.f32 %v579, %v632
    %v653 = vmul.f32 %v583, %v632
    %v654 = vmul.f32 %v587, %v632
    %v655 = vmul.f32 %v591, %v632
    %v656 = vmul.f32 %v595, %v632
    %v657 = vmul.f32 %v599, %v632
    %v658 = vmul.f32 %v603, %v632
    %v659 = vmul.f32 %v607, %v632
    %v660 = vmul.f32 %v611, %v632
    %v661 = vmul.f32 %v615, %v632
    %v662 = vmul.f32 %v619, %v632
    %v663 = vmul.f32 %v623, %v632
    %v664 = vmul.f32 %v627, %v632
    %v665 = vadd.f32 %v469, %v633
    %v666 = vadd.f32 %v470, %v634
    %v667 = vadd.f32 %v471, %v635
    %v668 = vadd.f32 %v472, %v636
    %v669 = vadd.f32 %v473, %v637
    %v670 = vadd.f32 %v474, %v638
    %v671 = vadd.f32 %v475, %v639
    %v672 = vadd.f32 %v476, %v640
    %v673 = vadd.f32 %v477, %v641
    %v674 = vadd.f32 %v478, %v642
    %v675 = vadd.f32 %v479, %v643
    %v676 = vadd.f32 %v480, %v644
    %v677 = vadd.f32 %v481, %v645
    %v678 = vadd.f32 %v482, %v646
    %v679 = vadd.f32 %v483, %v647
    %v680 = vadd.f32 %v484, %v648
    %v681 = vadd.f32 %v485, %v649
    %v682 = vadd.f32 %v486, %v650
    %v683 = vadd.f32 %v487, %v651
    %v684 = vadd.f32 %v488, %v652
    %v685 = vadd.f32 %v489, %v653
    %v686 = vadd.f32 %v490, %v654
    %v687 = vadd.f32 %v491, %v655
    %v688 = vadd.f32 %v492, %v656
    %v689 = vadd.f32 %v493, %v657
    %v690 = vadd.f32 %v494, %v658
    %v691 = vadd.f32 %v495, %v659
    %v692 = vadd.f32 %v496, %v660
    %v693 = vadd.f32 %v497, %v661
    %v694 = vadd.f32 %v498, %v662
    %v695 = vadd.f32 %v499, %v663
    %v696 = vadd.f32 %v500, %v664
    %697 = vset.pattern.permute.xlu0 2
    %698 = vperm.xlu0 %697, %v272
    %v699 = vpop.permute.xlu0 %698
    %701 = vset.pattern.permute.xlu0 2
    %702 = vperm.xlu0 %701, %v273
    %v703 = vpop.permute.xlu0 %702
    %705 = vset.pattern.permute.xlu0 2
    %706 = vperm.xlu0 %705, %v274
    %v707 = vpop.permute.xlu0 %706
    %709 = vset.pattern.permute.xlu0 2
    %710 = vperm.xlu0 %709, %v275
    %v711 = vpop.permute.xlu0 %710
    %713 = vset.pattern.permute.xlu0 2
    %714 = vperm.xlu0 %713, %v276
    %v715 = vpop.permute.xlu0 %714
    %717 = vset.pattern.permute.xlu0 2
    %718 = vperm.xlu0 %717, %v277
    %v719 = vpop.permute.xlu0 %718
    %721 = vset.pattern.permute.xlu0 2
    %722 = vperm.xlu0 %721, %v278
    %v723 = vpop.permute.xlu0 %722
    %725 = vset.pattern.permute.xlu0 2
    %726 = vperm.xlu0 %725, %v279
    %v727 = vpop.permute.xlu0 %726
    %729 = vset.pattern.permute.xlu0 2
    %730 = vperm.xlu0 %729, %v280
    %v731 = vpop.permute.xlu0 %730
    %733 = vset.pattern.permute.xlu0 2
    %734 = vperm.xlu0 %733, %v281
    %v735 = vpop.permute.xlu0 %734
    %737 = vset.pattern.permute.xlu0 2
    %738 = vperm.xlu0 %737, %v282
    %v739 = vpop.permute.xlu0 %738
    %741 = vset.pattern.permute.xlu0 2
    %742 = vperm.xlu0 %741, %v283
    %v743 = vpop.permute.xlu0 %742
    %745 = vset.pattern.permute.xlu0 2
    %746 = vperm.xlu0 %745, %v284
    %v747 = vpop.permute.xlu0 %746
    %749 = vset.pattern.permute.xlu0 2
    %750 = vperm.xlu0 %749, %v285
    %v751 = vpop.permute.xlu0 %750
    %753 = vset.pattern.permute.xlu0 2
    %754 = vperm.xlu0 %753, %v286
    %v755 = vpop.permute.xlu0 %754
    %757 = vset.pattern.permute.xlu0 2
    %758 = vperm.xlu0 %757, %v287
    %v759 = vpop.permute.xlu0 %758
    %761 = vset.pattern.permute.xlu0 2
    %762 = vperm.xlu0 %761, %v288
    %v763 = vpop.permute.xlu0 %762
    %765 = vset.pattern.permute.xlu0 2
    %766 = vperm.xlu0 %765, %v289
    %v767 = vpop.permute.xlu0 %766
    %769 = vset.pattern.permute.xlu0 2
    %770 = vperm.xlu0 %769, %v290
    %v771 = vpop.permute.xlu0 %770
    %773 = vset.pattern.permute.xlu0 2
    %774 = vperm.xlu0 %773, %v291
    %v775 = vpop.permute.xlu0 %774
    %777 = vset.pattern.permute.xlu0 2
    %778 = vperm.xlu0 %777, %v292
    %v779 = vpop.permute.xlu0 %778
    %781 = vset.pattern.permute.xlu0 2
    %782 = vperm.xlu0 %781, %v293
    %v783 = vpop.permute.xlu0 %782
    %785 = vset.pattern.permute.xlu0 2
    %786 = vperm.xlu0 %785, %v294
    %v787 = vpop.permute.xlu0 %786
    %789 = vset.pattern.permute.xlu0 2
    %790 = vperm.xlu0 %789, %v295
    %v791 = vpop.permute.xlu0 %790
    %793 = vset.pattern.permute.xlu0 2
    %794 = vperm.xlu0 %793, %v296
    %v795 = vpop.permute.xlu0 %794
    %797 = vset.pattern.permute.xlu0 2
    %798 = vperm.xlu0 %797, %v297
    %v799 = vpop.permute.xlu0 %798
    %801 = vset.pattern.permute.xlu0 2
    %802 = vperm.xlu0 %801, %v298
    %v803 = vpop.permute.xlu0 %802
    %805 = vset.pattern.permute.xlu0 2
    %806 = vperm.xlu0 %805, %v299
    %v807 = vpop.permute.xlu0 %806
    %809 = vset.pattern.permute.xlu0 2
    %810 = vperm.xlu0 %809, %v300
    %v811 = vpop.permute.xlu0 %810
    %813 = vset.pattern.permute.xlu0 2
    %814 = vperm.xlu0 %813, %v301
    %v815 = vpop.permute.xlu0 %814
    %817 = vset.pattern.permute.xlu0 2
    %818 = vperm.xlu0 %817, %v302
    %v819 = vpop.permute.xlu0 %818
    %821 = vset.pattern.permute.xlu0 2
    %822 = vperm.xlu0 %821, %v303
    %v823 = vpop.permute.xlu0 %822
    %v825 = vlaneseq
    %v826 = vshrl.u32 %v825, 7
    %v827 = vsub.s32 2, %v826
    %v828 = vrot.slane %v304, %v827
    %v829 = vmul.f32 %v699, %v828
    %v830 = vmul.f32 %v703, %v828
    %v831 = vmul.f32 %v707, %v828
    %v832 = vmul.f32 %v711, %v828
    %v833 = vmul.f32 %v715, %v828
    %v834 = vmul.f32 %v719, %v828
    %v835 = vmul.f32 %v723, %v828
    %v836 = vmul.f32 %v727, %v828
    %v837 = vmul.f32 %v731, %v828
    %v838 = vmul.f32 %v735, %v828
    %v839 = vmul.f32 %v739, %v828
    %v840 = vmul.f32 %v743, %v828
    %v841 = vmul.f32 %v747, %v828
    %v842 = vmul.f32 %v751, %v828
    %v843 = vmul.f32 %v755, %v828
    %v844 = vmul.f32 %v759, %v828
    %v845 = vmul.f32 %v763, %v828
    %v846 = vmul.f32 %v767, %v828
    %v847 = vmul.f32 %v771, %v828
    %v848 = vmul.f32 %v775, %v828
    %v849 = vmul.f32 %v779, %v828
    %v850 = vmul.f32 %v783, %v828
    %v851 = vmul.f32 %v787, %v828
    %v852 = vmul.f32 %v791, %v828
    %v853 = vmul.f32 %v795, %v828
    %v854 = vmul.f32 %v799, %v828
    %v855 = vmul.f32 %v803, %v828
    %v856 = vmul.f32 %v807, %v828
    %v857 = vmul.f32 %v811, %v828
    %v858 = vmul.f32 %v815, %v828
    %v859 = vmul.f32 %v819, %v828
    %v860 = vmul.f32 %v823, %v828
    %v861 = vadd.f32 %v665, %v829
    %v862 = vadd.f32 %v666, %v830
    %v863 = vadd.f32 %v667, %v831
    %v864 = vadd.f32 %v668, %v832
    %v865 = vadd.f32 %v669, %v833
    %v866 = vadd.f32 %v670, %v834
    %v867 = vadd.f32 %v671, %v835
    %v868 = vadd.f32 %v672, %v836
    %v869 = vadd.f32 %v673, %v837
    %v870 = vadd.f32 %v674, %v838
    %v871 = vadd.f32 %v675, %v839
    %v872 = vadd.f32 %v676, %v840
    %v873 = vadd.f32 %v677, %v841
    %v874 = vadd.f32 %v678, %v842
    %v875 = vadd.f32 %v679, %v843
    %v876 = vadd.f32 %v680, %v844
    %v877 = vadd.f32 %v681, %v845
    %v878 = vadd.f32 %v682, %v846
    %v879 = vadd.f32 %v683, %v847
    %v880 = vadd.f32 %v684, %v848
    %v881 = vadd.f32 %v685, %v849
    %v882 = vadd.f32 %v686, %v850
    %v883 = vadd.f32 %v687, %v851
    %v884 = vadd.f32 %v688, %v852
    %v885 = vadd.f32 %v689, %v853
    %v886 = vadd.f32 %v690, %v854
    %v887 = vadd.f32 %v691, %v855
    %v888 = vadd.f32 %v692, %v856
    %v889 = vadd.f32 %v693, %v857
    %v890 = vadd.f32 %v694, %v858
    %v891 = vadd.f32 %v695, %v859
    %v892 = vadd.f32 %v696, %v860
    %v893 = vld [vmem:[%s2] sm:$0x1]
    %v895 = vlaneseq
    %v896 = vshrl.u32 %v895, 7
    %v897 = vsub.s32 0, %v896
    %v898 = vrot.slane %v893, %v897
    %v900 = vadd.f32 %v861, %v898
    %v901 = vadd.f32 %v862, %v898
    %v902 = vadd.f32 %v863, %v898
    %v903 = vadd.f32 %v864, %v898
    %v904 = vadd.f32 %v865, %v898
    %v905 = vadd.f32 %v866, %v898
    %v906 = vadd.f32 %v867, %v898
    %v907 = vadd.f32 %v868, %v898
    %v908 = vadd.f32 %v869, %v898
    %v909 = vadd.f32 %v870, %v898
    %v910 = vadd.f32 %v871, %v898
    %v911 = vadd.f32 %v872, %v898
    %v912 = vadd.f32 %v873, %v898
    %v913 = vadd.f32 %v874, %v898
    %v914 = vadd.f32 %v875, %v898
    %v915 = vadd.f32 %v876, %v898
    %v916 = vadd.f32 %v877, %v898
    %v917 = vadd.f32 %v878, %v898
    %v918 = vadd.f32 %v879, %v898
    %v919 = vadd.f32 %v880, %v898
    %v920 = vadd.f32 %v881, %v898
    %v921 = vadd.f32 %v882, %v898
    %v922 = vadd.f32 %v883, %v898
    %v923 = vadd.f32 %v884, %v898
    %v924 = vadd.f32 %v885, %v898
    %v925 = vadd.f32 %v886, %v898
    %v926 = vadd.f32 %v887, %v898
    %v927 = vadd.f32 %v888, %v898
    %v928 = vadd.f32 %v889, %v898
    %v929 = vadd.f32 %v890, %v898
    %v930 = vadd.f32 %v891, %v898
    %v931 = vadd.f32 %v892, %v898
    %v932 = vmax.f32 %v900, 0.0
    %v933 = vmax.f32 %v901, 0.0
    %v934 = vmax.f32 %v902, 0.0
    %v935 = vmax.f32 %v903, 0.0
    %v936 = vmax.f32 %v904, 0.0
    %v937 = vmax.f32 %v905, 0.0
    %v938 = vmax.f32 %v906, 0.0
    %v939 = vmax.f32 %v907, 0.0
    %v940 = vmax.f32 %v908, 0.0
    %v941 = vmax.f32 %v909, 0.0
    %v942 = vmax.f32 %v910, 0.0
    %v943 = vmax.f32 %v911, 0.0
    %v944 = vmax.f32 %v912, 0.0
    %v945 = vmax.f32 %v913, 0.0
    %v946 = vmax.f32 %v914, 0.0
    %v947 = vmax.f32 %v915, 0.0
    %v948 = vmax.f32 %v916, 0.0
    %v949 = vmax.f32 %v917, 0.0
    %v950 = vmax.f32 %v918, 0.0
    %v951 = vmax.f32 %v919, 0.0
    %v952 = vmax.f32 %v920, 0.0
    %v953 = vmax.f32 %v921, 0.0
    %v954 = vmax.f32 %v922, 0.0
    %v955 = vmax.f32 %v923, 0.0
    %v956 = vmax.f32 %v924, 0.0
    %v957 = vmax.f32 %v925, 0.0
    %v958 = vmax.f32 %v926, 0.0
    %v959 = vmax.f32 %v927, 0.0
    %v960 = vmax.f32 %v928, 0.0
    %v961 = vmax.f32 %v929, 0.0
    %v962 = vmax.f32 %v930, 0.0
    %v963 = vmax.f32 %v931, 0.0
    %v964 = vpack.c.bf16 %v933, %v932
    %v965 = vpack.c.bf16 %v935, %v934
    %v966 = vpack.c.bf16 %v937, %v936
    %v967 = vpack.c.bf16 %v939, %v938
    %v968 = vpack.c.bf16 %v941, %v940
    %v969 = vpack.c.bf16 %v943, %v942
    %v970 = vpack.c.bf16 %v945, %v944
    %v971 = vpack.c.bf16 %v947, %v946
    %v972 = vpack.c.bf16 %v949, %v948
    %v973 = vpack.c.bf16 %v951, %v950
    %v974 = vpack.c.bf16 %v953, %v952
    %v975 = vpack.c.bf16 %v955, %v954
    %v976 = vpack.c.bf16 %v957, %v956
    %v977 = vpack.c.bf16 %v959, %v958
    %v978 = vpack.c.bf16 %v961, %v960
    %v979 = vpack.c.bf16 %v963, %v962
    %v980 = vld [vmem:[%s3] sm:$0xf]
    %v981 = vld [vmem:[%s3 + $0x4] sm:$0xf]
    %v982 = vld [vmem:[%s3 + $0x8] sm:$0xf]
    %v983 = vld [vmem:[%s3 + $0xc] sm:$0xf]
    %v984 = vld [vmem:[%s3 + $0x10] sm:$0xf]
    %v985 = vld [vmem:[%s3 + $0x14] sm:$0xf]
    %v986 = vld [vmem:[%s3 + $0x18] sm:$0xf]
    %v987 = vld [vmem:[%s3 + $0x1c] sm:$0xf]
    %v988 = vld [vmem:[%s4] sm:$0x1]
    %v990 = vlaneseq
    %v991 = vshrl.u32 %v990, 7
    %v992 = vsub.s32 0, %v991
    %v993 = vrot.slane %v988, %v992
    %v1003 = vunpack.c.l.b16 %v980
    %v1004 = vunpack.c.l.b16 %v981
    %v1005 = vunpack.c.l.b16 %v982
    %v1006 = vunpack.c.l.b16 %v983
    %v1007 = vunpack.c.l.b16 %v984
    %v1008 = vunpack.c.l.b16 %v985
    %v1009 = vunpack.c.l.b16 %v986
    %v1010 = vunpack.c.l.b16 %v987
    %v1011 = vpack.c.b16 %v1004, %v1003
    %v1012 = vpack.c.b16 %v1006, %v1005
    %v1013 = vpack.c.b16 %v1008, %v1007
    %v1014 = vpack.c.b16 %v1010, %v1009
    %vm1019 = vcmask 523264
    %v1021 = vsel %vm1019, %v964, 0
    %v1024 = vsel %vm1019, %v965, 0
    %v1027 = vsel %vm1019, %v966, 0
    %v1030 = vsel %vm1019, %v967, 0
    %v1033 = vsel %vm1019, %v968, 0
    %v1036 = vsel %vm1019, %v969, 0
    %v1039 = vsel %vm1019, %v970, 0
    %v1042 = vsel %vm1019, %v971, 0
    %v1045 = vsel %vm1019, %v972, 0
    %v1048 = vsel %vm1019, %v973, 0
    %v1051 = vsel %vm1019, %v974, 0
    %v1054 = vsel %vm1019, %v975, 0
    %v1057 = vsel %vm1019, %v976, 0
    %v1060 = vsel %vm1019, %v977, 0
    %v1063 = vsel %vm1019, %v978, 0
    %v1066 = vsel %vm1019, %v979, 0
    %1068 = vmatprep.subr.bf16.mxu0 0
    %1069 = vmatpush1.bf16.msra.mxu0 0
    %1070 = vmatprep.subr.bf16.mxu0 0
    %1071 = vmatpush1.bf16.msra.mxu0 0
    %1072 = vmatprep.subr.bf16.mxu0 0
    %1073 = vmatpush1.bf16.msra.mxu0 0
    %1074 = vmatprep.subr.bf16.mxu0 0
    %1075 = vmatpush1.bf16.msra.mxu0 0
    %1076 = vmatprep.subr.bf16.mxu0 0
    %1077 = vmatpush1.bf16.msra.mxu0 %v1014
    %1078 = vmatprep.subr.bf16.mxu0 0
    %1079 = vmatpush1.bf16.msra.mxu0 %v1013
    %1080 = vmatprep.subr.bf16.mxu0 0
    %1081 = vmatpush1.bf16.msra.mxu0 %v1012
    %1082 = vmatprep.subr.bf16.mxu0 0
    %1083 = vmatpush1.bf16.msra.mxu0 %v1011
    %1084 = vmatprep.subr.bf16.mxu0 0
    %1085 = vmatpush2.bf16.msra.mxu0 0
    %1086 = vmatprep.subr.bf16.mxu0 0
    %1087 = vmatpush2.bf16.msra.mxu0 0
    %1088 = vmatprep.subr.bf16.mxu0 0
    %1089 = vmatpush2.bf16.msra.mxu0 0
    %1090 = vmatprep.subr.bf16.mxu0 0
    %1091 = vmatpush2.bf16.msra.mxu0 0
    %1092 = vmatprep.subr.bf16.mxu0 0
    %1093 = vmatpush2.bf16.msra.mxu0 0
    %1094 = vmatprep.subr.bf16.mxu0 0
    %1095 = vmatpush2.bf16.msra.mxu0 0
    %1096 = vmatprep.subr.bf16.mxu0 0
    %1097 = vmatpush2.bf16.msra.mxu0 0
    %1098 = vmatprep.subr.bf16.mxu0 0
    %1099 = vmatpush2.bf16.msra.mxu0 0
    %1100 = vmatprep.mubr.bf16.mxu0 0
    %1101 = vmatmul.mubr.bf16.gmra.mxu0 %v1021
    %v1102 = vpop.f32.mrf.mxu0
    %v1103 = vadd.f32 %v993, %v1102
    %v1104 = vpop.f32.mrf.mxu0
    %v1105 = vpop.f32.mrf.mxu0
    %v1106 = vadd.f32 %v993, %v1105
    %v1107 = vpop.f32.mrf.mxu0
    %1108 = vmatprep.mubr.bf16.mxu0 0
    %1109 = vmatmul.mubr.bf16.gmra.mxu0 %v1024
    %v1110 = vpop.f32.mrf.mxu0
    %v1111 = vadd.f32 %v993, %v1110
    %v1112 = vpop.f32.mrf.mxu0
    %v1113 = vpop.f32.mrf.mxu0
    %v1114 = vadd.f32 %v993, %v1113
    %v1115 = vpop.f32.mrf.mxu0
    %1116 = vmatprep.mubr.bf16.mxu0 0
    %1117 = vmatmul.mubr.bf16.gmra.mxu0 %v1027
    %v1118 = vpop.f32.mrf.mxu0
    %v1119 = vadd.f32 %v993, %v1118
    %v1120 = vpop.f32.mrf.mxu0
    %v1121 = vpop.f32.mrf.mxu0
    %v1122 = vadd.f32 %v993, %v1121
    %v1123 = vpop.f32.mrf.mxu0
    %1124 = vmatprep.mubr.bf16.mxu0 0
    %1125 = vmatmul.mubr.bf16.gmra.mxu0 %v1030
    %v1126 = vpop.f32.mrf.mxu0
    %v1127 = vadd.f32 %v993, %v1126
    %v1128 = vpop.f32.mrf.mxu0
    %v1129 = vpop.f32.mrf.mxu0
    %v1130 = vadd.f32 %v993, %v1129
    %v1131 = vpop.f32.mrf.mxu0
    %1132 = vmatprep.mubr.bf16.mxu0 0
    %1133 = vmatmul.mubr.bf16.gmra.mxu0 %v1033
    %v1134 = vpop.f32.mrf.mxu0
    %v1135 = vadd.f32 %v993, %v1134
    %v1136 = vpop.f32.mrf.mxu0
    %v1137 = vpop.f32.mrf.mxu0
    %v1138 = vadd.f32 %v993, %v1137
    %v1139 = vpop.f32.mrf.mxu0
    %1140 = vmatprep.mubr.bf16.mxu0 0
    %1141 = vmatmul.mubr.bf16.gmra.mxu0 %v1036
    %v1142 = vpop.f32.mrf.mxu0
    %v1143 = vadd.f32 %v993, %v1142
    %v1144 = vpop.f32.mrf.mxu0
    %v1145 = vpop.f32.mrf.mxu0
    %v1146 = vadd.f32 %v993, %v1145
    %v1147 = vpop.f32.mrf.mxu0
    %1148 = vmatprep.mubr.bf16.mxu0 0
    %1149 = vmatmul.mubr.bf16.gmra.mxu0 %v1039
    %v1150 = vpop.f32.mrf.mxu0
    %v1151 = vadd.f32 %v993, %v1150
    %v1152 = vpop.f32.mrf.mxu0
    %v1153 = vpop.f32.mrf.mxu0
    %v1154 = vadd.f32 %v993, %v1153
    %v1155 = vpop.f32.mrf.mxu0
    %1156 = vmatprep.mubr.bf16.mxu0 0
    %1157 = vmatmul.mubr.bf16.gmra.mxu0 %v1042
    %v1158 = vpop.f32.mrf.mxu0
    %v1159 = vadd.f32 %v993, %v1158
    %v1160 = vpop.f32.mrf.mxu0
    %v1161 = vpop.f32.mrf.mxu0
    %v1162 = vadd.f32 %v993, %v1161
    %v1163 = vpop.f32.mrf.mxu0
    %1164 = vmatprep.mubr.bf16.mxu0 0
    %1165 = vmatmul.mubr.bf16.gmra.mxu0 %v1045
    %v1166 = vpop.f32.mrf.mxu0
    %v1167 = vadd.f32 %v993, %v1166
    %v1168 = vpop.f32.mrf.mxu0
    %v1169 = vpop.f32.mrf.mxu0
    %v1170 = vadd.f32 %v993, %v1169
    %v1171 = vpop.f32.mrf.mxu0
    %1172 = vmatprep.mubr.bf16.mxu0 0
    %1173 = vmatmul.mubr.bf16.gmra.mxu0 %v1048
    %v1174 = vpop.f32.mrf.mxu0
    %v1175 = vadd.f32 %v993, %v1174
    %v1176 = vpop.f32.mrf.mxu0
    %v1177 = vpop.f32.mrf.mxu0
    %v1178 = vadd.f32 %v993, %v1177
    %v1179 = vpop.f32.mrf.mxu0
    %1180 = vmatprep.mubr.bf16.mxu0 0
    %1181 = vmatmul.mubr.bf16.gmra.mxu0 %v1051
    %v1182 = vpop.f32.mrf.mxu0
    %v1183 = vadd.f32 %v993, %v1182
    %v1184 = vpop.f32.mrf.mxu0
    %v1185 = vpop.f32.mrf.mxu0
    %v1186 = vadd.f32 %v993, %v1185
    %v1187 = vpop.f32.mrf.mxu0
    %1188 = vmatprep.mubr.bf16.mxu0 0
    %1189 = vmatmul.mubr.bf16.gmra.mxu0 %v1054
    %v1190 = vpop.f32.mrf.mxu0
    %v1191 = vadd.f32 %v993, %v1190
    %v1192 = vpop.f32.mrf.mxu0
    %v1193 = vpop.f32.mrf.mxu0
    %v1194 = vadd.f32 %v993, %v1193
    %v1195 = vpop.f32.mrf.mxu0
    %1196 = vmatprep.mubr.bf16.mxu0 0
    %1197 = vmatmul.mubr.bf16.gmra.mxu0 %v1057
    %v1198 = vpop.f32.mrf.mxu0
    %v1199 = vadd.f32 %v993, %v1198
    %v1200 = vpop.f32.mrf.mxu0
    %v1201 = vpop.f32.mrf.mxu0
    %v1202 = vadd.f32 %v993, %v1201
    %v1203 = vpop.f32.mrf.mxu0
    %1204 = vmatprep.mubr.bf16.mxu0 0
    %1205 = vmatmul.mubr.bf16.gmra.mxu0 %v1060
    %v1206 = vpop.f32.mrf.mxu0
    %v1207 = vadd.f32 %v993, %v1206
    %v1208 = vpop.f32.mrf.mxu0
    %v1209 = vpop.f32.mrf.mxu0
    %v1210 = vadd.f32 %v993, %v1209
    %v1211 = vpop.f32.mrf.mxu0
    %1212 = vmatprep.mubr.bf16.mxu0 0
    %1213 = vmatmul.mubr.bf16.gmra.mxu0 %v1063
    %v1214 = vpop.f32.mrf.mxu0
    %v1215 = vadd.f32 %v993, %v1214
    %v1216 = vpop.f32.mrf.mxu0
    %v1217 = vpop.f32.mrf.mxu0
    %v1218 = vadd.f32 %v993, %v1217
    %v1219 = vpop.f32.mrf.mxu0
    %1220 = vmatprep.mubr.bf16.mxu0 0
    %1221 = vmatmul.mubr.bf16.gmra.mxu0 %v1066
    %v1222 = vpop.f32.mrf.mxu0
    %v1223 = vadd.f32 %v993, %v1222
    %v1224 = vpop.f32.mrf.mxu0
    %v1225 = vpop.f32.mrf.mxu0
    %v1226 = vadd.f32 %v993, %v1225
    %v1227 = vpop.f32.mrf.mxu0
    %1228 = vdwg.mxu0
    %v1229 = vmax.f32 %v1103, 0.0
    %v1230 = vmax.f32 %v1106, 0.0
    %v1231 = vmax.f32 %v1111, 0.0
    %v1232 = vmax.f32 %v1114, 0.0
    %v1233 = vmax.f32 %v1119, 0.0
    %v1234 = vmax.f32 %v1122, 0.0
    %v1235 = vmax.f32 %v1127, 0.0
    %v1236 = vmax.f32 %v1130, 0.0
    %v1237 = vmax.f32 %v1135, 0.0
    %v1238 = vmax.f32 %v1138, 0.0
    %v1239 = vmax.f32 %v1143, 0.0
    %v1240 = vmax.f32 %v1146, 0.0
    %v1241 = vmax.f32 %v1151, 0.0
    %v1242 = vmax.f32 %v1154, 0.0
    %v1243 = vmax.f32 %v1159, 0.0
    %v1244 = vmax.f32 %v1162, 0.0
    %v1245 = vmax.f32 %v1167, 0.0
    %v1246 = vmax.f32 %v1170, 0.0
    %v1247 = vmax.f32 %v1175, 0.0
    %v1248 = vmax.f32 %v1178, 0.0
    %v1249 = vmax.f32 %v1183, 0.0
    %v1250 = vmax.f32 %v1186, 0.0
    %v1251 = vmax.f32 %v1191, 0.0
    %v1252 = vmax.f32 %v1194, 0.0
    %v1253 = vmax.f32 %v1199, 0.0
    %v1254 = vmax.f32 %v1202, 0.0
    %v1255 = vmax.f32 %v1207, 0.0
    %v1256 = vmax.f32 %v1210, 0.0
    %v1257 = vmax.f32 %v1215, 0.0
    %v1258 = vmax.f32 %v1218, 0.0
    %v1259 = vmax.f32 %v1223, 0.0
    %v1260 = vmax.f32 %v1226, 0.0
    %v1261 = vpack.c.bf16 %v1230, %v1229
    %v1262 = vpack.c.bf16 %v1232, %v1231
    %v1263 = vpack.c.bf16 %v1234, %v1233
    %v1264 = vpack.c.bf16 %v1236, %v1235
    %v1265 = vpack.c.bf16 %v1238, %v1237
    %v1266 = vpack.c.bf16 %v1240, %v1239
    %v1267 = vpack.c.bf16 %v1242, %v1241
    %v1268 = vpack.c.bf16 %v1244, %v1243
    %v1269 = vpack.c.bf16 %v1246, %v1245
    %v1270 = vpack.c.bf16 %v1248, %v1247
    %v1271 = vpack.c.bf16 %v1250, %v1249
    %v1272 = vpack.c.bf16 %v1252, %v1251
    %v1273 = vpack.c.bf16 %v1254, %v1253
    %v1274 = vpack.c.bf16 %v1256, %v1255
    %v1275 = vpack.c.bf16 %v1258, %v1257
    %v1276 = vpack.c.bf16 %v1260, %v1259
    %v1277 = vld [vmem:[#allocation9] sm:$0xff]
    %v1278 = vld [vmem:[#allocation9 + $0x8] sm:$0xff]
    %v1279 = vld [vmem:[#allocation9 + $0x10] sm:$0xff]
    %v1280 = vld [vmem:[#allocation9 + $0x18] sm:$0xff]
    %v1281 = vld [vmem:[#allocation9 + $0x20] sm:$0xff]
    %v1282 = vld [vmem:[#allocation9 + $0x28] sm:$0xff]
    %v1283 = vld [vmem:[#allocation9 + $0x30] sm:$0xff]
    %v1284 = vld [vmem:[#allocation9 + $0x38] sm:$0xff]
    %v1285 = vld [vmem:[#allocation9 + $0x40] sm:$0xff]
    %v1286 = vld [vmem:[#allocation9 + $0x48] sm:$0xff]
    %v1287 = vld [vmem:[#allocation9 + $0x50] sm:$0xff]
    %v1288 = vld [vmem:[#allocation9 + $0x58] sm:$0xff]
    %v1289 = vld [vmem:[#allocation9 + $0x60] sm:$0xff]
    %v1290 = vld [vmem:[#allocation9 + $0x68] sm:$0xff]
    %v1291 = vld [vmem:[#allocation9 + $0x70] sm:$0xff]
    %v1292 = vld [vmem:[#allocation9 + $0x78] sm:$0xff]
    %v1293 = vld [vmem:[#allocation9 + $0x80] sm:$0xff]
    %v1294 = vld [vmem:[#allocation9 + $0x88] sm:$0xff]
    %v1295 = vld [vmem:[#allocation9 + $0x90] sm:$0xff]
    %v1296 = vld [vmem:[#allocation9 + $0x98] sm:$0xff]
    %v1297 = vld [vmem:[#allocation9 + $0xa0] sm:$0xff]
    %v1298 = vld [vmem:[#allocation9 + $0xa8] sm:$0xff]
    %v1299 = vld [vmem:[#allocation9 + $0xb0] sm:$0xff]
    %v1300 = vld [vmem:[#allocation9 + $0xb8] sm:$0xff]
    %v1301 = vld [vmem:[#allocation9 + $0xc0] sm:$0xff]
    %v1302 = vld [vmem:[#allocation9 + $0xc8] sm:$0xff]
    %v1303 = vld [vmem:[#allocation9 + $0xd0] sm:$0xff]
    %v1304 = vld [vmem:[#allocation9 + $0xd8] sm:$0xff]
    %v1305 = vld [vmem:[#allocation9 + $0xe0] sm:$0xff]
    %v1306 = vld [vmem:[#allocation9 + $0xe8] sm:$0xff]
    %v1307 = vld [vmem:[#allocation9 + $0xf0] sm:$0xff]
    %v1308 = vld [vmem:[#allocation9 + $0xf8] sm:$0xff]
    %v1309 = vld [vmem:[#allocation9 + $0x100] sm:$0xff]
    %v1310 = vld [vmem:[#allocation9 + $0x108] sm:$0xff]
    %v1311 = vld [vmem:[#allocation9 + $0x110] sm:$0xff]
    %v1312 = vld [vmem:[#allocation9 + $0x118] sm:$0xff]
    %v1313 = vld [vmem:[#allocation9 + $0x120] sm:$0xff]
    %v1314 = vld [vmem:[#allocation9 + $0x128] sm:$0xff]
    %v1315 = vld [vmem:[#allocation9 + $0x130] sm:$0xff]
    %v1316 = vld [vmem:[#allocation9 + $0x138] sm:$0xff]
    %v1317 = vld [vmem:[#allocation9 + $0x140] sm:$0xff]
    %v1318 = vld [vmem:[#allocation9 + $0x148] sm:$0xff]
    %v1319 = vld [vmem:[#allocation9 + $0x150] sm:$0xff]
    %v1320 = vld [vmem:[#allocation9 + $0x158] sm:$0xff]
    %v1321 = vld [vmem:[#allocation9 + $0x160] sm:$0xff]
    %v1322 = vld [vmem:[#allocation9 + $0x168] sm:$0xff]
    %v1323 = vld [vmem:[#allocation9 + $0x170] sm:$0xff]
    %v1324 = vld [vmem:[#allocation9 + $0x178] sm:$0xff]
    %v1325 = vld [vmem:[#allocation9 + $0x180] sm:$0xff]
    %v1326 = vld [vmem:[#allocation9 + $0x188] sm:$0xff]
    %v1327 = vld [vmem:[#allocation9 + $0x190] sm:$0xff]
    %v1328 = vld [vmem:[#allocation9 + $0x198] sm:$0xff]
    %v1329 = vld [vmem:[#allocation9 + $0x1a0] sm:$0xff]
    %v1330 = vld [vmem:[#allocation9 + $0x1a8] sm:$0xff]
    %v1331 = vld [vmem:[#allocation9 + $0x1b0] sm:$0xff]
    %v1332 = vld [vmem:[#allocation9 + $0x1b8] sm:$0xff]
    %v1333 = vld [vmem:[#allocation9 + $0x1c0] sm:$0xff]
    %v1334 = vld [vmem:[#allocation9 + $0x1c8] sm:$0xff]
    %v1335 = vld [vmem:[#allocation9 + $0x1d0] sm:$0xff]
    %v1336 = vld [vmem:[#allocation9 + $0x1d8] sm:$0xff]
    %v1337 = vld [vmem:[#allocation9 + $0x1e0] sm:$0xff]
    %v1338 = vld [vmem:[#allocation9 + $0x1e8] sm:$0xff]
    %v1339 = vld [vmem:[#allocation9 + $0x1f0] sm:$0xff]
    %v1340 = vld [vmem:[#allocation9 + $0x1f8] sm:$0xff]
    %v1341 = vld [vmem:[%s6] sm:$0xff]
    %v1343 = vlaneseq
    %v1344 = vshrl.u32 %v1343, 7
    %v1345 = vsub.s32 0, %v1344
    %v1346 = vrot.slane %v1341, %v1345
    %v1347 = vlaneseq
    %v1348 = vshrl.u32 %v1347, 7
    %v1349 = vsub.s32 1, %v1348
    %v1350 = vrot.slane %v1341, %v1349
    %v1351 = vlaneseq
    %v1352 = vshrl.u32 %v1351, 7
    %v1353 = vsub.s32 2, %v1352
    %v1354 = vrot.slane %v1341, %v1353
    %v1355 = vlaneseq
    %v1356 = vshrl.u32 %v1355, 7
    %v1357 = vsub.s32 3, %v1356
    %v1358 = vrot.slane %v1341, %v1357
    %v1359 = vlaneseq
    %v1360 = vshrl.u32 %v1359, 7
    %v1361 = vsub.s32 4, %v1360
    %v1362 = vrot.slane %v1341, %v1361
    %v1363 = vlaneseq
    %v1364 = vshrl.u32 %v1363, 7
    %v1365 = vsub.s32 5, %v1364
    %v1366 = vrot.slane %v1341, %v1365
    %v1367 = vlaneseq
    %v1368 = vshrl.u32 %v1367, 7
    %v1369 = vsub.s32 6, %v1368
    %v1370 = vrot.slane %v1341, %v1369
    %v1371 = vlaneseq
    %v1372 = vshrl.u32 %v1371, 7
    %v1373 = vsub.s32 7, %v1372
    %v1374 = vrot.slane %v1341, %v1373
    %v1447 = vunpack.c.l.b16 %v1277
    %v1448 = vunpack.c.h.b16 %v1277
    %v1449 = vunpack.c.l.b16 %v1278
    %v1450 = vunpack.c.h.b16 %v1278
    %v1451 = vunpack.c.l.b16 %v1279
    %v1452 = vunpack.c.h.b16 %v1279
    %v1453 = vunpack.c.l.b16 %v1280
    %v1454 = vunpack.c.h.b16 %v1280
    %v1455 = vunpack.c.l.b16 %v1281
    %v1456 = vunpack.c.h.b16 %v1281
    %v1457 = vunpack.c.l.b16 %v1282
    %v1458 = vunpack.c.h.b16 %v1282
    %v1459 = vunpack.c.l.b16 %v1283
    %v1460 = vunpack.c.h.b16 %v1283
    %v1461 = vunpack.c.l.b16 %v1284
    %v1462 = vunpack.c.h.b16 %v1284
    %v1463 = vunpack.c.l.b16 %v1285
    %v1464 = vunpack.c.h.b16 %v1285
    %v1465 = vunpack.c.l.b16 %v1286
    %v1466 = vunpack.c.h.b16 %v1286
    %v1467 = vunpack.c.l.b16 %v1287
    %v1468 = vunpack.c.h.b16 %v1287
    %v1469 = vunpack.c.l.b16 %v1288
    %v1470 = vunpack.c.h.b16 %v1288
    %v1471 = vunpack.c.l.b16 %v1289
    %v1472 = vunpack.c.h.b16 %v1289
    %v1473 = vunpack.c.l.b16 %v1290
    %v1474 = vunpack.c.h.b16 %v1290
    %v1475 = vunpack.c.l.b16 %v1291
    %v1476 = vunpack.c.h.b16 %v1291
    %v1477 = vunpack.c.l.b16 %v1292
    %v1478 = vunpack.c.h.b16 %v1292
    %v1479 = vunpack.c.l.b16 %v1293
    %v1480 = vunpack.c.h.b16 %v1293
    %v1481 = vunpack.c.l.b16 %v1294
    %v1482 = vunpack.c.h.b16 %v1294
    %v1483 = vunpack.c.l.b16 %v1295
    %v1484 = vunpack.c.h.b16 %v1295
    %v1485 = vunpack.c.l.b16 %v1296
    %v1486 = vunpack.c.h.b16 %v1296
    %v1487 = vunpack.c.l.b16 %v1297
    %v1488 = vunpack.c.h.b16 %v1297
    %v1489 = vunpack.c.l.b16 %v1298
    %v1490 = vunpack.c.h.b16 %v1298
    %v1491 = vunpack.c.l.b16 %v1299
    %v1492 = vunpack.c.h.b16 %v1299
    %v1493 = vunpack.c.l.b16 %v1300
    %v1494 = vunpack.c.h.b16 %v1300
    %v1495 = vunpack.c.l.b16 %v1301
    %v1496 = vunpack.c.h.b16 %v1301
    %v1497 = vunpack.c.l.b16 %v1302
    %v1498 = vunpack.c.h.b16 %v1302
    %v1499 = vunpack.c.l.b16 %v1303
    %v1500 = vunpack.c.h.b16 %v1303
    %v1501 = vunpack.c.l.b16 %v1304
    %v1502 = vunpack.c.h.b16 %v1304
    %v1503 = vunpack.c.l.b16 %v1305
    %v1504 = vunpack.c.h.b16 %v1305
    %v1505 = vunpack.c.l.b16 %v1306
    %v1506 = vunpack.c.h.b16 %v1306
    %v1507 = vunpack.c.l.b16 %v1307
    %v1508 = vunpack.c.h.b16 %v1307
    %v1509 = vunpack.c.l.b16 %v1308
    %v1510 = vunpack.c.h.b16 %v1308
    %v1511 = vunpack.c.l.b16 %v1309
    %v1512 = vunpack.c.h.b16 %v1309
    %v1513 = vunpack.c.l.b16 %v1310
    %v1514 = vunpack.c.h.b16 %v1310
    %v1515 = vunpack.c.l.b16 %v1311
    %v1516 = vunpack.c.h.b16 %v1311
    %v1517 = vunpack.c.l.b16 %v1312
    %v1518 = vunpack.c.h.b16 %v1312
    %v1519 = vunpack.c.l.b16 %v1313
    %v1520 = vunpack.c.h.b16 %v1313
    %v1521 = vunpack.c.l.b16 %v1314
    %v1522 = vunpack.c.h.b16 %v1314
    %v1523 = vunpack.c.l.b16 %v1315
    %v1524 = vunpack.c.h.b16 %v1315
    %v1525 = vunpack.c.l.b16 %v1316
    %v1526 = vunpack.c.h.b16 %v1316
    %v1527 = vunpack.c.l.b16 %v1317
    %v1528 = vunpack.c.h.b16 %v1317
    %v1529 = vunpack.c.l.b16 %v1318
    %v1530 = vunpack.c.h.b16 %v1318
    %v1531 = vunpack.c.l.b16 %v1319
    %v1532 = vunpack.c.h.b16 %v1319
    %v1533 = vunpack.c.l.b16 %v1320
    %v1534 = vunpack.c.h.b16 %v1320
    %v1535 = vunpack.c.l.b16 %v1321
    %v1536 = vunpack.c.h.b16 %v1321
    %v1537 = vunpack.c.l.b16 %v1322
    %v1538 = vunpack.c.h.b16 %v1322
    %v1539 = vunpack.c.l.b16 %v1323
    %v1540 = vunpack.c.h.b16 %v1323
    %v1541 = vunpack.c.l.b16 %v1324
    %v1542 = vunpack.c.h.b16 %v1324
    %v1543 = vunpack.c.l.b16 %v1325
    %v1544 = vunpack.c.h.b16 %v1325
    %v1545 = vunpack.c.l.b16 %v1326
    %v1546 = vunpack.c.h.b16 %v1326
    %v1547 = vunpack.c.l.b16 %v1327
    %v1548 = vunpack.c.h.b16 %v1327
    %v1549 = vunpack.c.l.b16 %v1328
    %v1550 = vunpack.c.h.b16 %v1328
    %v1551 = vunpack.c.l.b16 %v1329
    %v1552 = vunpack.c.h.b16 %v1329
    %v1553 = vunpack.c.l.b16 %v1330
    %v1554 = vunpack.c.h.b16 %v1330
    %v1555 = vunpack.c.l.b16 %v1331
    %v1556 = vunpack.c.h.b16 %v1331
    %v1557 = vunpack.c.l.b16 %v1332
    %v1558 = vunpack.c.h.b16 %v1332
    %v1559 = vunpack.c.l.b16 %v1333
    %v1560 = vunpack.c.h.b16 %v1333
    %v1561 = vunpack.c.l.b16 %v1334
    %v1562 = vunpack.c.h.b16 %v1334
    %v1563 = vunpack.c.l.b16 %v1335
    %v1564 = vunpack.c.h.b16 %v1335
    %v1565 = vunpack.c.l.b16 %v1336
    %v1566 = vunpack.c.h.b16 %v1336
    %v1567 = vunpack.c.l.b16 %v1337
    %v1568 = vunpack.c.h.b16 %v1337
    %v1569 = vunpack.c.l.b16 %v1338
    %v1570 = vunpack.c.h.b16 %v1338
    %v1571 = vunpack.c.l.b16 %v1339
    %v1572 = vunpack.c.h.b16 %v1339
    %v1573 = vunpack.c.l.b16 %v1340
    %v1574 = vunpack.c.h.b16 %v1340
    %v1575 = vpack.c.b16 %v1455, %v1447
    %v1576 = vpack.c.b16 %v1456, %v1448
    %v1577 = vpack.c.b16 %v1457, %v1449
    %v1578 = vpack.c.b16 %v1458, %v1450
    %v1579 = vpack.c.b16 %v1459, %v1451
    %v1580 = vpack.c.b16 %v1460, %v1452
    %v1581 = vpack.c.b16 %v1461, %v1453
    %v1582 = vpack.c.b16 %v1462, %v1454
    %v1583 = vpack.c.b16 %v1471, %v1463
    %v1584 = vpack.c.b16 %v1472, %v1464
    %v1585 = vpack.c.b16 %v1473, %v1465
    %v1586 = vpack.c.b16 %v1474, %v1466
    %v1587 = vpack.c.b16 %v1475, %v1467
    %v1588 = vpack.c.b16 %v1476, %v1468
    %v1589 = vpack.c.b16 %v1477, %v1469
    %v1590 = vpack.c.b16 %v1478, %v1470
    %v1591 = vpack.c.b16 %v1487, %v1479
    %v1592 = vpack.c.b16 %v1488, %v1480
    %v1593 = vpack.c.b16 %v1489, %v1481
    %v1594 = vpack.c.b16 %v1490, %v1482
    %v1595 = vpack.c.b16 %v1491, %v1483
    %v1596 = vpack.c.b16 %v1492, %v1484
    %v1597 = vpack.c.b16 %v1493, %v1485
    %v1598 = vpack.c.b16 %v1494, %v1486
    %v1599 = vpack.c.b16 %v1503, %v1495
    %v1600 = vpack.c.b16 %v1504, %v1496
    %v1601 = vpack.c.b16 %v1505, %v1497
    %v1602 = vpack.c.b16 %v1506, %v1498
    %v1603 = vpack.c.b16 %v1507, %v1499
    %v1604 = vpack.c.b16 %v1508, %v1500
    %v1605 = vpack.c.b16 %v1509, %v1501
    %v1606 = vpack.c.b16 %v1510, %v1502
    %v1607 = vpack.c.b16 %v1519, %v1511
    %v1608 = vpack.c.b16 %v1520, %v1512
    %v1609 = vpack.c.b16 %v1521, %v1513
    %v1610 = vpack.c.b16 %v1522, %v1514
    %v1611 = vpack.c.b16 %v1523, %v1515
    %v1612 = vpack.c.b16 %v1524, %v1516
    %v1613 = vpack.c.b16 %v1525, %v1517
    %v1614 = vpack.c.b16 %v1526, %v1518
    %v1615 = vpack.c.b16 %v1535, %v1527
    %v1616 = vpack.c.b16 %v1536, %v1528
    %v1617 = vpack.c.b16 %v1537, %v1529
    %v1618 = vpack.c.b16 %v1538, %v1530
    %v1619 = vpack.c.b16 %v1539, %v1531
    %v1620 = vpack.c.b16 %v1540, %v1532
    %v1621 = vpack.c.b16 %v1541, %v1533
    %v1622 = vpack.c.b16 %v1542, %v1534
    %v1623 = vpack.c.b16 %v1551, %v1543
    %v1624 = vpack.c.b16 %v1552, %v1544
    %v1625 = vpack.c.b16 %v1553, %v1545
    %v1626 = vpack.c.b16 %v1554, %v1546
    %v1627 = vpack.c.b16 %v1555, %v1547
    %v1628 = vpack.c.b16 %v1556, %v1548
    %v1629 = vpack.c.b16 %v1557, %v1549
    %v1630 = vpack.c.b16 %v1558, %v1550
    %v1631 = vpack.c.b16 %v1567, %v1559
    %v1632 = vpack.c.b16 %v1568, %v1560
    %v1633 = vpack.c.b16 %v1569, %v1561
    %v1634 = vpack.c.b16 %v1570, %v1562
    %v1635 = vpack.c.b16 %v1571, %v1563
    %v1636 = vpack.c.b16 %v1572, %v1564
    %v1637 = vpack.c.b16 %v1573, %v1565
    %v1638 = vpack.c.b16 %v1574, %v1566
    %1703 = vmatprep.subr.bf16.mxu0 %v1632
    %1704 = vmatpush1.bf16.msra.mxu0 %v1631
    %1705 = vmatprep.subr.bf16.mxu0 %v1624
    %1706 = vmatpush1.bf16.msra.mxu0 %v1623
    %1707 = vmatprep.subr.bf16.mxu0 %v1616
    %1708 = vmatpush1.bf16.msra.mxu0 %v1615
    %1709 = vmatprep.subr.bf16.mxu0 %v1608
    %1710 = vmatpush1.bf16.msra.mxu0 %v1607
    %1711 = vmatprep.subr.bf16.mxu0 %v1600
    %1712 = vmatpush1.bf16.msra.mxu0 %v1599
    %1713 = vmatprep.subr.bf16.mxu0 %v1592
    %1714 = vmatpush1.bf16.msra.mxu0 %v1591
    %1715 = vmatprep.subr.bf16.mxu0 %v1584
    %1716 = vmatpush1.bf16.msra.mxu0 %v1583
    %1717 = vmatprep.subr.bf16.mxu0 %v1576
    %1718 = vmatpush1.bf16.msra.mxu0 %v1575
    %1719 = vmatprep.subr.bf16.mxu0 0
    %1720 = vmatpush2.bf16.msra.mxu0 0
    %1721 = vmatprep.subr.bf16.mxu0 0
    %1722 = vmatpush2.bf16.msra.mxu0 0
    %1723 = vmatprep.subr.bf16.mxu0 0
    %1724 = vmatpush2.bf16.msra.mxu0 0
    %1725 = vmatprep.subr.bf16.mxu0 0
    %1726 = vmatpush2.bf16.msra.mxu0 0
    %1727 = vmatprep.subr.bf16.mxu0 0
    %1728 = vmatpush2.bf16.msra.mxu0 0
    %1729 = vmatprep.subr.bf16.mxu0 0
    %1730 = vmatpush2.bf16.msra.mxu0 0
    %1731 = vmatprep.subr.bf16.mxu0 0
    %1732 = vmatpush2.bf16.msra.mxu0 0
    %1733 = vmatprep.subr.bf16.mxu0 0
    %1734 = vmatpush2.bf16.msra.mxu0 0
    %1735 = vmatprep.mubr.bf16.mxu0 0
    %1736 = vmatmul.mubr.bf16.gmra.mxu0 %v1261
    %v1737 = vpop.f32.mrf.mxu0
    %v1738 = vadd.f32 %v1346, %v1737
    %v1739 = vpop.f32.mrf.mxu0
    %v1740 = vadd.f32 %v1350, %v1739
    %v1741 = vpop.f32.mrf.mxu0
    %v1742 = vadd.f32 %v1346, %v1741
    %v1743 = vpop.f32.mrf.mxu0
    %v1744 = vadd.f32 %v1350, %v1743
    %1745 = vmatprep.mubr.bf16.mxu0 0
    %1746 = vmatmul.mubr.bf16.gmra.mxu0 %v1262
    %v1747 = vpop.f32.mrf.mxu0
    %v1748 = vadd.f32 %v1346, %v1747
    %v1749 = vpop.f32.mrf.mxu0
    %v1750 = vadd.f32 %v1350, %v1749
    %v1751 = vpop.f32.mrf.mxu0
    %v1752 = vadd.f32 %v1346, %v1751
    %v1753 = vpop.f32.mrf.mxu0
    %v1754 = vadd.f32 %v1350, %v1753
    %1755 = vmatprep.mubr.bf16.mxu0 0
    %1756 = vmatmul.mubr.bf16.gmra.mxu0 %v1263
    %v1757 = vpop.f32.mrf.mxu0
    %v1758 = vadd.f32 %v1346, %v1757
    %v1759 = vpop.f32.mrf.mxu0
    %v1760 = vadd.f32 %v1350, %v1759
    %v1761 = vpop.f32.mrf.mxu0
    %v1762 = vadd.f32 %v1346, %v1761
    %v1763 = vpop.f32.mrf.mxu0
    %v1764 = vadd.f32 %v1350, %v1763
    %1765 = vmatprep.mubr.bf16.mxu0 0
    %1766 = vmatmul.mubr.bf16.gmra.mxu0 %v1264
    %v1767 = vpop.f32.mrf.mxu0
    %v1768 = vadd.f32 %v1346, %v1767
    %v1769 = vpop.f32.mrf.mxu0
    %v1770 = vadd.f32 %v1350, %v1769
    %v1771 = vpop.f32.mrf.mxu0
    %v1772 = vadd.f32 %v1346, %v1771
    %v1773 = vpop.f32.mrf.mxu0
    %v1774 = vadd.f32 %v1350, %v1773
    %1775 = vmatprep.mubr.bf16.mxu0 0
    %1776 = vmatmul.mubr.bf16.gmra.mxu0 %v1265
    %v1777 = vpop.f32.mrf.mxu0
    %v1778 = vadd.f32 %v1346, %v1777
    %v1779 = vpop.f32.mrf.mxu0
    %v1780 = vadd.f32 %v1350, %v1779
    %v1781 = vpop.f32.mrf.mxu0
    %v1782 = vadd.f32 %v1346, %v1781
    %v1783 = vpop.f32.mrf.mxu0
    %v1784 = vadd.f32 %v1350, %v1783
    %1785 = vmatprep.mubr.bf16.mxu0 0
    %1786 = vmatmul.mubr.bf16.gmra.mxu0 %v1266
    %v1787 = vpop.f32.mrf.mxu0
    %v1788 = vadd.f32 %v1346, %v1787
    %v1789 = vpop.f32.mrf.mxu0
    %v1790 = vadd.f32 %v1350, %v1789
    %v1791 = vpop.f32.mrf.mxu0
    %v1792 = vadd.f32 %v1346, %v1791
    %v1793 = vpop.f32.mrf.mxu0
    %v1794 = vadd.f32 %v1350, %v1793
    %1795 = vmatprep.mubr.bf16.mxu0 0
    %1796 = vmatmul.mubr.bf16.gmra.mxu0 %v1267
    %v1797 = vpop.f32.mrf.mxu0
    %v1798 = vadd.f32 %v1346, %v1797
    %v1799 = vpop.f32.mrf.mxu0
    %v1800 = vadd.f32 %v1350, %v1799
    %v1801 = vpop.f32.mrf.mxu0
    %v1802 = vadd.f32 %v1346, %v1801
    %v1803 = vpop.f32.mrf.mxu0
    %v1804 = vadd.f32 %v1350, %v1803
    %1805 = vmatprep.mubr.bf16.mxu0 0
    %1806 = vmatmul.mubr.bf16.gmra.mxu0 %v1268
    %v1807 = vpop.f32.mrf.mxu0
    %v1808 = vadd.f32 %v1346, %v1807
    %v1809 = vpop.f32.mrf.mxu0
    %v1810 = vadd.f32 %v1350, %v1809
    %v1811 = vpop.f32.mrf.mxu0
    %v1812 = vadd.f32 %v1346, %v1811
    %v1813 = vpop.f32.mrf.mxu0
    %v1814 = vadd.f32 %v1350, %v1813
    %1815 = vmatprep.mubr.bf16.mxu0 0
    %1816 = vmatmul.mubr.bf16.gmra.mxu0 %v1269
    %v1817 = vpop.f32.mrf.mxu0
    %v1818 = vadd.f32 %v1346, %v1817
    %v1819 = vpop.f32.mrf.mxu0
    %v1820 = vadd.f32 %v1350, %v1819
    %v1821 = vpop.f32.mrf.mxu0
    %v1822 = vadd.f32 %v1346, %v1821
    %v1823 = vpop.f32.mrf.mxu0
    %v1824 = vadd.f32 %v1350, %v1823
    %1825 = vmatprep.mubr.bf16.mxu0 0
    %1826 = vmatmul.mubr.bf16.gmra.mxu0 %v1270
    %v1827 = vpop.f32.mrf.mxu0
    %v1828 = vadd.f32 %v1346, %v1827
    %v1829 = vpop.f32.mrf.mxu0
    %v1830 = vadd.f32 %v1350, %v1829
    %v1831 = vpop.f32.mrf.mxu0
    %v1832 = vadd.f32 %v1346, %v1831
    %v1833 = vpop.f32.mrf.mxu0
    %v1834 = vadd.f32 %v1350, %v1833
    %1835 = vmatprep.mubr.bf16.mxu0 0
    %1836 = vmatmul.mubr.bf16.gmra.mxu0 %v1271
    %v1837 = vpop.f32.mrf.mxu0
    %v1838 = vadd.f32 %v1346, %v1837
    %v1839 = vpop.f32.mrf.mxu0
    %v1840 = vadd.f32 %v1350, %v1839
    %v1841 = vpop.f32.mrf.mxu0
    %v1842 = vadd.f32 %v1346, %v1841
    %v1843 = vpop.f32.mrf.mxu0
    %v1844 = vadd.f32 %v1350, %v1843
    %1845 = vmatprep.mubr.bf16.mxu0 0
    %1846 = vmatmul.mubr.bf16.gmra.mxu0 %v1272
    %v1847 = vpop.f32.mrf.mxu0
    %v1848 = vadd.f32 %v1346, %v1847
    %v1849 = vpop.f32.mrf.mxu0
    %v1850 = vadd.f32 %v1350, %v1849
    %v1851 = vpop.f32.mrf.mxu0
    %v1852 = vadd.f32 %v1346, %v1851
    %v1853 = vpop.f32.mrf.mxu0
    %v1854 = vadd.f32 %v1350, %v1853
    %1855 = vmatprep.mubr.bf16.mxu0 0
    %1856 = vmatmul.mubr.bf16.gmra.mxu0 %v1273
    %v1857 = vpop.f32.mrf.mxu0
    %v1858 = vadd.f32 %v1346, %v1857
    %v1859 = vpop.f32.mrf.mxu0
    %v1860 = vadd.f32 %v1350, %v1859
    %v1861 = vpop.f32.mrf.mxu0
    %v1862 = vadd.f32 %v1346, %v1861
    %v1863 = vpop.f32.mrf.mxu0
    %v1864 = vadd.f32 %v1350, %v1863
    %1865 = vmatprep.mubr.bf16.mxu0 0
    %1866 = vmatmul.mubr.bf16.gmra.mxu0 %v1274
    %v1867 = vpop.f32.mrf.mxu0
    %v1868 = vadd.f32 %v1346, %v1867
    %v1869 = vpop.f32.mrf.mxu0
    %v1870 = vadd.f32 %v1350, %v1869
    %v1871 = vpop.f32.mrf.mxu0
    %v1872 = vadd.f32 %v1346, %v1871
    %v1873 = vpop.f32.mrf.mxu0
    %v1874 = vadd.f32 %v1350, %v1873
    %1875 = vmatprep.mubr.bf16.mxu0 0
    %1876 = vmatmul.mubr.bf16.gmra.mxu0 %v1275
    %v1877 = vpop.f32.mrf.mxu0
    %v1878 = vadd.f32 %v1346, %v1877
    %v1879 = vpop.f32.mrf.mxu0
    %v1880 = vadd.f32 %v1350, %v1879
    %v1881 = vpop.f32.mrf.mxu0
    %v1882 = vadd.f32 %v1346, %v1881
    %v1883 = vpop.f32.mrf.mxu0
    %v1884 = vadd.f32 %v1350, %v1883
    %1885 = vmatprep.mubr.bf16.mxu0 0
    %1886 = vmatmul.mubr.bf16.gmra.mxu0 %v1276
    %v1887 = vpop.f32.mrf.mxu0
    %v1888 = vadd.f32 %v1346, %v1887
    %v1889 = vpop.f32.mrf.mxu0
    %v1890 = vadd.f32 %v1350, %v1889
    %v1891 = vpop.f32.mrf.mxu0
    %v1892 = vadd.f32 %v1346, %v1891
    %v1893 = vpop.f32.mrf.mxu0
    %v1894 = vadd.f32 %v1350, %v1893
    %1895 = vdwg.mxu0
    %1896 = vmatprep.subr.bf16.mxu0 %v1634
    %1897 = vmatpush1.bf16.msra.mxu0 %v1633
    %1898 = vmatprep.subr.bf16.mxu0 %v1626
    %1899 = vmatpush1.bf16.msra.mxu0 %v1625
    %1900 = vmatprep.subr.bf16.mxu0 %v1618
    %1901 = vmatpush1.bf16.msra.mxu0 %v1617
    %1902 = vmatprep.subr.bf16.mxu0 %v1610
    %1903 = vmatpush1.bf16.msra.mxu0 %v1609
    %1904 = vmatprep.subr.bf16.mxu0 %v1602
    %1905 = vmatpush1.bf16.msra.mxu0 %v1601
    %1906 = vmatprep.subr.bf16.mxu0 %v1594
    %1907 = vmatpush1.bf16.msra.mxu0 %v1593
    %1908 = vmatprep.subr.bf16.mxu0 %v1586
    %1909 = vmatpush1.bf16.msra.mxu0 %v1585
    %1910 = vmatprep.subr.bf16.mxu0 %v1578
    %1911 = vmatpush1.bf16.msra.mxu0 %v1577
    %1912 = vmatprep.subr.bf16.mxu0 0
    %1913 = vmatpush2.bf16.msra.mxu0 0
    %1914 = vmatprep.subr.bf16.mxu0 0
    %1915 = vmatpush2.bf16.msra.mxu0 0
    %1916 = vmatprep.subr.bf16.mxu0 0
    %1917 = vmatpush2.bf16.msra.mxu0 0
    %1918 = vmatprep.subr.bf16.mxu0 0
    %1919 = vmatpush2.bf16.msra.mxu0 0
    %1920 = vmatprep.subr.bf16.mxu0 0
    %1921 = vmatpush2.bf16.msra.mxu0 0
    %1922 = vmatprep.subr.bf16.mxu0 0
    %1923 = vmatpush2.bf16.msra.mxu0 0
    %1924 = vmatprep.subr.bf16.mxu0 0
    %1925 = vmatpush2.bf16.msra.mxu0 0
    %1926 = vmatprep.subr.bf16.mxu0 0
    %1927 = vmatpush2.bf16.msra.mxu0 0
    %1928 = vmatprep.mubr.bf16.mxu0 0
    %1929 = vmatmul.mubr.bf16.gmra.mxu0 %v1261
    %v1930 = vpop.f32.mrf.mxu0
    %v1931 = vadd.f32 %v1354, %v1930
    %v1932 = vpop.f32.mrf.mxu0
    %v1933 = vadd.f32 %v1358, %v1932
    %v1934 = vpop.f32.mrf.mxu0
    %v1935 = vadd.f32 %v1354, %v1934
    %v1936 = vpop.f32.mrf.mxu0
    %v1937 = vadd.f32 %v1358, %v1936
    %1938 = vmatprep.mubr.bf16.mxu0 0
    %1939 = vmatmul.mubr.bf16.gmra.mxu0 %v1262
    %v1940 = vpop.f32.mrf.mxu0
    %v1941 = vadd.f32 %v1354, %v1940
    %v1942 = vpop.f32.mrf.mxu0
    %v1943 = vadd.f32 %v1358, %v1942
    %v1944 = vpop.f32.mrf.mxu0
    %v1945 = vadd.f32 %v1354, %v1944
    %v1946 = vpop.f32.mrf.mxu0
    %v1947 = vadd.f32 %v1358, %v1946
    %1948 = vmatprep.mubr.bf16.mxu0 0
    %1949 = vmatmul.mubr.bf16.gmra.mxu0 %v1263
    %v1950 = vpop.f32.mrf.mxu0
    %v1951 = vadd.f32 %v1354, %v1950
    %v1952 = vpop.f32.mrf.mxu0
    %v1953 = vadd.f32 %v1358, %v1952
    %v1954 = vpop.f32.mrf.mxu0
    %v1955 = vadd.f32 %v1354, %v1954
    %v1956 = vpop.f32.mrf.mxu0
    %v1957 = vadd.f32 %v1358, %v1956
    %1958 = vmatprep.mubr.bf16.mxu0 0
    %1959 = vmatmul.mubr.bf16.gmra.mxu0 %v1264
    %v1960 = vpop.f32.mrf.mxu0
    %v1961 = vadd.f32 %v1354, %v1960
    %v1962 = vpop.f32.mrf.mxu0
    %v1963 = vadd.f32 %v1358, %v1962
    %v1964 = vpop.f32.mrf.mxu0
    %v1965 = vadd.f32 %v1354, %v1964
    %v1966 = vpop.f32.mrf.mxu0
    %v1967 = vadd.f32 %v1358, %v1966
    %1968 = vmatprep.mubr.bf16.mxu0 0
    %1969 = vmatmul.mubr.bf16.gmra.mxu0 %v1265
    %v1970 = vpop.f32.mrf.mxu0
    %v1971 = vadd.f32 %v1354, %v1970
    %v1972 = vpop.f32.mrf.mxu0
    %v1973 = vadd.f32 %v1358, %v1972
    %v1974 = vpop.f32.mrf.mxu0
    %v1975 = vadd.f32 %v1354, %v1974
    %v1976 = vpop.f32.mrf.mxu0
    %v1977 = vadd.f32 %v1358, %v1976
    %1978 = vmatprep.mubr.bf16.mxu0 0
    %1979 = vmatmul.mubr.bf16.gmra.mxu0 %v1266
    %v1980 = vpop.f32.mrf.mxu0
    %v1981 = vadd.f32 %v1354, %v1980
    %v1982 = vpop.f32.mrf.mxu0
    %v1983 = vadd.f32 %v1358, %v1982
    %v1984 = vpop.f32.mrf.mxu0
    %v1985 = vadd.f32 %v1354, %v1984
    %v1986 = vpop.f32.mrf.mxu0
    %v1987 = vadd.f32 %v1358, %v1986
    %1988 = vmatprep.mubr.bf16.mxu0 0
    %1989 = vmatmul.mubr.bf16.gmra.mxu0 %v1267
    %v1990 = vpop.f32.mrf.mxu0
    %v1991 = vadd.f32 %v1354, %v1990
    %v1992 = vpop.f32.mrf.mxu0
    %v1993 = vadd.f32 %v1358, %v1992
    %v1994 = vpop.f32.mrf.mxu0
    %v1995 = vadd.f32 %v1354, %v1994
    %v1996 = vpop.f32.mrf.mxu0
    %v1997 = vadd.f32 %v1358, %v1996
    %1998 = vmatprep.mubr.bf16.mxu0 0
    %1999 = vmatmul.mubr.bf16.gmra.mxu0 %v1268
    %v2000 = vpop.f32.mrf.mxu0
    %v2001 = vadd.f32 %v1354, %v2000
    %v2002 = vpop.f32.mrf.mxu0
    %v2003 = vadd.f32 %v1358, %v2002
    %v2004 = vpop.f32.mrf.mxu0
    %v2005 = vadd.f32 %v1354, %v2004
    %v2006 = vpop.f32.mrf.mxu0
    %v2007 = vadd.f32 %v1358, %v2006
    %2008 = vmatprep.mubr.bf16.mxu0 0
    %2009 = vmatmul.mubr.bf16.gmra.mxu0 %v1269
    %v2010 = vpop.f32.mrf.mxu0
    %v2011 = vadd.f32 %v1354, %v2010
    %v2012 = vpop.f32.mrf.mxu0
    %v2013 = vadd.f32 %v1358, %v2012
    %v2014 = vpop.f32.mrf.mxu0
    %v2015 = vadd.f32 %v1354, %v2014
    %v2016 = vpop.f32.mrf.mxu0
    %v2017 = vadd.f32 %v1358, %v2016
    %2018 = vmatprep.mubr.bf16.mxu0 0
    %2019 = vmatmul.mubr.bf16.gmra.mxu0 %v1270
    %v2020 = vpop.f32.mrf.mxu0
    %v2021 = vadd.f32 %v1354, %v2020
    %v2022 = vpop.f32.mrf.mxu0
    %v2023 = vadd.f32 %v1358, %v2022
    %v2024 = vpop.f32.mrf.mxu0
    %v2025 = vadd.f32 %v1354, %v2024
    %v2026 = vpop.f32.mrf.mxu0
    %v2027 = vadd.f32 %v1358, %v2026
    %2028 = vmatprep.mubr.bf16.mxu0 0
    %2029 = vmatmul.mubr.bf16.gmra.mxu0 %v1271
    %v2030 = vpop.f32.mrf.mxu0
    %v2031 = vadd.f32 %v1354, %v2030
    %v2032 = vpop.f32.mrf.mxu0
    %v2033 = vadd.f32 %v1358, %v2032
    %v2034 = vpop.f32.mrf.mxu0
    %v2035 = vadd.f32 %v1354, %v2034
    %v2036 = vpop.f32.mrf.mxu0
    %v2037 = vadd.f32 %v1358, %v2036
    %2038 = vmatprep.mubr.bf16.mxu0 0
    %2039 = vmatmul.mubr.bf16.gmra.mxu0 %v1272
    %v2040 = vpop.f32.mrf.mxu0
    %v2041 = vadd.f32 %v1354, %v2040
    %v2042 = vpop.f32.mrf.mxu0
    %v2043 = vadd.f32 %v1358, %v2042
    %v2044 = vpop.f32.mrf.mxu0
    %v2045 = vadd.f32 %v1354, %v2044
    %v2046 = vpop.f32.mrf.mxu0
    %v2047 = vadd.f32 %v1358, %v2046
    %2048 = vmatprep.mubr.bf16.mxu0 0
    %2049 = vmatmul.mubr.bf16.gmra.mxu0 %v1273
    %v2050 = vpop.f32.mrf.mxu0
    %v2051 = vadd.f32 %v1354, %v2050
    %v2052 = vpop.f32.mrf.mxu0
    %v2053 = vadd.f32 %v1358, %v2052
    %v2054 = vpop.f32.mrf.mxu0
    %v2055 = vadd.f32 %v1354, %v2054
    %v2056 = vpop.f32.mrf.mxu0
    %v2057 = vadd.f32 %v1358, %v2056
    %2058 = vmatprep.mubr.bf16.mxu0 0
    %2059 = vmatmul.mubr.bf16.gmra.mxu0 %v1274
    %v2060 = vpop.f32.mrf.mxu0
    %v2061 = vadd.f32 %v1354, %v2060
    %v2062 = vpop.f32.mrf.mxu0
    %v2063 = vadd.f32 %v1358, %v2062
    %v2064 = vpop.f32.mrf.mxu0
    %v2065 = vadd.f32 %v1354, %v2064
    %v2066 = vpop.f32.mrf.mxu0
    %v2067 = vadd.f32 %v1358, %v2066
    %2068 = vmatprep.mubr.bf16.mxu0 0
    %2069 = vmatmul.mubr.bf16.gmra.mxu0 %v1275
    %v2070 = vpop.f32.mrf.mxu0
    %v2071 = vadd.f32 %v1354, %v2070
    %v2072 = vpop.f32.mrf.mxu0
    %v2073 = vadd.f32 %v1358, %v2072
    %v2074 = vpop.f32.mrf.mxu0
    %v2075 = vadd.f32 %v1354, %v2074
    %v2076 = vpop.f32.mrf.mxu0
    %v2077 = vadd.f32 %v1358, %v2076
    %2078 = vmatprep.mubr.bf16.mxu0 0
    %2079 = vmatmul.mubr.bf16.gmra.mxu0 %v1276
    %v2080 = vpop.f32.mrf.mxu0
    %v2081 = vadd.f32 %v1354, %v2080
    %v2082 = vpop.f32.mrf.mxu0
    %v2083 = vadd.f32 %v1358, %v2082
    %v2084 = vpop.f32.mrf.mxu0
    %v2085 = vadd.f32 %v1354, %v2084
    %v2086 = vpop.f32.mrf.mxu0
    %v2087 = vadd.f32 %v1358, %v2086
    %2088 = vdwg.mxu0
    %2089 = vmatprep.subr.bf16.mxu0 %v1636
    %2090 = vmatpush1.bf16.msra.mxu0 %v1635
    %2091 = vmatprep.subr.bf16.mxu0 %v1628
    %2092 = vmatpush1.bf16.msra.mxu0 %v1627
    %2093 = vmatprep.subr.bf16.mxu0 %v1620
    %2094 = vmatpush1.bf16.msra.mxu0 %v1619
    %2095 = vmatprep.subr.bf16.mxu0 %v1612
    %2096 = vmatpush1.bf16.msra.mxu0 %v1611
    %2097 = vmatprep.subr.bf16.mxu0 %v1604
    %2098 = vmatpush1.bf16.msra.mxu0 %v1603
    %2099 = vmatprep.subr.bf16.mxu0 %v1596
    %2100 = vmatpush1.bf16.msra.mxu0 %v1595
    %2101 = vmatprep.subr.bf16.mxu0 %v1588
    %2102 = vmatpush1.bf16.msra.mxu0 %v1587
    %2103 = vmatprep.subr.bf16.mxu0 %v1580
    %2104 = vmatpush1.bf16.msra.mxu0 %v1579
    %2105 = vmatprep.subr.bf16.mxu0 0
    %2106 = vmatpush2.bf16.msra.mxu0 0
    %2107 = vmatprep.subr.bf16.mxu0 0
    %2108 = vmatpush2.bf16.msra.mxu0 0
    %2109 = vmatprep.subr.bf16.mxu0 0
    %2110 = vmatpush2.bf16.msra.mxu0 0
    %2111 = vmatprep.subr.bf16.mxu0 0
    %2112 = vmatpush2.bf16.msra.mxu0 0
    %2113 = vmatprep.subr.bf16.mxu0 0
    %2114 = vmatpush2.bf16.msra.mxu0 0
    %2115 = vmatprep.subr.bf16.mxu0 0
    %2116 = vmatpush2.bf16.msra.mxu0 0
    %2117 = vmatprep.subr.bf16.mxu0 0
    %2118 = vmatpush2.bf16.msra.mxu0 0
    %2119 = vmatprep.subr.bf16.mxu0 0
    %2120 = vmatpush2.bf16.msra.mxu0 0
    %2121 = vmatprep.mubr.bf16.mxu0 0
    %2122 = vmatmul.mubr.bf16.gmra.mxu0 %v1261
    %v2123 = vpop.f32.mrf.mxu0
    %v2124 = vadd.f32 %v1362, %v2123
    %v2125 = vpop.f32.mrf.mxu0
    %v2126 = vadd.f32 %v1366, %v2125
    %v2127 = vpop.f32.mrf.mxu0
    %v2128 = vadd.f32 %v1362, %v2127
    %v2129 = vpop.f32.mrf.mxu0
    %v2130 = vadd.f32 %v1366, %v2129
    %2131 = vmatprep.mubr.bf16.mxu0 0
    %2132 = vmatmul.mubr.bf16.gmra.mxu0 %v1262
    %v2133 = vpop.f32.mrf.mxu0
    %v2134 = vadd.f32 %v1362, %v2133
    %v2135 = vpop.f32.mrf.mxu0
    %v2136 = vadd.f32 %v1366, %v2135
    %v2137 = vpop.f32.mrf.mxu0
    %v2138 = vadd.f32 %v1362, %v2137
    %v2139 = vpop.f32.mrf.mxu0
    %v2140 = vadd.f32 %v1366, %v2139
    %2141 = vmatprep.mubr.bf16.mxu0 0
    %2142 = vmatmul.mubr.bf16.gmra.mxu0 %v1263
    %v2143 = vpop.f32.mrf.mxu0
    %v2144 = vadd.f32 %v1362, %v2143
    %v2145 = vpop.f32.mrf.mxu0
    %v2146 = vadd.f32 %v1366, %v2145
    %v2147 = vpop.f32.mrf.mxu0
    %v2148 = vadd.f32 %v1362, %v2147
    %v2149 = vpop.f32.mrf.mxu0
    %v2150 = vadd.f32 %v1366, %v2149
    %2151 = vmatprep.mubr.bf16.mxu0 0
    %2152 = vmatmul.mubr.bf16.gmra.mxu0 %v1264
    %v2153 = vpop.f32.mrf.mxu0
    %v2154 = vadd.f32 %v1362, %v2153
    %v2155 = vpop.f32.mrf.mxu0
    %v2156 = vadd.f32 %v1366, %v2155
    %v2157 = vpop.f32.mrf.mxu0
    %v2158 = vadd.f32 %v1362, %v2157
    %v2159 = vpop.f32.mrf.mxu0
    %v2160 = vadd.f32 %v1366, %v2159
    %2161 = vmatprep.mubr.bf16.mxu0 0
    %2162 = vmatmul.mubr.bf16.gmra.mxu0 %v1265
    %v2163 = vpop.f32.mrf.mxu0
    %v2164 = vadd.f32 %v1362, %v2163
    %v2165 = vpop.f32.mrf.mxu0
    %v2166 = vadd.f32 %v1366, %v2165
    %v2167 = vpop.f32.mrf.mxu0
    %v2168 = vadd.f32 %v1362, %v2167
    %v2169 = vpop.f32.mrf.mxu0
    %v2170 = vadd.f32 %v1366, %v2169
    %2171 = vmatprep.mubr.bf16.mxu0 0
    %2172 = vmatmul.mubr.bf16.gmra.mxu0 %v1266
    %v2173 = vpop.f32.mrf.mxu0
    %v2174 = vadd.f32 %v1362, %v2173
    %v2175 = vpop.f32.mrf.mxu0
    %v2176 = vadd.f32 %v1366, %v2175
    %v2177 = vpop.f32.mrf.mxu0
    %v2178 = vadd.f32 %v1362, %v2177
    %v2179 = vpop.f32.mrf.mxu0
    %v2180 = vadd.f32 %v1366, %v2179
    %2181 = vmatprep.mubr.bf16.mxu0 0
    %2182 = vmatmul.mubr.bf16.gmra.mxu0 %v1267
    %v2183 = vpop.f32.mrf.mxu0
    %v2184 = vadd.f32 %v1362, %v2183
    %v2185 = vpop.f32.mrf.mxu0
    %v2186 = vadd.f32 %v1366, %v2185
    %v2187 = vpop.f32.mrf.mxu0
    %v2188 = vadd.f32 %v1362, %v2187
    %v2189 = vpop.f32.mrf.mxu0
    %v2190 = vadd.f32 %v1366, %v2189
    %2191 = vmatprep.mubr.bf16.mxu0 0
    %2192 = vmatmul.mubr.bf16.gmra.mxu0 %v1268
    %v2193 = vpop.f32.mrf.mxu0
    %v2194 = vadd.f32 %v1362, %v2193
    %v2195 = vpop.f32.mrf.mxu0
    %v2196 = vadd.f32 %v1366, %v2195
    %v2197 = vpop.f32.mrf.mxu0
    %v2198 = vadd.f32 %v1362, %v2197
    %v2199 = vpop.f32.mrf.mxu0
    %v2200 = vadd.f32 %v1366, %v2199
    %2201 = vmatprep.mubr.bf16.mxu0 0
    %2202 = vmatmul.mubr.bf16.gmra.mxu0 %v1269
    %v2203 = vpop.f32.mrf.mxu0
    %v2204 = vadd.f32 %v1362, %v2203
    %v2205 = vpop.f32.mrf.mxu0
    %v2206 = vadd.f32 %v1366, %v2205
    %v2207 = vpop.f32.mrf.mxu0
    %v2208 = vadd.f32 %v1362, %v2207
    %v2209 = vpop.f32.mrf.mxu0
    %v2210 = vadd.f32 %v1366, %v2209
    %2211 = vmatprep.mubr.bf16.mxu0 0
    %2212 = vmatmul.mubr.bf16.gmra.mxu0 %v1270
    %v2213 = vpop.f32.mrf.mxu0
    %v2214 = vadd.f32 %v1362, %v2213
    %v2215 = vpop.f32.mrf.mxu0
    %v2216 = vadd.f32 %v1366, %v2215
    %v2217 = vpop.f32.mrf.mxu0
    %v2218 = vadd.f32 %v1362, %v2217
    %v2219 = vpop.f32.mrf.mxu0
    %v2220 = vadd.f32 %v1366, %v2219
    %2221 = vmatprep.mubr.bf16.mxu0 0
    %2222 = vmatmul.mubr.bf16.gmra.mxu0 %v1271
    %v2223 = vpop.f32.mrf.mxu0
    %v2224 = vadd.f32 %v1362, %v2223
    %v2225 = vpop.f32.mrf.mxu0
    %v2226 = vadd.f32 %v1366, %v2225
    %v2227 = vpop.f32.mrf.mxu0
    %v2228 = vadd.f32 %v1362, %v2227
    %v2229 = vpop.f32.mrf.mxu0
    %v2230 = vadd.f32 %v1366, %v2229
    %2231 = vmatprep.mubr.bf16.mxu0 0
    %2232 = vmatmul.mubr.bf16.gmra.mxu0 %v1272
    %v2233 = vpop.f32.mrf.mxu0
    %v2234 = vadd.f32 %v1362, %v2233
    %v2235 = vpop.f32.mrf.mxu0
    %v2236 = vadd.f32 %v1366, %v2235
    %v2237 = vpop.f32.mrf.mxu0
    %v2238 = vadd.f32 %v1362, %v2237
    %v2239 = vpop.f32.mrf.mxu0
    %v2240 = vadd.f32 %v1366, %v2239
    %2241 = vmatprep.mubr.bf16.mxu0 0
    %2242 = vmatmul.mubr.bf16.gmra.mxu0 %v1273
    %v2243 = vpop.f32.mrf.mxu0
    %v2244 = vadd.f32 %v1362, %v2243
    %v2245 = vpop.f32.mrf.mxu0
    %v2246 = vadd.f32 %v1366, %v2245
    %v2247 = vpop.f32.mrf.mxu0
    %v2248 = vadd.f32 %v1362, %v2247
    %v2249 = vpop.f32.mrf.mxu0
    %v2250 = vadd.f32 %v1366, %v2249
    %2251 = vmatprep.mubr.bf16.mxu0 0
    %2252 = vmatmul.mubr.bf16.gmra.mxu0 %v1274
    %v2253 = vpop.f32.mrf.mxu0
    %v2254 = vadd.f32 %v1362, %v2253
    %v2255 = vpop.f32.mrf.mxu0
    %v2256 = vadd.f32 %v1366, %v2255
    %v2257 = vpop.f32.mrf.mxu0
    %v2258 = vadd.f32 %v1362, %v2257
    %v2259 = vpop.f32.mrf.mxu0
    %v2260 = vadd.f32 %v1366, %v2259
    %2261 = vmatprep.mubr.bf16.mxu0 0
    %2262 = vmatmul.mubr.bf16.gmra.mxu0 %v1275
    %v2263 = vpop.f32.mrf.mxu0
    %v2264 = vadd.f32 %v1362, %v2263
    %v2265 = vpop.f32.mrf.mxu0
    %v2266 = vadd.f32 %v1366, %v2265
    %v2267 = vpop.f32.mrf.mxu0
    %v2268 = vadd.f32 %v1362, %v2267
    %v2269 = vpop.f32.mrf.mxu0
    %v2270 = vadd.f32 %v1366, %v2269
    %2271 = vmatprep.mubr.bf16.mxu0 0
    %2272 = vmatmul.mubr.bf16.gmra.mxu0 %v1276
    %v2273 = vpop.f32.mrf.mxu0
    %v2274 = vadd.f32 %v1362, %v2273
    %v2275 = vpop.f32.mrf.mxu0
    %v2276 = vadd.f32 %v1366, %v2275
    %v2277 = vpop.f32.mrf.mxu0
    %v2278 = vadd.f32 %v1362, %v2277
    %v2279 = vpop.f32.mrf.mxu0
    %v2280 = vadd.f32 %v1366, %v2279
    %2281 = vdwg.mxu0
    %2282 = vmatprep.subr.bf16.mxu0 %v1638
    %2283 = vmatpush1.bf16.msra.mxu0 %v1637
    %2284 = vmatprep.subr.bf16.mxu0 %v1630
    %2285 = vmatpush1.bf16.msra.mxu0 %v1629
    %2286 = vmatprep.subr.bf16.mxu0 %v1622
    %2287 = vmatpush1.bf16.msra.mxu0 %v1621
    %2288 = vmatprep.subr.bf16.mxu0 %v1614
    %2289 = vmatpush1.bf16.msra.mxu0 %v1613
    %2290 = vmatprep.subr.bf16.mxu0 %v1606
    %2291 = vmatpush1.bf16.msra.mxu0 %v1605
    %2292 = vmatprep.subr.bf16.mxu0 %v1598
    %2293 = vmatpush1.bf16.msra.mxu0 %v1597
    %2294 = vmatprep.subr.bf16.mxu0 %v1590
    %2295 = vmatpush1.bf16.msra.mxu0 %v1589
    %2296 = vmatprep.subr.bf16.mxu0 %v1582
    %2297 = vmatpush1.bf16.msra.mxu0 %v1581
    %2298 = vmatprep.subr.bf16.mxu0 0
    %2299 = vmatpush2.bf16.msra.mxu0 0
    %2300 = vmatprep.subr.bf16.mxu0 0
    %2301 = vmatpush2.bf16.msra.mxu0 0
    %2302 = vmatprep.subr.bf16.mxu0 0
    %2303 = vmatpush2.bf16.msra.mxu0 0
    %2304 = vmatprep.subr.bf16.mxu0 0
    %2305 = vmatpush2.bf16.msra.mxu0 0
    %2306 = vmatprep.subr.bf16.mxu0 0
    %2307 = vmatpush2.bf16.msra.mxu0 0
    %2308 = vmatprep.subr.bf16.mxu0 0
    %2309 = vmatpush2.bf16.msra.mxu0 0
    %2310 = vmatprep.subr.bf16.mxu0 0
    %2311 = vmatpush2.bf16.msra.mxu0 0
    %2312 = vmatprep.subr.bf16.mxu0 0
    %2313 = vmatpush2.bf16.msra.mxu0 0
    %2314 = vmatprep.mubr.bf16.mxu0 0
    %2315 = vmatmul.mubr.bf16.gmra.mxu0 %v1261
    %v2316 = vpop.f32.mrf.mxu0
    %v2317 = vadd.f32 %v1370, %v2316
    %v2318 = vpop.f32.mrf.mxu0
    %v2319 = vadd.f32 %v1374, %v2318
    %v2320 = vpop.f32.mrf.mxu0
    %v2321 = vadd.f32 %v1370, %v2320
    %v2322 = vpop.f32.mrf.mxu0
    %v2323 = vadd.f32 %v1374, %v2322
    %2324 = vmatprep.mubr.bf16.mxu0 0
    %2325 = vmatmul.mubr.bf16.gmra.mxu0 %v1262
    %v2326 = vpop.f32.mrf.mxu0
    %v2327 = vadd.f32 %v1370, %v2326
    %v2328 = vpop.f32.mrf.mxu0
    %v2329 = vadd.f32 %v1374, %v2328
    %v2330 = vpop.f32.mrf.mxu0
    %v2331 = vadd.f32 %v1370, %v2330
    %v2332 = vpop.f32.mrf.mxu0
    %v2333 = vadd.f32 %v1374, %v2332
    %2334 = vmatprep.mubr.bf16.mxu0 0
    %2335 = vmatmul.mubr.bf16.gmra.mxu0 %v1263
    %v2336 = vpop.f32.mrf.mxu0
    %v2337 = vadd.f32 %v1370, %v2336
    %v2338 = vpop.f32.mrf.mxu0
    %v2339 = vadd.f32 %v1374, %v2338
    %v2340 = vpop.f32.mrf.mxu0
    %v2341 = vadd.f32 %v1370, %v2340
    %v2342 = vpop.f32.mrf.mxu0
    %v2343 = vadd.f32 %v1374, %v2342
    %2344 = vmatprep.mubr.bf16.mxu0 0
    %2345 = vmatmul.mubr.bf16.gmra.mxu0 %v1264
    %v2346 = vpop.f32.mrf.mxu0
    %v2347 = vadd.f32 %v1370, %v2346
    %v2348 = vpop.f32.mrf.mxu0
    %v2349 = vadd.f32 %v1374, %v2348
    %v2350 = vpop.f32.mrf.mxu0
    %v2351 = vadd.f32 %v1370, %v2350
    %v2352 = vpop.f32.mrf.mxu0
    %v2353 = vadd.f32 %v1374, %v2352
    %2354 = vmatprep.mubr.bf16.mxu0 0
    %2355 = vmatmul.mubr.bf16.gmra.mxu0 %v1265
    %v2356 = vpop.f32.mrf.mxu0
    %v2357 = vadd.f32 %v1370, %v2356
    %v2358 = vpop.f32.mrf.mxu0
    %v2359 = vadd.f32 %v1374, %v2358
    %v2360 = vpop.f32.mrf.mxu0
    %v2361 = vadd.f32 %v1370, %v2360
    %v2362 = vpop.f32.mrf.mxu0
    %v2363 = vadd.f32 %v1374, %v2362
    %2364 = vmatprep.mubr.bf16.mxu0 0
    %2365 = vmatmul.mubr.bf16.gmra.mxu0 %v1266
    %v2366 = vpop.f32.mrf.mxu0
    %v2367 = vadd.f32 %v1370, %v2366
    %v2368 = vpop.f32.mrf.mxu0
    %v2369 = vadd.f32 %v1374, %v2368
    %v2370 = vpop.f32.mrf.mxu0
    %v2371 = vadd.f32 %v1370, %v2370
    %v2372 = vpop.f32.mrf.mxu0
    %v2373 = vadd.f32 %v1374, %v2372
    %2374 = vmatprep.mubr.bf16.mxu0 0
    %2375 = vmatmul.mubr.bf16.gmra.mxu0 %v1267
    %v2376 = vpop.f32.mrf.mxu0
    %v2377 = vadd.f32 %v1370, %v2376
    %v2378 = vpop.f32.mrf.mxu0
    %v2379 = vadd.f32 %v1374, %v2378
    %v2380 = vpop.f32.mrf.mxu0
    %v2381 = vadd.f32 %v1370, %v2380
    %v2382 = vpop.f32.mrf.mxu0
    %v2383 = vadd.f32 %v1374, %v2382
    %2384 = vmatprep.mubr.bf16.mxu0 0
    %2385 = vmatmul.mubr.bf16.gmra.mxu0 %v1268
    %v2386 = vpop.f32.mrf.mxu0
    %v2387 = vadd.f32 %v1370, %v2386
    %v2388 = vpop.f32.mrf.mxu0
    %v2389 = vadd.f32 %v1374, %v2388
    %v2390 = vpop.f32.mrf.mxu0
    %v2391 = vadd.f32 %v1370, %v2390
    %v2392 = vpop.f32.mrf.mxu0
    %v2393 = vadd.f32 %v1374, %v2392
    %2394 = vmatprep.mubr.bf16.mxu0 0
    %2395 = vmatmul.mubr.bf16.gmra.mxu0 %v1269
    %v2396 = vpop.f32.mrf.mxu0
    %v2397 = vadd.f32 %v1370, %v2396
    %v2398 = vpop.f32.mrf.mxu0
    %v2399 = vadd.f32 %v1374, %v2398
    %v2400 = vpop.f32.mrf.mxu0
    %v2401 = vadd.f32 %v1370, %v2400
    %v2402 = vpop.f32.mrf.mxu0
    %v2403 = vadd.f32 %v1374, %v2402
    %2404 = vmatprep.mubr.bf16.mxu0 0
    %2405 = vmatmul.mubr.bf16.gmra.mxu0 %v1270
    %v2406 = vpop.f32.mrf.mxu0
    %v2407 = vadd.f32 %v1370, %v2406
    %v2408 = vpop.f32.mrf.mxu0
    %v2409 = vadd.f32 %v1374, %v2408
    %v2410 = vpop.f32.mrf.mxu0
    %v2411 = vadd.f32 %v1370, %v2410
    %v2412 = vpop.f32.mrf.mxu0
    %v2413 = vadd.f32 %v1374, %v2412
    %2414 = vmatprep.mubr.bf16.mxu0 0
    %2415 = vmatmul.mubr.bf16.gmra.mxu0 %v1271
    %v2416 = vpop.f32.mrf.mxu0
    %v2417 = vadd.f32 %v1370, %v2416
    %v2418 = vpop.f32.mrf.mxu0
    %v2419 = vadd.f32 %v1374, %v2418
    %v2420 = vpop.f32.mrf.mxu0
    %v2421 = vadd.f32 %v1370, %v2420
    %v2422 = vpop.f32.mrf.mxu0
    %v2423 = vadd.f32 %v1374, %v2422
    %2424 = vmatprep.mubr.bf16.mxu0 0
    %2425 = vmatmul.mubr.bf16.gmra.mxu0 %v1272
    %v2426 = vpop.f32.mrf.mxu0
    %v2427 = vadd.f32 %v1370, %v2426
    %v2428 = vpop.f32.mrf.mxu0
    %v2429 = vadd.f32 %v1374, %v2428
    %v2430 = vpop.f32.mrf.mxu0
    %v2431 = vadd.f32 %v1370, %v2430
    %v2432 = vpop.f32.mrf.mxu0
    %v2433 = vadd.f32 %v1374, %v2432
    %2434 = vmatprep.mubr.bf16.mxu0 0
    %2435 = vmatmul.mubr.bf16.gmra.mxu0 %v1273
    %v2436 = vpop.f32.mrf.mxu0
    %v2437 = vadd.f32 %v1370, %v2436
    %v2438 = vpop.f32.mrf.mxu0
    %v2439 = vadd.f32 %v1374, %v2438
    %v2440 = vpop.f32.mrf.mxu0
    %v2441 = vadd.f32 %v1370, %v2440
    %v2442 = vpop.f32.mrf.mxu0
    %v2443 = vadd.f32 %v1374, %v2442
    %2444 = vmatprep.mubr.bf16.mxu0 0
    %2445 = vmatmul.mubr.bf16.gmra.mxu0 %v1274
    %v2446 = vpop.f32.mrf.mxu0
    %v2447 = vadd.f32 %v1370, %v2446
    %v2448 = vpop.f32.mrf.mxu0
    %v2449 = vadd.f32 %v1374, %v2448
    %v2450 = vpop.f32.mrf.mxu0
    %v2451 = vadd.f32 %v1370, %v2450
    %v2452 = vpop.f32.mrf.mxu0
    %v2453 = vadd.f32 %v1374, %v2452
    %2454 = vmatprep.mubr.bf16.mxu0 0
    %2455 = vmatmul.mubr.bf16.gmra.mxu0 %v1275
    %v2456 = vpop.f32.mrf.mxu0
    %v2457 = vadd.f32 %v1370, %v2456
    %v2458 = vpop.f32.mrf.mxu0
    %v2459 = vadd.f32 %v1374, %v2458
    %v2460 = vpop.f32.mrf.mxu0
    %v2461 = vadd.f32 %v1370, %v2460
    %v2462 = vpop.f32.mrf.mxu0
    %v2463 = vadd.f32 %v1374, %v2462
    %2464 = vmatprep.mubr.bf16.mxu0 0
    %2465 = vmatmul.mubr.bf16.gmra.mxu0 %v1276
    %v2466 = vpop.f32.mrf.mxu0
    %v2467 = vadd.f32 %v1370, %v2466
    %v2468 = vpop.f32.mrf.mxu0
    %v2469 = vadd.f32 %v1374, %v2468
    %v2470 = vpop.f32.mrf.mxu0
    %v2471 = vadd.f32 %v1370, %v2470
    %v2472 = vpop.f32.mrf.mxu0
    %v2473 = vadd.f32 %v1374, %v2472
    %2474 = vdwg.mxu0
    %v2475 = vmax.f32 %v1738, 0.0
    %v2476 = vmax.f32 %v1740, 0.0
    %v2477 = vmax.f32 %v1931, 0.0
    %v2478 = vmax.f32 %v1933, 0.0
    %v2479 = vmax.f32 %v2124, 0.0
    %v2480 = vmax.f32 %v2126, 0.0
    %v2481 = vmax.f32 %v2317, 0.0
    %v2482 = vmax.f32 %v2319, 0.0
    %v2483 = vmax.f32 %v1742, 0.0
    %v2484 = vmax.f32 %v1744, 0.0
    %v2485 = vmax.f32 %v1935, 0.0
    %v2486 = vmax.f32 %v1937, 0.0
    %v2487 = vmax.f32 %v2128, 0.0
    %v2488 = vmax.f32 %v2130, 0.0
    %v2489 = vmax.f32 %v2321, 0.0
    %v2490 = vmax.f32 %v2323, 0.0
    %v2491 = vmax.f32 %v1748, 0.0
    %v2492 = vmax.f32 %v1750, 0.0
    %v2493 = vmax.f32 %v1941, 0.0
    %v2494 = vmax.f32 %v1943, 0.0
    %v2495 = vmax.f32 %v2134, 0.0
    %v2496 = vmax.f32 %v2136, 0.0
    %v2497 = vmax.f32 %v2327, 0.0
    %v2498 = vmax.f32 %v2329, 0.0
    %v2499 = vmax.f32 %v1752, 0.0
    %v2500 = vmax.f32 %v1754, 0.0
    %v2501 = vmax.f32 %v1945, 0.0
    %v2502 = vmax.f32 %v1947, 0.0
    %v2503 = vmax.f32 %v2138, 0.0
    %v2504 = vmax.f32 %v2140, 0.0
    %v2505 = vmax.f32 %v2331, 0.0
    %v2506 = vmax.f32 %v2333, 0.0
    %v2507 = vmax.f32 %v1758, 0.0
    %v2508 = vmax.f32 %v1760, 0.0
    %v2509 = vmax.f32 %v1951, 0.0
    %v2510 = vmax.f32 %v1953, 0.0
    %v2511 = vmax.f32 %v2144, 0.0
    %v2512 = vmax.f32 %v2146, 0.0
    %v2513 = vmax.f32 %v2337, 0.0
    %v2514 = vmax.f32 %v2339, 0.0
    %v2515 = vmax.f32 %v1762, 0.0
    %v2516 = vmax.f32 %v1764, 0.0
    %v2517 = vmax.f32 %v1955, 0.0
    %v2518 = vmax.f32 %v1957, 0.0
    %v2519 = vmax.f32 %v2148, 0.0
    %v2520 = vmax.f32 %v2150, 0.0
    %v2521 = vmax.f32 %v2341, 0.0
    %v2522 = vmax.f32 %v2343, 0.0
    %v2523 = vmax.f32 %v1768, 0.0
    %v2524 = vmax.f32 %v1770, 0.0
    %v2525 = vmax.f32 %v1961, 0.0
    %v2526 = vmax.f32 %v1963, 0.0
    %v2527 = vmax.f32 %v2154, 0.0
    %v2528 = vmax.f32 %v2156, 0.0
    %v2529 = vmax.f32 %v2347, 0.0
    %v2530 = vmax.f32 %v2349, 0.0
    %v2531 = vmax.f32 %v1772, 0.0
    %v2532 = vmax.f32 %v1774, 0.0
    %v2533 = vmax.f32 %v1965, 0.0
    %v2534 = vmax.f32 %v1967, 0.0
    %v2535 = vmax.f32 %v2158, 0.0
    %v2536 = vmax.f32 %v2160, 0.0
    %v2537 = vmax.f32 %v2351, 0.0
    %v2538 = vmax.f32 %v2353, 0.0
    %v2539 = vmax.f32 %v1778, 0.0
    %v2540 = vmax.f32 %v1780, 0.0
    %v2541 = vmax.f32 %v1971, 0.0
    %v2542 = vmax.f32 %v1973, 0.0
    %v2543 = vmax.f32 %v2164, 0.0
    %v2544 = vmax.f32 %v2166, 0.0
    %v2545 = vmax.f32 %v2357, 0.0
    %v2546 = vmax.f32 %v2359, 0.0
    %v2547 = vmax.f32 %v1782, 0.0
    %v2548 = vmax.f32 %v1784, 0.0
    %v2549 = vmax.f32 %v1975, 0.0
    %v2550 = vmax.f32 %v1977, 0.0
    %v2551 = vmax.f32 %v2168, 0.0
    %v2552 = vmax.f32 %v2170, 0.0
    %v2553 = vmax.f32 %v2361, 0.0
    %v2554 = vmax.f32 %v2363, 0.0
    %v2555 = vmax.f32 %v1788, 0.0
    %v2556 = vmax.f32 %v1790, 0.0
    %v2557 = vmax.f32 %v1981, 0.0
    %v2558 = vmax.f32 %v1983, 0.0
    %v2559 = vmax.f32 %v2174, 0.0
    %v2560 = vmax.f32 %v2176, 0.0
    %v2561 = vmax.f32 %v2367, 0.0
    %v2562 = vmax.f32 %v2369, 0.0
    %v2563 = vmax.f32 %v1792, 0.0
    %v2564 = vmax.f32 %v1794, 0.0
    %v2565 = vmax.f32 %v1985, 0.0
    %v2566 = vmax.f32 %v1987, 0.0
    %v2567 = vmax.f32 %v2178, 0.0
    %v2568 = vmax.f32 %v2180, 0.0
    %v2569 = vmax.f32 %v2371, 0.0
    %v2570 = vmax.f32 %v2373, 0.0
    %v2571 = vmax.f32 %v1798, 0.0
    %v2572 = vmax.f32 %v1800, 0.0
    %v2573 = vmax.f32 %v1991, 0.0
    %v2574 = vmax.f32 %v1993, 0.0
    %v2575 = vmax.f32 %v2184, 0.0
    %v2576 = vmax.f32 %v2186, 0.0
    %v2577 = vmax.f32 %v2377, 0.0
    %v2578 = vmax.f32 %v2379, 0.0
    %v2579 = vmax.f32 %v1802, 0.0
    %v2580 = vmax.f32 %v1804, 0.0
    %v2581 = vmax.f32 %v1995, 0.0
    %v2582 = vmax.f32 %v1997, 0.0
    %v2583 = vmax.f32 %v2188, 0.0
    %v2584 = vmax.f32 %v2190, 0.0
    %v2585 = vmax.f32 %v2381, 0.0
    %v2586 = vmax.f32 %v2383, 0.0
    %v2587 = vmax.f32 %v1808, 0.0
    %v2588 = vmax.f32 %v1810, 0.0
    %v2589 = vmax.f32 %v2001, 0.0
    %v2590 = vmax.f32 %v2003, 0.0
    %v2591 = vmax.f32 %v2194, 0.0
    %v2592 = vmax.f32 %v2196, 0.0
    %v2593 = vmax.f32 %v2387, 0.0
    %v2594 = vmax.f32 %v2389, 0.0
    %v2595 = vmax.f32 %v1812, 0.0
    %v2596 = vmax.f32 %v1814, 0.0
    %v2597 = vmax.f32 %v2005, 0.0
    %v2598 = vmax.f32 %v2007, 0.0
    %v2599 = vmax.f32 %v2198, 0.0
    %v2600 = vmax.f32 %v2200, 0.0
    %v2601 = vmax.f32 %v2391, 0.0
    %v2602 = vmax.f32 %v2393, 0.0
    %v2603 = vmax.f32 %v1818, 0.0
    %v2604 = vmax.f32 %v1820, 0.0
    %v2605 = vmax.f32 %v2011, 0.0
    %v2606 = vmax.f32 %v2013, 0.0
    %v2607 = vmax.f32 %v2204, 0.0
    %v2608 = vmax.f32 %v2206, 0.0
    %v2609 = vmax.f32 %v2397, 0.0
    %v2610 = vmax.f32 %v2399, 0.0
    %v2611 = vmax.f32 %v1822, 0.0
    %v2612 = vmax.f32 %v1824, 0.0
    %v2613 = vmax.f32 %v2015, 0.0
    %v2614 = vmax.f32 %v2017, 0.0
    %v2615 = vmax.f32 %v2208, 0.0
    %v2616 = vmax.f32 %v2210, 0.0
    %v2617 = vmax.f32 %v2401, 0.0
    %v2618 = vmax.f32 %v2403, 0.0
    %v2619 = vmax.f32 %v1828, 0.0
    %v2620 = vmax.f32 %v1830, 0.0
    %v2621 = vmax.f32 %v2021, 0.0
    %v2622 = vmax.f32 %v2023, 0.0
    %v2623 = vmax.f32 %v2214, 0.0
    %v2624 = vmax.f32 %v2216, 0.0
    %v2625 = vmax.f32 %v2407, 0.0
    %v2626 = vmax.f32 %v2409, 0.0
    %v2627 = vmax.f32 %v1832, 0.0
    %v2628 = vmax.f32 %v1834, 0.0
    %v2629 = vmax.f32 %v2025, 0.0
    %v2630 = vmax.f32 %v2027, 0.0
    %v2631 = vmax.f32 %v2218, 0.0
    %v2632 = vmax.f32 %v2220, 0.0
    %v2633 = vmax.f32 %v2411, 0.0
    %v2634 = vmax.f32 %v2413, 0.0
    %v2635 = vmax.f32 %v1838, 0.0
    %v2636 = vmax.f32 %v1840, 0.0
    %v2637 = vmax.f32 %v2031, 0.0
    %v2638 = vmax.f32 %v2033, 0.0
    %v2639 = vmax.f32 %v2224, 0.0
    %v2640 = vmax.f32 %v2226, 0.0
    %v2641 = vmax.f32 %v2417, 0.0
    %v2642 = vmax.f32 %v2419, 0.0
    %v2643 = vmax.f32 %v1842, 0.0
    %v2644 = vmax.f32 %v1844, 0.0
    %v2645 = vmax.f32 %v2035, 0.0
    %v2646 = vmax.f32 %v2037, 0.0
    %v2647 = vmax.f32 %v2228, 0.0
    %v2648 = vmax.f32 %v2230, 0.0
    %v2649 = vmax.f32 %v2421, 0.0
    %v2650 = vmax.f32 %v2423, 0.0
    %v2651 = vmax.f32 %v1848, 0.0
    %v2652 = vmax.f32 %v1850, 0.0
    %v2653 = vmax.f32 %v2041, 0.0
    %v2654 = vmax.f32 %v2043, 0.0
    %v2655 = vmax.f32 %v2234, 0.0
    %v2656 = vmax.f32 %v2236, 0.0
    %v2657 = vmax.f32 %v2427, 0.0
    %v2658 = vmax.f32 %v2429, 0.0
    %v2659 = vmax.f32 %v1852, 0.0
    %v2660 = vmax.f32 %v1854, 0.0
    %v2661 = vmax.f32 %v2045, 0.0
    %v2662 = vmax.f32 %v2047, 0.0
    %v2663 = vmax.f32 %v2238, 0.0
    %v2664 = vmax.f32 %v2240, 0.0
    %v2665 = vmax.f32 %v2431, 0.0
    %v2666 = vmax.f32 %v2433, 0.0
    %v2667 = vmax.f32 %v1858, 0.0
    %v2668 = vmax.f32 %v1860, 0.0
    %v2669 = vmax.f32 %v2051, 0.0
    %v2670 = vmax.f32 %v2053, 0.0
    %v2671 = vmax.f32 %v2244, 0.0
    %v2672 = vmax.f32 %v2246, 0.0
    %v2673 = vmax.f32 %v2437, 0.0
    %v2674 = vmax.f32 %v2439, 0.0
    %v2675 = vmax.f32 %v1862, 0.0
    %v2676 = vmax.f32 %v1864, 0.0
    %v2677 = vmax.f32 %v2055, 0.0
    %v2678 = vmax.f32 %v2057, 0.0
    %v2679 = vmax.f32 %v2248, 0.0
    %v2680 = vmax.f32 %v2250, 0.0
    %v2681 = vmax.f32 %v2441, 0.0
    %v2682 = vmax.f32 %v2443, 0.0
    %v2683 = vmax.f32 %v1868, 0.0
    %v2684 = vmax.f32 %v1870, 0.0
    %v2685 = vmax.f32 %v2061, 0.0
    %v2686 = vmax.f32 %v2063, 0.0
    %v2687 = vmax.f32 %v2254, 0.0
    %v2688 = vmax.f32 %v2256, 0.0
    %v2689 = vmax.f32 %v2447, 0.0
    %v2690 = vmax.f32 %v2449, 0.0
    %v2691 = vmax.f32 %v1872, 0.0
    %v2692 = vmax.f32 %v1874, 0.0
    %v2693 = vmax.f32 %v2065, 0.0
    %v2694 = vmax.f32 %v2067, 0.0
    %v2695 = vmax.f32 %v2258, 0.0
    %v2696 = vmax.f32 %v2260, 0.0
    %v2697 = vmax.f32 %v2451, 0.0
    %v2698 = vmax.f32 %v2453, 0.0
    %v2699 = vmax.f32 %v1878, 0.0
    %v2700 = vmax.f32 %v1880, 0.0
    %v2701 = vmax.f32 %v2071, 0.0
    %v2702 = vmax.f32 %v2073, 0.0
    %v2703 = vmax.f32 %v2264, 0.0
    %v2704 = vmax.f32 %v2266, 0.0
    %v2705 = vmax.f32 %v2457, 0.0
    %v2706 = vmax.f32 %v2459, 0.0
    %v2707 = vmax.f32 %v1882, 0.0
    %v2708 = vmax.f32 %v1884, 0.0
    %v2709 = vmax.f32 %v2075, 0.0
    %v2710 = vmax.f32 %v2077, 0.0
    %v2711 = vmax.f32 %v2268, 0.0
    %v2712 = vmax.f32 %v2270, 0.0
    %v2713 = vmax.f32 %v2461, 0.0
    %v2714 = vmax.f32 %v2463, 0.0
    %v2715 = vmax.f32 %v1888, 0.0
    %v2716 = vmax.f32 %v1890, 0.0
    %v2717 = vmax.f32 %v2081, 0.0
    %v2718 = vmax.f32 %v2083, 0.0
    %v2719 = vmax.f32 %v2274, 0.0
    %v2720 = vmax.f32 %v2276, 0.0
    %v2721 = vmax.f32 %v2467, 0.0
    %v2722 = vmax.f32 %v2469, 0.0
    %v2723 = vmax.f32 %v1892, 0.0
    %v2724 = vmax.f32 %v1894, 0.0
    %v2725 = vmax.f32 %v2085, 0.0
    %v2726 = vmax.f32 %v2087, 0.0
    %v2727 = vmax.f32 %v2278, 0.0
    %v2728 = vmax.f32 %v2280, 0.0
    %v2729 = vmax.f32 %v2471, 0.0
    %v2730 = vmax.f32 %v2473, 0.0
    %v2731 = vpack.c.bf16 %v2483, %v2475
    %v2732 = vpack.c.bf16 %v2484, %v2476
    %v2733 = vpack.c.bf16 %v2485, %v2477
    %v2734 = vpack.c.bf16 %v2486, %v2478
    %v2735 = vpack.c.bf16 %v2487, %v2479
    %v2736 = vpack.c.bf16 %v2488, %v2480
    %v2737 = vpack.c.bf16 %v2489, %v2481
    %v2738 = vpack.c.bf16 %v2490, %v2482
    %v2739 = vpack.c.bf16 %v2499, %v2491
    %v2740 = vpack.c.bf16 %v2500, %v2492
    %v2741 = vpack.c.bf16 %v2501, %v2493
    %v2742 = vpack.c.bf16 %v2502, %v2494
    %v2743 = vpack.c.bf16 %v2503, %v2495
    %v2744 = vpack.c.bf16 %v2504, %v2496
    %v2745 = vpack.c.bf16 %v2505, %v2497
    %v2746 = vpack.c.bf16 %v2506, %v2498
    %v2747 = vpack.c.bf16 %v2515, %v2507
    %v2748 = vpack.c.bf16 %v2516, %v2508
    %v2749 = vpack.c.bf16 %v2517, %v2509
    %v2750 = vpack.c.bf16 %v2518, %v2510
    %v2751 = vpack.c.bf16 %v2519, %v2511
    %v2752 = vpack.c.bf16 %v2520, %v2512
    %v2753 = vpack.c.bf16 %v2521, %v2513
    %v2754 = vpack.c.bf16 %v2522, %v2514
    %v2755 = vpack.c.bf16 %v2531, %v2523
    %v2756 = vpack.c.bf16 %v2532, %v2524
    %v2757 = vpack.c.bf16 %v2533, %v2525
    %v2758 = vpack.c.bf16 %v2534, %v2526
    %v2759 = vpack.c.bf16 %v2535, %v2527
    %v2760 = vpack.c.bf16 %v2536, %v2528
    %v2761 = vpack.c.bf16 %v2537, %v2529
    %v2762 = vpack.c.bf16 %v2538, %v2530
    %v2763 = vpack.c.bf16 %v2547, %v2539
    %v2764 = vpack.c.bf16 %v2548, %v2540
    %v2765 = vpack.c.bf16 %v2549, %v2541
    %v2766 = vpack.c.bf16 %v2550, %v2542
    %v2767 = vpack.c.bf16 %v2551, %v2543
    %v2768 = vpack.c.bf16 %v2552, %v2544
    %v2769 = vpack.c.bf16 %v2553, %v2545
    %v2770 = vpack.c.bf16 %v2554, %v2546
    %v2771 = vpack.c.bf16 %v2563, %v2555
    %v2772 = vpack.c.bf16 %v2564, %v2556
    %v2773 = vpack.c.bf16 %v2565, %v2557
    %v2774 = vpack.c.bf16 %v2566, %v2558
    %v2775 = vpack.c.bf16 %v2567, %v2559
    %v2776 = vpack.c.bf16 %v2568, %v2560
    %v2777 = vpack.c.bf16 %v2569, %v2561
    %v2778 = vpack.c.bf16 %v2570, %v2562
    %v2779 = vpack.c.bf16 %v2579, %v2571
    %v2780 = vpack.c.bf16 %v2580, %v2572
    %v2781 = vpack.c.bf16 %v2581, %v2573
    %v2782 = vpack.c.bf16 %v2582, %v2574
    %v2783 = vpack.c.bf16 %v2583, %v2575
    %v2784 = vpack.c.bf16 %v2584, %v2576
    %v2785 = vpack.c.bf16 %v2585, %v2577
    %v2786 = vpack.c.bf16 %v2586, %v2578
    %v2787 = vpack.c.bf16 %v2595, %v2587
    %v2788 = vpack.c.bf16 %v2596, %v2588
    %v2789 = vpack.c.bf16 %v2597, %v2589
    %v2790 = vpack.c.bf16 %v2598, %v2590
    %v2791 = vpack.c.bf16 %v2599, %v2591
    %v2792 = vpack.c.bf16 %v2600, %v2592
    %v2793 = vpack.c.bf16 %v2601, %v2593
    %v2794 = vpack.c.bf16 %v2602, %v2594
    %v2795 = vpack.c.bf16 %v2611, %v2603
    %v2796 = vpack.c.bf16 %v2612, %v2604
    %v2797 = vpack.c.bf16 %v2613, %v2605
    %v2798 = vpack.c.bf16 %v2614, %v2606
    %v2799 = vpack.c.bf16 %v2615, %v2607
    %v2800 = vpack.c.bf16 %v2616, %v2608
    %v2801 = vpack.c.bf16 %v2617, %v2609
    %v2802 = vpack.c.bf16 %v2618, %v2610
    %v2803 = vpack.c.bf16 %v2627, %v2619
    %v2804 = vpack.c.bf16 %v2628, %v2620
    %v2805 = vpack.c.bf16 %v2629, %v2621
    %v2806 = vpack.c.bf16 %v2630, %v2622
    %v2807 = vpack.c.bf16 %v2631, %v2623
    %v2808 = vpack.c.bf16 %v2632, %v2624
    %v2809 = vpack.c.bf16 %v2633, %v2625
    %v2810 = vpack.c.bf16 %v2634, %v2626
    %v2811 = vpack.c.bf16 %v2643, %v2635
    %v2812 = vpack.c.bf16 %v2644, %v2636
    %v2813 = vpack.c.bf16 %v2645, %v2637
    %v2814 = vpack.c.bf16 %v2646, %v2638
    %v2815 = vpack.c.bf16 %v2647, %v2639
    %v2816 = vpack.c.bf16 %v2648, %v2640
    %v2817 = vpack.c.bf16 %v2649, %v2641
    %v2818 = vpack.c.bf16 %v2650, %v2642
    %v2819 = vpack.c.bf16 %v2659, %v2651
    %v2820 = vpack.c.bf16 %v2660, %v2652
    %v2821 = vpack.c.bf16 %v2661, %v2653
    %v2822 = vpack.c.bf16 %v2662, %v2654
    %v2823 = vpack.c.bf16 %v2663, %v2655
    %v2824 = vpack.c.bf16 %v2664, %v2656
    %v2825 = vpack.c.bf16 %v2665, %v2657
    %v2826 = vpack.c.bf16 %v2666, %v2658
    %v2827 = vpack.c.bf16 %v2675, %v2667
    %v2828 = vpack.c.bf16 %v2676, %v2668
    %v2829 = vpack.c.bf16 %v2677, %v2669
    %v2830 = vpack.c.bf16 %v2678, %v2670
    %v2831 = vpack.c.bf16 %v2679, %v2671
    %v2832 = vpack.c.bf16 %v2680, %v2672
    %v2833 = vpack.c.bf16 %v2681, %v2673
    %v2834 = vpack.c.bf16 %v2682, %v2674
    %v2835 = vpack.c.bf16 %v2691, %v2683
    %v2836 = vpack.c.bf16 %v2692, %v2684
    %v2837 = vpack.c.bf16 %v2693, %v2685
    %v2838 = vpack.c.bf16 %v2694, %v2686
    %v2839 = vpack.c.bf16 %v2695, %v2687
    %v2840 = vpack.c.bf16 %v2696, %v2688
    %v2841 = vpack.c.bf16 %v2697, %v2689
    %v2842 = vpack.c.bf16 %v2698, %v2690
    %v2843 = vpack.c.bf16 %v2707, %v2699
    %v2844 = vpack.c.bf16 %v2708, %v2700
    %v2845 = vpack.c.bf16 %v2709, %v2701
    %v2846 = vpack.c.bf16 %v2710, %v2702
    %v2847 = vpack.c.bf16 %v2711, %v2703
    %v2848 = vpack.c.bf16 %v2712, %v2704
    %v2849 = vpack.c.bf16 %v2713, %v2705
    %v2850 = vpack.c.bf16 %v2714, %v2706
    %v2851 = vpack.c.bf16 %v2723, %v2715
    %v2852 = vpack.c.bf16 %v2724, %v2716
    %v2853 = vpack.c.bf16 %v2725, %v2717
    %v2854 = vpack.c.bf16 %v2726, %v2718
    %v2855 = vpack.c.bf16 %v2727, %v2719
    %v2856 = vpack.c.bf16 %v2728, %v2720
    %v2857 = vpack.c.bf16 %v2729, %v2721
    %v2858 = vpack.c.bf16 %v2730, %v2722
    %v2859 = vmax.bf16 %v2731, %v2739
    %v2860 = vmax.bf16 %v2859, %v2747
    %v2861 = vmax.bf16 %v2860, %v2755
    %v2862 = vmax.bf16 %v2861, %v2763
    %v2863 = vmax.bf16 %v2862, %v2771
    %v2864 = vmax.bf16 %v2863, %v2779
    %v2865 = vmax.bf16 %v2864, %v2787
    %v2866 = vunpack.i.l.bf16 %v2865
    %v2867 = vunpack.i.h.bf16 %v2865
    %v2868 = vmax.f32 %v2866, %v2867
    %v2869 = vrot.slane %v2868, 4
    %v2870 = vmax.f32 %v2868, %v2869
    %v2871 = vrot.slane %v2870, 2
    %v2872 = vmax.f32 %v2870, %v2871
    %v2873 = vrot.slane %v2872, 1
    %v2874 = vmax.f32 %v2872, %v2873
    %v2875 = vpack.i.bf16 %v2874, %v2874
    %v2876 = vmax.bf16 %v2732, %v2740
    %v2877 = vmax.bf16 %v2876, %v2748
    %v2878 = vmax.bf16 %v2877, %v2756
    %v2879 = vmax.bf16 %v2878, %v2764
    %v2880 = vmax.bf16 %v2879, %v2772
    %v2881 = vmax.bf16 %v2880, %v2780
    %v2882 = vmax.bf16 %v2881, %v2788
    %v2883 = vunpack.i.l.bf16 %v2882
    %v2884 = vunpack.i.h.bf16 %v2882
    %v2885 = vmax.f32 %v2883, %v2884
    %v2886 = vrot.slane %v2885, 4
    %v2887 = vmax.f32 %v2885, %v2886
    %v2888 = vrot.slane %v2887, 2
    %v2889 = vmax.f32 %v2887, %v2888
    %v2890 = vrot.slane %v2889, 1
    %v2891 = vmax.f32 %v2889, %v2890
    %v2892 = vpack.i.bf16 %v2891, %v2891
    %v2893 = vmax.bf16 %v2733, %v2741
    %v2894 = vmax.bf16 %v2893, %v2749
    %v2895 = vmax.bf16 %v2894, %v2757
    %v2896 = vmax.bf16 %v2895, %v2765
    %v2897 = vmax.bf16 %v2896, %v2773
    %v2898 = vmax.bf16 %v2897, %v2781
    %v2899 = vmax.bf16 %v2898, %v2789
    %v2900 = vunpack.i.l.bf16 %v2899
    %v2901 = vunpack.i.h.bf16 %v2899
    %v2902 = vmax.f32 %v2900, %v2901
    %v2903 = vrot.slane %v2902, 4
    %v2904 = vmax.f32 %v2902, %v2903
    %v2905 = vrot.slane %v2904, 2
    %v2906 = vmax.f32 %v2904, %v2905
    %v2907 = vrot.slane %v2906, 1
    %v2908 = vmax.f32 %v2906, %v2907
    %v2909 = vpack.i.bf16 %v2908, %v2908
    %v2910 = vmax.bf16 %v2734, %v2742
    %v2911 = vmax.bf16 %v2910, %v2750
    %v2912 = vmax.bf16 %v2911, %v2758
    %v2913 = vmax.bf16 %v2912, %v2766
    %v2914 = vmax.bf16 %v2913, %v2774
    %v2915 = vmax.bf16 %v2914, %v2782
    %v2916 = vmax.bf16 %v2915, %v2790
    %v2917 = vunpack.i.l.bf16 %v2916
    %v2918 = vunpack.i.h.bf16 %v2916
    %v2919 = vmax.f32 %v2917, %v2918
    %v2920 = vrot.slane %v2919, 4
    %v2921 = vmax.f32 %v2919, %v2920
    %v2922 = vrot.slane %v2921, 2
    %v2923 = vmax.f32 %v2921, %v2922
    %v2924 = vrot.slane %v2923, 1
    %v2925 = vmax.f32 %v2923, %v2924
    %v2926 = vpack.i.bf16 %v2925, %v2925
    %v2927 = vmax.bf16 %v2735, %v2743
    %v2928 = vmax.bf16 %v2927, %v2751
    %v2929 = vmax.bf16 %v2928, %v2759
    %v2930 = vmax.bf16 %v2929, %v2767
    %v2931 = vmax.bf16 %v2930, %v2775
    %v2932 = vmax.bf16 %v2931, %v2783
    %v2933 = vmax.bf16 %v2932, %v2791
    %v2934 = vunpack.i.l.bf16 %v2933
    %v2935 = vunpack.i.h.bf16 %v2933
    %v2936 = vmax.f32 %v2934, %v2935
    %v2937 = vrot.slane %v2936, 4
    %v2938 = vmax.f32 %v2936, %v2937
    %v2939 = vrot.slane %v2938, 2
    %v2940 = vmax.f32 %v2938, %v2939
    %v2941 = vrot.slane %v2940, 1
    %v2942 = vmax.f32 %v2940, %v2941
    %v2943 = vpack.i.bf16 %v2942, %v2942
    %v2944 = vmax.bf16 %v2736, %v2744
    %v2945 = vmax.bf16 %v2944, %v2752
    %v2946 = vmax.bf16 %v2945, %v2760
    %v2947 = vmax.bf16 %v2946, %v2768
    %v2948 = vmax.bf16 %v2947, %v2776
    %v2949 = vmax.bf16 %v2948, %v2784
    %v2950 = vmax.bf16 %v2949, %v2792
    %v2951 = vunpack.i.l.bf16 %v2950
    %v2952 = vunpack.i.h.bf16 %v2950
    %v2953 = vmax.f32 %v2951, %v2952
    %v2954 = vrot.slane %v2953, 4
    %v2955 = vmax.f32 %v2953, %v2954
    %v2956 = vrot.slane %v2955, 2
    %v2957 = vmax.f32 %v2955, %v2956
    %v2958 = vrot.slane %v2957, 1
    %v2959 = vmax.f32 %v2957, %v2958
    %v2960 = vpack.i.bf16 %v2959, %v2959
    %v2961 = vmax.bf16 %v2737, %v2745
    %v2962 = vmax.bf16 %v2961, %v2753
    %v2963 = vmax.bf16 %v2962, %v2761
    %v2964 = vmax.bf16 %v2963, %v2769
    %v2965 = vmax.bf16 %v2964, %v2777
    %v2966 = vmax.bf16 %v2965, %v2785
    %v2967 = vmax.bf16 %v2966, %v2793
    %v2968 = vunpack.i.l.bf16 %v2967
    %v2969 = vunpack.i.h.bf16 %v2967
    %v2970 = vmax.f32 %v2968, %v2969
    %v2971 = vrot.slane %v2970, 4
    %v2972 = vmax.f32 %v2970, %v2971
    %v2973 = vrot.slane %v2972, 2
    %v2974 = vmax.f32 %v2972, %v2973
    %v2975 = vrot.slane %v2974, 1
    %v2976 = vmax.f32 %v2974, %v2975
    %v2977 = vpack.i.bf16 %v2976, %v2976
    %v2978 = vmax.bf16 %v2738, %v2746
    %v2979 = vmax.bf16 %v2978, %v2754
    %v2980 = vmax.bf16 %v2979, %v2762
    %v2981 = vmax.bf16 %v2980, %v2770
    %v2982 = vmax.bf16 %v2981, %v2778
    %v2983 = vmax.bf16 %v2982, %v2786
    %v2984 = vmax.bf16 %v2983, %v2794
    %v2985 = vunpack.i.l.bf16 %v2984
    %v2986 = vunpack.i.h.bf16 %v2984
    %v2987 = vmax.f32 %v2985, %v2986
    %v2988 = vrot.slane %v2987, 4
    %v2989 = vmax.f32 %v2987, %v2988
    %v2990 = vrot.slane %v2989, 2
    %v2991 = vmax.f32 %v2989, %v2990
    %v2992 = vrot.slane %v2991, 1
    %v2993 = vmax.f32 %v2991, %v2992
    %v2994 = vpack.i.bf16 %v2993, %v2993
    %v2995 = vmax.bf16 %v2795, %v2803
    %v2996 = vmax.bf16 %v2995, %v2811
    %v2997 = vmax.bf16 %v2996, %v2819
    %v2998 = vmax.bf16 %v2997, %v2827
    %v2999 = vmax.bf16 %v2998, %v2835
    %v3000 = vmax.bf16 %v2999, %v2843
    %v3001 = vmax.bf16 %v3000, %v2851
    %v3002 = vunpack.i.l.bf16 %v3001
    %v3003 = vunpack.i.h.bf16 %v3001
    %v3004 = vmax.f32 %v3002, %v3003
    %v3005 = vrot.slane %v3004, 4
    %v3006 = vmax.f32 %v3004, %v3005
    %v3007 = vrot.slane %v3006, 2
    %v3008 = vmax.f32 %v3006, %v3007
    %v3009 = vrot.slane %v3008, 1
    %v3010 = vmax.f32 %v3008, %v3009
    %v3011 = vpack.i.bf16 %v3010, %v3010
    %v3012 = vmax.bf16 %v2796, %v2804
    %v3013 = vmax.bf16 %v3012, %v2812
    %v3014 = vmax.bf16 %v3013, %v2820
    %v3015 = vmax.bf16 %v3014, %v2828
    %v3016 = vmax.bf16 %v3015, %v2836
    %v3017 = vmax.bf16 %v3016, %v2844
    %v3018 = vmax.bf16 %v3017, %v2852
    %v3019 = vunpack.i.l.bf16 %v3018
    %v3020 = vunpack.i.h.bf16 %v3018
    %v3021 = vmax.f32 %v3019, %v3020
    %v3022 = vrot.slane %v3021, 4
    %v3023 = vmax.f32 %v3021, %v3022
    %v3024 = vrot.slane %v3023, 2
    %v3025 = vmax.f32 %v3023, %v3024
    %v3026 = vrot.slane %v3025, 1
    %v3027 = vmax.f32 %v3025, %v3026
    %v3028 = vpack.i.bf16 %v3027, %v3027
    %v3029 = vmax.bf16 %v2797, %v2805
    %v3030 = vmax.bf16 %v3029, %v2813
    %v3031 = vmax.bf16 %v3030, %v2821
    %v3032 = vmax.bf16 %v3031, %v2829
    %v3033 = vmax.bf16 %v3032, %v2837
    %v3034 = vmax.bf16 %v3033, %v2845
    %v3035 = vmax.bf16 %v3034, %v2853
    %v3036 = vunpack.i.l.bf16 %v3035
    %v3037 = vunpack.i.h.bf16 %v3035
    %v3038 = vmax.f32 %v3036, %v3037
    %v3039 = vrot.slane %v3038, 4
    %v3040 = vmax.f32 %v3038, %v3039
    %v3041 = vrot.slane %v3040, 2
    %v3042 = vmax.f32 %v3040, %v3041
    %v3043 = vrot.slane %v3042, 1
    %v3044 = vmax.f32 %v3042, %v3043
    %v3045 = vpack.i.bf16 %v3044, %v3044
    %v3046 = vmax.bf16 %v2798, %v2806
    %v3047 = vmax.bf16 %v3046, %v2814
    %v3048 = vmax.bf16 %v3047, %v2822
    %v3049 = vmax.bf16 %v3048, %v2830
    %v3050 = vmax.bf16 %v3049, %v2838
    %v3051 = vmax.bf16 %v3050, %v2846
    %v3052 = vmax.bf16 %v3051, %v2854
    %v3053 = vunpack.i.l.bf16 %v3052
    %v3054 = vunpack.i.h.bf16 %v3052
    %v3055 = vmax.f32 %v3053, %v3054
    %v3056 = vrot.slane %v3055, 4
    %v3057 = vmax.f32 %v3055, %v3056
    %v3058 = vrot.slane %v3057, 2
    %v3059 = vmax.f32 %v3057, %v3058
    %v3060 = vrot.slane %v3059, 1
    %v3061 = vmax.f32 %v3059, %v3060
    %v3062 = vpack.i.bf16 %v3061, %v3061
    %v3063 = vmax.bf16 %v2799, %v2807
    %v3064 = vmax.bf16 %v3063, %v2815
    %v3065 = vmax.bf16 %v3064, %v2823
    %v3066 = vmax.bf16 %v3065, %v2831
    %v3067 = vmax.bf16 %v3066, %v2839
    %v3068 = vmax.bf16 %v3067, %v2847
    %v3069 = vmax.bf16 %v3068, %v2855
    %v3070 = vunpack.i.l.bf16 %v3069
    %v3071 = vunpack.i.h.bf16 %v3069
    %v3072 = vmax.f32 %v3070, %v3071
    %v3073 = vrot.slane %v3072, 4
    %v3074 = vmax.f32 %v3072, %v3073
    %v3075 = vrot.slane %v3074, 2
    %v3076 = vmax.f32 %v3074, %v3075
    %v3077 = vrot.slane %v3076, 1
    %v3078 = vmax.f32 %v3076, %v3077
    %v3079 = vpack.i.bf16 %v3078, %v3078
    %v3080 = vmax.bf16 %v2800, %v2808
    %v3081 = vmax.bf16 %v3080, %v2816
    %v3082 = vmax.bf16 %v3081, %v2824
    %v3083 = vmax.bf16 %v3082, %v2832
    %v3084 = vmax.bf16 %v3083, %v2840
    %v3085 = vmax.bf16 %v3084, %v2848
    %v3086 = vmax.bf16 %v3085, %v2856
    %v3087 = vunpack.i.l.bf16 %v3086
    %v3088 = vunpack.i.h.bf16 %v3086
    %v3089 = vmax.f32 %v3087, %v3088
    %v3090 = vrot.slane %v3089, 4
    %v3091 = vmax.f32 %v3089, %v3090
    %v3092 = vrot.slane %v3091, 2
    %v3093 = vmax.f32 %v3091, %v3092
    %v3094 = vrot.slane %v3093, 1
    %v3095 = vmax.f32 %v3093, %v3094
    %v3096 = vpack.i.bf16 %v3095, %v3095
    %v3097 = vmax.bf16 %v2801, %v2809
    %v3098 = vmax.bf16 %v3097, %v2817
    %v3099 = vmax.bf16 %v3098, %v2825
    %v3100 = vmax.bf16 %v3099, %v2833
    %v3101 = vmax.bf16 %v3100, %v2841
    %v3102 = vmax.bf16 %v3101, %v2849
    %v3103 = vmax.bf16 %v3102, %v2857
    %v3104 = vunpack.i.l.bf16 %v3103
    %v3105 = vunpack.i.h.bf16 %v3103
    %v3106 = vmax.f32 %v3104, %v3105
    %v3107 = vrot.slane %v3106, 4
    %v3108 = vmax.f32 %v3106, %v3107
    %v3109 = vrot.slane %v3108, 2
    %v3110 = vmax.f32 %v3108, %v3109
    %v3111 = vrot.slane %v3110, 1
    %v3112 = vmax.f32 %v3110, %v3111
    %v3113 = vpack.i.bf16 %v3112, %v3112
    %v3114 = vmax.bf16 %v2802, %v2810
    %v3115 = vmax.bf16 %v3114, %v2818
    %v3116 = vmax.bf16 %v3115, %v2826
    %v3117 = vmax.bf16 %v3116, %v2834
    %v3118 = vmax.bf16 %v3117, %v2842
    %v3119 = vmax.bf16 %v3118, %v2850
    %v3120 = vmax.bf16 %v3119, %v2858
    %v3121 = vunpack.i.l.bf16 %v3120
    %v3122 = vunpack.i.h.bf16 %v3120
    %v3123 = vmax.f32 %v3121, %v3122
    %v3124 = vrot.slane %v3123, 4
    %v3125 = vmax.f32 %v3123, %v3124
    %v3126 = vrot.slane %v3125, 2
    %v3127 = vmax.f32 %v3125, %v3126
    %v3128 = vrot.slane %v3127, 1
    %v3129 = vmax.f32 %v3127, %v3128
    %v3130 = vpack.i.bf16 %v3129, %v3129
    %vm3131 = vcmask 1040384
    %vm3132 = vsmask.f32 256
    %vm3133 = vmand %vm3131, %vm3132
    %v3134 = vsel %vm3133, %v2875, %v3011
    %v3135 = vsel %vm3133, %v2892, %v3028
    %v3136 = vsel %vm3133, %v2909, %v3045
    %v3137 = vsel %vm3133, %v2926, %v3062
    %v3138 = vsel %vm3133, %v2943, %v3079
    %v3139 = vsel %vm3133, %v2960, %v3096
    %v3140 = vsel %vm3133, %v2977, %v3113
    %v3141 = vsel %vm3133, %v2994, %v3130
    %s3142 = smul.u32 4, 128
    %s3143 = smul.u32 %s3142, 4
    %s3144 = sshll.u32 %s3143, 4
    %3145 = dma.done [#allocation8], %s3144
    %s3146 = smul.u32 4, 64
    %s3147 = smul.u32 %s3146, 2
    %s3148 = sshll.u32 %s3147, 4
    %3149 = dma.done %s118, %s3148
    %v3150 = vld [vmem:[#allocation2] sm:$0xff]
    %v3151 = vld [vmem:[#allocation2 + $0x8] sm:$0xff]
    %v3152 = vld [vmem:[#allocation2 + $0x10] sm:$0xff]
    %v3153 = vld [vmem:[#allocation2 + $0x18] sm:$0xff]
    %v3154 = vld [vmem:[#allocation2 + $0x20] sm:$0xff]
    %v3155 = vld [vmem:[#allocation2 + $0x28] sm:$0xff]
    %v3156 = vld [vmem:[#allocation2 + $0x30] sm:$0xff]
    %v3157 = vld [vmem:[#allocation2 + $0x38] sm:$0xff]
    %v3158 = vld [vmem:[#allocation2 + $0x40] sm:$0xff]
    %v3159 = vld [vmem:[#allocation2 + $0x48] sm:$0xff]
    %v3160 = vld [vmem:[#allocation2 + $0x50] sm:$0xff]
    %v3161 = vld [vmem:[#allocation2 + $0x58] sm:$0xff]
    %v3162 = vld [vmem:[#allocation2 + $0x60] sm:$0xff]
    %v3163 = vld [vmem:[#allocation2 + $0x68] sm:$0xff]
    %v3164 = vld [vmem:[#allocation2 + $0x70] sm:$0xff]
    %v3165 = vld [vmem:[#allocation2 + $0x78] sm:$0xff]
    %v3166 = vld [vmem:[#allocation2 + $0x80] sm:$0xff]
    %v3167 = vld [vmem:[#allocation2 + $0x88] sm:$0xff]
    %v3168 = vld [vmem:[#allocation2 + $0x90] sm:$0xff]
    %v3169 = vld [vmem:[#allocation2 + $0x98] sm:$0xff]
    %v3170 = vld [vmem:[#allocation2 + $0xa0] sm:$0xff]
    %v3171 = vld [vmem:[#allocation2 + $0xa8] sm:$0xff]
    %v3172 = vld [vmem:[#allocation2 + $0xb0] sm:$0xff]
    %v3173 = vld [vmem:[#allocation2 + $0xb8] sm:$0xff]
    %v3174 = vld [vmem:[#allocation2 + $0xc0] sm:$0xff]
    %v3175 = vld [vmem:[#allocation2 + $0xc8] sm:$0xff]
    %v3176 = vld [vmem:[#allocation2 + $0xd0] sm:$0xff]
    %v3177 = vld [vmem:[#allocation2 + $0xd8] sm:$0xff]
    %v3178 = vld [vmem:[#allocation2 + $0xe0] sm:$0xff]
    %v3179 = vld [vmem:[#allocation2 + $0xe8] sm:$0xff]
    %v3180 = vld [vmem:[#allocation2 + $0xf0] sm:$0xff]
    %v3181 = vld [vmem:[#allocation2 + $0xf8] sm:$0xff]
    %v3182 = vld [vmem:[#allocation2 + $0x100] sm:$0xff]
    %v3183 = vld [vmem:[#allocation2 + $0x108] sm:$0xff]
    %v3184 = vld [vmem:[#allocation2 + $0x110] sm:$0xff]
    %v3185 = vld [vmem:[#allocation2 + $0x118] sm:$0xff]
    %v3186 = vld [vmem:[#allocation2 + $0x120] sm:$0xff]
    %v3187 = vld [vmem:[#allocation2 + $0x128] sm:$0xff]
    %v3188 = vld [vmem:[#allocation2 + $0x130] sm:$0xff]
    %v3189 = vld [vmem:[#allocation2 + $0x138] sm:$0xff]
    %v3190 = vld [vmem:[#allocation2 + $0x140] sm:$0xff]
    %v3191 = vld [vmem:[#allocation2 + $0x148] sm:$0xff]
    %v3192 = vld [vmem:[#allocation2 + $0x150] sm:$0xff]
    %v3193 = vld [vmem:[#allocation2 + $0x158] sm:$0xff]
    %v3194 = vld [vmem:[#allocation2 + $0x160] sm:$0xff]
    %v3195 = vld [vmem:[#allocation2 + $0x168] sm:$0xff]
    %v3196 = vld [vmem:[#allocation2 + $0x170] sm:$0xff]
    %v3197 = vld [vmem:[#allocation2 + $0x178] sm:$0xff]
    %v3198 = vld [vmem:[#allocation2 + $0x180] sm:$0xff]
    %v3199 = vld [vmem:[#allocation2 + $0x188] sm:$0xff]
    %v3200 = vld [vmem:[#allocation2 + $0x190] sm:$0xff]
    %v3201 = vld [vmem:[#allocation2 + $0x198] sm:$0xff]
    %v3202 = vld [vmem:[#allocation2 + $0x1a0] sm:$0xff]
    %v3203 = vld [vmem:[#allocation2 + $0x1a8] sm:$0xff]
    %v3204 = vld [vmem:[#allocation2 + $0x1b0] sm:$0xff]
    %v3205 = vld [vmem:[#allocation2 + $0x1b8] sm:$0xff]
    %v3206 = vld [vmem:[#allocation2 + $0x1c0] sm:$0xff]
    %v3207 = vld [vmem:[#allocation2 + $0x1c8] sm:$0xff]
    %v3208 = vld [vmem:[#allocation2 + $0x1d0] sm:$0xff]
    %v3209 = vld [vmem:[#allocation2 + $0x1d8] sm:$0xff]
    %v3210 = vld [vmem:[#allocation2 + $0x1e0] sm:$0xff]
    %v3211 = vld [vmem:[#allocation2 + $0x1e8] sm:$0xff]
    %v3212 = vld [vmem:[#allocation2 + $0x1f0] sm:$0xff]
    %v3213 = vld [vmem:[#allocation2 + $0x1f8] sm:$0xff]
    %v3214 = vld [vmem:[#allocation2 + $0x200] sm:$0xff]
    %v3215 = vld [vmem:[#allocation2 + $0x208] sm:$0xff]
    %v3216 = vld [vmem:[#allocation2 + $0x210] sm:$0xff]
    %v3217 = vld [vmem:[#allocation2 + $0x218] sm:$0xff]
    %v3218 = vld [vmem:[#allocation2 + $0x220] sm:$0xff]
    %v3219 = vld [vmem:[#allocation2 + $0x228] sm:$0xff]
    %v3220 = vld [vmem:[#allocation2 + $0x230] sm:$0xff]
    %v3221 = vld [vmem:[#allocation2 + $0x238] sm:$0xff]
    %v3222 = vld [vmem:[#allocation2 + $0x240] sm:$0xff]
    %v3223 = vld [vmem:[#allocation2 + $0x248] sm:$0xff]
    %v3224 = vld [vmem:[#allocation2 + $0x250] sm:$0xff]
    %v3225 = vld [vmem:[#allocation2 + $0x258] sm:$0xff]
    %v3226 = vld [vmem:[#allocation2 + $0x260] sm:$0xff]
    %v3227 = vld [vmem:[#allocation2 + $0x268] sm:$0xff]
    %v3228 = vld [vmem:[#allocation2 + $0x270] sm:$0xff]
    %v3229 = vld [vmem:[#allocation2 + $0x278] sm:$0xff]
    %v3230 = vld [vmem:[#allocation2 + $0x280] sm:$0xff]
    %v3231 = vld [vmem:[#allocation2 + $0x288] sm:$0xff]
    %v3232 = vld [vmem:[#allocation2 + $0x290] sm:$0xff]
    %v3233 = vld [vmem:[#allocation2 + $0x298] sm:$0xff]
    %v3234 = vld [vmem:[#allocation2 + $0x2a0] sm:$0xff]
    %v3235 = vld [vmem:[#allocation2 + $0x2a8] sm:$0xff]
    %v3236 = vld [vmem:[#allocation2 + $0x2b0] sm:$0xff]
    %v3237 = vld [vmem:[#allocation2 + $0x2b8] sm:$0xff]
    %v3238 = vld [vmem:[#allocation2 + $0x2c0] sm:$0xff]
    %v3239 = vld [vmem:[#allocation2 + $0x2c8] sm:$0xff]
    %v3240 = vld [vmem:[#allocation2 + $0x2d0] sm:$0xff]
    %v3241 = vld [vmem:[#allocation2 + $0x2d8] sm:$0xff]
    %v3242 = vld [vmem:[#allocation2 + $0x2e0] sm:$0xff]
    %v3243 = vld [vmem:[#allocation2 + $0x2e8] sm:$0xff]
    %v3244 = vld [vmem:[#allocation2 + $0x2f0] sm:$0xff]
    %v3245 = vld [vmem:[#allocation2 + $0x2f8] sm:$0xff]
    %v3246 = vld [vmem:[#allocation2 + $0x300] sm:$0xff]
    %v3247 = vld [vmem:[#allocation2 + $0x308] sm:$0xff]
    %v3248 = vld [vmem:[#allocation2 + $0x310] sm:$0xff]
    %v3249 = vld [vmem:[#allocation2 + $0x318] sm:$0xff]
    %v3250 = vld [vmem:[#allocation2 + $0x320] sm:$0xff]
    %v3251 = vld [vmem:[#allocation2 + $0x328] sm:$0xff]
    %v3252 = vld [vmem:[#allocation2 + $0x330] sm:$0xff]
    %v3253 = vld [vmem:[#allocation2 + $0x338] sm:$0xff]
    %v3254 = vld [vmem:[#allocation2 + $0x340] sm:$0xff]
    %v3255 = vld [vmem:[#allocation2 + $0x348] sm:$0xff]
    %v3256 = vld [vmem:[#allocation2 + $0x350] sm:$0xff]
    %v3257 = vld [vmem:[#allocation2 + $0x358] sm:$0xff]
    %v3258 = vld [vmem:[#allocation2 + $0x360] sm:$0xff]
    %v3259 = vld [vmem:[#allocation2 + $0x368] sm:$0xff]
    %v3260 = vld [vmem:[#allocation2 + $0x370] sm:$0xff]
    %v3261 = vld [vmem:[#allocation2 + $0x378] sm:$0xff]
    %v3262 = vld [vmem:[#allocation2 + $0x380] sm:$0xff]
    %v3263 = vld [vmem:[#allocation2 + $0x388] sm:$0xff]
    %v3264 = vld [vmem:[#allocation2 + $0x390] sm:$0xff]
    %v3265 = vld [vmem:[#allocation2 + $0x398] sm:$0xff]
    %v3266 = vld [vmem:[#allocation2 + $0x3a0] sm:$0xff]
    %v3267 = vld [vmem:[#allocation2 + $0x3a8] sm:$0xff]
    %v3268 = vld [vmem:[#allocation2 + $0x3b0] sm:$0xff]
    %v3269 = vld [vmem:[#allocation2 + $0x3b8] sm:$0xff]
    %v3270 = vld [vmem:[#allocation2 + $0x3c0] sm:$0xff]
    %v3271 = vld [vmem:[#allocation2 + $0x3c8] sm:$0xff]
    %v3272 = vld [vmem:[#allocation2 + $0x3d0] sm:$0xff]
    %v3273 = vld [vmem:[#allocation2 + $0x3d8] sm:$0xff]
    %v3274 = vld [vmem:[#allocation2 + $0x3e0] sm:$0xff]
    %v3275 = vld [vmem:[#allocation2 + $0x3e8] sm:$0xff]
    %v3276 = vld [vmem:[#allocation2 + $0x3f0] sm:$0xff]
    %v3277 = vld [vmem:[#allocation2 + $0x3f8] sm:$0xff]
    %v3278 = vld [vmem:[#allocation2 + $0x400] sm:$0xff]
    %v3279 = vld [vmem:[#allocation2 + $0x408] sm:$0xff]
    %v3280 = vld [vmem:[#allocation2 + $0x410] sm:$0xff]
    %v3281 = vld [vmem:[#allocation2 + $0x418] sm:$0xff]
    %v3282 = vld [vmem:[#allocation2 + $0x420] sm:$0xff]
    %v3283 = vld [vmem:[#allocation2 + $0x428] sm:$0xff]
    %v3284 = vld [vmem:[#allocation2 + $0x430] sm:$0xff]
    %v3285 = vld [vmem:[#allocation2 + $0x438] sm:$0xff]
    %v3286 = vld [vmem:[#allocation2 + $0x440] sm:$0xff]
    %v3287 = vld [vmem:[#allocation2 + $0x448] sm:$0xff]
    %v3288 = vld [vmem:[#allocation2 + $0x450] sm:$0xff]
    %v3289 = vld [vmem:[#allocation2 + $0x458] sm:$0xff]
    %v3290 = vld [vmem:[#allocation2 + $0x460] sm:$0xff]
    %v3291 = vld [vmem:[#allocation2 + $0x468] sm:$0xff]
    %v3292 = vld [vmem:[#allocation2 + $0x470] sm:$0xff]
    %v3293 = vld [vmem:[#allocation2 + $0x478] sm:$0xff]
    %v3294 = vld [vmem:[#allocation2 + $0x480] sm:$0xff]
    %v3295 = vld [vmem:[#allocation2 + $0x488] sm:$0xff]
    %v3296 = vld [vmem:[#allocation2 + $0x490] sm:$0xff]
    %v3297 = vld [vmem:[#allocation2 + $0x498] sm:$0xff]
    %v3298 = vld [vmem:[#allocation2 + $0x4a0] sm:$0xff]
    %v3299 = vld [vmem:[#allocation2 + $0x4a8] sm:$0xff]
    %v3300 = vld [vmem:[#allocation2 + $0x4b0] sm:$0xff]
    %v3301 = vld [vmem:[#allocation2 + $0x4b8] sm:$0xff]
    %v3302 = vld [vmem:[#allocation2 + $0x4c0] sm:$0xff]
    %v3303 = vld [vmem:[#allocation2 + $0x4c8] sm:$0xff]
    %v3304 = vld [vmem:[#allocation2 + $0x4d0] sm:$0xff]
    %v3305 = vld [vmem:[#allocation2 + $0x4d8] sm:$0xff]
    %v3306 = vld [vmem:[#allocation2 + $0x4e0] sm:$0xff]
    %v3307 = vld [vmem:[#allocation2 + $0x4e8] sm:$0xff]
    %v3308 = vld [vmem:[#allocation2 + $0x4f0] sm:$0xff]
    %v3309 = vld [vmem:[#allocation2 + $0x4f8] sm:$0xff]
    %v3310 = vld [vmem:[#allocation2 + $0x500] sm:$0xff]
    %v3311 = vld [vmem:[#allocation2 + $0x508] sm:$0xff]
    %v3312 = vld [vmem:[#allocation2 + $0x510] sm:$0xff]
    %v3313 = vld [vmem:[#allocation2 + $0x518] sm:$0xff]
    %v3314 = vld [vmem:[#allocation2 + $0x520] sm:$0xff]
    %v3315 = vld [vmem:[#allocation2 + $0x528] sm:$0xff]
    %v3316 = vld [vmem:[#allocation2 + $0x530] sm:$0xff]
    %v3317 = vld [vmem:[#allocation2 + $0x538] sm:$0xff]
    %v3318 = vld [vmem:[#allocation2 + $0x540] sm:$0xff]
    %v3319 = vld [vmem:[#allocation2 + $0x548] sm:$0xff]
    %v3320 = vld [vmem:[#allocation2 + $0x550] sm:$0xff]
    %v3321 = vld [vmem:[#allocation2 + $0x558] sm:$0xff]
    %v3322 = vld [vmem:[#allocation2 + $0x560] sm:$0xff]
    %v3323 = vld [vmem:[#allocation2 + $0x568] sm:$0xff]
    %v3324 = vld [vmem:[#allocation2 + $0x570] sm:$0xff]
    %v3325 = vld [vmem:[#allocation2 + $0x578] sm:$0xff]
    %v3326 = vld [vmem:[#allocation2 + $0x580] sm:$0xff]
    %v3327 = vld [vmem:[#allocation2 + $0x588] sm:$0xff]
    %v3328 = vld [vmem:[#allocation2 + $0x590] sm:$0xff]
    %v3329 = vld [vmem:[#allocation2 + $0x598] sm:$0xff]
    %v3330 = vld [vmem:[#allocation2 + $0x5a0] sm:$0xff]
    %v3331 = vld [vmem:[#allocation2 + $0x5a8] sm:$0xff]
    %v3332 = vld [vmem:[#allocation2 + $0x5b0] sm:$0xff]
    %v3333 = vld [vmem:[#allocation2 + $0x5b8] sm:$0xff]
    %v3334 = vld [vmem:[#allocation2 + $0x5c0] sm:$0xff]
    %v3335 = vld [vmem:[#allocation2 + $0x5c8] sm:$0xff]
    %v3336 = vld [vmem:[#allocation2 + $0x5d0] sm:$0xff]
    %v3337 = vld [vmem:[#allocation2 + $0x5d8] sm:$0xff]
    %v3338 = vld [vmem:[#allocation2 + $0x5e0] sm:$0xff]
    %v3339 = vld [vmem:[#allocation2 + $0x5e8] sm:$0xff]
    %v3340 = vld [vmem:[#allocation2 + $0x5f0] sm:$0xff]
    %v3341 = vld [vmem:[#allocation2 + $0x5f8] sm:$0xff]
    %v3342 = vld [vmem:[#allocation2 + $0x600] sm:$0xff]
    %v3343 = vld [vmem:[#allocation2 + $0x608] sm:$0xff]
    %v3344 = vld [vmem:[#allocation2 + $0x610] sm:$0xff]
    %v3345 = vld [vmem:[#allocation2 + $0x618] sm:$0xff]
    %v3346 = vld [vmem:[#allocation2 + $0x620] sm:$0xff]
    %v3347 = vld [vmem:[#allocation2 + $0x628] sm:$0xff]
    %v3348 = vld [vmem:[#allocation2 + $0x630] sm:$0xff]
    %v3349 = vld [vmem:[#allocation2 + $0x638] sm:$0xff]
    %v3350 = vld [vmem:[#allocation2 + $0x640] sm:$0xff]
    %v3351 = vld [vmem:[#allocation2 + $0x648] sm:$0xff]
    %v3352 = vld [vmem:[#allocation2 + $0x650] sm:$0xff]
    %v3353 = vld [vmem:[#allocation2 + $0x658] sm:$0xff]
    %v3354 = vld [vmem:[#allocation2 + $0x660] sm:$0xff]
    %v3355 = vld [vmem:[#allocation2 + $0x668] sm:$0xff]
    %v3356 = vld [vmem:[#allocation2 + $0x670] sm:$0xff]
    %v3357 = vld [vmem:[#allocation2 + $0x678] sm:$0xff]
    %v3358 = vld [vmem:[#allocation2 + $0x680] sm:$0xff]
    %v3359 = vld [vmem:[#allocation2 + $0x688] sm:$0xff]
    %v3360 = vld [vmem:[#allocation2 + $0x690] sm:$0xff]
    %v3361 = vld [vmem:[#allocation2 + $0x698] sm:$0xff]
    %v3362 = vld [vmem:[#allocation2 + $0x6a0] sm:$0xff]
    %v3363 = vld [vmem:[#allocation2 + $0x6a8] sm:$0xff]
    %v3364 = vld [vmem:[#allocation2 + $0x6b0] sm:$0xff]
    %v3365 = vld [vmem:[#allocation2 + $0x6b8] sm:$0xff]
    %v3366 = vld [vmem:[#allocation2 + $0x6c0] sm:$0xff]
    %v3367 = vld [vmem:[#allocation2 + $0x6c8] sm:$0xff]
    %v3368 = vld [vmem:[#allocation2 + $0x6d0] sm:$0xff]
    %v3369 = vld [vmem:[#allocation2 + $0x6d8] sm:$0xff]
    %v3370 = vld [vmem:[#allocation2 + $0x6e0] sm:$0xff]
    %v3371 = vld [vmem:[#allocation2 + $0x6e8] sm:$0xff]
    %v3372 = vld [vmem:[#allocation2 + $0x6f0] sm:$0xff]
    %v3373 = vld [vmem:[#allocation2 + $0x6f8] sm:$0xff]
    %v3374 = vld [vmem:[#allocation2 + $0x700] sm:$0xff]
    %v3375 = vld [vmem:[#allocation2 + $0x708] sm:$0xff]
    %v3376 = vld [vmem:[#allocation2 + $0x710] sm:$0xff]
    %v3377 = vld [vmem:[#allocation2 + $0x718] sm:$0xff]
    %v3378 = vld [vmem:[#allocation2 + $0x720] sm:$0xff]
    %v3379 = vld [vmem:[#allocation2 + $0x728] sm:$0xff]
    %v3380 = vld [vmem:[#allocation2 + $0x730] sm:$0xff]
    %v3381 = vld [vmem:[#allocation2 + $0x738] sm:$0xff]
    %v3382 = vld [vmem:[#allocation2 + $0x740] sm:$0xff]
    %v3383 = vld [vmem:[#allocation2 + $0x748] sm:$0xff]
    %v3384 = vld [vmem:[#allocation2 + $0x750] sm:$0xff]
    %v3385 = vld [vmem:[#allocation2 + $0x758] sm:$0xff]
    %v3386 = vld [vmem:[#allocation2 + $0x760] sm:$0xff]
    %v3387 = vld [vmem:[#allocation2 + $0x768] sm:$0xff]
    %v3388 = vld [vmem:[#allocation2 + $0x770] sm:$0xff]
    %v3389 = vld [vmem:[#allocation2 + $0x778] sm:$0xff]
    %v3390 = vld [vmem:[#allocation2 + $0x780] sm:$0xff]
    %v3391 = vld [vmem:[#allocation2 + $0x788] sm:$0xff]
    %v3392 = vld [vmem:[#allocation2 + $0x790] sm:$0xff]
    %v3393 = vld [vmem:[#allocation2 + $0x798] sm:$0xff]
    %v3394 = vld [vmem:[#allocation2 + $0x7a0] sm:$0xff]
    %v3395 = vld [vmem:[#allocation2 + $0x7a8] sm:$0xff]
    %v3396 = vld [vmem:[#allocation2 + $0x7b0] sm:$0xff]
    %v3397 = vld [vmem:[#allocation2 + $0x7b8] sm:$0xff]
    %v3398 = vld [vmem:[#allocation2 + $0x7c0] sm:$0xff]
    %v3399 = vld [vmem:[#allocation2 + $0x7c8] sm:$0xff]
    %v3400 = vld [vmem:[#allocation2 + $0x7d0] sm:$0xff]
    %v3401 = vld [vmem:[#allocation2 + $0x7d8] sm:$0xff]
    %v3402 = vld [vmem:[#allocation2 + $0x7e0] sm:$0xff]
    %v3403 = vld [vmem:[#allocation2 + $0x7e8] sm:$0xff]
    %v3404 = vld [vmem:[#allocation2 + $0x7f0] sm:$0xff]
    %v3405 = vld [vmem:[#allocation2 + $0x7f8] sm:$0xff]
    %v3406 = vld [vmem:[%s8] sm:$0xf]
    %v3408 = vlaneseq
    %v3409 = vshrl.u32 %v3408, 7
    %v3410 = vsub.s32 0, %v3409
    %v3411 = vrot.slane %v3406, %v3410
    %v3412 = vlaneseq
    %v3413 = vshrl.u32 %v3412, 7
    %v3414 = vsub.s32 1, %v3413
    %v3415 = vrot.slane %v3406, %v3414
    %v3416 = vlaneseq
    %v3417 = vshrl.u32 %v3416, 7
    %v3418 = vsub.s32 2, %v3417
    %v3419 = vrot.slane %v3406, %v3418
    %v3420 = vlaneseq
    %v3421 = vshrl.u32 %v3420, 7
    %v3422 = vsub.s32 3, %v3421
    %v3423 = vrot.slane %v3406, %v3422
    %v3684 = vunpack.c.l.b16 %v3150
    %v3685 = vunpack.c.h.b16 %v3150
    %v3686 = vunpack.c.l.b16 %v3151
    %v3687 = vunpack.c.h.b16 %v3151
    %v3688 = vunpack.c.l.b16 %v3152
    %v3689 = vunpack.c.h.b16 %v3152
    %v3690 = vunpack.c.l.b16 %v3153
    %v3691 = vunpack.c.h.b16 %v3153
    %v3692 = vunpack.c.l.b16 %v3154
    %v3693 = vunpack.c.h.b16 %v3154
    %v3694 = vunpack.c.l.b16 %v3155
    %v3695 = vunpack.c.h.b16 %v3155
    %v3696 = vunpack.c.l.b16 %v3156
    %v3697 = vunpack.c.h.b16 %v3156
    %v3698 = vunpack.c.l.b16 %v3157
    %v3699 = vunpack.c.h.b16 %v3157
    %v3700 = vunpack.c.l.b16 %v3158
    %v3701 = vunpack.c.h.b16 %v3158
    %v3702 = vunpack.c.l.b16 %v3159
    %v3703 = vunpack.c.h.b16 %v3159
    %v3704 = vunpack.c.l.b16 %v3160
    %v3705 = vunpack.c.h.b16 %v3160
    %v3706 = vunpack.c.l.b16 %v3161
    %v3707 = vunpack.c.h.b16 %v3161
    %v3708 = vunpack.c.l.b16 %v3162
    %v3709 = vunpack.c.h.b16 %v3162
    %v3710 = vunpack.c.l.b16 %v3163
    %v3711 = vunpack.c.h.b16 %v3163
    %v3712 = vunpack.c.l.b16 %v3164
    %v3713 = vunpack.c.h.b16 %v3164
    %v3714 = vunpack.c.l.b16 %v3165
    %v3715 = vunpack.c.h.b16 %v3165
    %v3716 = vunpack.c.l.b16 %v3166
    %v3717 = vunpack.c.h.b16 %v3166
    %v3718 = vunpack.c.l.b16 %v3167
    %v3719 = vunpack.c.h.b16 %v3167
    %v3720 = vunpack.c.l.b16 %v3168
    %v3721 = vunpack.c.h.b16 %v3168
    %v3722 = vunpack.c.l.b16 %v3169
    %v3723 = vunpack.c.h.b16 %v3169
    %v3724 = vunpack.c.l.b16 %v3170
    %v3725 = vunpack.c.h.b16 %v3170
    %v3726 = vunpack.c.l.b16 %v3171
    %v3727 = vunpack.c.h.b16 %v3171
    %v3728 = vunpack.c.l.b16 %v3172
    %v3729 = vunpack.c.h.b16 %v3172
    %v3730 = vunpack.c.l.b16 %v3173
    %v3731 = vunpack.c.h.b16 %v3173
    %v3732 = vunpack.c.l.b16 %v3174
    %v3733 = vunpack.c.h.b16 %v3174
    %v3734 = vunpack.c.l.b16 %v3175
    %v3735 = vunpack.c.h.b16 %v3175
    %v3736 = vunpack.c.l.b16 %v3176
    %v3737 = vunpack.c.h.b16 %v3176
    %v3738 = vunpack.c.l.b16 %v3177
    %v3739 = vunpack.c.h.b16 %v3177
    %v3740 = vunpack.c.l.b16 %v3178
    %v3741 = vunpack.c.h.b16 %v3178
    %v3742 = vunpack.c.l.b16 %v3179
    %v3743 = vunpack.c.h.b16 %v3179
    %v3744 = vunpack.c.l.b16 %v3180
    %v3745 = vunpack.c.h.b16 %v3180
    %v3746 = vunpack.c.l.b16 %v3181
    %v3747 = vunpack.c.h.b16 %v3181
    %v3748 = vunpack.c.l.b16 %v3182
    %v3749 = vunpack.c.h.b16 %v3182
    %v3750 = vunpack.c.l.b16 %v3183
    %v3751 = vunpack.c.h.b16 %v3183
    %v3752 = vunpack.c.l.b16 %v3184
    %v3753 = vunpack.c.h.b16 %v3184
    %v3754 = vunpack.c.l.b16 %v3185
    %v3755 = vunpack.c.h.b16 %v3185
    %v3756 = vunpack.c.l.b16 %v3186
    %v3757 = vunpack.c.h.b16 %v3186
    %v3758 = vunpack.c.l.b16 %v3187
    %v3759 = vunpack.c.h.b16 %v3187
    %v3760 = vunpack.c.l.b16 %v3188
    %v3761 = vunpack.c.h.b16 %v3188
    %v3762 = vunpack.c.l.b16 %v3189
    %v3763 = vunpack.c.h.b16 %v3189
    %v3764 = vunpack.c.l.b16 %v3190
    %v3765 = vunpack.c.h.b16 %v3190
    %v3766 = vunpack.c.l.b16 %v3191
    %v3767 = vunpack.c.h.b16 %v3191
    %v3768 = vunpack.c.l.b16 %v3192
    %v3769 = vunpack.c.h.b16 %v3192
    %v3770 = vunpack.c.l.b16 %v3193
    %v3771 = vunpack.c.h.b16 %v3193
    %v3772 = vunpack.c.l.b16 %v3194
    %v3773 = vunpack.c.h.b16 %v3194
    %v3774 = vunpack.c.l.b16 %v3195
    %v3775 = vunpack.c.h.b16 %v3195
    %v3776 = vunpack.c.l.b16 %v3196
    %v3777 = vunpack.c.h.b16 %v3196
    %v3778 = vunpack.c.l.b16 %v3197
    %v3779 = vunpack.c.h.b16 %v3197
    %v3780 = vunpack.c.l.b16 %v3198
    %v3781 = vunpack.c.h.b16 %v3198
    %v3782 = vunpack.c.l.b16 %v3199
    %v3783 = vunpack.c.h.b16 %v3199
    %v3784 = vunpack.c.l.b16 %v3200
    %v3785 = vunpack.c.h.b16 %v3200
    %v3786 = vunpack.c.l.b16 %v3201
    %v3787 = vunpack.c.h.b16 %v3201
    %v3788 = vunpack.c.l.b16 %v3202
    %v3789 = vunpack.c.h.b16 %v3202
    %v3790 = vunpack.c.l.b16 %v3203
    %v3791 = vunpack.c.h.b16 %v3203
    %v3792 = vunpack.c.l.b16 %v3204
    %v3793 = vunpack.c.h.b16 %v3204
    %v3794 = vunpack.c.l.b16 %v3205
    %v3795 = vunpack.c.h.b16 %v3205
    %v3796 = vunpack.c.l.b16 %v3206
    %v3797 = vunpack.c.h.b16 %v3206
    %v3798 = vunpack.c.l.b16 %v3207
    %v3799 = vunpack.c.h.b16 %v3207
    %v3800 = vunpack.c.l.b16 %v3208
    %v3801 = vunpack.c.h.b16 %v3208
    %v3802 = vunpack.c.l.b16 %v3209
    %v3803 = vunpack.c.h.b16 %v3209
    %v3804 = vunpack.c.l.b16 %v3210
    %v3805 = vunpack.c.h.b16 %v3210
    %v3806 = vunpack.c.l.b16 %v3211
    %v3807 = vunpack.c.h.b16 %v3211
    %v3808 = vunpack.c.l.b16 %v3212
    %v3809 = vunpack.c.h.b16 %v3212
    %v3810 = vunpack.c.l.b16 %v3213
    %v3811 = vunpack.c.h.b16 %v3213
    %v3812 = vunpack.c.l.b16 %v3214
    %v3813 = vunpack.c.h.b16 %v3214
    %v3814 = vunpack.c.l.b16 %v3215
    %v3815 = vunpack.c.h.b16 %v3215
    %v3816 = vunpack.c.l.b16 %v3216
    %v3817 = vunpack.c.h.b16 %v3216
    %v3818 = vunpack.c.l.b16 %v3217
    %v3819 = vunpack.c.h.b16 %v3217
    %v3820 = vunpack.c.l.b16 %v3218
    %v3821 = vunpack.c.h.b16 %v3218
    %v3822 = vunpack.c.l.b16 %v3219
    %v3823 = vunpack.c.h.b16 %v3219
    %v3824 = vunpack.c.l.b16 %v3220
    %v3825 = vunpack.c.h.b16 %v3220
    %v3826 = vunpack.c.l.b16 %v3221
    %v3827 = vunpack.c.h.b16 %v3221
    %v3828 = vunpack.c.l.b16 %v3222
    %v3829 = vunpack.c.h.b16 %v3222
    %v3830 = vunpack.c.l.b16 %v3223
    %v3831 = vunpack.c.h.b16 %v3223
    %v3832 = vunpack.c.l.b16 %v3224
    %v3833 = vunpack.c.h.b16 %v3224
    %v3834 = vunpack.c.l.b16 %v3225
    %v3835 = vunpack.c.h.b16 %v3225
    %v3836 = vunpack.c.l.b16 %v3226
    %v3837 = vunpack.c.h.b16 %v3226
    %v3838 = vunpack.c.l.b16 %v3227
    %v3839 = vunpack.c.h.b16 %v3227
    %v3840 = vunpack.c.l.b16 %v3228
    %v3841 = vunpack.c.h.b16 %v3228
    %v3842 = vunpack.c.l.b16 %v3229
    %v3843 = vunpack.c.h.b16 %v3229
    %v3844 = vunpack.c.l.b16 %v3230
    %v3845 = vunpack.c.h.b16 %v3230
    %v3846 = vunpack.c.l.b16 %v3231
    %v3847 = vunpack.c.h.b16 %v3231
    %v3848 = vunpack.c.l.b16 %v3232
    %v3849 = vunpack.c.h.b16 %v3232
    %v3850 = vunpack.c.l.b16 %v3233
    %v3851 = vunpack.c.h.b16 %v3233
    %v3852 = vunpack.c.l.b16 %v3234
    %v3853 = vunpack.c.h.b16 %v3234
    %v3854 = vunpack.c.l.b16 %v3235
    %v3855 = vunpack.c.h.b16 %v3235
    %v3856 = vunpack.c.l.b16 %v3236
    %v3857 = vunpack.c.h.b16 %v3236
    %v3858 = vunpack.c.l.b16 %v3237
    %v3859 = vunpack.c.h.b16 %v3237
    %v3860 = vunpack.c.l.b16 %v3238
    %v3861 = vunpack.c.h.b16 %v3238
    %v3862 = vunpack.c.l.b16 %v3239
    %v3863 = vunpack.c.h.b16 %v3239
    %v3864 = vunpack.c.l.b16 %v3240
    %v3865 = vunpack.c.h.b16 %v3240
    %v3866 = vunpack.c.l.b16 %v3241
    %v3867 = vunpack.c.h.b16 %v3241
    %v3868 = vunpack.c.l.b16 %v3242
    %v3869 = vunpack.c.h.b16 %v3242
    %v3870 = vunpack.c.l.b16 %v3243
    %v3871 = vunpack.c.h.b16 %v3243
    %v3872 = vunpack.c.l.b16 %v3244
    %v3873 = vunpack.c.h.b16 %v3244
    %v3874 = vunpack.c.l.b16 %v3245
    %v3875 = vunpack.c.h.b16 %v3245
    %v3876 = vunpack.c.l.b16 %v3246
    %v3877 = vunpack.c.h.b16 %v3246
    %v3878 = vunpack.c.l.b16 %v3247
    %v3879 = vunpack.c.h.b16 %v3247
    %v3880 = vunpack.c.l.b16 %v3248
    %v3881 = vunpack.c.h.b16 %v3248
    %v3882 = vunpack.c.l.b16 %v3249
    %v3883 = vunpack.c.h.b16 %v3249
    %v3884 = vunpack.c.l.b16 %v3250
    %v3885 = vunpack.c.h.b16 %v3250
    %v3886 = vunpack.c.l.b16 %v3251
    %v3887 = vunpack.c.h.b16 %v3251
    %v3888 = vunpack.c.l.b16 %v3252
    %v3889 = vunpack.c.h.b16 %v3252
    %v3890 = vunpack.c.l.b16 %v3253
    %v3891 = vunpack.c.h.b16 %v3253
    %v3892 = vunpack.c.l.b16 %v3254
    %v3893 = vunpack.c.h.b16 %v3254
    %v3894 = vunpack.c.l.b16 %v3255
    %v3895 = vunpack.c.h.b16 %v3255
    %v3896 = vunpack.c.l.b16 %v3256
    %v3897 = vunpack.c.h.b16 %v3256
    %v3898 = vunpack.c.l.b16 %v3257
    %v3899 = vunpack.c.h.b16 %v3257
    %v3900 = vunpack.c.l.b16 %v3258
    %v3901 = vunpack.c.h.b16 %v3258
    %v3902 = vunpack.c.l.b16 %v3259
    %v3903 = vunpack.c.h.b16 %v3259
    %v3904 = vunpack.c.l.b16 %v3260
    %v3905 = vunpack.c.h.b16 %v3260
    %v3906 = vunpack.c.l.b16 %v3261
    %v3907 = vunpack.c.h.b16 %v3261
    %v3908 = vunpack.c.l.b16 %v3262
    %v3909 = vunpack.c.h.b16 %v3262
    %v3910 = vunpack.c.l.b16 %v3263
    %v3911 = vunpack.c.h.b16 %v3263
    %v3912 = vunpack.c.l.b16 %v3264
    %v3913 = vunpack.c.h.b16 %v3264
    %v3914 = vunpack.c.l.b16 %v3265
    %v3915 = vunpack.c.h.b16 %v3265
    %v3916 = vunpack.c.l.b16 %v3266
    %v3917 = vunpack.c.h.b16 %v3266
    %v3918 = vunpack.c.l.b16 %v3267
    %v3919 = vunpack.c.h.b16 %v3267
    %v3920 = vunpack.c.l.b16 %v3268
    %v3921 = vunpack.c.h.b16 %v3268
    %v3922 = vunpack.c.l.b16 %v3269
    %v3923 = vunpack.c.h.b16 %v3269
    %v3924 = vunpack.c.l.b16 %v3270
    %v3925 = vunpack.c.h.b16 %v3270
    %v3926 = vunpack.c.l.b16 %v3271
    %v3927 = vunpack.c.h.b16 %v3271
    %v3928 = vunpack.c.l.b16 %v3272
    %v3929 = vunpack.c.h.b16 %v3272
    %v3930 = vunpack.c.l.b16 %v3273
    %v3931 = vunpack.c.h.b16 %v3273
    %v3932 = vunpack.c.l.b16 %v3274
    %v3933 = vunpack.c.h.b16 %v3274
    %v3934 = vunpack.c.l.b16 %v3275
    %v3935 = vunpack.c.h.b16 %v3275
    %v3936 = vunpack.c.l.b16 %v3276
    %v3937 = vunpack.c.h.b16 %v3276
    %v3938 = vunpack.c.l.b16 %v3277
    %v3939 = vunpack.c.h.b16 %v3277
    %v3940 = vunpack.c.l.b16 %v3278
    %v3941 = vunpack.c.h.b16 %v3278
    %v3942 = vunpack.c.l.b16 %v3279
    %v3943 = vunpack.c.h.b16 %v3279
    %v3944 = vunpack.c.l.b16 %v3280
    %v3945 = vunpack.c.h.b16 %v3280
    %v3946 = vunpack.c.l.b16 %v3281
    %v3947 = vunpack.c.h.b16 %v3281
    %v3948 = vunpack.c.l.b16 %v3282
    %v3949 = vunpack.c.h.b16 %v3282
    %v3950 = vunpack.c.l.b16 %v3283
    %v3951 = vunpack.c.h.b16 %v3283
    %v3952 = vunpack.c.l.b16 %v3284
    %v3953 = vunpack.c.h.b16 %v3284
    %v3954 = vunpack.c.l.b16 %v3285
    %v3955 = vunpack.c.h.b16 %v3285
    %v3956 = vunpack.c.l.b16 %v3286
    %v3957 = vunpack.c.h.b16 %v3286
    %v3958 = vunpack.c.l.b16 %v3287
    %v3959 = vunpack.c.h.b16 %v3287
    %v3960 = vunpack.c.l.b16 %v3288
    %v3961 = vunpack.c.h.b16 %v3288
    %v3962 = vunpack.c.l.b16 %v3289
    %v3963 = vunpack.c.h.b16 %v3289
    %v3964 = vunpack.c.l.b16 %v3290
    %v3965 = vunpack.c.h.b16 %v3290
    %v3966 = vunpack.c.l.b16 %v3291
    %v3967 = vunpack.c.h.b16 %v3291
    %v3968 = vunpack.c.l.b16 %v3292
    %v3969 = vunpack.c.h.b16 %v3292
    %v3970 = vunpack.c.l.b16 %v3293
    %v3971 = vunpack.c.h.b16 %v3293
    %v3972 = vunpack.c.l.b16 %v3294
    %v3973 = vunpack.c.h.b16 %v3294
    %v3974 = vunpack.c.l.b16 %v3295
    %v3975 = vunpack.c.h.b16 %v3295
    %v3976 = vunpack.c.l.b16 %v3296
    %v3977 = vunpack.c.h.b16 %v3296
    %v3978 = vunpack.c.l.b16 %v3297
    %v3979 = vunpack.c.h.b16 %v3297
    %v3980 = vunpack.c.l.b16 %v3298
    %v3981 = vunpack.c.h.b16 %v3298
    %v3982 = vunpack.c.l.b16 %v3299
    %v3983 = vunpack.c.h.b16 %v3299
    %v3984 = vunpack.c.l.b16 %v3300
    %v3985 = vunpack.c.h.b16 %v3300
    %v3986 = vunpack.c.l.b16 %v3301
    %v3987 = vunpack.c.h.b16 %v3301
    %v3988 = vunpack.c.l.b16 %v3302
    %v3989 = vunpack.c.h.b16 %v3302
    %v3990 = vunpack.c.l.b16 %v3303
    %v3991 = vunpack.c.h.b16 %v3303
    %v3992 = vunpack.c.l.b16 %v3304
    %v3993 = vunpack.c.h.b16 %v3304
    %v3994 = vunpack.c.l.b16 %v3305
    %v3995 = vunpack.c.h.b16 %v3305
    %v3996 = vunpack.c.l.b16 %v3306
    %v3997 = vunpack.c.h.b16 %v3306
    %v3998 = vunpack.c.l.b16 %v3307
    %v3999 = vunpack.c.h.b16 %v3307
    %v4000 = vunpack.c.l.b16 %v3308
    %v4001 = vunpack.c.h.b16 %v3308
    %v4002 = vunpack.c.l.b16 %v3309
    %v4003 = vunpack.c.h.b16 %v3309
    %v4004 = vunpack.c.l.b16 %v3310
    %v4005 = vunpack.c.h.b16 %v3310
    %v4006 = vunpack.c.l.b16 %v3311
    %v4007 = vunpack.c.h.b16 %v3311
    %v4008 = vunpack.c.l.b16 %v3312
    %v4009 = vunpack.c.h.b16 %v3312
    %v4010 = vunpack.c.l.b16 %v3313
    %v4011 = vunpack.c.h.b16 %v3313
    %v4012 = vunpack.c.l.b16 %v3314
    %v4013 = vunpack.c.h.b16 %v3314
    %v4014 = vunpack.c.l.b16 %v3315
    %v4015 = vunpack.c.h.b16 %v3315
    %v4016 = vunpack.c.l.b16 %v3316
    %v4017 = vunpack.c.h.b16 %v3316
    %v4018 = vunpack.c.l.b16 %v3317
    %v4019 = vunpack.c.h.b16 %v3317
    %v4020 = vunpack.c.l.b16 %v3318
    %v4021 = vunpack.c.h.b16 %v3318
    %v4022 = vunpack.c.l.b16 %v3319
    %v4023 = vunpack.c.h.b16 %v3319
    %v4024 = vunpack.c.l.b16 %v3320
    %v4025 = vunpack.c.h.b16 %v3320
    %v4026 = vunpack.c.l.b16 %v3321
    %v4027 = vunpack.c.h.b16 %v3321
    %v4028 = vunpack.c.l.b16 %v3322
    %v4029 = vunpack.c.h.b16 %v3322
    %v4030 = vunpack.c.l.b16 %v3323
    %v4031 = vunpack.c.h.b16 %v3323
    %v4032 = vunpack.c.l.b16 %v3324
    %v4033 = vunpack.c.h.b16 %v3324
    %v4034 = vunpack.c.l.b16 %v3325
    %v4035 = vunpack.c.h.b16 %v3325
    %v4036 = vunpack.c.l.b16 %v3326
    %v4037 = vunpack.c.h.b16 %v3326
    %v4038 = vunpack.c.l.b16 %v3327
    %v4039 = vunpack.c.h.b16 %v3327
    %v4040 = vunpack.c.l.b16 %v3328
    %v4041 = vunpack.c.h.b16 %v3328
    %v4042 = vunpack.c.l.b16 %v3329
    %v4043 = vunpack.c.h.b16 %v3329
    %v4044 = vunpack.c.l.b16 %v3330
    %v4045 = vunpack.c.h.b16 %v3330
    %v4046 = vunpack.c.l.b16 %v3331
    %v4047 = vunpack.c.h.b16 %v3331
    %v4048 = vunpack.c.l.b16 %v3332
    %v4049 = vunpack.c.h.b16 %v3332
    %v4050 = vunpack.c.l.b16 %v3333
    %v4051 = vunpack.c.h.b16 %v3333
    %v4052 = vunpack.c.l.b16 %v3334
    %v4053 = vunpack.c.h.b16 %v3334
    %v4054 = vunpack.c.l.b16 %v3335
    %v4055 = vunpack.c.h.b16 %v3335
    %v4056 = vunpack.c.l.b16 %v3336
    %v4057 = vunpack.c.h.b16 %v3336
    %v4058 = vunpack.c.l.b16 %v3337
    %v4059 = vunpack.c.h.b16 %v3337
    %v4060 = vunpack.c.l.b16 %v3338
    %v4061 = vunpack.c.h.b16 %v3338
    %v4062 = vunpack.c.l.b16 %v3339
    %v4063 = vunpack.c.h.b16 %v3339
    %v4064 = vunpack.c.l.b16 %v3340
    %v4065 = vunpack.c.h.b16 %v3340
    %v4066 = vunpack.c.l.b16 %v3341
    %v4067 = vunpack.c.h.b16 %v3341
    %v4068 = vunpack.c.l.b16 %v3342
    %v4069 = vunpack.c.h.b16 %v3342
    %v4070 = vunpack.c.l.b16 %v3343
    %v4071 = vunpack.c.h.b16 %v3343
    %v4072 = vunpack.c.l.b16 %v3344
    %v4073 = vunpack.c.h.b16 %v3344
    %v4074 = vunpack.c.l.b16 %v3345
    %v4075 = vunpack.c.h.b16 %v3345
    %v4076 = vunpack.c.l.b16 %v3346
    %v4077 = vunpack.c.h.b16 %v3346
    %v4078 = vunpack.c.l.b16 %v3347
    %v4079 = vunpack.c.h.b16 %v3347
    %v4080 = vunpack.c.l.b16 %v3348
    %v4081 = vunpack.c.h.b16 %v3348
    %v4082 = vunpack.c.l.b16 %v3349
    %v4083 = vunpack.c.h.b16 %v3349
    %v4084 = vunpack.c.l.b16 %v3350
    %v4085 = vunpack.c.h.b16 %v3350
    %v4086 = vunpack.c.l.b16 %v3351
    %v4087 = vunpack.c.h.b16 %v3351
    %v4088 = vunpack.c.l.b16 %v3352
    %v4089 = vunpack.c.h.b16 %v3352
    %v4090 = vunpack.c.l.b16 %v3353
    %v4091 = vunpack.c.h.b16 %v3353
    %v4092 = vunpack.c.l.b16 %v3354
    %v4093 = vunpack.c.h.b16 %v3354
    %v4094 = vunpack.c.l.b16 %v3355
    %v4095 = vunpack.c.h.b16 %v3355
    %v4096 = vunpack.c.l.b16 %v3356
    %v4097 = vunpack.c.h.b16 %v3356
    %v4098 = vunpack.c.l.b16 %v3357
    %v4099 = vunpack.c.h.b16 %v3357
    %v4100 = vunpack.c.l.b16 %v3358
    %v4101 = vunpack.c.h.b16 %v3358
    %v4102 = vunpack.c.l.b16 %v3359
    %v4103 = vunpack.c.h.b16 %v3359
    %v4104 = vunpack.c.l.b16 %v3360
    %v4105 = vunpack.c.h.b16 %v3360
    %v4106 = vunpack.c.l.b16 %v3361
    %v4107 = vunpack.c.h.b16 %v3361
    %v4108 = vunpack.c.l.b16 %v3362
    %v4109 = vunpack.c.h.b16 %v3362
    %v4110 = vunpack.c.l.b16 %v3363
    %v4111 = vunpack.c.h.b16 %v3363
    %v4112 = vunpack.c.l.b16 %v3364
    %v4113 = vunpack.c.h.b16 %v3364
    %v4114 = vunpack.c.l.b16 %v3365
    %v4115 = vunpack.c.h.b16 %v3365
    %v4116 = vunpack.c.l.b16 %v3366
    %v4117 = vunpack.c.h.b16 %v3366
    %v4118 = vunpack.c.l.b16 %v3367
    %v4119 = vunpack.c.h.b16 %v3367
    %v4120 = vunpack.c.l.b16 %v3368
    %v4121 = vunpack.c.h.b16 %v3368
    %v4122 = vunpack.c.l.b16 %v3369
    %v4123 = vunpack.c.h.b16 %v3369
    %v4124 = vunpack.c.l.b16 %v3370
    %v4125 = vunpack.c.h.b16 %v3370
    %v4126 = vunpack.c.l.b16 %v3371
    %v4127 = vunpack.c.h.b16 %v3371
    %v4128 = vunpack.c.l.b16 %v3372
    %v4129 = vunpack.c.h.b16 %v3372
    %v4130 = vunpack.c.l.b16 %v3373
    %v4131 = vunpack.c.h.b16 %v3373
    %v4132 = vunpack.c.l.b16 %v3374
    %v4133 = vunpack.c.h.b16 %v3374
    %v4134 = vunpack.c.l.b16 %v3375
    %v4135 = vunpack.c.h.b16 %v3375
    %v4136 = vunpack.c.l.b16 %v3376
    %v4137 = vunpack.c.h.b16 %v3376
    %v4138 = vunpack.c.l.b16 %v3377
    %v4139 = vunpack.c.h.b16 %v3377
    %v4140 = vunpack.c.l.b16 %v3378
    %v4141 = vunpack.c.h.b16 %v3378
    %v4142 = vunpack.c.l.b16 %v3379
    %v4143 = vunpack.c.h.b16 %v3379
    %v4144 = vunpack.c.l.b16 %v3380
    %v4145 = vunpack.c.h.b16 %v3380
    %v4146 = vunpack.c.l.b16 %v3381
    %v4147 = vunpack.c.h.b16 %v3381
    %v4148 = vunpack.c.l.b16 %v3382
    %v4149 = vunpack.c.h.b16 %v3382
    %v4150 = vunpack.c.l.b16 %v3383
    %v4151 = vunpack.c.h.b16 %v3383
    %v4152 = vunpack.c.l.b16 %v3384
    %v4153 = vunpack.c.h.b16 %v3384
    %v4154 = vunpack.c.l.b16 %v3385
    %v4155 = vunpack.c.h.b16 %v3385
    %v4156 = vunpack.c.l.b16 %v3386
    %v4157 = vunpack.c.h.b16 %v3386
    %v4158 = vunpack.c.l.b16 %v3387
    %v4159 = vunpack.c.h.b16 %v3387
    %v4160 = vunpack.c.l.b16 %v3388
    %v4161 = vunpack.c.h.b16 %v3388
    %v4162 = vunpack.c.l.b16 %v3389
    %v4163 = vunpack.c.h.b16 %v3389
    %v4164 = vunpack.c.l.b16 %v3390
    %v4165 = vunpack.c.h.b16 %v3390
    %v4166 = vunpack.c.l.b16 %v3391
    %v4167 = vunpack.c.h.b16 %v3391
    %v4168 = vunpack.c.l.b16 %v3392
    %v4169 = vunpack.c.h.b16 %v3392
    %v4170 = vunpack.c.l.b16 %v3393
    %v4171 = vunpack.c.h.b16 %v3393
    %v4172 = vunpack.c.l.b16 %v3394
    %v4173 = vunpack.c.h.b16 %v3394
    %v4174 = vunpack.c.l.b16 %v3395
    %v4175 = vunpack.c.h.b16 %v3395
    %v4176 = vunpack.c.l.b16 %v3396
    %v4177 = vunpack.c.h.b16 %v3396
    %v4178 = vunpack.c.l.b16 %v3397
    %v4179 = vunpack.c.h.b16 %v3397
    %v4180 = vunpack.c.l.b16 %v3398
    %v4181 = vunpack.c.h.b16 %v3398
    %v4182 = vunpack.c.l.b16 %v3399
    %v4183 = vunpack.c.h.b16 %v3399
    %v4184 = vunpack.c.l.b16 %v3400
    %v4185 = vunpack.c.h.b16 %v3400
    %v4186 = vunpack.c.l.b16 %v3401
    %v4187 = vunpack.c.h.b16 %v3401
    %v4188 = vunpack.c.l.b16 %v3402
    %v4189 = vunpack.c.h.b16 %v3402
    %v4190 = vunpack.c.l.b16 %v3403
    %v4191 = vunpack.c.h.b16 %v3403
    %v4192 = vunpack.c.l.b16 %v3404
    %v4193 = vunpack.c.h.b16 %v3404
    %v4194 = vunpack.c.l.b16 %v3405
    %v4195 = vunpack.c.h.b16 %v3405
    %v4196 = vpack.c.b16 %v3688, %v3684
    %v4197 = vpack.c.b16 %v3689, %v3685
    %v4198 = vpack.c.b16 %v3690, %v3686
    %v4199 = vpack.c.b16 %v3691, %v3687
    %v4200 = vpack.c.b16 %v3696, %v3692
    %v4201 = vpack.c.b16 %v3697, %v3693
    %v4202 = vpack.c.b16 %v3698, %v3694
    %v4203 = vpack.c.b16 %v3699, %v3695
    %v4204 = vpack.c.b16 %v3704, %v3700
    %v4205 = vpack.c.b16 %v3705, %v3701
    %v4206 = vpack.c.b16 %v3706, %v3702
    %v4207 = vpack.c.b16 %v3707, %v3703
    %v4208 = vpack.c.b16 %v3712, %v3708
    %v4209 = vpack.c.b16 %v3713, %v3709
    %v4210 = vpack.c.b16 %v3714, %v3710
    %v4211 = vpack.c.b16 %v3715, %v3711
    %v4212 = vpack.c.b16 %v3720, %v3716
    %v4213 = vpack.c.b16 %v3721, %v3717
    %v4214 = vpack.c.b16 %v3722, %v3718
    %v4215 = vpack.c.b16 %v3723, %v3719
    %v4216 = vpack.c.b16 %v3728, %v3724
    %v4217 = vpack.c.b16 %v3729, %v3725
    %v4218 = vpack.c.b16 %v3730, %v3726
    %v4219 = vpack.c.b16 %v3731, %v3727
    %v4220 = vpack.c.b16 %v3736, %v3732
    %v4221 = vpack.c.b16 %v3737, %v3733
    %v4222 = vpack.c.b16 %v3738, %v3734
    %v4223 = vpack.c.b16 %v3739, %v3735
    %v4224 = vpack.c.b16 %v3744, %v3740
    %v4225 = vpack.c.b16 %v3745, %v3741
    %v4226 = vpack.c.b16 %v3746, %v3742
    %v4227 = vpack.c.b16 %v3747, %v3743
    %v4228 = vpack.c.b16 %v3752, %v3748
    %v4229 = vpack.c.b16 %v3753, %v3749
    %v4230 = vpack.c.b16 %v3754, %v3750
    %v4231 = vpack.c.b16 %v3755, %v3751
    %v4232 = vpack.c.b16 %v3760, %v3756
    %v4233 = vpack.c.b16 %v3761, %v3757
    %v4234 = vpack.c.b16 %v3762, %v3758
    %v4235 = vpack.c.b16 %v3763, %v3759
    %v4236 = vpack.c.b16 %v3768, %v3764
    %v4237 = vpack.c.b16 %v3769, %v3765
    %v4238 = vpack.c.b16 %v3770, %v3766
    %v4239 = vpack.c.b16 %v3771, %v3767
    %v4240 = vpack.c.b16 %v3776, %v3772
    %v4241 = vpack.c.b16 %v3777, %v3773
    %v4242 = vpack.c.b16 %v3778, %v3774
    %v4243 = vpack.c.b16 %v3779, %v3775
    %v4244 = vpack.c.b16 %v3784, %v3780
    %v4245 = vpack.c.b16 %v3785, %v3781
    %v4246 = vpack.c.b16 %v3786, %v3782
    %v4247 = vpack.c.b16 %v3787, %v3783
    %v4248 = vpack.c.b16 %v3792, %v3788
    %v4249 = vpack.c.b16 %v3793, %v3789
    %v4250 = vpack.c.b16 %v3794, %v3790
    %v4251 = vpack.c.b16 %v3795, %v3791
    %v4252 = vpack.c.b16 %v3800, %v3796
    %v4253 = vpack.c.b16 %v3801, %v3797
    %v4254 = vpack.c.b16 %v3802, %v3798
    %v4255 = vpack.c.b16 %v3803, %v3799
    %v4256 = vpack.c.b16 %v3808, %v3804
    %v4257 = vpack.c.b16 %v3809, %v3805
    %v4258 = vpack.c.b16 %v3810, %v3806
    %v4259 = vpack.c.b16 %v3811, %v3807
    %v4260 = vpack.c.b16 %v3816, %v3812
    %v4261 = vpack.c.b16 %v3817, %v3813
    %v4262 = vpack.c.b16 %v3818, %v3814
    %v4263 = vpack.c.b16 %v3819, %v3815
    %v4264 = vpack.c.b16 %v3824, %v3820
    %v4265 = vpack.c.b16 %v3825, %v3821
    %v4266 = vpack.c.b16 %v3826, %v3822
    %v4267 = vpack.c.b16 %v3827, %v3823
    %v4268 = vpack.c.b16 %v3832, %v3828
    %v4269 = vpack.c.b16 %v3833, %v3829
    %v4270 = vpack.c.b16 %v3834, %v3830
    %v4271 = vpack.c.b16 %v3835, %v3831
    %v4272 = vpack.c.b16 %v3840, %v3836
    %v4273 = vpack.c.b16 %v3841, %v3837
    %v4274 = vpack.c.b16 %v3842, %v3838
    %v4275 = vpack.c.b16 %v3843, %v3839
    %v4276 = vpack.c.b16 %v3848, %v3844
    %v4277 = vpack.c.b16 %v3849, %v3845
    %v4278 = vpack.c.b16 %v3850, %v3846
    %v4279 = vpack.c.b16 %v3851, %v3847
    %v4280 = vpack.c.b16 %v3856, %v3852
    %v4281 = vpack.c.b16 %v3857, %v3853
    %v4282 = vpack.c.b16 %v3858, %v3854
    %v4283 = vpack.c.b16 %v3859, %v3855
    %v4284 = vpack.c.b16 %v3864, %v3860
    %v4285 = vpack.c.b16 %v3865, %v3861
    %v4286 = vpack.c.b16 %v3866, %v3862
    %v4287 = vpack.c.b16 %v3867, %v3863
    %v4288 = vpack.c.b16 %v3872, %v3868
    %v4289 = vpack.c.b16 %v3873, %v3869
    %v4290 = vpack.c.b16 %v3874, %v3870
    %v4291 = vpack.c.b16 %v3875, %v3871
    %v4292 = vpack.c.b16 %v3880, %v3876
    %v4293 = vpack.c.b16 %v3881, %v3877
    %v4294 = vpack.c.b16 %v3882, %v3878
    %v4295 = vpack.c.b16 %v3883, %v3879
    %v4296 = vpack.c.b16 %v3888, %v3884
    %v4297 = vpack.c.b16 %v3889, %v3885
    %v4298 = vpack.c.b16 %v3890, %v3886
    %v4299 = vpack.c.b16 %v3891, %v3887
    %v4300 = vpack.c.b16 %v3896, %v3892
    %v4301 = vpack.c.b16 %v3897, %v3893
    %v4302 = vpack.c.b16 %v3898, %v3894
    %v4303 = vpack.c.b16 %v3899, %v3895
    %v4304 = vpack.c.b16 %v3904, %v3900
    %v4305 = vpack.c.b16 %v3905, %v3901
    %v4306 = vpack.c.b16 %v3906, %v3902
    %v4307 = vpack.c.b16 %v3907, %v3903
    %v4308 = vpack.c.b16 %v3912, %v3908
    %v4309 = vpack.c.b16 %v3913, %v3909
    %v4310 = vpack.c.b16 %v3914, %v3910
    %v4311 = vpack.c.b16 %v3915, %v3911
    %v4312 = vpack.c.b16 %v3920, %v3916
    %v4313 = vpack.c.b16 %v3921, %v3917
    %v4314 = vpack.c.b16 %v3922, %v3918
    %v4315 = vpack.c.b16 %v3923, %v3919
    %v4316 = vpack.c.b16 %v3928, %v3924
    %v4317 = vpack.c.b16 %v3929, %v3925
    %v4318 = vpack.c.b16 %v3930, %v3926
    %v4319 = vpack.c.b16 %v3931, %v3927
    %v4320 = vpack.c.b16 %v3936, %v3932
    %v4321 = vpack.c.b16 %v3937, %v3933
    %v4322 = vpack.c.b16 %v3938, %v3934
    %v4323 = vpack.c.b16 %v3939, %v3935
    %v4324 = vpack.c.b16 %v3944, %v3940
    %v4325 = vpack.c.b16 %v3945, %v3941
    %v4326 = vpack.c.b16 %v3946, %v3942
    %v4327 = vpack.c.b16 %v3947, %v3943
    %v4328 = vpack.c.b16 %v3952, %v3948
    %v4329 = vpack.c.b16 %v3953, %v3949
    %v4330 = vpack.c.b16 %v3954, %v3950
    %v4331 = vpack.c.b16 %v3955, %v3951
    %v4332 = vpack.c.b16 %v3960, %v3956
    %v4333 = vpack.c.b16 %v3961, %v3957
    %v4334 = vpack.c.b16 %v3962, %v3958
    %v4335 = vpack.c.b16 %v3963, %v3959
    %v4336 = vpack.c.b16 %v3968, %v3964
    %v4337 = vpack.c.b16 %v3969, %v3965
    %v4338 = vpack.c.b16 %v3970, %v3966
    %v4339 = vpack.c.b16 %v3971, %v3967
    %v4340 = vpack.c.b16 %v3976, %v3972
    %v4341 = vpack.c.b16 %v3977, %v3973
    %v4342 = vpack.c.b16 %v3978, %v3974
    %v4343 = vpack.c.b16 %v3979, %v3975
    %v4344 = vpack.c.b16 %v3984, %v3980
    %v4345 = vpack.c.b16 %v3985, %v3981
    %v4346 = vpack.c.b16 %v3986, %v3982
    %v4347 = vpack.c.b16 %v3987, %v3983
    %v4348 = vpack.c.b16 %v3992, %v3988
    %v4349 = vpack.c.b16 %v3993, %v3989
    %v4350 = vpack.c.b16 %v3994, %v3990
    %v4351 = vpack.c.b16 %v3995, %v3991
    %v4352 = vpack.c.b16 %v4000, %v3996
    %v4353 = vpack.c.b16 %v4001, %v3997
    %v4354 = vpack.c.b16 %v4002, %v3998
    %v4355 = vpack.c.b16 %v4003, %v3999
    %v4356 = vpack.c.b16 %v4008, %v4004
    %v4357 = vpack.c.b16 %v4009, %v4005
    %v4358 = vpack.c.b16 %v4010, %v4006
    %v4359 = vpack.c.b16 %v4011, %v4007
    %v4360 = vpack.c.b16 %v4016, %v4012
    %v4361 = vpack.c.b16 %v4017, %v4013
    %v4362 = vpack.c.b16 %v4018, %v4014
    %v4363 = vpack.c.b16 %v4019, %v4015
    %v4364 = vpack.c.b16 %v4024, %v4020
    %v4365 = vpack.c.b16 %v4025, %v4021
    %v4366 = vpack.c.b16 %v4026, %v4022
    %v4367 = vpack.c.b16 %v4027, %v4023
    %v4368 = vpack.c.b16 %v4032, %v4028
    %v4369 = vpack.c.b16 %v4033, %v4029
    %v4370 = vpack.c.b16 %v4034, %v4030
    %v4371 = vpack.c.b16 %v4035, %v4031
    %v4372 = vpack.c.b16 %v4040, %v4036
    %v4373 = vpack.c.b16 %v4041, %v4037
    %v4374 = vpack.c.b16 %v4042, %v4038
    %v4375 = vpack.c.b16 %v4043, %v4039
    %v4376 = vpack.c.b16 %v4048, %v4044
    %v4377 = vpack.c.b16 %v4049, %v4045
    %v4378 = vpack.c.b16 %v4050, %v4046
    %v4379 = vpack.c.b16 %v4051, %v4047
    %v4380 = vpack.c.b16 %v4056, %v4052
    %v4381 = vpack.c.b16 %v4057, %v4053
    %v4382 = vpack.c.b16 %v4058, %v4054
    %v4383 = vpack.c.b16 %v4059, %v4055
    %v4384 = vpack.c.b16 %v4064, %v4060
    %v4385 = vpack.c.b16 %v4065, %v4061
    %v4386 = vpack.c.b16 %v4066, %v4062
    %v4387 = vpack.c.b16 %v4067, %v4063
    %v4388 = vpack.c.b16 %v4072, %v4068
    %v4389 = vpack.c.b16 %v4073, %v4069
    %v4390 = vpack.c.b16 %v4074, %v4070
    %v4391 = vpack.c.b16 %v4075, %v4071
    %v4392 = vpack.c.b16 %v4080, %v4076
    %v4393 = vpack.c.b16 %v4081, %v4077
    %v4394 = vpack.c.b16 %v4082, %v4078
    %v4395 = vpack.c.b16 %v4083, %v4079
    %v4396 = vpack.c.b16 %v4088, %v4084
    %v4397 = vpack.c.b16 %v4089, %v4085
    %v4398 = vpack.c.b16 %v4090, %v4086
    %v4399 = vpack.c.b16 %v4091, %v4087
    %v4400 = vpack.c.b16 %v4096, %v4092
    %v4401 = vpack.c.b16 %v4097, %v4093
    %v4402 = vpack.c.b16 %v4098, %v4094
    %v4403 = vpack.c.b16 %v4099, %v4095
    %v4404 = vpack.c.b16 %v4104, %v4100
    %v4405 = vpack.c.b16 %v4105, %v4101
    %v4406 = vpack.c.b16 %v4106, %v4102
    %v4407 = vpack.c.b16 %v4107, %v4103
    %v4408 = vpack.c.b16 %v4112, %v4108
    %v4409 = vpack.c.b16 %v4113, %v4109
    %v4410 = vpack.c.b16 %v4114, %v4110
    %v4411 = vpack.c.b16 %v4115, %v4111
    %v4412 = vpack.c.b16 %v4120, %v4116
    %v4413 = vpack.c.b16 %v4121, %v4117
    %v4414 = vpack.c.b16 %v4122, %v4118
    %v4415 = vpack.c.b16 %v4123, %v4119
    %v4416 = vpack.c.b16 %v4128, %v4124
    %v4417 = vpack.c.b16 %v4129, %v4125
    %v4418 = vpack.c.b16 %v4130, %v4126
    %v4419 = vpack.c.b16 %v4131, %v4127
    %v4420 = vpack.c.b16 %v4136, %v4132
    %v4421 = vpack.c.b16 %v4137, %v4133
    %v4422 = vpack.c.b16 %v4138, %v4134
    %v4423 = vpack.c.b16 %v4139, %v4135
    %v4424 = vpack.c.b16 %v4144, %v4140
    %v4425 = vpack.c.b16 %v4145, %v4141
    %v4426 = vpack.c.b16 %v4146, %v4142
    %v4427 = vpack.c.b16 %v4147, %v4143
    %v4428 = vpack.c.b16 %v4152, %v4148
    %v4429 = vpack.c.b16 %v4153, %v4149
    %v4430 = vpack.c.b16 %v4154, %v4150
    %v4431 = vpack.c.b16 %v4155, %v4151
    %v4432 = vpack.c.b16 %v4160, %v4156
    %v4433 = vpack.c.b16 %v4161, %v4157
    %v4434 = vpack.c.b16 %v4162, %v4158
    %v4435 = vpack.c.b16 %v4163, %v4159
    %v4436 = vpack.c.b16 %v4168, %v4164
    %v4437 = vpack.c.b16 %v4169, %v4165
    %v4438 = vpack.c.b16 %v4170, %v4166
    %v4439 = vpack.c.b16 %v4171, %v4167
    %v4440 = vpack.c.b16 %v4176, %v4172
    %v4441 = vpack.c.b16 %v4177, %v4173
    %v4442 = vpack.c.b16 %v4178, %v4174
    %v4443 = vpack.c.b16 %v4179, %v4175
    %v4444 = vpack.c.b16 %v4184, %v4180
    %v4445 = vpack.c.b16 %v4185, %v4181
    %v4446 = vpack.c.b16 %v4186, %v4182
    %v4447 = vpack.c.b16 %v4187, %v4183
    %v4448 = vpack.c.b16 %v4192, %v4188
    %v4449 = vpack.c.b16 %v4193, %v4189
    %v4450 = vpack.c.b16 %v4194, %v4190
    %v4451 = vpack.c.b16 %v4195, %v4191
    %4708 = vmatprep.subr.bf16.mxu0 %v4225
    %4709 = vmatpush1.bf16.msra.mxu0 %v4224
    %4710 = vmatprep.subr.bf16.mxu0 %v4221
    %4711 = vmatpush1.bf16.msra.mxu0 %v4220
    %4712 = vmatprep.subr.bf16.mxu0 %v4217
    %4713 = vmatpush1.bf16.msra.mxu0 %v4216
    %4714 = vmatprep.subr.bf16.mxu0 %v4213
    %4715 = vmatpush1.bf16.msra.mxu0 %v4212
    %4716 = vmatprep.subr.bf16.mxu0 %v4209
    %4717 = vmatpush1.bf16.msra.mxu0 %v4208
    %4718 = vmatprep.subr.bf16.mxu0 %v4205
    %4719 = vmatpush1.bf16.msra.mxu0 %v4204
    %4720 = vmatprep.subr.bf16.mxu0 %v4201
    %4721 = vmatpush1.bf16.msra.mxu0 %v4200
    %4722 = vmatprep.subr.bf16.mxu0 %v4197
    %4723 = vmatpush1.bf16.msra.mxu0 %v4196
    %4724 = vmatprep.subr.bf16.mxu0 %v4257
    %4725 = vmatpush2.bf16.msra.mxu0 %v4256
    %4726 = vmatprep.subr.bf16.mxu0 %v4253
    %4727 = vmatpush2.bf16.msra.mxu0 %v4252
    %4728 = vmatprep.subr.bf16.mxu0 %v4249
    %4729 = vmatpush2.bf16.msra.mxu0 %v4248
    %4730 = vmatprep.subr.bf16.mxu0 %v4245
    %4731 = vmatpush2.bf16.msra.mxu0 %v4244
    %4732 = vmatprep.subr.bf16.mxu0 %v4241
    %4733 = vmatpush2.bf16.msra.mxu0 %v4240
    %4734 = vmatprep.subr.bf16.mxu0 %v4237
    %4735 = vmatpush2.bf16.msra.mxu0 %v4236
    %4736 = vmatprep.subr.bf16.mxu0 %v4233
    %4737 = vmatpush2.bf16.msra.mxu0 %v4232
    %4738 = vmatprep.subr.bf16.mxu0 %v4229
    %4739 = vmatpush2.bf16.msra.mxu0 %v4228
    %4740 = vmatprep.mubr.bf16.mxu0 %v3135
    %4741 = vmatmul.mubr.bf16.gmra.mxu0 %v3134
    %v4742 = vpop.f32.mrf.mxu0
    %v4743 = vadd.f32 %v3411, %v4742
    %v4744 = vpop.f32.mrf.mxu0
    %v4745 = vadd.f32 %v3415, %v4744
    %v4746 = vpop.f32.mrf.mxu0
    %v4747 = vpop.f32.mrf.mxu0
    %4748 = vdwg.mxu0
    %4749 = vmatprep.subr.bf16.mxu0 %v4289
    %4750 = vmatpush1.bf16.msra.mxu0 %v4288
    %4751 = vmatprep.subr.bf16.mxu0 %v4285
    %4752 = vmatpush1.bf16.msra.mxu0 %v4284
    %4753 = vmatprep.subr.bf16.mxu0 %v4281
    %4754 = vmatpush1.bf16.msra.mxu0 %v4280
    %4755 = vmatprep.subr.bf16.mxu0 %v4277
    %4756 = vmatpush1.bf16.msra.mxu0 %v4276
    %4757 = vmatprep.subr.bf16.mxu0 %v4273
    %4758 = vmatpush1.bf16.msra.mxu0 %v4272
    %4759 = vmatprep.subr.bf16.mxu0 %v4269
    %4760 = vmatpush1.bf16.msra.mxu0 %v4268
    %4761 = vmatprep.subr.bf16.mxu0 %v4265
    %4762 = vmatpush1.bf16.msra.mxu0 %v4264
    %4763 = vmatprep.subr.bf16.mxu0 %v4261
    %4764 = vmatpush1.bf16.msra.mxu0 %v4260
    %4765 = vmatprep.subr.bf16.mxu0 %v4321
    %4766 = vmatpush2.bf16.msra.mxu0 %v4320
    %4767 = vmatprep.subr.bf16.mxu0 %v4317
    %4768 = vmatpush2.bf16.msra.mxu0 %v4316
    %4769 = vmatprep.subr.bf16.mxu0 %v4313
    %4770 = vmatpush2.bf16.msra.mxu0 %v4312
    %4771 = vmatprep.subr.bf16.mxu0 %v4309
    %4772 = vmatpush2.bf16.msra.mxu0 %v4308
    %4773 = vmatprep.subr.bf16.mxu0 %v4305
    %4774 = vmatpush2.bf16.msra.mxu0 %v4304
    %4775 = vmatprep.subr.bf16.mxu0 %v4301
    %4776 = vmatpush2.bf16.msra.mxu0 %v4300
    %4777 = vmatprep.subr.bf16.mxu0 %v4297
    %4778 = vmatpush2.bf16.msra.mxu0 %v4296
    %4779 = vmatprep.subr.bf16.mxu0 %v4293
    %4780 = vmatpush2.bf16.msra.mxu0 %v4292
    %4781 = vmatprep.mubr.bf16.mxu0 %v3137
    %4782 = vmatmul.mubr.bf16.gmra.mxu0 %v3136
    %v4783 = vpop.f32.mrf.mxu0
    %v4784 = vadd.f32 %v4743, %v4783
    %v4785 = vpop.f32.mrf.mxu0
    %v4786 = vadd.f32 %v4745, %v4785
    %v4787 = vpop.f32.mrf.mxu0
    %v4788 = vpop.f32.mrf.mxu0
    %4789 = vdwg.mxu0
    %4790 = vmatprep.subr.bf16.mxu0 %v4353
    %4791 = vmatpush1.bf16.msra.mxu0 %v4352
    %4792 = vmatprep.subr.bf16.mxu0 %v4349
    %4793 = vmatpush1.bf16.msra.mxu0 %v4348
    %4794 = vmatprep.subr.bf16.mxu0 %v4345
    %4795 = vmatpush1.bf16.msra.mxu0 %v4344
    %4796 = vmatprep.subr.bf16.mxu0 %v4341
    %4797 = vmatpush1.bf16.msra.mxu0 %v4340
    %4798 = vmatprep.subr.bf16.mxu0 %v4337
    %4799 = vmatpush1.bf16.msra.mxu0 %v4336
    %4800 = vmatprep.subr.bf16.mxu0 %v4333
    %4801 = vmatpush1.bf16.msra.mxu0 %v4332
    %4802 = vmatprep.subr.bf16.mxu0 %v4329
    %4803 = vmatpush1.bf16.msra.mxu0 %v4328
    %4804 = vmatprep.subr.bf16.mxu0 %v4325
    %4805 = vmatpush1.bf16.msra.mxu0 %v4324
    %4806 = vmatprep.subr.bf16.mxu0 %v4385
    %4807 = vmatpush2.bf16.msra.mxu0 %v4384
    %4808 = vmatprep.subr.bf16.mxu0 %v4381
    %4809 = vmatpush2.bf16.msra.mxu0 %v4380
    %4810 = vmatprep.subr.bf16.mxu0 %v4377
    %4811 = vmatpush2.bf16.msra.mxu0 %v4376
    %4812 = vmatprep.subr.bf16.mxu0 %v4373
    %4813 = vmatpush2.bf16.msra.mxu0 %v4372
    %4814 = vmatprep.subr.bf16.mxu0 %v4369
    %4815 = vmatpush2.bf16.msra.mxu0 %v4368
    %4816 = vmatprep.subr.bf16.mxu0 %v4365
    %4817 = vmatpush2.bf16.msra.mxu0 %v4364
    %4818 = vmatprep.subr.bf16.mxu0 %v4361
    %4819 = vmatpush2.bf16.msra.mxu0 %v4360
    %4820 = vmatprep.subr.bf16.mxu0 %v4357
    %4821 = vmatpush2.bf16.msra.mxu0 %v4356
    %4822 = vmatprep.mubr.bf16.mxu0 %v3139
    %4823 = vmatmul.mubr.bf16.gmra.mxu0 %v3138
    %v4824 = vpop.f32.mrf.mxu0
    %v4825 = vadd.f32 %v4784, %v4824
    %v4826 = vpop.f32.mrf.mxu0
    %v4827 = vadd.f32 %v4786, %v4826
    %v4828 = vpop.f32.mrf.mxu0
    %v4829 = vpop.f32.mrf.mxu0
    %4830 = vdwg.mxu0
    %4831 = vmatprep.subr.bf16.mxu0 %v4417
    %4832 = vmatpush1.bf16.msra.mxu0 %v4416
    %4833 = vmatprep.subr.bf16.mxu0 %v4413
    %4834 = vmatpush1.bf16.msra.mxu0 %v4412
    %4835 = vmatprep.subr.bf16.mxu0 %v4409
    %4836 = vmatpush1.bf16.msra.mxu0 %v4408
    %4837 = vmatprep.subr.bf16.mxu0 %v4405
    %4838 = vmatpush1.bf16.msra.mxu0 %v4404
    %4839 = vmatprep.subr.bf16.mxu0 %v4401
    %4840 = vmatpush1.bf16.msra.mxu0 %v4400
    %4841 = vmatprep.subr.bf16.mxu0 %v4397
    %4842 = vmatpush1.bf16.msra.mxu0 %v4396
    %4843 = vmatprep.subr.bf16.mxu0 %v4393
    %4844 = vmatpush1.bf16.msra.mxu0 %v4392
    %4845 = vmatprep.subr.bf16.mxu0 %v4389
    %4846 = vmatpush1.bf16.msra.mxu0 %v4388
    %4847 = vmatprep.subr.bf16.mxu0 %v4449
    %4848 = vmatpush2.bf16.msra.mxu0 %v4448
    %4849 = vmatprep.subr.bf16.mxu0 %v4445
    %4850 = vmatpush2.bf16.msra.mxu0 %v4444
    %4851 = vmatprep.subr.bf16.mxu0 %v4441
    %4852 = vmatpush2.bf16.msra.mxu0 %v4440
    %4853 = vmatprep.subr.bf16.mxu0 %v4437
    %4854 = vmatpush2.bf16.msra.mxu0 %v4436
    %4855 = vmatprep.subr.bf16.mxu0 %v4433
    %4856 = vmatpush2.bf16.msra.mxu0 %v4432
    %4857 = vmatprep.subr.bf16.mxu0 %v4429
    %4858 = vmatpush2.bf16.msra.mxu0 %v4428
    %4859 = vmatprep.subr.bf16.mxu0 %v4425
    %4860 = vmatpush2.bf16.msra.mxu0 %v4424
    %4861 = vmatprep.subr.bf16.mxu0 %v4421
    %4862 = vmatpush2.bf16.msra.mxu0 %v4420
    %4863 = vmatprep.mubr.bf16.mxu0 %v3141
    %4864 = vmatmul.mubr.bf16.gmra.mxu0 %v3140
    %v4865 = vpop.f32.mrf.mxu0
    %v4866 = vadd.f32 %v4825, %v4865
    %v4867 = vpop.f32.mrf.mxu0
    %v4868 = vadd.f32 %v4827, %v4867
    %v4869 = vpop.f32.mrf.mxu0
    %v4870 = vpop.f32.mrf.mxu0
    %4871 = vdwg.mxu0
    %4872 = vmatprep.subr.bf16.mxu0 %v4227
    %4873 = vmatpush1.bf16.msra.mxu0 %v4226
    %4874 = vmatprep.subr.bf16.mxu0 %v4223
    %4875 = vmatpush1.bf16.msra.mxu0 %v4222
    %4876 = vmatprep.subr.bf16.mxu0 %v4219
    %4877 = vmatpush1.bf16.msra.mxu0 %v4218
    %4878 = vmatprep.subr.bf16.mxu0 %v4215
    %4879 = vmatpush1.bf16.msra.mxu0 %v4214
    %4880 = vmatprep.subr.bf16.mxu0 %v4211
    %4881 = vmatpush1.bf16.msra.mxu0 %v4210
    %4882 = vmatprep.subr.bf16.mxu0 %v4207
    %4883 = vmatpush1.bf16.msra.mxu0 %v4206
    %4884 = vmatprep.subr.bf16.mxu0 %v4203
    %4885 = vmatpush1.bf16.msra.mxu0 %v4202
    %4886 = vmatprep.subr.bf16.mxu0 %v4199
    %4887 = vmatpush1.bf16.msra.mxu0 %v4198
    %4888 = vmatprep.subr.bf16.mxu0 %v4259
    %4889 = vmatpush2.bf16.msra.mxu0 %v4258
    %4890 = vmatprep.subr.bf16.mxu0 %v4255
    %4891 = vmatpush2.bf16.msra.mxu0 %v4254
    %4892 = vmatprep.subr.bf16.mxu0 %v4251
    %4893 = vmatpush2.bf16.msra.mxu0 %v4250
    %4894 = vmatprep.subr.bf16.mxu0 %v4247
    %4895 = vmatpush2.bf16.msra.mxu0 %v4246
    %4896 = vmatprep.subr.bf16.mxu0 %v4243
    %4897 = vmatpush2.bf16.msra.mxu0 %v4242
    %4898 = vmatprep.subr.bf16.mxu0 %v4239
    %4899 = vmatpush2.bf16.msra.mxu0 %v4238
    %4900 = vmatprep.subr.bf16.mxu0 %v4235
    %4901 = vmatpush2.bf16.msra.mxu0 %v4234
    %4902 = vmatprep.subr.bf16.mxu0 %v4231
    %4903 = vmatpush2.bf16.msra.mxu0 %v4230
    %4904 = vmatprep.mubr.bf16.mxu0 %v3135
    %4905 = vmatmul.mubr.bf16.gmra.mxu0 %v3134
    %v4906 = vpop.f32.mrf.mxu0
    %v4907 = vadd.f32 %v3419, %v4906
    %v4908 = vpop.f32.mrf.mxu0
    %v4909 = vadd.f32 %v3423, %v4908
    %v4910 = vpop.f32.mrf.mxu0
    %v4911 = vpop.f32.mrf.mxu0
    %4912 = vdwg.mxu0
    %4913 = vmatprep.subr.bf16.mxu0 %v4291
    %4914 = vmatpush1.bf16.msra.mxu0 %v4290
    %4915 = vmatprep.subr.bf16.mxu0 %v4287
    %4916 = vmatpush1.bf16.msra.mxu0 %v4286
    %4917 = vmatprep.subr.bf16.mxu0 %v4283
    %4918 = vmatpush1.bf16.msra.mxu0 %v4282
    %4919 = vmatprep.subr.bf16.mxu0 %v4279
    %4920 = vmatpush1.bf16.msra.mxu0 %v4278
    %4921 = vmatprep.subr.bf16.mxu0 %v4275
    %4922 = vmatpush1.bf16.msra.mxu0 %v4274
    %4923 = vmatprep.subr.bf16.mxu0 %v4271
    %4924 = vmatpush1.bf16.msra.mxu0 %v4270
    %4925 = vmatprep.subr.bf16.mxu0 %v4267
    %4926 = vmatpush1.bf16.msra.mxu0 %v4266
    %4927 = vmatprep.subr.bf16.mxu0 %v4263
    %4928 = vmatpush1.bf16.msra.mxu0 %v4262
    %4929 = vmatprep.subr.bf16.mxu0 %v4323
    %4930 = vmatpush2.bf16.msra.mxu0 %v4322
    %4931 = vmatprep.subr.bf16.mxu0 %v4319
    %4932 = vmatpush2.bf16.msra.mxu0 %v4318
    %4933 = vmatprep.subr.bf16.mxu0 %v4315
    %4934 = vmatpush2.bf16.msra.mxu0 %v4314
    %4935 = vmatprep.subr.bf16.mxu0 %v4311
    %4936 = vmatpush2.bf16.msra.mxu0 %v4310
    %4937 = vmatprep.subr.bf16.mxu0 %v4307
    %4938 = vmatpush2.bf16.msra.mxu0 %v4306
    %4939 = vmatprep.subr.bf16.mxu0 %v4303
    %4940 = vmatpush2.bf16.msra.mxu0 %v4302
    %4941 = vmatprep.subr.bf16.mxu0 %v4299
    %4942 = vmatpush2.bf16.msra.mxu0 %v4298
    %4943 = vmatprep.subr.bf16.mxu0 %v4295
    %4944 = vmatpush2.bf16.msra.mxu0 %v4294
    %4945 = vmatprep.mubr.bf16.mxu0 %v3137
    %4946 = vmatmul.mubr.bf16.gmra.mxu0 %v3136
    %v4947 = vpop.f32.mrf.mxu0
    %v4948 = vadd.f32 %v4907, %v4947
    %v4949 = vpop.f32.mrf.mxu0
    %v4950 = vadd.f32 %v4909, %v4949
    %v4951 = vpop.f32.mrf.mxu0
    %v4952 = vpop.f32.mrf.mxu0
    %4953 = vdwg.mxu0
    %4954 = vmatprep.subr.bf16.mxu0 %v4355
    %4955 = vmatpush1.bf16.msra.mxu0 %v4354
    %4956 = vmatprep.subr.bf16.mxu0 %v4351
    %4957 = vmatpush1.bf16.msra.mxu0 %v4350
    %4958 = vmatprep.subr.bf16.mxu0 %v4347
    %4959 = vmatpush1.bf16.msra.mxu0 %v4346
    %4960 = vmatprep.subr.bf16.mxu0 %v4343
    %4961 = vmatpush1.bf16.msra.mxu0 %v4342
    %4962 = vmatprep.subr.bf16.mxu0 %v4339
    %4963 = vmatpush1.bf16.msra.mxu0 %v4338
    %4964 = vmatprep.subr.bf16.mxu0 %v4335
    %4965 = vmatpush1.bf16.msra.mxu0 %v4334
    %4966 = vmatprep.subr.bf16.mxu0 %v4331
    %4967 = vmatpush1.bf16.msra.mxu0 %v4330
    %4968 = vmatprep.subr.bf16.mxu0 %v4327
    %4969 = vmatpush1.bf16.msra.mxu0 %v4326
    %4970 = vmatprep.subr.bf16.mxu0 %v4387
    %4971 = vmatpush2.bf16.msra.mxu0 %v4386
    %4972 = vmatprep.subr.bf16.mxu0 %v4383
    %4973 = vmatpush2.bf16.msra.mxu0 %v4382
    %4974 = vmatprep.subr.bf16.mxu0 %v4379
    %4975 = vmatpush2.bf16.msra.mxu0 %v4378
    %4976 = vmatprep.subr.bf16.mxu0 %v4375
    %4977 = vmatpush2.bf16.msra.mxu0 %v4374
    %4978 = vmatprep.subr.bf16.mxu0 %v4371
    %4979 = vmatpush2.bf16.msra.mxu0 %v4370
    %4980 = vmatprep.subr.bf16.mxu0 %v4367
    %4981 = vmatpush2.bf16.msra.mxu0 %v4366
    %4982 = vmatprep.subr.bf16.mxu0 %v4363
    %4983 = vmatpush2.bf16.msra.mxu0 %v4362
    %4984 = vmatprep.subr.bf16.mxu0 %v4359
    %4985 = vmatpush2.bf16.msra.mxu0 %v4358
    %4986 = vmatprep.mubr.bf16.mxu0 %v3139
    %4987 = vmatmul.mubr.bf16.gmra.mxu0 %v3138
    %v4988 = vpop.f32.mrf.mxu0
    %v4989 = vadd.f32 %v4948, %v4988
    %v4990 = vpop.f32.mrf.mxu0
    %v4991 = vadd.f32 %v4950, %v4990
    %v4992 = vpop.f32.mrf.mxu0
    %v4993 = vpop.f32.mrf.mxu0
    %4994 = vdwg.mxu0
    %4995 = vmatprep.subr.bf16.mxu0 %v4419
    %4996 = vmatpush1.bf16.msra.mxu0 %v4418
    %4997 = vmatprep.subr.bf16.mxu0 %v4415
    %4998 = vmatpush1.bf16.msra.mxu0 %v4414
    %4999 = vmatprep.subr.bf16.mxu0 %v4411
    %5000 = vmatpush1.bf16.msra.mxu0 %v4410
    %5001 = vmatprep.subr.bf16.mxu0 %v4407
    %5002 = vmatpush1.bf16.msra.mxu0 %v4406
    %5003 = vmatprep.subr.bf16.mxu0 %v4403
    %5004 = vmatpush1.bf16.msra.mxu0 %v4402
    %5005 = vmatprep.subr.bf16.mxu0 %v4399
    %5006 = vmatpush1.bf16.msra.mxu0 %v4398
    %5007 = vmatprep.subr.bf16.mxu0 %v4395
    %5008 = vmatpush1.bf16.msra.mxu0 %v4394
    %5009 = vmatprep.subr.bf16.mxu0 %v4391
    %5010 = vmatpush1.bf16.msra.mxu0 %v4390
    %5011 = vmatprep.subr.bf16.mxu0 %v4451
    %5012 = vmatpush2.bf16.msra.mxu0 %v4450
    %5013 = vmatprep.subr.bf16.mxu0 %v4447
    %5014 = vmatpush2.bf16.msra.mxu0 %v4446
    %5015 = vmatprep.subr.bf16.mxu0 %v4443
    %5016 = vmatpush2.bf16.msra.mxu0 %v4442
    %5017 = vmatprep.subr.bf16.mxu0 %v4439
    %5018 = vmatpush2.bf16.msra.mxu0 %v4438
    %5019 = vmatprep.subr.bf16.mxu0 %v4435
    %5020 = vmatpush2.bf16.msra.mxu0 %v4434
    %5021 = vmatprep.subr.bf16.mxu0 %v4431
    %5022 = vmatpush2.bf16.msra.mxu0 %v4430
    %5023 = vmatprep.subr.bf16.mxu0 %v4427
    %5024 = vmatpush2.bf16.msra.mxu0 %v4426
    %5025 = vmatprep.subr.bf16.mxu0 %v4423
    %5026 = vmatpush2.bf16.msra.mxu0 %v4422
    %5027 = vmatprep.mubr.bf16.mxu0 %v3141
    %5028 = vmatmul.mubr.bf16.gmra.mxu0 %v3140
    %v5029 = vpop.f32.mrf.mxu0
    %v5030 = vadd.f32 %v4989, %v5029
    %v5031 = vpop.f32.mrf.mxu0
    %v5032 = vadd.f32 %v4991, %v5031
    %v5033 = vpop.f32.mrf.mxu0
    %v5034 = vpop.f32.mrf.mxu0
    %5035 = vdwg.mxu0
    %v5036 = vmax.f32 %v4866, 0.0
    %v5037 = vmax.f32 %v4868, 0.0
    %v5038 = vmax.f32 %v5030, 0.0
    %v5039 = vmax.f32 %v5032, 0.0
    %v5040 = vpack.c.bf16 %v5036, %v5036
    %v5041 = vpack.c.bf16 %v5037, %v5037
    %v5042 = vpack.c.bf16 %v5038, %v5038
    %v5043 = vpack.c.bf16 %v5039, %v5039
    %v5044 = vld [vmem:[#allocation3] sm:$0xff]
    %v5045 = vld [vmem:[#allocation3 + $0x8] sm:$0xff]
    %v5046 = vld [vmem:[#allocation3 + $0x10] sm:$0xff]
    %v5047 = vld [vmem:[#allocation3 + $0x18] sm:$0xff]
    %v5048 = vld [vmem:[#allocation3 + $0x20] sm:$0xff]
    %v5049 = vld [vmem:[#allocation3 + $0x28] sm:$0xff]
    %v5050 = vld [vmem:[#allocation3 + $0x30] sm:$0xff]
    %v5051 = vld [vmem:[#allocation3 + $0x38] sm:$0xff]
    %v5052 = vld [vmem:[#allocation3 + $0x40] sm:$0xff]
    %v5053 = vld [vmem:[#allocation3 + $0x48] sm:$0xff]
    %v5054 = vld [vmem:[#allocation3 + $0x50] sm:$0xff]
    %v5055 = vld [vmem:[#allocation3 + $0x58] sm:$0xff]
    %v5056 = vld [vmem:[#allocation3 + $0x60] sm:$0xff]
    %v5057 = vld [vmem:[#allocation3 + $0x68] sm:$0xff]
    %v5058 = vld [vmem:[#allocation3 + $0x70] sm:$0xff]
    %v5059 = vld [vmem:[#allocation3 + $0x78] sm:$0xff]
    %v5060 = vld [vmem:[#allocation3 + $0x80] sm:$0xff]
    %v5061 = vld [vmem:[#allocation3 + $0x88] sm:$0xff]
    %v5062 = vld [vmem:[#allocation3 + $0x90] sm:$0xff]
    %v5063 = vld [vmem:[#allocation3 + $0x98] sm:$0xff]
    %v5064 = vld [vmem:[#allocation3 + $0xa0] sm:$0xff]
    %v5065 = vld [vmem:[#allocation3 + $0xa8] sm:$0xff]
    %v5066 = vld [vmem:[#allocation3 + $0xb0] sm:$0xff]
    %v5067 = vld [vmem:[#allocation3 + $0xb8] sm:$0xff]
    %v5068 = vld [vmem:[#allocation3 + $0xc0] sm:$0xff]
    %v5069 = vld [vmem:[#allocation3 + $0xc8] sm:$0xff]
    %v5070 = vld [vmem:[#allocation3 + $0xd0] sm:$0xff]
    %v5071 = vld [vmem:[#allocation3 + $0xd8] sm:$0xff]
    %v5072 = vld [vmem:[#allocation3 + $0xe0] sm:$0xff]
    %v5073 = vld [vmem:[#allocation3 + $0xe8] sm:$0xff]
    %v5074 = vld [vmem:[#allocation3 + $0xf0] sm:$0xff]
    %v5075 = vld [vmem:[#allocation3 + $0xf8] sm:$0xff]
    %v5076 = vld [vmem:[#allocation3 + $0x100] sm:$0xff]
    %v5077 = vld [vmem:[#allocation3 + $0x108] sm:$0xff]
    %v5078 = vld [vmem:[#allocation3 + $0x110] sm:$0xff]
    %v5079 = vld [vmem:[#allocation3 + $0x118] sm:$0xff]
    %v5080 = vld [vmem:[#allocation3 + $0x120] sm:$0xff]
    %v5081 = vld [vmem:[#allocation3 + $0x128] sm:$0xff]
    %v5082 = vld [vmem:[#allocation3 + $0x130] sm:$0xff]
    %v5083 = vld [vmem:[#allocation3 + $0x138] sm:$0xff]
    %v5084 = vld [vmem:[#allocation3 + $0x140] sm:$0xff]
    %v5085 = vld [vmem:[#allocation3 + $0x148] sm:$0xff]
    %v5086 = vld [vmem:[#allocation3 + $0x150] sm:$0xff]
    %v5087 = vld [vmem:[#allocation3 + $0x158] sm:$0xff]
    %v5088 = vld [vmem:[#allocation3 + $0x160] sm:$0xff]
    %v5089 = vld [vmem:[#allocation3 + $0x168] sm:$0xff]
    %v5090 = vld [vmem:[#allocation3 + $0x170] sm:$0xff]
    %v5091 = vld [vmem:[#allocation3 + $0x178] sm:$0xff]
    %v5092 = vld [vmem:[#allocation3 + $0x180] sm:$0xff]
    %v5093 = vld [vmem:[#allocation3 + $0x188] sm:$0xff]
    %v5094 = vld [vmem:[#allocation3 + $0x190] sm:$0xff]
    %v5095 = vld [vmem:[#allocation3 + $0x198] sm:$0xff]
    %v5096 = vld [vmem:[#allocation3 + $0x1a0] sm:$0xff]
    %v5097 = vld [vmem:[#allocation3 + $0x1a8] sm:$0xff]
    %v5098 = vld [vmem:[#allocation3 + $0x1b0] sm:$0xff]
    %v5099 = vld [vmem:[#allocation3 + $0x1b8] sm:$0xff]
    %v5100 = vld [vmem:[#allocation3 + $0x1c0] sm:$0xff]
    %v5101 = vld [vmem:[#allocation3 + $0x1c8] sm:$0xff]
    %v5102 = vld [vmem:[#allocation3 + $0x1d0] sm:$0xff]
    %v5103 = vld [vmem:[#allocation3 + $0x1d8] sm:$0xff]
    %v5104 = vld [vmem:[#allocation3 + $0x1e0] sm:$0xff]
    %v5105 = vld [vmem:[#allocation3 + $0x1e8] sm:$0xff]
    %v5106 = vld [vmem:[#allocation3 + $0x1f0] sm:$0xff]
    %v5107 = vld [vmem:[#allocation3 + $0x1f8] sm:$0xff]
    %v5108 = vld [vmem:[%s10] sm:$0x3]
    %v5110 = vlaneseq
    %v5111 = vshrl.u32 %v5110, 7
    %v5112 = vsub.s32 0, %v5111
    %v5113 = vrot.slane %v5108, %v5112
    %v5114 = vlaneseq
    %v5115 = vshrl.u32 %v5114, 7
    %v5116 = vsub.s32 1, %v5115
    %v5117 = vrot.slane %v5108, %v5116
    %v5184 = vunpack.c.l.b16 %v5044
    %v5185 = vunpack.c.h.b16 %v5044
    %v5186 = vunpack.c.l.b16 %v5045
    %v5187 = vunpack.c.h.b16 %v5045
    %v5188 = vunpack.c.l.b16 %v5046
    %v5189 = vunpack.c.h.b16 %v5046
    %v5190 = vunpack.c.l.b16 %v5047
    %v5191 = vunpack.c.h.b16 %v5047
    %v5192 = vunpack.c.l.b16 %v5048
    %v5193 = vunpack.c.h.b16 %v5048
    %v5194 = vunpack.c.l.b16 %v5049
    %v5195 = vunpack.c.h.b16 %v5049
    %v5196 = vunpack.c.l.b16 %v5050
    %v5197 = vunpack.c.h.b16 %v5050
    %v5198 = vunpack.c.l.b16 %v5051
    %v5199 = vunpack.c.h.b16 %v5051
    %v5200 = vunpack.c.l.b16 %v5052
    %v5201 = vunpack.c.h.b16 %v5052
    %v5202 = vunpack.c.l.b16 %v5053
    %v5203 = vunpack.c.h.b16 %v5053
    %v5204 = vunpack.c.l.b16 %v5054
    %v5205 = vunpack.c.h.b16 %v5054
    %v5206 = vunpack.c.l.b16 %v5055
    %v5207 = vunpack.c.h.b16 %v5055
    %v5208 = vunpack.c.l.b16 %v5056
    %v5209 = vunpack.c.h.b16 %v5056
    %v5210 = vunpack.c.l.b16 %v5057
    %v5211 = vunpack.c.h.b16 %v5057
    %v5212 = vunpack.c.l.b16 %v5058
    %v5213 = vunpack.c.h.b16 %v5058
    %v5214 = vunpack.c.l.b16 %v5059
    %v5215 = vunpack.c.h.b16 %v5059
    %v5216 = vunpack.c.l.b16 %v5060
    %v5217 = vunpack.c.h.b16 %v5060
    %v5218 = vunpack.c.l.b16 %v5061
    %v5219 = vunpack.c.h.b16 %v5061
    %v5220 = vunpack.c.l.b16 %v5062
    %v5221 = vunpack.c.h.b16 %v5062
    %v5222 = vunpack.c.l.b16 %v5063
    %v5223 = vunpack.c.h.b16 %v5063
    %v5224 = vunpack.c.l.b16 %v5064
    %v5225 = vunpack.c.h.b16 %v5064
    %v5226 = vunpack.c.l.b16 %v5065
    %v5227 = vunpack.c.h.b16 %v5065
    %v5228 = vunpack.c.l.b16 %v5066
    %v5229 = vunpack.c.h.b16 %v5066
    %v5230 = vunpack.c.l.b16 %v5067
    %v5231 = vunpack.c.h.b16 %v5067
    %v5232 = vunpack.c.l.b16 %v5068
    %v5233 = vunpack.c.h.b16 %v5068
    %v5234 = vunpack.c.l.b16 %v5069
    %v5235 = vunpack.c.h.b16 %v5069
    %v5236 = vunpack.c.l.b16 %v5070
    %v5237 = vunpack.c.h.b16 %v5070
    %v5238 = vunpack.c.l.b16 %v5071
    %v5239 = vunpack.c.h.b16 %v5071
    %v5240 = vunpack.c.l.b16 %v5072
    %v5241 = vunpack.c.h.b16 %v5072
    %v5242 = vunpack.c.l.b16 %v5073
    %v5243 = vunpack.c.h.b16 %v5073
    %v5244 = vunpack.c.l.b16 %v5074
    %v5245 = vunpack.c.h.b16 %v5074
    %v5246 = vunpack.c.l.b16 %v5075
    %v5247 = vunpack.c.h.b16 %v5075
    %v5248 = vunpack.c.l.b16 %v5076
    %v5249 = vunpack.c.h.b16 %v5076
    %v5250 = vunpack.c.l.b16 %v5077
    %v5251 = vunpack.c.h.b16 %v5077
    %v5252 = vunpack.c.l.b16 %v5078
    %v5253 = vunpack.c.h.b16 %v5078
    %v5254 = vunpack.c.l.b16 %v5079
    %v5255 = vunpack.c.h.b16 %v5079
    %v5256 = vunpack.c.l.b16 %v5080
    %v5257 = vunpack.c.h.b16 %v5080
    %v5258 = vunpack.c.l.b16 %v5081
    %v5259 = vunpack.c.h.b16 %v5081
    %v5260 = vunpack.c.l.b16 %v5082
    %v5261 = vunpack.c.h.b16 %v5082
    %v5262 = vunpack.c.l.b16 %v5083
    %v5263 = vunpack.c.h.b16 %v5083
    %v5264 = vunpack.c.l.b16 %v5084
    %v5265 = vunpack.c.h.b16 %v5084
    %v5266 = vunpack.c.l.b16 %v5085
    %v5267 = vunpack.c.h.b16 %v5085
    %v5268 = vunpack.c.l.b16 %v5086
    %v5269 = vunpack.c.h.b16 %v5086
    %v5270 = vunpack.c.l.b16 %v5087
    %v5271 = vunpack.c.h.b16 %v5087
    %v5272 = vunpack.c.l.b16 %v5088
    %v5273 = vunpack.c.h.b16 %v5088
    %v5274 = vunpack.c.l.b16 %v5089
    %v5275 = vunpack.c.h.b16 %v5089
    %v5276 = vunpack.c.l.b16 %v5090
    %v5277 = vunpack.c.h.b16 %v5090
    %v5278 = vunpack.c.l.b16 %v5091
    %v5279 = vunpack.c.h.b16 %v5091
    %v5280 = vunpack.c.l.b16 %v5092
    %v5281 = vunpack.c.h.b16 %v5092
    %v5282 = vunpack.c.l.b16 %v5093
    %v5283 = vunpack.c.h.b16 %v5093
    %v5284 = vunpack.c.l.b16 %v5094
    %v5285 = vunpack.c.h.b16 %v5094
    %v5286 = vunpack.c.l.b16 %v5095
    %v5287 = vunpack.c.h.b16 %v5095
    %v5288 = vunpack.c.l.b16 %v5096
    %v5289 = vunpack.c.h.b16 %v5096
    %v5290 = vunpack.c.l.b16 %v5097
    %v5291 = vunpack.c.h.b16 %v5097
    %v5292 = vunpack.c.l.b16 %v5098
    %v5293 = vunpack.c.h.b16 %v5098
    %v5294 = vunpack.c.l.b16 %v5099
    %v5295 = vunpack.c.h.b16 %v5099
    %v5296 = vunpack.c.l.b16 %v5100
    %v5297 = vunpack.c.h.b16 %v5100
    %v5298 = vunpack.c.l.b16 %v5101
    %v5299 = vunpack.c.h.b16 %v5101
    %v5300 = vunpack.c.l.b16 %v5102
    %v5301 = vunpack.c.h.b16 %v5102
    %v5302 = vunpack.c.l.b16 %v5103
    %v5303 = vunpack.c.h.b16 %v5103
    %v5304 = vunpack.c.l.b16 %v5104
    %v5305 = vunpack.c.h.b16 %v5104
    %v5306 = vunpack.c.l.b16 %v5105
    %v5307 = vunpack.c.h.b16 %v5105
    %v5308 = vunpack.c.l.b16 %v5106
    %v5309 = vunpack.c.h.b16 %v5106
    %v5310 = vunpack.c.l.b16 %v5107
    %v5311 = vunpack.c.h.b16 %v5107
    %v5312 = vpack.c.b16 %v5186, %v5184
    %v5313 = vpack.c.b16 %v5187, %v5185
    %v5314 = vpack.c.b16 %v5190, %v5188
    %v5315 = vpack.c.b16 %v5191, %v5189
    %v5316 = vpack.c.b16 %v5194, %v5192
    %v5317 = vpack.c.b16 %v5195, %v5193
    %v5318 = vpack.c.b16 %v5198, %v5196
    %v5319 = vpack.c.b16 %v5199, %v5197
    %v5320 = vpack.c.b16 %v5202, %v5200
    %v5321 = vpack.c.b16 %v5203, %v5201
    %v5322 = vpack.c.b16 %v5206, %v5204
    %v5323 = vpack.c.b16 %v5207, %v5205
    %v5324 = vpack.c.b16 %v5210, %v5208
    %v5325 = vpack.c.b16 %v5211, %v5209
    %v5326 = vpack.c.b16 %v5214, %v5212
    %v5327 = vpack.c.b16 %v5215, %v5213
    %v5328 = vpack.c.b16 %v5218, %v5216
    %v5329 = vpack.c.b16 %v5219, %v5217
    %v5330 = vpack.c.b16 %v5222, %v5220
    %v5331 = vpack.c.b16 %v5223, %v5221
    %v5332 = vpack.c.b16 %v5226, %v5224
    %v5333 = vpack.c.b16 %v5227, %v5225
    %v5334 = vpack.c.b16 %v5230, %v5228
    %v5335 = vpack.c.b16 %v5231, %v5229
    %v5336 = vpack.c.b16 %v5234, %v5232
    %v5337 = vpack.c.b16 %v5235, %v5233
    %v5338 = vpack.c.b16 %v5238, %v5236
    %v5339 = vpack.c.b16 %v5239, %v5237
    %v5340 = vpack.c.b16 %v5242, %v5240
    %v5341 = vpack.c.b16 %v5243, %v5241
    %v5342 = vpack.c.b16 %v5246, %v5244
    %v5343 = vpack.c.b16 %v5247, %v5245
    %v5344 = vpack.c.b16 %v5250, %v5248
    %v5345 = vpack.c.b16 %v5251, %v5249
    %v5346 = vpack.c.b16 %v5254, %v5252
    %v5347 = vpack.c.b16 %v5255, %v5253
    %v5348 = vpack.c.b16 %v5258, %v5256
    %v5349 = vpack.c.b16 %v5259, %v5257
    %v5350 = vpack.c.b16 %v5262, %v5260
    %v5351 = vpack.c.b16 %v5263, %v5261
    %v5352 = vpack.c.b16 %v5266, %v5264
    %v5353 = vpack.c.b16 %v5267, %v5265
    %v5354 = vpack.c.b16 %v5270, %v5268
    %v5355 = vpack.c.b16 %v5271, %v5269
    %v5356 = vpack.c.b16 %v5274, %v5272
    %v5357 = vpack.c.b16 %v5275, %v5273
    %v5358 = vpack.c.b16 %v5278, %v5276
    %v5359 = vpack.c.b16 %v5279, %v5277
    %v5360 = vpack.c.b16 %v5282, %v5280
    %v5361 = vpack.c.b16 %v5283, %v5281
    %v5362 = vpack.c.b16 %v5286, %v5284
    %v5363 = vpack.c.b16 %v5287, %v5285
    %v5364 = vpack.c.b16 %v5290, %v5288
    %v5365 = vpack.c.b16 %v5291, %v5289
    %v5366 = vpack.c.b16 %v5294, %v5292
    %v5367 = vpack.c.b16 %v5295, %v5293
    %v5368 = vpack.c.b16 %v5298, %v5296
    %v5369 = vpack.c.b16 %v5299, %v5297
    %v5370 = vpack.c.b16 %v5302, %v5300
    %v5371 = vpack.c.b16 %v5303, %v5301
    %v5372 = vpack.c.b16 %v5306, %v5304
    %v5373 = vpack.c.b16 %v5307, %v5305
    %v5374 = vpack.c.b16 %v5310, %v5308
    %v5375 = vpack.c.b16 %v5311, %v5309
    %5440 = vmatprep.subr.bf16.mxu0 %v5327
    %5441 = vmatpush1.bf16.msra.mxu0 %v5326
    %5442 = vmatprep.subr.bf16.mxu0 %v5325
    %5443 = vmatpush1.bf16.msra.mxu0 %v5324
    %5444 = vmatprep.subr.bf16.mxu0 %v5323
    %5445 = vmatpush1.bf16.msra.mxu0 %v5322
    %5446 = vmatprep.subr.bf16.mxu0 %v5321
    %5447 = vmatpush1.bf16.msra.mxu0 %v5320
    %5448 = vmatprep.subr.bf16.mxu0 %v5319
    %5449 = vmatpush1.bf16.msra.mxu0 %v5318
    %5450 = vmatprep.subr.bf16.mxu0 %v5317
    %5451 = vmatpush1.bf16.msra.mxu0 %v5316
    %5452 = vmatprep.subr.bf16.mxu0 %v5315
    %5453 = vmatpush1.bf16.msra.mxu0 %v5314
    %5454 = vmatprep.subr.bf16.mxu0 %v5313
    %5455 = vmatpush1.bf16.msra.mxu0 %v5312
    %5456 = vmatprep.subr.bf16.mxu0 %v5343
    %5457 = vmatpush2.bf16.msra.mxu0 %v5342
    %5458 = vmatprep.subr.bf16.mxu0 %v5341
    %5459 = vmatpush2.bf16.msra.mxu0 %v5340
    %5460 = vmatprep.subr.bf16.mxu0 %v5339
    %5461 = vmatpush2.bf16.msra.mxu0 %v5338
    %5462 = vmatprep.subr.bf16.mxu0 %v5337
    %5463 = vmatpush2.bf16.msra.mxu0 %v5336
    %5464 = vmatprep.subr.bf16.mxu0 %v5335
    %5465 = vmatpush2.bf16.msra.mxu0 %v5334
    %5466 = vmatprep.subr.bf16.mxu0 %v5333
    %5467 = vmatpush2.bf16.msra.mxu0 %v5332
    %5468 = vmatprep.subr.bf16.mxu0 %v5331
    %5469 = vmatpush2.bf16.msra.mxu0 %v5330
    %5470 = vmatprep.subr.bf16.mxu0 %v5329
    %5471 = vmatpush2.bf16.msra.mxu0 %v5328
    %5472 = vmatprep.mubr.bf16.mxu0 %v5041
    %5473 = vmatmul.mubr.bf16.gmra.mxu0 %v5040
    %v5474 = vpop.f32.mrf.mxu0
    %v5475 = vadd.f32 %v5113, %v5474
    %v5476 = vpop.f32.mrf.mxu0
    %v5477 = vadd.f32 %v5117, %v5476
    %v5478 = vpop.f32.mrf.mxu0
    %v5479 = vpop.f32.mrf.mxu0
    %5480 = vdwg.mxu0
    %5481 = vmatprep.subr.bf16.mxu0 %v5359
    %5482 = vmatpush1.bf16.msra.mxu0 %v5358
    %5483 = vmatprep.subr.bf16.mxu0 %v5357
    %5484 = vmatpush1.bf16.msra.mxu0 %v5356
    %5485 = vmatprep.subr.bf16.mxu0 %v5355
    %5486 = vmatpush1.bf16.msra.mxu0 %v5354
    %5487 = vmatprep.subr.bf16.mxu0 %v5353
    %5488 = vmatpush1.bf16.msra.mxu0 %v5352
    %5489 = vmatprep.subr.bf16.mxu0 %v5351
    %5490 = vmatpush1.bf16.msra.mxu0 %v5350
    %5491 = vmatprep.subr.bf16.mxu0 %v5349
    %5492 = vmatpush1.bf16.msra.mxu0 %v5348
    %5493 = vmatprep.subr.bf16.mxu0 %v5347
    %5494 = vmatpush1.bf16.msra.mxu0 %v5346
    %5495 = vmatprep.subr.bf16.mxu0 %v5345
    %5496 = vmatpush1.bf16.msra.mxu0 %v5344
    %5497 = vmatprep.subr.bf16.mxu0 %v5375
    %5498 = vmatpush2.bf16.msra.mxu0 %v5374
    %5499 = vmatprep.subr.bf16.mxu0 %v5373
    %5500 = vmatpush2.bf16.msra.mxu0 %v5372
    %5501 = vmatprep.subr.bf16.mxu0 %v5371
    %5502 = vmatpush2.bf16.msra.mxu0 %v5370
    %5503 = vmatprep.subr.bf16.mxu0 %v5369
    %5504 = vmatpush2.bf16.msra.mxu0 %v5368
    %5505 = vmatprep.subr.bf16.mxu0 %v5367
    %5506 = vmatpush2.bf16.msra.mxu0 %v5366
    %5507 = vmatprep.subr.bf16.mxu0 %v5365
    %5508 = vmatpush2.bf16.msra.mxu0 %v5364
    %5509 = vmatprep.subr.bf16.mxu0 %v5363
    %5510 = vmatpush2.bf16.msra.mxu0 %v5362
    %5511 = vmatprep.subr.bf16.mxu0 %v5361
    %5512 = vmatpush2.bf16.msra.mxu0 %v5360
    %5513 = vmatprep.mubr.bf16.mxu0 %v5043
    %5514 = vmatmul.mubr.bf16.gmra.mxu0 %v5042
    %v5515 = vpop.f32.mrf.mxu0
    %v5516 = vadd.f32 %v5475, %v5515
    %v5517 = vpop.f32.mrf.mxu0
    %v5518 = vadd.f32 %v5477, %v5517
    %v5519 = vpop.f32.mrf.mxu0
    %v5520 = vpop.f32.mrf.mxu0
    %5521 = vdwg.mxu0
    %v5522 = vmax.f32 %v5516, 0.0
    %v5523 = vmax.f32 %v5518, 0.0
    %v5524 = vpack.c.bf16 %v5522, %v5522
    %v5525 = vpack.c.bf16 %v5523, %v5523
    %v5526 = vlaneseq
    %v5527 = vand.u32 %v5526, 127
    %vm5528 = vcmp.lt.s32.totalorder %v5527, 0
    %v5529 = vsub.s32 0, %v5527
    %v5530 = vsel %vm5528, %v5529, %v5527
    %v5531 = vshrl.u32 %v5530, 2
    %v5532 = vand.u32 %v5530, 3
    %v5533 = vsub.s32 0, %v5532
    %v5534 = vsel %vm5528, %v5533, %v5532
    %vm5535 = vcmp.ne.s32.totalorder %v5534, 0
    %vm5536 = vcmp.lt.s32.totalorder %v5534, 0
    %vm5537 = vmand %vm5536, %vm5535
    %v5538 = vadd.s32 %v5534, 4
    %v5539 = vsel %vm5537, %v5538, %v5534
    %vm5540 = vcmp.eq.s32.totalorder %v5539, 0
    %v5541 = vsel %vm5540, 1, 0
    %v5542 = vcvt.s32.f32 %v5541
    %v5543 = vld [vmem:[%s11] sm:$0xf]
    %v5544 = vld [vmem:[%s11 + $0x4] sm:$0xf]
    %v5545 = vld [vmem:[%s11 + $0x8] sm:$0xf]
    %v5546 = vld [vmem:[%s11 + $0xc] sm:$0xf]
    %v5547 = vld [vmem:[%s11 + $0x10] sm:$0xf]
    %v5548 = vld [vmem:[%s11 + $0x14] sm:$0xf]
    %v5549 = vld [vmem:[%s11 + $0x18] sm:$0xf]
    %v5550 = vld [vmem:[%s11 + $0x1c] sm:$0xf]
    %v5551 = vld [vmem:[%s11 + $0x20] sm:$0xf]
    %v5552 = vld [vmem:[%s11 + $0x24] sm:$0xf]
    %v5553 = vld [vmem:[%s11 + $0x28] sm:$0xf]
    %v5554 = vld [vmem:[%s11 + $0x2c] sm:$0xf]
    %v5555 = vld [vmem:[%s11 + $0x30] sm:$0xf]
    %v5556 = vld [vmem:[%s11 + $0x34] sm:$0xf]
    %v5557 = vld [vmem:[%s11 + $0x38] sm:$0xf]
    %v5558 = vld [vmem:[%s11 + $0x3c] sm:$0xf]
    %v5559 = vld [vmem:[%s11 + $0x40] sm:$0xf]
    %v5560 = vld [vmem:[%s11 + $0x44] sm:$0xf]
    %v5561 = vld [vmem:[%s11 + $0x48] sm:$0xf]
    %v5562 = vld [vmem:[%s11 + $0x4c] sm:$0xf]
    %v5563 = vld [vmem:[%s11 + $0x50] sm:$0xf]
    %v5564 = vld [vmem:[%s11 + $0x54] sm:$0xf]
    %v5565 = vld [vmem:[%s11 + $0x58] sm:$0xf]
    %v5566 = vld [vmem:[%s11 + $0x5c] sm:$0xf]
    %v5567 = vld [vmem:[%s11 + $0x60] sm:$0xf]
    %v5568 = vld [vmem:[%s11 + $0x64] sm:$0xf]
    %v5569 = vld [vmem:[%s11 + $0x68] sm:$0xf]
    %v5570 = vld [vmem:[%s11 + $0x6c] sm:$0xf]
    %v5571 = vld [vmem:[%s11 + $0x70] sm:$0xf]
    %v5572 = vld [vmem:[%s11 + $0x74] sm:$0xf]
    %v5573 = vld [vmem:[%s11 + $0x78] sm:$0xf]
    %v5574 = vld [vmem:[%s11 + $0x7c] sm:$0xf]
    %v5575 = vld [vmem:[%s12] sm:$0x1]
    %v5577 = vlaneseq
    %v5578 = vshrl.u32 %v5577, 7
    %v5579 = vsub.s32 0, %v5578
    %v5580 = vrot.slane %v5575, %v5579
    %v5614 = vunpack.c.l.b16 %v5543
    %v5615 = vunpack.c.l.b16 %v5544
    %v5616 = vunpack.c.l.b16 %v5545
    %v5617 = vunpack.c.l.b16 %v5546
    %v5618 = vunpack.c.l.b16 %v5547
    %v5619 = vunpack.c.l.b16 %v5548
    %v5620 = vunpack.c.l.b16 %v5549
    %v5621 = vunpack.c.l.b16 %v5550
    %v5622 = vunpack.c.l.b16 %v5551
    %v5623 = vunpack.c.l.b16 %v5552
    %v5624 = vunpack.c.l.b16 %v5553
    %v5625 = vunpack.c.l.b16 %v5554
    %v5626 = vunpack.c.l.b16 %v5555
    %v5627 = vunpack.c.l.b16 %v5556
    %v5628 = vunpack.c.l.b16 %v5557
    %v5629 = vunpack.c.l.b16 %v5558
    %v5630 = vunpack.c.l.b16 %v5559
    %v5631 = vunpack.c.l.b16 %v5560
    %v5632 = vunpack.c.l.b16 %v5561
    %v5633 = vunpack.c.l.b16 %v5562
    %v5634 = vunpack.c.l.b16 %v5563
    %v5635 = vunpack.c.l.b16 %v5564
    %v5636 = vunpack.c.l.b16 %v5565
    %v5637 = vunpack.c.l.b16 %v5566
    %v5638 = vunpack.c.l.b16 %v5567
    %v5639 = vunpack.c.l.b16 %v5568
    %v5640 = vunpack.c.l.b16 %v5569
    %v5641 = vunpack.c.l.b16 %v5570
    %v5642 = vunpack.c.l.b16 %v5571
    %v5643 = vunpack.c.l.b16 %v5572
    %v5644 = vunpack.c.l.b16 %v5573
    %v5645 = vunpack.c.l.b16 %v5574
    %v5646 = vpack.c.b16 %v5615, %v5614
    %v5647 = vpack.c.b16 %v5617, %v5616
    %v5648 = vpack.c.b16 %v5619, %v5618
    %v5649 = vpack.c.b16 %v5621, %v5620
    %v5650 = vpack.c.b16 %v5623, %v5622
    %v5651 = vpack.c.b16 %v5625, %v5624
    %v5652 = vpack.c.b16 %v5627, %v5626
    %v5653 = vpack.c.b16 %v5629, %v5628
    %v5654 = vpack.c.b16 %v5631, %v5630
    %v5655 = vpack.c.b16 %v5633, %v5632
    %v5656 = vpack.c.b16 %v5635, %v5634
    %v5657 = vpack.c.b16 %v5637, %v5636
    %v5658 = vpack.c.b16 %v5639, %v5638
    %v5659 = vpack.c.b16 %v5641, %v5640
    %v5660 = vpack.c.b16 %v5643, %v5642
    %v5661 = vpack.c.b16 %v5645, %v5644
    %5678 = vmatprep.subr.bf16.mxu0 0
    %5679 = vmatpush1.bf16.msra.mxu0 %v5653
    %5680 = vmatprep.subr.bf16.mxu0 0
    %5681 = vmatpush1.bf16.msra.mxu0 %v5652
    %5682 = vmatprep.subr.bf16.mxu0 0
    %5683 = vmatpush1.bf16.msra.mxu0 %v5651
    %5684 = vmatprep.subr.bf16.mxu0 0
    %5685 = vmatpush1.bf16.msra.mxu0 %v5650
    %5686 = vmatprep.subr.bf16.mxu0 0
    %5687 = vmatpush1.bf16.msra.mxu0 %v5649
    %5688 = vmatprep.subr.bf16.mxu0 0
    %5689 = vmatpush1.bf16.msra.mxu0 %v5648
    %5690 = vmatprep.subr.bf16.mxu0 0
    %5691 = vmatpush1.bf16.msra.mxu0 %v5647
    %5692 = vmatprep.subr.bf16.mxu0 0
    %5693 = vmatpush1.bf16.msra.mxu0 %v5646
    %5694 = vmatprep.subr.bf16.mxu0 0
    %5695 = vmatpush2.bf16.msra.mxu0 %v5661
    %5696 = vmatprep.subr.bf16.mxu0 0
    %5697 = vmatpush2.bf16.msra.mxu0 %v5660
    %5698 = vmatprep.subr.bf16.mxu0 0
    %5699 = vmatpush2.bf16.msra.mxu0 %v5659
    %5700 = vmatprep.subr.bf16.mxu0 0
    %5701 = vmatpush2.bf16.msra.mxu0 %v5658
    %5702 = vmatprep.subr.bf16.mxu0 0
    %5703 = vmatpush2.bf16.msra.mxu0 %v5657
    %5704 = vmatprep.subr.bf16.mxu0 0
    %5705 = vmatpush2.bf16.msra.mxu0 %v5656
    %5706 = vmatprep.subr.bf16.mxu0 0
    %5707 = vmatpush2.bf16.msra.mxu0 %v5655
    %5708 = vmatprep.subr.bf16.mxu0 0
    %5709 = vmatpush2.bf16.msra.mxu0 %v5654
    %5710 = vmatprep.mubr.bf16.mxu0 %v5525
    %5711 = vmatmul.mubr.bf16.gmra.mxu0 %v5524
    %v5712 = vpop.f32.mrf.mxu0
    %v5713 = vadd.f32 %v5580, %v5712
    %v5714 = vpop.f32.mrf.mxu0
    %v5715 = vpop.f32.mrf.mxu0
    %v5716 = vpop.f32.mrf.mxu0
    %5717 = vdwg.mxu0
    %v5718 = vadd.f32 %v5713, %v5542
    %vm5719 = vcmask 66560
    %5720 = vst.msk [vmem:[#allocation15] sm:$0x3] %vm5719, %v5718
    %v5723 = vunpack.c.l.s4 1966171168
    %v5724 = vunpack.c.0.s8 %v5723
    %v5725 = vlaneseq
    %v5726 = vshrl.u32 %v5725, 7
    %v5727 = vsub.s32 %v5724, %v5726
    %v5728 = vrot.slane %v5718, %v5727
    %v5729 = vcombine.high %v5728, %v5728
    %v5731 = vunpack.c.l.s4 1966171168
    %v5732 = vunpack.c.0.s8 %v5731
    %v5733 = vlaneseq
    %v5734 = vshrl.u32 %v5733, 7
    %v5735 = vsub.s32 %v5732, %v5734
    %v5736 = vrot.slane %v5728, %v5735
    %v5738 = vunpack.c.l.s4 1966171168
    %v5739 = vunpack.c.0.s8 %v5738
    %v5740 = vlaneseq
    %v5741 = vshrl.u32 %v5740, 7
    %v5742 = vsub.s32 %v5739, %v5741
    %v5743 = vrot.slane %v5729, %v5742
    %v5744 = vlaneseq
    %v5745 = vshrl.u32 %v5744, 7
    %v5746 = vsub.s32 0, %v5745
    %v5747 = vrot.slane %v5736, %v5746
    %v5748 = vlaneseq
    %v5749 = vshrl.u32 %v5748, 7
    %v5750 = vsub.s32 0, %v5749
    %v5751 = vrot.slane %v5743, %v5750
    %v5754 = vmul.f32 %v308, %v5747
    %v5755 = vmul.f32 %v313, %v5747
    %v5756 = vmul.f32 %v318, %v5747
    %v5757 = vmul.f32 %v323, %v5747
    %v5758 = vmul.f32 %v328, %v5747
    %v5759 = vmul.f32 %v333, %v5747
    %v5760 = vmul.f32 %v338, %v5747
    %v5761 = vmul.f32 %v343, %v5747
    %v5762 = vmul.f32 %v348, %v5747
    %v5763 = vmul.f32 %v353, %v5747
    %v5764 = vmul.f32 %v358, %v5747
    %v5765 = vmul.f32 %v363, %v5747
    %v5766 = vmul.f32 %v368, %v5747
    %v5767 = vmul.f32 %v373, %v5747
    %v5768 = vmul.f32 %v378, %v5747
    %v5769 = vmul.f32 %v383, %v5747
    %v5770 = vmul.f32 %v388, %v5751
    %v5771 = vmul.f32 %v393, %v5751
    %v5772 = vmul.f32 %v398, %v5751
    %v5773 = vmul.f32 %v403, %v5751
    %v5774 = vmul.f32 %v408, %v5751
    %v5775 = vmul.f32 %v413, %v5751
    %v5776 = vmul.f32 %v418, %v5751
    %v5777 = vmul.f32 %v423, %v5751
    %v5778 = vmul.f32 %v428, %v5751
    %v5779 = vmul.f32 %v433, %v5751
    %v5780 = vmul.f32 %v438, %v5751
    %v5781 = vmul.f32 %v443, %v5751
    %v5782 = vmul.f32 %v448, %v5751
    %v5783 = vmul.f32 %v453, %v5751
    %v5784 = vmul.f32 %v458, %v5751
    %v5785 = vmul.f32 %v463, %v5751
    %v5786 = vmul.f32 %v503, %v5747
    %v5787 = vmul.f32 %v507, %v5747
    %v5788 = vmul.f32 %v511, %v5747
    %v5789 = vmul.f32 %v515, %v5747
    %v5790 = vmul.f32 %v519, %v5747
    %v5791 = vmul.f32 %v523, %v5747
    %v5792 = vmul.f32 %v527, %v5747
    %v5793 = vmul.f32 %v531, %v5747
    %v5794 = vmul.f32 %v535, %v5747
    %v5795 = vmul.f32 %v539, %v5747
    %v5796 = vmul.f32 %v543, %v5747
    %v5797 = vmul.f32 %v547, %v5747
    %v5798 = vmul.f32 %v551, %v5747
    %v5799 = vmul.f32 %v555, %v5747
    %v5800 = vmul.f32 %v559, %v5747
    %v5801 = vmul.f32 %v563, %v5747
    %v5802 = vmul.f32 %v567, %v5751
    %v5803 = vmul.f32 %v571, %v5751
    %v5804 = vmul.f32 %v575, %v5751
    %v5805 = vmul.f32 %v579, %v5751
    %v5806 = vmul.f32 %v583, %v5751
    %v5807 = vmul.f32 %v587, %v5751
    %v5808 = vmul.f32 %v591, %v5751
    %v5809 = vmul.f32 %v595, %v5751
    %v5810 = vmul.f32 %v599, %v5751
    %v5811 = vmul.f32 %v603, %v5751
    %v5812 = vmul.f32 %v607, %v5751
    %v5813 = vmul.f32 %v611, %v5751
    %v5814 = vmul.f32 %v615, %v5751
    %v5815 = vmul.f32 %v619, %v5751
    %v5816 = vmul.f32 %v623, %v5751
    %v5817 = vmul.f32 %v627, %v5751
    %5850 = vrot.lane.b32.xlu0 %v5786, 125
    %v5851 = vpop.permute.xlu0 %5850
    %5852 = vrot.lane.b32.xlu0 %v5787, 125
    %v5853 = vpop.permute.xlu0 %5852
    %5854 = vrot.lane.b32.xlu0 %v5788, 125
    %v5855 = vpop.permute.xlu0 %5854
    %5856 = vrot.lane.b32.xlu0 %v5789, 125
    %v5857 = vpop.permute.xlu0 %5856
    %5858 = vrot.lane.b32.xlu0 %v5790, 125
    %v5859 = vpop.permute.xlu0 %5858
    %5860 = vrot.lane.b32.xlu0 %v5791, 125
    %v5861 = vpop.permute.xlu0 %5860
    %5862 = vrot.lane.b32.xlu0 %v5792, 125
    %v5863 = vpop.permute.xlu0 %5862
    %5864 = vrot.lane.b32.xlu0 %v5793, 125
    %v5865 = vpop.permute.xlu0 %5864
    %5866 = vrot.lane.b32.xlu0 %v5794, 125
    %v5867 = vpop.permute.xlu0 %5866
    %5868 = vrot.lane.b32.xlu0 %v5795, 125
    %v5869 = vpop.permute.xlu0 %5868
    %5870 = vrot.lane.b32.xlu0 %v5796, 125
    %v5871 = vpop.permute.xlu0 %5870
    %5872 = vrot.lane.b32.xlu0 %v5797, 125
    %v5873 = vpop.permute.xlu0 %5872
    %5874 = vrot.lane.b32.xlu0 %v5798, 125
    %v5875 = vpop.permute.xlu0 %5874
    %5876 = vrot.lane.b32.xlu0 %v5799, 125
    %v5877 = vpop.permute.xlu0 %5876
    %5878 = vrot.lane.b32.xlu0 %v5800, 125
    %v5879 = vpop.permute.xlu0 %5878
    %5880 = vrot.lane.b32.xlu0 %v5801, 125
    %v5881 = vpop.permute.xlu0 %5880
    %5882 = vrot.lane.b32.xlu0 %v5802, 125
    %v5883 = vpop.permute.xlu0 %5882
    %5884 = vrot.lane.b32.xlu0 %v5803, 125
    %v5885 = vpop.permute.xlu0 %5884
    %5886 = vrot.lane.b32.xlu0 %v5804, 125
    %v5887 = vpop.permute.xlu0 %5886
    %5888 = vrot.lane.b32.xlu0 %v5805, 125
    %v5889 = vpop.permute.xlu0 %5888
    %5890 = vrot.lane.b32.xlu0 %v5806, 125
    %v5891 = vpop.permute.xlu0 %5890
    %5892 = vrot.lane.b32.xlu0 %v5807, 125
    %v5893 = vpop.permute.xlu0 %5892
    %5894 = vrot.lane.b32.xlu0 %v5808, 125
    %v5895 = vpop.permute.xlu0 %5894
    %5896 = vrot.lane.b32.xlu0 %v5809, 125
    %v5897 = vpop.permute.xlu0 %5896
    %5898 = vrot.lane.b32.xlu0 %v5810, 125
    %v5899 = vpop.permute.xlu0 %5898
    %5900 = vrot.lane.b32.xlu0 %v5811, 125
    %v5901 = vpop.permute.xlu0 %5900
    %5902 = vrot.lane.b32.xlu0 %v5812, 125
    %v5903 = vpop.permute.xlu0 %5902
    %5904 = vrot.lane.b32.xlu0 %v5813, 125
    %v5905 = vpop.permute.xlu0 %5904
    %5906 = vrot.lane.b32.xlu0 %v5814, 125
    %v5907 = vpop.permute.xlu0 %5906
    %5908 = vrot.lane.b32.xlu0 %v5815, 125
    %v5909 = vpop.permute.xlu0 %5908
    %5910 = vrot.lane.b32.xlu0 %v5816, 125
    %v5911 = vpop.permute.xlu0 %5910
    %5912 = vrot.lane.b32.xlu0 %v5817, 125
    %v5913 = vpop.permute.xlu0 %5912
    %v5946 = vadd.f32 %v5754, %v5851
    %v5947 = vadd.f32 %v5755, %v5853
    %v5948 = vadd.f32 %v5756, %v5855
    %v5949 = vadd.f32 %v5757, %v5857
    %v5950 = vadd.f32 %v5758, %v5859
    %v5951 = vadd.f32 %v5759, %v5861
    %v5952 = vadd.f32 %v5760, %v5863
    %v5953 = vadd.f32 %v5761, %v5865
    %v5954 = vadd.f32 %v5762, %v5867
    %v5955 = vadd.f32 %v5763, %v5869
    %v5956 = vadd.f32 %v5764, %v5871
    %v5957 = vadd.f32 %v5765, %v5873
    %v5958 = vadd.f32 %v5766, %v5875
    %v5959 = vadd.f32 %v5767, %v5877
    %v5960 = vadd.f32 %v5768, %v5879
    %v5961 = vadd.f32 %v5769, %v5881
    %v5962 = vadd.f32 %v5770, %v5883
    %v5963 = vadd.f32 %v5771, %v5885
    %v5964 = vadd.f32 %v5772, %v5887
    %v5965 = vadd.f32 %v5773, %v5889
    %v5966 = vadd.f32 %v5774, %v5891
    %v5967 = vadd.f32 %v5775, %v5893
    %v5968 = vadd.f32 %v5776, %v5895
    %v5969 = vadd.f32 %v5777, %v5897
    %v5970 = vadd.f32 %v5778, %v5899
    %v5971 = vadd.f32 %v5779, %v5901
    %v5972 = vadd.f32 %v5780, %v5903
    %v5973 = vadd.f32 %v5781, %v5905
    %v5974 = vadd.f32 %v5782, %v5907
    %v5975 = vadd.f32 %v5783, %v5909
    %v5976 = vadd.f32 %v5784, %v5911
    %v5977 = vadd.f32 %v5785, %v5913
    %v5978 = vmul.f32 %v699, %v5747
    %v5979 = vmul.f32 %v703, %v5747
    %v5980 = vmul.f32 %v707, %v5747
    %v5981 = vmul.f32 %v711, %v5747
    %v5982 = vmul.f32 %v715, %v5747
    %v5983 = vmul.f32 %v719, %v5747
    %v5984 = vmul.f32 %v723, %v5747
    %v5985 = vmul.f32 %v727, %v5747
    %v5986 = vmul.f32 %v731, %v5747
    %v5987 = vmul.f32 %v735, %v5747
    %v5988 = vmul.f32 %v739, %v5747
    %v5989 = vmul.f32 %v743, %v5747
    %v5990 = vmul.f32 %v747, %v5747
    %v5991 = vmul.f32 %v751, %v5747
    %v5992 = vmul.f32 %v755, %v5747
    %v5993 = vmul.f32 %v759, %v5747
    %v5994 = vmul.f32 %v763, %v5751
    %v5995 = vmul.f32 %v767, %v5751
    %v5996 = vmul.f32 %v771, %v5751
    %v5997 = vmul.f32 %v775, %v5751
    %v5998 = vmul.f32 %v779, %v5751
    %v5999 = vmul.f32 %v783, %v5751
    %v6000 = vmul.f32 %v787, %v5751
    %v6001 = vmul.f32 %v791, %v5751
    %v6002 = vmul.f32 %v795, %v5751
    %v6003 = vmul.f32 %v799, %v5751
    %v6004 = vmul.f32 %v803, %v5751
    %v6005 = vmul.f32 %v807, %v5751
    %v6006 = vmul.f32 %v811, %v5751
    %v6007 = vmul.f32 %v815, %v5751
    %v6008 = vmul.f32 %v819, %v5751
    %v6009 = vmul.f32 %v823, %v5751
    %6042 = vrot.lane.b32.xlu0 %v5978, 122
    %v6043 = vpop.permute.xlu0 %6042
    %6044 = vrot.lane.b32.xlu0 %v5979, 122
    %v6045 = vpop.permute.xlu0 %6044
    %6046 = vrot.lane.b32.xlu0 %v5980, 122
    %v6047 = vpop.permute.xlu0 %6046
    %6048 = vrot.lane.b32.xlu0 %v5981, 122
    %v6049 = vpop.permute.xlu0 %6048
    %6050 = vrot.lane.b32.xlu0 %v5982, 122
    %v6051 = vpop.permute.xlu0 %6050
    %6052 = vrot.lane.b32.xlu0 %v5983, 122
    %v6053 = vpop.permute.xlu0 %6052
    %6054 = vrot.lane.b32.xlu0 %v5984, 122
    %v6055 = vpop.permute.xlu0 %6054
    %6056 = vrot.lane.b32.xlu0 %v5985, 122
    %v6057 = vpop.permute.xlu0 %6056
    %6058 = vrot.lane.b32.xlu0 %v5986, 122
    %v6059 = vpop.permute.xlu0 %6058
    %6060 = vrot.lane.b32.xlu0 %v5987, 122
    %v6061 = vpop.permute.xlu0 %6060
    %6062 = vrot.lane.b32.xlu0 %v5988, 122
    %v6063 = vpop.permute.xlu0 %6062
    %6064 = vrot.lane.b32.xlu0 %v5989, 122
    %v6065 = vpop.permute.xlu0 %6064
    %6066 = vrot.lane.b32.xlu0 %v5990, 122
    %v6067 = vpop.permute.xlu0 %6066
    %6068 = vrot.lane.b32.xlu0 %v5991, 122
    %v6069 = vpop.permute.xlu0 %6068
    %6070 = vrot.lane.b32.xlu0 %v5992, 122
    %v6071 = vpop.permute.xlu0 %6070
    %6072 = vrot.lane.b32.xlu0 %v5993, 122
    %v6073 = vpop.permute.xlu0 %6072
    %6074 = vrot.lane.b32.xlu0 %v5994, 122
    %v6075 = vpop.permute.xlu0 %6074
    %6076 = vrot.lane.b32.xlu0 %v5995, 122
    %v6077 = vpop.permute.xlu0 %6076
    %6078 = vrot.lane.b32.xlu0 %v5996, 122
    %v6079 = vpop.permute.xlu0 %6078
    %6080 = vrot.lane.b32.xlu0 %v5997, 122
    %v6081 = vpop.permute.xlu0 %6080
    %6082 = vrot.lane.b32.xlu0 %v5998, 122
    %v6083 = vpop.permute.xlu0 %6082
    %6084 = vrot.lane.b32.xlu0 %v5999, 122
    %v6085 = vpop.permute.xlu0 %6084
    %6086 = vrot.lane.b32.xlu0 %v6000, 122
    %v6087 = vpop.permute.xlu0 %6086
    %6088 = vrot.lane.b32.xlu0 %v6001, 122
    %v6089 = vpop.permute.xlu0 %6088
    %6090 = vrot.lane.b32.xlu0 %v6002, 122
    %v6091 = vpop.permute.xlu0 %6090
    %6092 = vrot.lane.b32.xlu0 %v6003, 122
    %v6093 = vpop.permute.xlu0 %6092
    %6094 = vrot.lane.b32.xlu0 %v6004, 122
    %v6095 = vpop.permute.xlu0 %6094
    %6096 = vrot.lane.b32.xlu0 %v6005, 122
    %v6097 = vpop.permute.xlu0 %6096
    %6098 = vrot.lane.b32.xlu0 %v6006, 122
    %v6099 = vpop.permute.xlu0 %6098
    %6100 = vrot.lane.b32.xlu0 %v6007, 122
    %v6101 = vpop.permute.xlu0 %6100
    %6102 = vrot.lane.b32.xlu0 %v6008, 122
    %v6103 = vpop.permute.xlu0 %6102
    %6104 = vrot.lane.b32.xlu0 %v6009, 122
    %v6105 = vpop.permute.xlu0 %6104
    %v6138 = vadd.f32 %v5946, %v6043
    %v6139 = vadd.f32 %v5947, %v6045
    %v6140 = vadd.f32 %v5948, %v6047
    %v6141 = vadd.f32 %v5949, %v6049
    %v6142 = vadd.f32 %v5950, %v6051
    %v6143 = vadd.f32 %v5951, %v6053
    %v6144 = vadd.f32 %v5952, %v6055
    %v6145 = vadd.f32 %v5953, %v6057
    %v6146 = vadd.f32 %v5954, %v6059
    %v6147 = vadd.f32 %v5955, %v6061
    %v6148 = vadd.f32 %v5956, %v6063
    %v6149 = vadd.f32 %v5957, %v6065
    %v6150 = vadd.f32 %v5958, %v6067
    %v6151 = vadd.f32 %v5959, %v6069
    %v6152 = vadd.f32 %v5960, %v6071
    %v6153 = vadd.f32 %v5961, %v6073
    %v6154 = vadd.f32 %v5962, %v6075
    %v6155 = vadd.f32 %v5963, %v6077
    %v6156 = vadd.f32 %v5964, %v6079
    %v6157 = vadd.f32 %v5965, %v6081
    %v6158 = vadd.f32 %v5966, %v6083
    %v6159 = vadd.f32 %v5967, %v6085
    %v6160 = vadd.f32 %v5968, %v6087
    %v6161 = vadd.f32 %v5969, %v6089
    %v6162 = vadd.f32 %v5970, %v6091
    %v6163 = vadd.f32 %v5971, %v6093
    %v6164 = vadd.f32 %v5972, %v6095
    %v6165 = vadd.f32 %v5973, %v6097
    %v6166 = vadd.f32 %v5974, %v6099
    %v6167 = vadd.f32 %v5975, %v6101
    %v6168 = vadd.f32 %v5976, %v6103
    %v6169 = vadd.f32 %v5977, %v6105
    %v6170 = vld [vmem:[%s13] sm:$0x7]
    %6172 = vset.pattern.permute.xlu0 0
    %6173 = vperm.xlu0 %6172, %v6138
    %v6174 = vpop.permute.xlu0 %6173
    %6177 = vset.pattern.permute.xlu0 0
    %6178 = vperm.xlu0 %6177, %v6139
    %v6179 = vpop.permute.xlu0 %6178
    %6182 = vset.pattern.permute.xlu0 0
    %6183 = vperm.xlu0 %6182, %v6140
    %v6184 = vpop.permute.xlu0 %6183
    %6187 = vset.pattern.permute.xlu0 0
    %6188 = vperm.xlu0 %6187, %v6141
    %v6189 = vpop.permute.xlu0 %6188
    %6192 = vset.pattern.permute.xlu0 0
    %6193 = vperm.xlu0 %6192, %v6142
    %v6194 = vpop.permute.xlu0 %6193
    %6197 = vset.pattern.permute.xlu0 0
    %6198 = vperm.xlu0 %6197, %v6143
    %v6199 = vpop.permute.xlu0 %6198
    %6202 = vset.pattern.permute.xlu0 0
    %6203 = vperm.xlu0 %6202, %v6144
    %v6204 = vpop.permute.xlu0 %6203
    %6207 = vset.pattern.permute.xlu0 0
    %6208 = vperm.xlu0 %6207, %v6145
    %v6209 = vpop.permute.xlu0 %6208
    %6212 = vset.pattern.permute.xlu0 0
    %6213 = vperm.xlu0 %6212, %v6146
    %v6214 = vpop.permute.xlu0 %6213
    %6217 = vset.pattern.permute.xlu0 0
    %6218 = vperm.xlu0 %6217, %v6147
    %v6219 = vpop.permute.xlu0 %6218
    %6222 = vset.pattern.permute.xlu0 0
    %6223 = vperm.xlu0 %6222, %v6148
    %v6224 = vpop.permute.xlu0 %6223
    %6227 = vset.pattern.permute.xlu0 0
    %6228 = vperm.xlu0 %6227, %v6149
    %v6229 = vpop.permute.xlu0 %6228
    %6232 = vset.pattern.permute.xlu0 0
    %6233 = vperm.xlu0 %6232, %v6150
    %v6234 = vpop.permute.xlu0 %6233
    %6237 = vset.pattern.permute.xlu0 0
    %6238 = vperm.xlu0 %6237, %v6151
    %v6239 = vpop.permute.xlu0 %6238
    %6242 = vset.pattern.permute.xlu0 0
    %6243 = vperm.xlu0 %6242, %v6152
    %v6244 = vpop.permute.xlu0 %6243
    %6247 = vset.pattern.permute.xlu0 0
    %6248 = vperm.xlu0 %6247, %v6153
    %v6249 = vpop.permute.xlu0 %6248
    %6252 = vset.pattern.permute.xlu0 0
    %6253 = vperm.xlu0 %6252, %v6154
    %v6254 = vpop.permute.xlu0 %6253
    %6257 = vset.pattern.permute.xlu0 0
    %6258 = vperm.xlu0 %6257, %v6155
    %v6259 = vpop.permute.xlu0 %6258
    %6262 = vset.pattern.permute.xlu0 0
    %6263 = vperm.xlu0 %6262, %v6156
    %v6264 = vpop.permute.xlu0 %6263
    %6267 = vset.pattern.permute.xlu0 0
    %6268 = vperm.xlu0 %6267, %v6157
    %v6269 = vpop.permute.xlu0 %6268
    %6272 = vset.pattern.permute.xlu0 0
    %6273 = vperm.xlu0 %6272, %v6158
    %v6274 = vpop.permute.xlu0 %6273
    %6277 = vset.pattern.permute.xlu0 0
    %6278 = vperm.xlu0 %6277, %v6159
    %v6279 = vpop.permute.xlu0 %6278
    %6282 = vset.pattern.permute.xlu0 0
    %6283 = vperm.xlu0 %6282, %v6160
    %v6284 = vpop.permute.xlu0 %6283
    %6287 = vset.pattern.permute.xlu0 0
    %6288 = vperm.xlu0 %6287, %v6161
    %v6289 = vpop.permute.xlu0 %6288
    %6292 = vset.pattern.permute.xlu0 0
    %6293 = vperm.xlu0 %6292, %v6162
    %v6294 = vpop.permute.xlu0 %6293
    %6297 = vset.pattern.permute.xlu0 0
    %6298 = vperm.xlu0 %6297, %v6163
    %v6299 = vpop.permute.xlu0 %6298
    %6302 = vset.pattern.permute.xlu0 0
    %6303 = vperm.xlu0 %6302, %v6164
    %v6304 = vpop.permute.xlu0 %6303
    %6307 = vset.pattern.permute.xlu0 0
    %6308 = vperm.xlu0 %6307, %v6165
    %v6309 = vpop.permute.xlu0 %6308
    %6312 = vset.pattern.permute.xlu0 0
    %6313 = vperm.xlu0 %6312, %v6166
    %v6314 = vpop.permute.xlu0 %6313
    %6317 = vset.pattern.permute.xlu0 0
    %6318 = vperm.xlu0 %6317, %v6167
    %v6319 = vpop.permute.xlu0 %6318
    %6322 = vset.pattern.permute.xlu0 0
    %6323 = vperm.xlu0 %6322, %v6168
    %v6324 = vpop.permute.xlu0 %6323
    %6327 = vset.pattern.permute.xlu0 0
    %6328 = vperm.xlu0 %6327, %v6169
    %v6329 = vpop.permute.xlu0 %6328
    %v6331 = vlaneseq
    %v6332 = vshrl.u32 %v6331, 7
    %v6333 = vsub.s32 0, %v6332
    %v6334 = vrot.slane %v6170, %v6333
    %v6335 = vmul.f32 %v6174, %v6334
    %v6336 = vmul.f32 %v6179, %v6334
    %v6337 = vmul.f32 %v6184, %v6334
    %v6338 = vmul.f32 %v6189, %v6334
    %v6339 = vmul.f32 %v6194, %v6334
    %v6340 = vmul.f32 %v6199, %v6334
    %v6341 = vmul.f32 %v6204, %v6334
    %v6342 = vmul.f32 %v6209, %v6334
    %v6343 = vmul.f32 %v6214, %v6334
    %v6344 = vmul.f32 %v6219, %v6334
    %v6345 = vmul.f32 %v6224, %v6334
    %v6346 = vmul.f32 %v6229, %v6334
    %v6347 = vmul.f32 %v6234, %v6334
    %v6348 = vmul.f32 %v6239, %v6334
    %v6349 = vmul.f32 %v6244, %v6334
    %v6350 = vmul.f32 %v6249, %v6334
    %v6351 = vmul.f32 %v6254, %v6334
    %v6352 = vmul.f32 %v6259, %v6334
    %v6353 = vmul.f32 %v6264, %v6334
    %v6354 = vmul.f32 %v6269, %v6334
    %v6355 = vmul.f32 %v6274, %v6334
    %v6356 = vmul.f32 %v6279, %v6334
    %v6357 = vmul.f32 %v6284, %v6334
    %v6358 = vmul.f32 %v6289, %v6334
    %v6359 = vmul.f32 %v6294, %v6334
    %v6360 = vmul.f32 %v6299, %v6334
    %v6361 = vmul.f32 %v6304, %v6334
    %v6362 = vmul.f32 %v6309, %v6334
    %v6363 = vmul.f32 %v6314, %v6334
    %v6364 = vmul.f32 %v6319, %v6334
    %v6365 = vmul.f32 %v6324, %v6334
    %v6366 = vmul.f32 %v6329, %v6334
    %6367 = vset.pattern.permute.xlu0 1
    %6368 = vperm.xlu0 %6367, %v6138
    %v6369 = vpop.permute.xlu0 %6368
    %6371 = vset.pattern.permute.xlu0 1
    %6372 = vperm.xlu0 %6371, %v6139
    %v6373 = vpop.permute.xlu0 %6372
    %6375 = vset.pattern.permute.xlu0 1
    %6376 = vperm.xlu0 %6375, %v6140
    %v6377 = vpop.permute.xlu0 %6376
    %6379 = vset.pattern.permute.xlu0 1
    %6380 = vperm.xlu0 %6379, %v6141
    %v6381 = vpop.permute.xlu0 %6380
    %6383 = vset.pattern.permute.xlu0 1
    %6384 = vperm.xlu0 %6383, %v6142
    %v6385 = vpop.permute.xlu0 %6384
    %6387 = vset.pattern.permute.xlu0 1
    %6388 = vperm.xlu0 %6387, %v6143
    %v6389 = vpop.permute.xlu0 %6388
    %6391 = vset.pattern.permute.xlu0 1
    %6392 = vperm.xlu0 %6391, %v6144
    %v6393 = vpop.permute.xlu0 %6392
    %6395 = vset.pattern.permute.xlu0 1
    %6396 = vperm.xlu0 %6395, %v6145
    %v6397 = vpop.permute.xlu0 %6396
    %6399 = vset.pattern.permute.xlu0 1
    %6400 = vperm.xlu0 %6399, %v6146
    %v6401 = vpop.permute.xlu0 %6400
    %6403 = vset.pattern.permute.xlu0 1
    %6404 = vperm.xlu0 %6403, %v6147
    %v6405 = vpop.permute.xlu0 %6404
    %6407 = vset.pattern.permute.xlu0 1
    %6408 = vperm.xlu0 %6407, %v6148
    %v6409 = vpop.permute.xlu0 %6408
    %6411 = vset.pattern.permute.xlu0 1
    %6412 = vperm.xlu0 %6411, %v6149
    %v6413 = vpop.permute.xlu0 %6412
    %6415 = vset.pattern.permute.xlu0 1
    %6416 = vperm.xlu0 %6415, %v6150
    %v6417 = vpop.permute.xlu0 %6416
    %6419 = vset.pattern.permute.xlu0 1
    %6420 = vperm.xlu0 %6419, %v6151
    %v6421 = vpop.permute.xlu0 %6420
    %6423 = vset.pattern.permute.xlu0 1
    %6424 = vperm.xlu0 %6423, %v6152
    %v6425 = vpop.permute.xlu0 %6424
    %6427 = vset.pattern.permute.xlu0 1
    %6428 = vperm.xlu0 %6427, %v6153
    %v6429 = vpop.permute.xlu0 %6428
    %6431 = vset.pattern.permute.xlu0 1
    %6432 = vperm.xlu0 %6431, %v6154
    %v6433 = vpop.permute.xlu0 %6432
    %6435 = vset.pattern.permute.xlu0 1
    %6436 = vperm.xlu0 %6435, %v6155
    %v6437 = vpop.permute.xlu0 %6436
    %6439 = vset.pattern.permute.xlu0 1
    %6440 = vperm.xlu0 %6439, %v6156
    %v6441 = vpop.permute.xlu0 %6440
    %6443 = vset.pattern.permute.xlu0 1
    %6444 = vperm.xlu0 %6443, %v6157
    %v6445 = vpop.permute.xlu0 %6444
    %6447 = vset.pattern.permute.xlu0 1
    %6448 = vperm.xlu0 %6447, %v6158
    %v6449 = vpop.permute.xlu0 %6448
    %6451 = vset.pattern.permute.xlu0 1
    %6452 = vperm.xlu0 %6451, %v6159
    %v6453 = vpop.permute.xlu0 %6452
    %6455 = vset.pattern.permute.xlu0 1
    %6456 = vperm.xlu0 %6455, %v6160
    %v6457 = vpop.permute.xlu0 %6456
    %6459 = vset.pattern.permute.xlu0 1
    %6460 = vperm.xlu0 %6459, %v6161
    %v6461 = vpop.permute.xlu0 %6460
    %6463 = vset.pattern.permute.xlu0 1
    %6464 = vperm.xlu0 %6463, %v6162
    %v6465 = vpop.permute.xlu0 %6464
    %6467 = vset.pattern.permute.xlu0 1
    %6468 = vperm.xlu0 %6467, %v6163
    %v6469 = vpop.permute.xlu0 %6468
    %6471 = vset.pattern.permute.xlu0 1
    %6472 = vperm.xlu0 %6471, %v6164
    %v6473 = vpop.permute.xlu0 %6472
    %6475 = vset.pattern.permute.xlu0 1
    %6476 = vperm.xlu0 %6475, %v6165
    %v6477 = vpop.permute.xlu0 %6476
    %6479 = vset.pattern.permute.xlu0 1
    %6480 = vperm.xlu0 %6479, %v6166
    %v6481 = vpop.permute.xlu0 %6480
    %6483 = vset.pattern.permute.xlu0 1
    %6484 = vperm.xlu0 %6483, %v6167
    %v6485 = vpop.permute.xlu0 %6484
    %6487 = vset.pattern.permute.xlu0 1
    %6488 = vperm.xlu0 %6487, %v6168
    %v6489 = vpop.permute.xlu0 %6488
    %6491 = vset.pattern.permute.xlu0 1
    %6492 = vperm.xlu0 %6491, %v6169
    %v6493 = vpop.permute.xlu0 %6492
    %v6495 = vlaneseq
    %v6496 = vshrl.u32 %v6495, 7
    %v6497 = vsub.s32 1, %v6496
    %v6498 = vrot.slane %v6170, %v6497
    %v6499 = vmul.f32 %v6369, %v6498
    %v6500 = vmul.f32 %v6373, %v6498
    %v6501 = vmul.f32 %v6377, %v6498
    %v6502 = vmul.f32 %v6381, %v6498
    %v6503 = vmul.f32 %v6385, %v6498
    %v6504 = vmul.f32 %v6389, %v6498
    %v6505 = vmul.f32 %v6393, %v6498
    %v6506 = vmul.f32 %v6397, %v6498
    %v6507 = vmul.f32 %v6401, %v6498
    %v6508 = vmul.f32 %v6405, %v6498
    %v6509 = vmul.f32 %v6409, %v6498
    %v6510 = vmul.f32 %v6413, %v6498
    %v6511 = vmul.f32 %v6417, %v6498
    %v6512 = vmul.f32 %v6421, %v6498
    %v6513 = vmul.f32 %v6425, %v6498
    %v6514 = vmul.f32 %v6429, %v6498
    %v6515 = vmul.f32 %v6433, %v6498
    %v6516 = vmul.f32 %v6437, %v6498
    %v6517 = vmul.f32 %v6441, %v6498
    %v6518 = vmul.f32 %v6445, %v6498
    %v6519 = vmul.f32 %v6449, %v6498
    %v6520 = vmul.f32 %v6453, %v6498
    %v6521 = vmul.f32 %v6457, %v6498
    %v6522 = vmul.f32 %v6461, %v6498
    %v6523 = vmul.f32 %v6465, %v6498
    %v6524 = vmul.f32 %v6469, %v6498
    %v6525 = vmul.f32 %v6473, %v6498
    %v6526 = vmul.f32 %v6477, %v6498
    %v6527 = vmul.f32 %v6481, %v6498
    %v6528 = vmul.f32 %v6485, %v6498
    %v6529 = vmul.f32 %v6489, %v6498
    %v6530 = vmul.f32 %v6493, %v6498
    %v6531 = vadd.f32 %v6335, %v6499
    %v6532 = vadd.f32 %v6336, %v6500
    %v6533 = vadd.f32 %v6337, %v6501
    %v6534 = vadd.f32 %v6338, %v6502
    %v6535 = vadd.f32 %v6339, %v6503
    %v6536 = vadd.f32 %v6340, %v6504
    %v6537 = vadd.f32 %v6341, %v6505
    %v6538 = vadd.f32 %v6342, %v6506
    %v6539 = vadd.f32 %v6343, %v6507
    %v6540 = vadd.f32 %v6344, %v6508
    %v6541 = vadd.f32 %v6345, %v6509
    %v6542 = vadd.f32 %v6346, %v6510
    %v6543 = vadd.f32 %v6347, %v6511
    %v6544 = vadd.f32 %v6348, %v6512
    %v6545 = vadd.f32 %v6349, %v6513
    %v6546 = vadd.f32 %v6350, %v6514
    %v6547 = vadd.f32 %v6351, %v6515
    %v6548 = vadd.f32 %v6352, %v6516
    %v6549 = vadd.f32 %v6353, %v6517
    %v6550 = vadd.f32 %v6354, %v6518
    %v6551 = vadd.f32 %v6355, %v6519
    %v6552 = vadd.f32 %v6356, %v6520
    %v6553 = vadd.f32 %v6357, %v6521
    %v6554 = vadd.f32 %v6358, %v6522
    %v6555 = vadd.f32 %v6359, %v6523
    %v6556 = vadd.f32 %v6360, %v6524
    %v6557 = vadd.f32 %v6361, %v6525
    %v6558 = vadd.f32 %v6362, %v6526
    %v6559 = vadd.f32 %v6363, %v6527
    %v6560 = vadd.f32 %v6364, %v6528
    %v6561 = vadd.f32 %v6365, %v6529
    %v6562 = vadd.f32 %v6366, %v6530
    %6563 = vset.pattern.permute.xlu0 2
    %6564 = vperm.xlu0 %6563, %v6138
    %v6565 = vpop.permute.xlu0 %6564
    %6567 = vset.pattern.permute.xlu0 2
    %6568 = vperm.xlu0 %6567, %v6139
    %v6569 = vpop.permute.xlu0 %6568
    %6571 = vset.pattern.permute.xlu0 2
    %6572 = vperm.xlu0 %6571, %v6140
    %v6573 = vpop.permute.xlu0 %6572
    %6575 = vset.pattern.permute.xlu0 2
    %6576 = vperm.xlu0 %6575, %v6141
    %v6577 = vpop.permute.xlu0 %6576
    %6579 = vset.pattern.permute.xlu0 2
    %6580 = vperm.xlu0 %6579, %v6142
    %v6581 = vpop.permute.xlu0 %6580
    %6583 = vset.pattern.permute.xlu0 2
    %6584 = vperm.xlu0 %6583, %v6143
    %v6585 = vpop.permute.xlu0 %6584
    %6587 = vset.pattern.permute.xlu0 2
    %6588 = vperm.xlu0 %6587, %v6144
    %v6589 = vpop.permute.xlu0 %6588
    %6591 = vset.pattern.permute.xlu0 2
    %6592 = vperm.xlu0 %6591, %v6145
    %v6593 = vpop.permute.xlu0 %6592
    %6595 = vset.pattern.permute.xlu0 2
    %6596 = vperm.xlu0 %6595, %v6146
    %v6597 = vpop.permute.xlu0 %6596
    %6599 = vset.pattern.permute.xlu0 2
    %6600 = vperm.xlu0 %6599, %v6147
    %v6601 = vpop.permute.xlu0 %6600
    %6603 = vset.pattern.permute.xlu0 2
    %6604 = vperm.xlu0 %6603, %v6148
    %v6605 = vpop.permute.xlu0 %6604
    %6607 = vset.pattern.permute.xlu0 2
    %6608 = vperm.xlu0 %6607, %v6149
    %v6609 = vpop.permute.xlu0 %6608
    %6611 = vset.pattern.permute.xlu0 2
    %6612 = vperm.xlu0 %6611, %v6150
    %v6613 = vpop.permute.xlu0 %6612
    %6615 = vset.pattern.permute.xlu0 2
    %6616 = vperm.xlu0 %6615, %v6151
    %v6617 = vpop.permute.xlu0 %6616
    %6619 = vset.pattern.permute.xlu0 2
    %6620 = vperm.xlu0 %6619, %v6152
    %v6621 = vpop.permute.xlu0 %6620
    %6623 = vset.pattern.permute.xlu0 2
    %6624 = vperm.xlu0 %6623, %v6153
    %v6625 = vpop.permute.xlu0 %6624
    %6627 = vset.pattern.permute.xlu0 2
    %6628 = vperm.xlu0 %6627, %v6154
    %v6629 = vpop.permute.xlu0 %6628
    %6631 = vset.pattern.permute.xlu0 2
    %6632 = vperm.xlu0 %6631, %v6155
    %v6633 = vpop.permute.xlu0 %6632
    %6635 = vset.pattern.permute.xlu0 2
    %6636 = vperm.xlu0 %6635, %v6156
    %v6637 = vpop.permute.xlu0 %6636
    %6639 = vset.pattern.permute.xlu0 2
    %6640 = vperm.xlu0 %6639, %v6157
    %v6641 = vpop.permute.xlu0 %6640
    %6643 = vset.pattern.permute.xlu0 2
    %6644 = vperm.xlu0 %6643, %v6158
    %v6645 = vpop.permute.xlu0 %6644
    %6647 = vset.pattern.permute.xlu0 2
    %6648 = vperm.xlu0 %6647, %v6159
    %v6649 = vpop.permute.xlu0 %6648
    %6651 = vset.pattern.permute.xlu0 2
    %6652 = vperm.xlu0 %6651, %v6160
    %v6653 = vpop.permute.xlu0 %6652
    %6655 = vset.pattern.permute.xlu0 2
    %6656 = vperm.xlu0 %6655, %v6161
    %v6657 = vpop.permute.xlu0 %6656
    %6659 = vset.pattern.permute.xlu0 2
    %6660 = vperm.xlu0 %6659, %v6162
    %v6661 = vpop.permute.xlu0 %6660
    %6663 = vset.pattern.permute.xlu0 2
    %6664 = vperm.xlu0 %6663, %v6163
    %v6665 = vpop.permute.xlu0 %6664
    %6667 = vset.pattern.permute.xlu0 2
    %6668 = vperm.xlu0 %6667, %v6164
    %v6669 = vpop.permute.xlu0 %6668
    %6671 = vset.pattern.permute.xlu0 2
    %6672 = vperm.xlu0 %6671, %v6165
    %v6673 = vpop.permute.xlu0 %6672
    %6675 = vset.pattern.permute.xlu0 2
    %6676 = vperm.xlu0 %6675, %v6166
    %v6677 = vpop.permute.xlu0 %6676
    %6679 = vset.pattern.permute.xlu0 2
    %6680 = vperm.xlu0 %6679, %v6167
    %v6681 = vpop.permute.xlu0 %6680
    %6683 = vset.pattern.permute.xlu0 2
    %6684 = vperm.xlu0 %6683, %v6168
    %v6685 = vpop.permute.xlu0 %6684
    %6687 = vset.pattern.permute.xlu0 2
    %6688 = vperm.xlu0 %6687, %v6169
    %v6689 = vpop.permute.xlu0 %6688
    %v6691 = vlaneseq
    %v6692 = vshrl.u32 %v6691, 7
    %v6693 = vsub.s32 2, %v6692
    %v6694 = vrot.slane %v6170, %v6693
    %v6695 = vmul.f32 %v6565, %v6694
    %v6696 = vmul.f32 %v6569, %v6694
    %v6697 = vmul.f32 %v6573, %v6694
    %v6698 = vmul.f32 %v6577, %v6694
    %v6699 = vmul.f32 %v6581, %v6694
    %v6700 = vmul.f32 %v6585, %v6694
    %v6701 = vmul.f32 %v6589, %v6694
    %v6702 = vmul.f32 %v6593, %v6694
    %v6703 = vmul.f32 %v6597, %v6694
    %v6704 = vmul.f32 %v6601, %v6694
    %v6705 = vmul.f32 %v6605, %v6694
    %v6706 = vmul.f32 %v6609, %v6694
    %v6707 = vmul.f32 %v6613, %v6694
    %v6708 = vmul.f32 %v6617, %v6694
    %v6709 = vmul.f32 %v6621, %v6694
    %v6710 = vmul.f32 %v6625, %v6694
    %v6711 = vmul.f32 %v6629, %v6694
    %v6712 = vmul.f32 %v6633, %v6694
    %v6713 = vmul.f32 %v6637, %v6694
    %v6714 = vmul.f32 %v6641, %v6694
    %v6715 = vmul.f32 %v6645, %v6694
    %v6716 = vmul.f32 %v6649, %v6694
    %v6717 = vmul.f32 %v6653, %v6694
    %v6718 = vmul.f32 %v6657, %v6694
    %v6719 = vmul.f32 %v6661, %v6694
    %v6720 = vmul.f32 %v6665, %v6694
    %v6721 = vmul.f32 %v6669, %v6694
    %v6722 = vmul.f32 %v6673, %v6694
    %v6723 = vmul.f32 %v6677, %v6694
    %v6724 = vmul.f32 %v6681, %v6694
    %v6725 = vmul.f32 %v6685, %v6694
    %v6726 = vmul.f32 %v6689, %v6694
    %v6727 = vadd.f32 %v6531, %v6695
    %v6728 = vadd.f32 %v6532, %v6696
    %v6729 = vadd.f32 %v6533, %v6697
    %v6730 = vadd.f32 %v6534, %v6698
    %v6731 = vadd.f32 %v6535, %v6699
    %v6732 = vadd.f32 %v6536, %v6700
    %v6733 = vadd.f32 %v6537, %v6701
    %v6734 = vadd.f32 %v6538, %v6702
    %v6735 = vadd.f32 %v6539, %v6703
    %v6736 = vadd.f32 %v6540, %v6704
    %v6737 = vadd.f32 %v6541, %v6705
    %v6738 = vadd.f32 %v6542, %v6706
    %v6739 = vadd.f32 %v6543, %v6707
    %v6740 = vadd.f32 %v6544, %v6708
    %v6741 = vadd.f32 %v6545, %v6709
    %v6742 = vadd.f32 %v6546, %v6710
    %v6743 = vadd.f32 %v6547, %v6711
    %v6744 = vadd.f32 %v6548, %v6712
    %v6745 = vadd.f32 %v6549, %v6713
    %v6746 = vadd.f32 %v6550, %v6714
    %v6747 = vadd.f32 %v6551, %v6715
    %v6748 = vadd.f32 %v6552, %v6716
    %v6749 = vadd.f32 %v6553, %v6717
    %v6750 = vadd.f32 %v6554, %v6718
    %v6751 = vadd.f32 %v6555, %v6719
    %v6752 = vadd.f32 %v6556, %v6720
    %v6753 = vadd.f32 %v6557, %v6721
    %v6754 = vadd.f32 %v6558, %v6722
    %v6755 = vadd.f32 %v6559, %v6723
    %v6756 = vadd.f32 %v6560, %v6724
    %v6757 = vadd.f32 %v6561, %v6725
    %v6758 = vadd.f32 %v6562, %v6726
    %v6759 = vld [vmem:[%s14] sm:$0x1]
    %v6761 = vlaneseq
    %v6762 = vshrl.u32 %v6761, 7
    %v6763 = vsub.s32 0, %v6762
    %v6764 = vrot.slane %v6759, %v6763
    %v6766 = vadd.f32 %v6727, %v6764
    %v6767 = vadd.f32 %v6728, %v6764
    %v6768 = vadd.f32 %v6729, %v6764
    %v6769 = vadd.f32 %v6730, %v6764
    %v6770 = vadd.f32 %v6731, %v6764
    %v6771 = vadd.f32 %v6732, %v6764
    %v6772 = vadd.f32 %v6733, %v6764
    %v6773 = vadd.f32 %v6734, %v6764
    %v6774 = vadd.f32 %v6735, %v6764
    %v6775 = vadd.f32 %v6736, %v6764
    %v6776 = vadd.f32 %v6737, %v6764
    %v6777 = vadd.f32 %v6738, %v6764
    %v6778 = vadd.f32 %v6739, %v6764
    %v6779 = vadd.f32 %v6740, %v6764
    %v6780 = vadd.f32 %v6741, %v6764
    %v6781 = vadd.f32 %v6742, %v6764
    %v6782 = vadd.f32 %v6743, %v6764
    %v6783 = vadd.f32 %v6744, %v6764
    %v6784 = vadd.f32 %v6745, %v6764
    %v6785 = vadd.f32 %v6746, %v6764
    %v6786 = vadd.f32 %v6747, %v6764
    %v6787 = vadd.f32 %v6748, %v6764
    %v6788 = vadd.f32 %v6749, %v6764
    %v6789 = vadd.f32 %v6750, %v6764
    %v6790 = vadd.f32 %v6751, %v6764
    %v6791 = vadd.f32 %v6752, %v6764
    %v6792 = vadd.f32 %v6753, %v6764
    %v6793 = vadd.f32 %v6754, %v6764
    %v6794 = vadd.f32 %v6755, %v6764
    %v6795 = vadd.f32 %v6756, %v6764
    %v6796 = vadd.f32 %v6757, %v6764
    %v6797 = vadd.f32 %v6758, %v6764
    %v6798 = vmax.f32 %v6766, 0.0
    %v6799 = vmax.f32 %v6767, 0.0
    %v6800 = vmax.f32 %v6768, 0.0
    %v6801 = vmax.f32 %v6769, 0.0
    %v6802 = vmax.f32 %v6770, 0.0
    %v6803 = vmax.f32 %v6771, 0.0
    %v6804 = vmax.f32 %v6772, 0.0
    %v6805 = vmax.f32 %v6773, 0.0
    %v6806 = vmax.f32 %v6774, 0.0
    %v6807 = vmax.f32 %v6775, 0.0
    %v6808 = vmax.f32 %v6776, 0.0
    %v6809 = vmax.f32 %v6777, 0.0
    %v6810 = vmax.f32 %v6778, 0.0
    %v6811 = vmax.f32 %v6779, 0.0
    %v6812 = vmax.f32 %v6780, 0.0
    %v6813 = vmax.f32 %v6781, 0.0
    %v6814 = vmax.f32 %v6782, 0.0
    %v6815 = vmax.f32 %v6783, 0.0
    %v6816 = vmax.f32 %v6784, 0.0
    %v6817 = vmax.f32 %v6785, 0.0
    %v6818 = vmax.f32 %v6786, 0.0
    %v6819 = vmax.f32 %v6787, 0.0
    %v6820 = vmax.f32 %v6788, 0.0
    %v6821 = vmax.f32 %v6789, 0.0
    %v6822 = vmax.f32 %v6790, 0.0
    %v6823 = vmax.f32 %v6791, 0.0
    %v6824 = vmax.f32 %v6792, 0.0
    %v6825 = vmax.f32 %v6793, 0.0
    %v6826 = vmax.f32 %v6794, 0.0
    %v6827 = vmax.f32 %v6795, 0.0
    %v6828 = vmax.f32 %v6796, 0.0
    %v6829 = vmax.f32 %v6797, 0.0
    %v6830 = vpack.c.bf16 %v6799, %v6798
    %v6831 = vpack.c.bf16 %v6801, %v6800
    %v6832 = vpack.c.bf16 %v6803, %v6802
    %v6833 = vpack.c.bf16 %v6805, %v6804
    %v6834 = vpack.c.bf16 %v6807, %v6806
    %v6835 = vpack.c.bf16 %v6809, %v6808
    %v6836 = vpack.c.bf16 %v6811, %v6810
    %v6837 = vpack.c.bf16 %v6813, %v6812
    %v6838 = vpack.c.bf16 %v6815, %v6814
    %v6839 = vpack.c.bf16 %v6817, %v6816
    %v6840 = vpack.c.bf16 %v6819, %v6818
    %v6841 = vpack.c.bf16 %v6821, %v6820
    %v6842 = vpack.c.bf16 %v6823, %v6822
    %v6843 = vpack.c.bf16 %v6825, %v6824
    %v6844 = vpack.c.bf16 %v6827, %v6826
    %v6845 = vpack.c.bf16 %v6829, %v6828
    %v6846 = vld [vmem:[%s15] sm:$0xf]
    %v6847 = vld [vmem:[%s15 + $0x4] sm:$0xf]
    %v6848 = vld [vmem:[%s15 + $0x8] sm:$0xf]
    %v6849 = vld [vmem:[%s15 + $0xc] sm:$0xf]
    %v6850 = vld [vmem:[%s15 + $0x10] sm:$0xf]
    %v6851 = vld [vmem:[%s15 + $0x14] sm:$0xf]
    %v6852 = vld [vmem:[%s15 + $0x18] sm:$0xf]
    %v6853 = vld [vmem:[%s15 + $0x1c] sm:$0xf]
    %v6854 = vld [vmem:[%s16] sm:$0x1]
    %v6856 = vlaneseq
    %v6857 = vshrl.u32 %v6856, 7
    %v6858 = vsub.s32 0, %v6857
    %v6859 = vrot.slane %v6854, %v6858
    %v6869 = vunpack.c.l.b16 %v6846
    %v6870 = vunpack.c.l.b16 %v6847
    %v6871 = vunpack.c.l.b16 %v6848
    %v6872 = vunpack.c.l.b16 %v6849
    %v6873 = vunpack.c.l.b16 %v6850
    %v6874 = vunpack.c.l.b16 %v6851
    %v6875 = vunpack.c.l.b16 %v6852
    %v6876 = vunpack.c.l.b16 %v6853
    %v6877 = vpack.c.b16 %v6870, %v6869
    %v6878 = vpack.c.b16 %v6872, %v6871
    %v6879 = vpack.c.b16 %v6874, %v6873
    %v6880 = vpack.c.b16 %v6876, %v6875
    %v6886 = vsel %vm1019, %v6830, 0
    %v6889 = vsel %vm1019, %v6831, 0
    %v6892 = vsel %vm1019, %v6832, 0
    %v6895 = vsel %vm1019, %v6833, 0
    %v6898 = vsel %vm1019, %v6834, 0
    %v6901 = vsel %vm1019, %v6835, 0
    %v6904 = vsel %vm1019, %v6836, 0
    %v6907 = vsel %vm1019, %v6837, 0
    %v6910 = vsel %vm1019, %v6838, 0
    %v6913 = vsel %vm1019, %v6839, 0
    %v6916 = vsel %vm1019, %v6840, 0
    %v6919 = vsel %vm1019, %v6841, 0
    %v6922 = vsel %vm1019, %v6842, 0
    %v6925 = vsel %vm1019, %v6843, 0
    %v6928 = vsel %vm1019, %v6844, 0
    %v6931 = vsel %vm1019, %v6845, 0
    %6933 = vmatprep.subr.bf16.mxu0 0
    %6934 = vmatpush1.bf16.msra.mxu0 0
    %6935 = vmatprep.subr.bf16.mxu0 0
    %6936 = vmatpush1.bf16.msra.mxu0 0
    %6937 = vmatprep.subr.bf16.mxu0 0
    %6938 = vmatpush1.bf16.msra.mxu0 0
    %6939 = vmatprep.subr.bf16.mxu0 0
    %6940 = vmatpush1.bf16.msra.mxu0 0
    %6941 = vmatprep.subr.bf16.mxu0 0
    %6942 = vmatpush1.bf16.msra.mxu0 %v6880
    %6943 = vmatprep.subr.bf16.mxu0 0
    %6944 = vmatpush1.bf16.msra.mxu0 %v6879
    %6945 = vmatprep.subr.bf16.mxu0 0
    %6946 = vmatpush1.bf16.msra.mxu0 %v6878
    %6947 = vmatprep.subr.bf16.mxu0 0
    %6948 = vmatpush1.bf16.msra.mxu0 %v6877
    %6949 = vmatprep.subr.bf16.mxu0 0
    %6950 = vmatpush2.bf16.msra.mxu0 0
    %6951 = vmatprep.subr.bf16.mxu0 0
    %6952 = vmatpush2.bf16.msra.mxu0 0
    %6953 = vmatprep.subr.bf16.mxu0 0
    %6954 = vmatpush2.bf16.msra.mxu0 0
    %6955 = vmatprep.subr.bf16.mxu0 0
    %6956 = vmatpush2.bf16.msra.mxu0 0
    %6957 = vmatprep.subr.bf16.mxu0 0
    %6958 = vmatpush2.bf16.msra.mxu0 0
    %6959 = vmatprep.subr.bf16.mxu0 0
    %6960 = vmatpush2.bf16.msra.mxu0 0
    %6961 = vmatprep.subr.bf16.mxu0 0
    %6962 = vmatpush2.bf16.msra.mxu0 0
    %6963 = vmatprep.subr.bf16.mxu0 0
    %6964 = vmatpush2.bf16.msra.mxu0 0
    %6965 = vmatprep.mubr.bf16.mxu0 0
    %6966 = vmatmul.mubr.bf16.gmra.mxu0 %v6886
    %v6967 = vpop.f32.mrf.mxu0
    %v6968 = vadd.f32 %v6859, %v6967
    %v6969 = vpop.f32.mrf.mxu0
    %v6970 = vpop.f32.mrf.mxu0
    %v6971 = vadd.f32 %v6859, %v6970
    %v6972 = vpop.f32.mrf.mxu0
    %6973 = vmatprep.mubr.bf16.mxu0 0
    %6974 = vmatmul.mubr.bf16.gmra.mxu0 %v6889
    %v6975 = vpop.f32.mrf.mxu0
    %v6976 = vadd.f32 %v6859, %v6975
    %v6977 = vpop.f32.mrf.mxu0
    %v6978 = vpop.f32.mrf.mxu0
    %v6979 = vadd.f32 %v6859, %v6978
    %v6980 = vpop.f32.mrf.mxu0
    %6981 = vmatprep.mubr.bf16.mxu0 0
    %6982 = vmatmul.mubr.bf16.gmra.mxu0 %v6892
    %v6983 = vpop.f32.mrf.mxu0
    %v6984 = vadd.f32 %v6859, %v6983
    %v6985 = vpop.f32.mrf.mxu0
    %v6986 = vpop.f32.mrf.mxu0
    %v6987 = vadd.f32 %v6859, %v6986
    %v6988 = vpop.f32.mrf.mxu0
    %6989 = vmatprep.mubr.bf16.mxu0 0
    %6990 = vmatmul.mubr.bf16.gmra.mxu0 %v6895
    %v6991 = vpop.f32.mrf.mxu0
    %v6992 = vadd.f32 %v6859, %v6991
    %v6993 = vpop.f32.mrf.mxu0
    %v6994 = vpop.f32.mrf.mxu0
    %v6995 = vadd.f32 %v6859, %v6994
    %v6996 = vpop.f32.mrf.mxu0
    %6997 = vmatprep.mubr.bf16.mxu0 0
    %6998 = vmatmul.mubr.bf16.gmra.mxu0 %v6898
    %v6999 = vpop.f32.mrf.mxu0
    %v7000 = vadd.f32 %v6859, %v6999
    %v7001 = vpop.f32.mrf.mxu0
    %v7002 = vpop.f32.mrf.mxu0
    %v7003 = vadd.f32 %v6859, %v7002
    %v7004 = vpop.f32.mrf.mxu0
    %7005 = vmatprep.mubr.bf16.mxu0 0
    %7006 = vmatmul.mubr.bf16.gmra.mxu0 %v6901
    %v7007 = vpop.f32.mrf.mxu0
    %v7008 = vadd.f32 %v6859, %v7007
    %v7009 = vpop.f32.mrf.mxu0
    %v7010 = vpop.f32.mrf.mxu0
    %v7011 = vadd.f32 %v6859, %v7010
    %v7012 = vpop.f32.mrf.mxu0
    %7013 = vmatprep.mubr.bf16.mxu0 0
    %7014 = vmatmul.mubr.bf16.gmra.mxu0 %v6904
    %v7015 = vpop.f32.mrf.mxu0
    %v7016 = vadd.f32 %v6859, %v7015
    %v7017 = vpop.f32.mrf.mxu0
    %v7018 = vpop.f32.mrf.mxu0
    %v7019 = vadd.f32 %v6859, %v7018
    %v7020 = vpop.f32.mrf.mxu0
    %7021 = vmatprep.mubr.bf16.mxu0 0
    %7022 = vmatmul.mubr.bf16.gmra.mxu0 %v6907
    %v7023 = vpop.f32.mrf.mxu0
    %v7024 = vadd.f32 %v6859, %v7023
    %v7025 = vpop.f32.mrf.mxu0
    %v7026 = vpop.f32.mrf.mxu0
    %v7027 = vadd.f32 %v6859, %v7026
    %v7028 = vpop.f32.mrf.mxu0
    %7029 = vmatprep.mubr.bf16.mxu0 0
    %7030 = vmatmul.mubr.bf16.gmra.mxu0 %v6910
    %v7031 = vpop.f32.mrf.mxu0
    %v7032 = vadd.f32 %v6859, %v7031
    %v7033 = vpop.f32.mrf.mxu0
    %v7034 = vpop.f32.mrf.mxu0
    %v7035 = vadd.f32 %v6859, %v7034
    %v7036 = vpop.f32.mrf.mxu0
    %7037 = vmatprep.mubr.bf16.mxu0 0
    %7038 = vmatmul.mubr.bf16.gmra.mxu0 %v6913
    %v7039 = vpop.f32.mrf.mxu0
    %v7040 = vadd.f32 %v6859, %v7039
    %v7041 = vpop.f32.mrf.mxu0
    %v7042 = vpop.f32.mrf.mxu0
    %v7043 = vadd.f32 %v6859, %v7042
    %v7044 = vpop.f32.mrf.mxu0
    %7045 = vmatprep.mubr.bf16.mxu0 0
    %7046 = vmatmul.mubr.bf16.gmra.mxu0 %v6916
    %v7047 = vpop.f32.mrf.mxu0
    %v7048 = vadd.f32 %v6859, %v7047
    %v7049 = vpop.f32.mrf.mxu0
    %v7050 = vpop.f32.mrf.mxu0
    %v7051 = vadd.f32 %v6859, %v7050
    %v7052 = vpop.f32.mrf.mxu0
    %7053 = vmatprep.mubr.bf16.mxu0 0
    %7054 = vmatmul.mubr.bf16.gmra.mxu0 %v6919
    %v7055 = vpop.f32.mrf.mxu0
    %v7056 = vadd.f32 %v6859, %v7055
    %v7057 = vpop.f32.mrf.mxu0
    %v7058 = vpop.f32.mrf.mxu0
    %v7059 = vadd.f32 %v6859, %v7058
    %v7060 = vpop.f32.mrf.mxu0
    %7061 = vmatprep.mubr.bf16.mxu0 0
    %7062 = vmatmul.mubr.bf16.gmra.mxu0 %v6922
    %v7063 = vpop.f32.mrf.mxu0
    %v7064 = vadd.f32 %v6859, %v7063
    %v7065 = vpop.f32.mrf.mxu0
    %v7066 = vpop.f32.mrf.mxu0
    %v7067 = vadd.f32 %v6859, %v7066
    %v7068 = vpop.f32.mrf.mxu0
    %7069 = vmatprep.mubr.bf16.mxu0 0
    %7070 = vmatmul.mubr.bf16.gmra.mxu0 %v6925
    %v7071 = vpop.f32.mrf.mxu0
    %v7072 = vadd.f32 %v6859, %v7071
    %v7073 = vpop.f32.mrf.mxu0
    %v7074 = vpop.f32.mrf.mxu0
    %v7075 = vadd.f32 %v6859, %v7074
    %v7076 = vpop.f32.mrf.mxu0
    %7077 = vmatprep.mubr.bf16.mxu0 0
    %7078 = vmatmul.mubr.bf16.gmra.mxu0 %v6928
    %v7079 = vpop.f32.mrf.mxu0
    %v7080 = vadd.f32 %v6859, %v7079
    %v7081 = vpop.f32.mrf.mxu0
    %v7082 = vpop.f32.mrf.mxu0
    %v7083 = vadd.f32 %v6859, %v7082
    %v7084 = vpop.f32.mrf.mxu0
    %7085 = vmatprep.mubr.bf16.mxu0 0
    %7086 = vmatmul.mubr.bf16.gmra.mxu0 %v6931
    %v7087 = vpop.f32.mrf.mxu0
    %v7088 = vadd.f32 %v6859, %v7087
    %v7089 = vpop.f32.mrf.mxu0
    %v7090 = vpop.f32.mrf.mxu0
    %v7091 = vadd.f32 %v6859, %v7090
    %v7092 = vpop.f32.mrf.mxu0
    %7093 = vdwg.mxu0
    %v7094 = vmax.f32 %v6968, 0.0
    %v7095 = vmax.f32 %v6971, 0.0
    %v7096 = vmax.f32 %v6976, 0.0
    %v7097 = vmax.f32 %v6979, 0.0
    %v7098 = vmax.f32 %v6984, 0.0
    %v7099 = vmax.f32 %v6987, 0.0
    %v7100 = vmax.f32 %v6992, 0.0
    %v7101 = vmax.f32 %v6995, 0.0
    %v7102 = vmax.f32 %v7000, 0.0
    %v7103 = vmax.f32 %v7003, 0.0
    %v7104 = vmax.f32 %v7008, 0.0
    %v7105 = vmax.f32 %v7011, 0.0
    %v7106 = vmax.f32 %v7016, 0.0
    %v7107 = vmax.f32 %v7019, 0.0
    %v7108 = vmax.f32 %v7024, 0.0
    %v7109 = vmax.f32 %v7027, 0.0
    %v7110 = vmax.f32 %v7032, 0.0
    %v7111 = vmax.f32 %v7035, 0.0
    %v7112 = vmax.f32 %v7040, 0.0
    %v7113 = vmax.f32 %v7043, 0.0
    %v7114 = vmax.f32 %v7048, 0.0
    %v7115 = vmax.f32 %v7051, 0.0
    %v7116 = vmax.f32 %v7056, 0.0
    %v7117 = vmax.f32 %v7059, 0.0
    %v7118 = vmax.f32 %v7064, 0.0
    %v7119 = vmax.f32 %v7067, 0.0
    %v7120 = vmax.f32 %v7072, 0.0
    %v7121 = vmax.f32 %v7075, 0.0
    %v7122 = vmax.f32 %v7080, 0.0
    %v7123 = vmax.f32 %v7083, 0.0
    %v7124 = vmax.f32 %v7088, 0.0
    %v7125 = vmax.f32 %v7091, 0.0
    %v7126 = vpack.c.bf16 %v7095, %v7094
    %v7127 = vpack.c.bf16 %v7097, %v7096
    %v7128 = vpack.c.bf16 %v7099, %v7098
    %v7129 = vpack.c.bf16 %v7101, %v7100
    %v7130 = vpack.c.bf16 %v7103, %v7102
    %v7131 = vpack.c.bf16 %v7105, %v7104
    %v7132 = vpack.c.bf16 %v7107, %v7106
    %v7133 = vpack.c.bf16 %v7109, %v7108
    %v7134 = vpack.c.bf16 %v7111, %v7110
    %v7135 = vpack.c.bf16 %v7113, %v7112
    %v7136 = vpack.c.bf16 %v7115, %v7114
    %v7137 = vpack.c.bf16 %v7117, %v7116
    %v7138 = vpack.c.bf16 %v7119, %v7118
    %v7139 = vpack.c.bf16 %v7121, %v7120
    %v7140 = vpack.c.bf16 %v7123, %v7122
    %v7141 = vpack.c.bf16 %v7125, %v7124
    %v7142 = vld [vmem:[#allocation12] sm:$0xff]
    %v7143 = vld [vmem:[#allocation12 + $0x8] sm:$0xff]
    %v7144 = vld [vmem:[#allocation12 + $0x10] sm:$0xff]
    %v7145 = vld [vmem:[#allocation12 + $0x18] sm:$0xff]
    %v7146 = vld [vmem:[#allocation12 + $0x20] sm:$0xff]
    %v7147 = vld [vmem:[#allocation12 + $0x28] sm:$0xff]
    %v7148 = vld [vmem:[#allocation12 + $0x30] sm:$0xff]
    %v7149 = vld [vmem:[#allocation12 + $0x38] sm:$0xff]
    %v7150 = vld [vmem:[#allocation12 + $0x40] sm:$0xff]
    %v7151 = vld [vmem:[#allocation12 + $0x48] sm:$0xff]
    %v7152 = vld [vmem:[#allocation12 + $0x50] sm:$0xff]
    %v7153 = vld [vmem:[#allocation12 + $0x58] sm:$0xff]
    %v7154 = vld [vmem:[#allocation12 + $0x60] sm:$0xff]
    %v7155 = vld [vmem:[#allocation12 + $0x68] sm:$0xff]
    %v7156 = vld [vmem:[#allocation12 + $0x70] sm:$0xff]
    %v7157 = vld [vmem:[#allocation12 + $0x78] sm:$0xff]
    %v7158 = vld [vmem:[#allocation12 + $0x80] sm:$0xff]
    %v7159 = vld [vmem:[#allocation12 + $0x88] sm:$0xff]
    %v7160 = vld [vmem:[#allocation12 + $0x90] sm:$0xff]
    %v7161 = vld [vmem:[#allocation12 + $0x98] sm:$0xff]
    %v7162 = vld [vmem:[#allocation12 + $0xa0] sm:$0xff]
    %v7163 = vld [vmem:[#allocation12 + $0xa8] sm:$0xff]
    %v7164 = vld [vmem:[#allocation12 + $0xb0] sm:$0xff]
    %v7165 = vld [vmem:[#allocation12 + $0xb8] sm:$0xff]
    %v7166 = vld [vmem:[#allocation12 + $0xc0] sm:$0xff]
    %v7167 = vld [vmem:[#allocation12 + $0xc8] sm:$0xff]
    %v7168 = vld [vmem:[#allocation12 + $0xd0] sm:$0xff]
    %v7169 = vld [vmem:[#allocation12 + $0xd8] sm:$0xff]
    %v7170 = vld [vmem:[#allocation12 + $0xe0] sm:$0xff]
    %v7171 = vld [vmem:[#allocation12 + $0xe8] sm:$0xff]
    %v7172 = vld [vmem:[#allocation12 + $0xf0] sm:$0xff]
    %v7173 = vld [vmem:[#allocation12 + $0xf8] sm:$0xff]
    %v7174 = vld [vmem:[#allocation12 + $0x100] sm:$0xff]
    %v7175 = vld [vmem:[#allocation12 + $0x108] sm:$0xff]
    %v7176 = vld [vmem:[#allocation12 + $0x110] sm:$0xff]
    %v7177 = vld [vmem:[#allocation12 + $0x118] sm:$0xff]
    %v7178 = vld [vmem:[#allocation12 + $0x120] sm:$0xff]
    %v7179 = vld [vmem:[#allocation12 + $0x128] sm:$0xff]
    %v7180 = vld [vmem:[#allocation12 + $0x130] sm:$0xff]
    %v7181 = vld [vmem:[#allocation12 + $0x138] sm:$0xff]
    %v7182 = vld [vmem:[#allocation12 + $0x140] sm:$0xff]
    %v7183 = vld [vmem:[#allocation12 + $0x148] sm:$0xff]
    %v7184 = vld [vmem:[#allocation12 + $0x150] sm:$0xff]
    %v7185 = vld [vmem:[#allocation12 + $0x158] sm:$0xff]
    %v7186 = vld [vmem:[#allocation12 + $0x160] sm:$0xff]
    %v7187 = vld [vmem:[#allocation12 + $0x168] sm:$0xff]
    %v7188 = vld [vmem:[#allocation12 + $0x170] sm:$0xff]
    %v7189 = vld [vmem:[#allocation12 + $0x178] sm:$0xff]
    %v7190 = vld [vmem:[#allocation12 + $0x180] sm:$0xff]
    %v7191 = vld [vmem:[#allocation12 + $0x188] sm:$0xff]
    %v7192 = vld [vmem:[#allocation12 + $0x190] sm:$0xff]
    %v7193 = vld [vmem:[#allocation12 + $0x198] sm:$0xff]
    %v7194 = vld [vmem:[#allocation12 + $0x1a0] sm:$0xff]
    %v7195 = vld [vmem:[#allocation12 + $0x1a8] sm:$0xff]
    %v7196 = vld [vmem:[#allocation12 + $0x1b0] sm:$0xff]
    %v7197 = vld [vmem:[#allocation12 + $0x1b8] sm:$0xff]
    %v7198 = vld [vmem:[#allocation12 + $0x1c0] sm:$0xff]
    %v7199 = vld [vmem:[#allocation12 + $0x1c8] sm:$0xff]
    %v7200 = vld [vmem:[#allocation12 + $0x1d0] sm:$0xff]
    %v7201 = vld [vmem:[#allocation12 + $0x1d8] sm:$0xff]
    %v7202 = vld [vmem:[#allocation12 + $0x1e0] sm:$0xff]
    %v7203 = vld [vmem:[#allocation12 + $0x1e8] sm:$0xff]
    %v7204 = vld [vmem:[#allocation12 + $0x1f0] sm:$0xff]
    %v7205 = vld [vmem:[#allocation12 + $0x1f8] sm:$0xff]
    %v7206 = vld [vmem:[%s18] sm:$0xff]
    %v7208 = vlaneseq
    %v7209 = vshrl.u32 %v7208, 7
    %v7210 = vsub.s32 0, %v7209
    %v7211 = vrot.slane %v7206, %v7210
    %v7212 = vlaneseq
    %v7213 = vshrl.u32 %v7212, 7
    %v7214 = vsub.s32 1, %v7213
    %v7215 = vrot.slane %v7206, %v7214
    %v7216 = vlaneseq
    %v7217 = vshrl.u32 %v7216, 7
    %v7218 = vsub.s32 2, %v7217
    %v7219 = vrot.slane %v7206, %v7218
    %v7220 = vlaneseq
    %v7221 = vshrl.u32 %v7220, 7
    %v7222 = vsub.s32 3, %v7221
    %v7223 = vrot.slane %v7206, %v7222
    %v7224 = vlaneseq
    %v7225 = vshrl.u32 %v7224, 7
    %v7226 = vsub.s32 4, %v7225
    %v7227 = vrot.slane %v7206, %v7226
    %v7228 = vlaneseq
    %v7229 = vshrl.u32 %v7228, 7
    %v7230 = vsub.s32 5, %v7229
    %v7231 = vrot.slane %v7206, %v7230
    %v7232 = vlaneseq
    %v7233 = vshrl.u32 %v7232, 7
    %v7234 = vsub.s32 6, %v7233
    %v7235 = vrot.slane %v7206, %v7234
    %v7236 = vlaneseq
    %v7237 = vshrl.u32 %v7236, 7
    %v7238 = vsub.s32 7, %v7237
    %v7239 = vrot.slane %v7206, %v7238
    %v7312 = vunpack.c.l.b16 %v7142
    %v7313 = vunpack.c.h.b16 %v7142
    %v7314 = vunpack.c.l.b16 %v7143
    %v7315 = vunpack.c.h.b16 %v7143
    %v7316 = vunpack.c.l.b16 %v7144
    %v7317 = vunpack.c.h.b16 %v7144
    %v7318 = vunpack.c.l.b16 %v7145
    %v7319 = vunpack.c.h.b16 %v7145
    %v7320 = vunpack.c.l.b16 %v7146
    %v7321 = vunpack.c.h.b16 %v7146
    %v7322 = vunpack.c.l.b16 %v7147
    %v7323 = vunpack.c.h.b16 %v7147
    %v7324 = vunpack.c.l.b16 %v7148
    %v7325 = vunpack.c.h.b16 %v7148
    %v7326 = vunpack.c.l.b16 %v7149
    %v7327 = vunpack.c.h.b16 %v7149
    %v7328 = vunpack.c.l.b16 %v7150
    %v7329 = vunpack.c.h.b16 %v7150
    %v7330 = vunpack.c.l.b16 %v7151
    %v7331 = vunpack.c.h.b16 %v7151
    %v7332 = vunpack.c.l.b16 %v7152
    %v7333 = vunpack.c.h.b16 %v7152
    %v7334 = vunpack.c.l.b16 %v7153
    %v7335 = vunpack.c.h.b16 %v7153
    %v7336 = vunpack.c.l.b16 %v7154
    %v7337 = vunpack.c.h.b16 %v7154
    %v7338 = vunpack.c.l.b16 %v7155
    %v7339 = vunpack.c.h.b16 %v7155
    %v7340 = vunpack.c.l.b16 %v7156
    %v7341 = vunpack.c.h.b16 %v7156
    %v7342 = vunpack.c.l.b16 %v7157
    %v7343 = vunpack.c.h.b16 %v7157
    %v7344 = vunpack.c.l.b16 %v7158
    %v7345 = vunpack.c.h.b16 %v7158
    %v7346 = vunpack.c.l.b16 %v7159
    %v7347 = vunpack.c.h.b16 %v7159
    %v7348 = vunpack.c.l.b16 %v7160
    %v7349 = vunpack.c.h.b16 %v7160
    %v7350 = vunpack.c.l.b16 %v7161
    %v7351 = vunpack.c.h.b16 %v7161
    %v7352 = vunpack.c.l.b16 %v7162
    %v7353 = vunpack.c.h.b16 %v7162
    %v7354 = vunpack.c.l.b16 %v7163
    %v7355 = vunpack.c.h.b16 %v7163
    %v7356 = vunpack.c.l.b16 %v7164
    %v7357 = vunpack.c.h.b16 %v7164
    %v7358 = vunpack.c.l.b16 %v7165
    %v7359 = vunpack.c.h.b16 %v7165
    %v7360 = vunpack.c.l.b16 %v7166
    %v7361 = vunpack.c.h.b16 %v7166
    %v7362 = vunpack.c.l.b16 %v7167
    %v7363 = vunpack.c.h.b16 %v7167
    %v7364 = vunpack.c.l.b16 %v7168
    %v7365 = vunpack.c.h.b16 %v7168
    %v7366 = vunpack.c.l.b16 %v7169
    %v7367 = vunpack.c.h.b16 %v7169
    %v7368 = vunpack.c.l.b16 %v7170
    %v7369 = vunpack.c.h.b16 %v7170
    %v7370 = vunpack.c.l.b16 %v7171
    %v7371 = vunpack.c.h.b16 %v7171
    %v7372 = vunpack.c.l.b16 %v7172
    %v7373 = vunpack.c.h.b16 %v7172
    %v7374 = vunpack.c.l.b16 %v7173
    %v7375 = vunpack.c.h.b16 %v7173
    %v7376 = vunpack.c.l.b16 %v7174
    %v7377 = vunpack.c.h.b16 %v7174
    %v7378 = vunpack.c.l.b16 %v7175
    %v7379 = vunpack.c.h.b16 %v7175
    %v7380 = vunpack.c.l.b16 %v7176
    %v7381 = vunpack.c.h.b16 %v7176
    %v7382 = vunpack.c.l.b16 %v7177
    %v7383 = vunpack.c.h.b16 %v7177
    %v7384 = vunpack.c.l.b16 %v7178
    %v7385 = vunpack.c.h.b16 %v7178
    %v7386 = vunpack.c.l.b16 %v7179
    %v7387 = vunpack.c.h.b16 %v7179
    %v7388 = vunpack.c.l.b16 %v7180
    %v7389 = vunpack.c.h.b16 %v7180
    %v7390 = vunpack.c.l.b16 %v7181
    %v7391 = vunpack.c.h.b16 %v7181
    %v7392 = vunpack.c.l.b16 %v7182
    %v7393 = vunpack.c.h.b16 %v7182
    %v7394 = vunpack.c.l.b16 %v7183
    %v7395 = vunpack.c.h.b16 %v7183
    %v7396 = vunpack.c.l.b16 %v7184
    %v7397 = vunpack.c.h.b16 %v7184
    %v7398 = vunpack.c.l.b16 %v7185
    %v7399 = vunpack.c.h.b16 %v7185
    %v7400 = vunpack.c.l.b16 %v7186
    %v7401 = vunpack.c.h.b16 %v7186
    %v7402 = vunpack.c.l.b16 %v7187
    %v7403 = vunpack.c.h.b16 %v7187
    %v7404 = vunpack.c.l.b16 %v7188
    %v7405 = vunpack.c.h.b16 %v7188
    %v7406 = vunpack.c.l.b16 %v7189
    %v7407 = vunpack.c.h.b16 %v7189
    %v7408 = vunpack.c.l.b16 %v7190
    %v7409 = vunpack.c.h.b16 %v7190
    %v7410 = vunpack.c.l.b16 %v7191
    %v7411 = vunpack.c.h.b16 %v7191
    %v7412 = vunpack.c.l.b16 %v7192
    %v7413 = vunpack.c.h.b16 %v7192
    %v7414 = vunpack.c.l.b16 %v7193
    %v7415 = vunpack.c.h.b16 %v7193
    %v7416 = vunpack.c.l.b16 %v7194
    %v7417 = vunpack.c.h.b16 %v7194
    %v7418 = vunpack.c.l.b16 %v7195
    %v7419 = vunpack.c.h.b16 %v7195
    %v7420 = vunpack.c.l.b16 %v7196
    %v7421 = vunpack.c.h.b16 %v7196
    %v7422 = vunpack.c.l.b16 %v7197
    %v7423 = vunpack.c.h.b16 %v7197
    %v7424 = vunpack.c.l.b16 %v7198
    %v7425 = vunpack.c.h.b16 %v7198
    %v7426 = vunpack.c.l.b16 %v7199
    %v7427 = vunpack.c.h.b16 %v7199
    %v7428 = vunpack.c.l.b16 %v7200
    %v7429 = vunpack.c.h.b16 %v7200
    %v7430 = vunpack.c.l.b16 %v7201
    %v7431 = vunpack.c.h.b16 %v7201
    %v7432 = vunpack.c.l.b16 %v7202
    %v7433 = vunpack.c.h.b16 %v7202
    %v7434 = vunpack.c.l.b16 %v7203
    %v7435 = vunpack.c.h.b16 %v7203
    %v7436 = vunpack.c.l.b16 %v7204
    %v7437 = vunpack.c.h.b16 %v7204
    %v7438 = vunpack.c.l.b16 %v7205
    %v7439 = vunpack.c.h.b16 %v7205
    %v7440 = vpack.c.b16 %v7320, %v7312
    %v7441 = vpack.c.b16 %v7321, %v7313
    %v7442 = vpack.c.b16 %v7322, %v7314
    %v7443 = vpack.c.b16 %v7323, %v7315
    %v7444 = vpack.c.b16 %v7324, %v7316
    %v7445 = vpack.c.b16 %v7325, %v7317
    %v7446 = vpack.c.b16 %v7326, %v7318
    %v7447 = vpack.c.b16 %v7327, %v7319
    %v7448 = vpack.c.b16 %v7336, %v7328
    %v7449 = vpack.c.b16 %v7337, %v7329
    %v7450 = vpack.c.b16 %v7338, %v7330
    %v7451 = vpack.c.b16 %v7339, %v7331
    %v7452 = vpack.c.b16 %v7340, %v7332
    %v7453 = vpack.c.b16 %v7341, %v7333
    %v7454 = vpack.c.b16 %v7342, %v7334
    %v7455 = vpack.c.b16 %v7343, %v7335
    %v7456 = vpack.c.b16 %v7352, %v7344
    %v7457 = vpack.c.b16 %v7353, %v7345
    %v7458 = vpack.c.b16 %v7354, %v7346
    %v7459 = vpack.c.b16 %v7355, %v7347
    %v7460 = vpack.c.b16 %v7356, %v7348
    %v7461 = vpack.c.b16 %v7357, %v7349
    %v7462 = vpack.c.b16 %v7358, %v7350
    %v7463 = vpack.c.b16 %v7359, %v7351
    %v7464 = vpack.c.b16 %v7368, %v7360
    %v7465 = vpack.c.b16 %v7369, %v7361
    %v7466 = vpack.c.b16 %v7370, %v7362
    %v7467 = vpack.c.b16 %v7371, %v7363
    %v7468 = vpack.c.b16 %v7372, %v7364
    %v7469 = vpack.c.b16 %v7373, %v7365
    %v7470 = vpack.c.b16 %v7374, %v7366
    %v7471 = vpack.c.b16 %v7375, %v7367
    %v7472 = vpack.c.b16 %v7384, %v7376
    %v7473 = vpack.c.b16 %v7385, %v7377
    %v7474 = vpack.c.b16 %v7386, %v7378
    %v7475 = vpack.c.b16 %v7387, %v7379
    %v7476 = vpack.c.b16 %v7388, %v7380
    %v7477 = vpack.c.b16 %v7389, %v7381
    %v7478 = vpack.c.b16 %v7390, %v7382
    %v7479 = vpack.c.b16 %v7391, %v7383
    %v7480 = vpack.c.b16 %v7400, %v7392
    %v7481 = vpack.c.b16 %v7401, %v7393
    %v7482 = vpack.c.b16 %v7402, %v7394
    %v7483 = vpack.c.b16 %v7403, %v7395
    %v7484 = vpack.c.b16 %v7404, %v7396
    %v7485 = vpack.c.b16 %v7405, %v7397
    %v7486 = vpack.c.b16 %v7406, %v7398
    %v7487 = vpack.c.b16 %v7407, %v7399
    %v7488 = vpack.c.b16 %v7416, %v7408
    %v7489 = vpack.c.b16 %v7417, %v7409
    %v7490 = vpack.c.b16 %v7418, %v7410
    %v7491 = vpack.c.b16 %v7419, %v7411
    %v7492 = vpack.c.b16 %v7420, %v7412
    %v7493 = vpack.c.b16 %v7421, %v7413
    %v7494 = vpack.c.b16 %v7422, %v7414
    %v7495 = vpack.c.b16 %v7423, %v7415
    %v7496 = vpack.c.b16 %v7432, %v7424
    %v7497 = vpack.c.b16 %v7433, %v7425
    %v7498 = vpack.c.b16 %v7434, %v7426
    %v7499 = vpack.c.b16 %v7435, %v7427
    %v7500 = vpack.c.b16 %v7436, %v7428
    %v7501 = vpack.c.b16 %v7437, %v7429
    %v7502 = vpack.c.b16 %v7438, %v7430
    %v7503 = vpack.c.b16 %v7439, %v7431
    %7568 = vmatprep.subr.bf16.mxu0 %v7497
    %7569 = vmatpush1.bf16.msra.mxu0 %v7496
    %7570 = vmatprep.subr.bf16.mxu0 %v7489
    %7571 = vmatpush1.bf16.msra.mxu0 %v7488
    %7572 = vmatprep.subr.bf16.mxu0 %v7481
    %7573 = vmatpush1.bf16.msra.mxu0 %v7480
    %7574 = vmatprep.subr.bf16.mxu0 %v7473
    %7575 = vmatpush1.bf16.msra.mxu0 %v7472
    %7576 = vmatprep.subr.bf16.mxu0 %v7465
    %7577 = vmatpush1.bf16.msra.mxu0 %v7464
    %7578 = vmatprep.subr.bf16.mxu0 %v7457
    %7579 = vmatpush1.bf16.msra.mxu0 %v7456
    %7580 = vmatprep.subr.bf16.mxu0 %v7449
    %7581 = vmatpush1.bf16.msra.mxu0 %v7448
    %7582 = vmatprep.subr.bf16.mxu0 %v7441
    %7583 = vmatpush1.bf16.msra.mxu0 %v7440
    %7584 = vmatprep.subr.bf16.mxu0 0
    %7585 = vmatpush2.bf16.msra.mxu0 0
    %7586 = vmatprep.subr.bf16.mxu0 0
    %7587 = vmatpush2.bf16.msra.mxu0 0
    %7588 = vmatprep.subr.bf16.mxu0 0
    %7589 = vmatpush2.bf16.msra.mxu0 0
    %7590 = vmatprep.subr.bf16.mxu0 0
    %7591 = vmatpush2.bf16.msra.mxu0 0
    %7592 = vmatprep.subr.bf16.mxu0 0
    %7593 = vmatpush2.bf16.msra.mxu0 0
    %7594 = vmatprep.subr.bf16.mxu0 0
    %7595 = vmatpush2.bf16.msra.mxu0 0
    %7596 = vmatprep.subr.bf16.mxu0 0
    %7597 = vmatpush2.bf16.msra.mxu0 0
    %7598 = vmatprep.subr.bf16.mxu0 0
    %7599 = vmatpush2.bf16.msra.mxu0 0
    %7600 = vmatprep.mubr.bf16.mxu0 0
    %7601 = vmatmul.mubr.bf16.gmra.mxu0 %v7126
    %v7602 = vpop.f32.mrf.mxu0
    %v7603 = vadd.f32 %v7211, %v7602
    %v7604 = vpop.f32.mrf.mxu0
    %v7605 = vadd.f32 %v7215, %v7604
    %v7606 = vpop.f32.mrf.mxu0
    %v7607 = vadd.f32 %v7211, %v7606
    %v7608 = vpop.f32.mrf.mxu0
    %v7609 = vadd.f32 %v7215, %v7608
    %7610 = vmatprep.mubr.bf16.mxu0 0
    %7611 = vmatmul.mubr.bf16.gmra.mxu0 %v7127
    %v7612 = vpop.f32.mrf.mxu0
    %v7613 = vadd.f32 %v7211, %v7612
    %v7614 = vpop.f32.mrf.mxu0
    %v7615 = vadd.f32 %v7215, %v7614
    %v7616 = vpop.f32.mrf.mxu0
    %v7617 = vadd.f32 %v7211, %v7616
    %v7618 = vpop.f32.mrf.mxu0
    %v7619 = vadd.f32 %v7215, %v7618
    %7620 = vmatprep.mubr.bf16.mxu0 0
    %7621 = vmatmul.mubr.bf16.gmra.mxu0 %v7128
    %v7622 = vpop.f32.mrf.mxu0
    %v7623 = vadd.f32 %v7211, %v7622
    %v7624 = vpop.f32.mrf.mxu0
    %v7625 = vadd.f32 %v7215, %v7624
    %v7626 = vpop.f32.mrf.mxu0
    %v7627 = vadd.f32 %v7211, %v7626
    %v7628 = vpop.f32.mrf.mxu0
    %v7629 = vadd.f32 %v7215, %v7628
    %7630 = vmatprep.mubr.bf16.mxu0 0
    %7631 = vmatmul.mubr.bf16.gmra.mxu0 %v7129
    %v7632 = vpop.f32.mrf.mxu0
    %v7633 = vadd.f32 %v7211, %v7632
    %v7634 = vpop.f32.mrf.mxu0
    %v7635 = vadd.f32 %v7215, %v7634
    %v7636 = vpop.f32.mrf.mxu0
    %v7637 = vadd.f32 %v7211, %v7636
    %v7638 = vpop.f32.mrf.mxu0
    %v7639 = vadd.f32 %v7215, %v7638
    %7640 = vmatprep.mubr.bf16.mxu0 0
    %7641 = vmatmul.mubr.bf16.gmra.mxu0 %v7130
    %v7642 = vpop.f32.mrf.mxu0
    %v7643 = vadd.f32 %v7211, %v7642
    %v7644 = vpop.f32.mrf.mxu0
    %v7645 = vadd.f32 %v7215, %v7644
    %v7646 = vpop.f32.mrf.mxu0
    %v7647 = vadd.f32 %v7211, %v7646
    %v7648 = vpop.f32.mrf.mxu0
    %v7649 = vadd.f32 %v7215, %v7648
    %7650 = vmatprep.mubr.bf16.mxu0 0
    %7651 = vmatmul.mubr.bf16.gmra.mxu0 %v7131
    %v7652 = vpop.f32.mrf.mxu0
    %v7653 = vadd.f32 %v7211, %v7652
    %v7654 = vpop.f32.mrf.mxu0
    %v7655 = vadd.f32 %v7215, %v7654
    %v7656 = vpop.f32.mrf.mxu0
    %v7657 = vadd.f32 %v7211, %v7656
    %v7658 = vpop.f32.mrf.mxu0
    %v7659 = vadd.f32 %v7215, %v7658
    %7660 = vmatprep.mubr.bf16.mxu0 0
    %7661 = vmatmul.mubr.bf16.gmra.mxu0 %v7132
    %v7662 = vpop.f32.mrf.mxu0
    %v7663 = vadd.f32 %v7211, %v7662
    %v7664 = vpop.f32.mrf.mxu0
    %v7665 = vadd.f32 %v7215, %v7664
    %v7666 = vpop.f32.mrf.mxu0
    %v7667 = vadd.f32 %v7211, %v7666
    %v7668 = vpop.f32.mrf.mxu0
    %v7669 = vadd.f32 %v7215, %v7668
    %7670 = vmatprep.mubr.bf16.mxu0 0
    %7671 = vmatmul.mubr.bf16.gmra.mxu0 %v7133
    %v7672 = vpop.f32.mrf.mxu0
    %v7673 = vadd.f32 %v7211, %v7672
    %v7674 = vpop.f32.mrf.mxu0
    %v7675 = vadd.f32 %v7215, %v7674
    %v7676 = vpop.f32.mrf.mxu0
    %v7677 = vadd.f32 %v7211, %v7676
    %v7678 = vpop.f32.mrf.mxu0
    %v7679 = vadd.f32 %v7215, %v7678
    %7680 = vmatprep.mubr.bf16.mxu0 0
    %7681 = vmatmul.mubr.bf16.gmra.mxu0 %v7134
    %v7682 = vpop.f32.mrf.mxu0
    %v7683 = vadd.f32 %v7211, %v7682
    %v7684 = vpop.f32.mrf.mxu0
    %v7685 = vadd.f32 %v7215, %v7684
    %v7686 = vpop.f32.mrf.mxu0
    %v7687 = vadd.f32 %v7211, %v7686
    %v7688 = vpop.f32.mrf.mxu0
    %v7689 = vadd.f32 %v7215, %v7688
    %7690 = vmatprep.mubr.bf16.mxu0 0
    %7691 = vmatmul.mubr.bf16.gmra.mxu0 %v7135
    %v7692 = vpop.f32.mrf.mxu0
    %v7693 = vadd.f32 %v7211, %v7692
    %v7694 = vpop.f32.mrf.mxu0
    %v7695 = vadd.f32 %v7215, %v7694
    %v7696 = vpop.f32.mrf.mxu0
    %v7697 = vadd.f32 %v7211, %v7696
    %v7698 = vpop.f32.mrf.mxu0
    %v7699 = vadd.f32 %v7215, %v7698
    %7700 = vmatprep.mubr.bf16.mxu0 0
    %7701 = vmatmul.mubr.bf16.gmra.mxu0 %v7136
    %v7702 = vpop.f32.mrf.mxu0
    %v7703 = vadd.f32 %v7211, %v7702
    %v7704 = vpop.f32.mrf.mxu0
    %v7705 = vadd.f32 %v7215, %v7704
    %v7706 = vpop.f32.mrf.mxu0
    %v7707 = vadd.f32 %v7211, %v7706
    %v7708 = vpop.f32.mrf.mxu0
    %v7709 = vadd.f32 %v7215, %v7708
    %7710 = vmatprep.mubr.bf16.mxu0 0
    %7711 = vmatmul.mubr.bf16.gmra.mxu0 %v7137
    %v7712 = vpop.f32.mrf.mxu0
    %v7713 = vadd.f32 %v7211, %v7712
    %v7714 = vpop.f32.mrf.mxu0
    %v7715 = vadd.f32 %v7215, %v7714
    %v7716 = vpop.f32.mrf.mxu0
    %v7717 = vadd.f32 %v7211, %v7716
    %v7718 = vpop.f32.mrf.mxu0
    %v7719 = vadd.f32 %v7215, %v7718
    %7720 = vmatprep.mubr.bf16.mxu0 0
    %7721 = vmatmul.mubr.bf16.gmra.mxu0 %v7138
    %v7722 = vpop.f32.mrf.mxu0
    %v7723 = vadd.f32 %v7211, %v7722
    %v7724 = vpop.f32.mrf.mxu0
    %v7725 = vadd.f32 %v7215, %v7724
    %v7726 = vpop.f32.mrf.mxu0
    %v7727 = vadd.f32 %v7211, %v7726
    %v7728 = vpop.f32.mrf.mxu0
    %v7729 = vadd.f32 %v7215, %v7728
    %7730 = vmatprep.mubr.bf16.mxu0 0
    %7731 = vmatmul.mubr.bf16.gmra.mxu0 %v7139
    %v7732 = vpop.f32.mrf.mxu0
    %v7733 = vadd.f32 %v7211, %v7732
    %v7734 = vpop.f32.mrf.mxu0
    %v7735 = vadd.f32 %v7215, %v7734
    %v7736 = vpop.f32.mrf.mxu0
    %v7737 = vadd.f32 %v7211, %v7736
    %v7738 = vpop.f32.mrf.mxu0
    %v7739 = vadd.f32 %v7215, %v7738
    %7740 = vmatprep.mubr.bf16.mxu0 0
    %7741 = vmatmul.mubr.bf16.gmra.mxu0 %v7140
    %v7742 = vpop.f32.mrf.mxu0
    %v7743 = vadd.f32 %v7211, %v7742
    %v7744 = vpop.f32.mrf.mxu0
    %v7745 = vadd.f32 %v7215, %v7744
    %v7746 = vpop.f32.mrf.mxu0
    %v7747 = vadd.f32 %v7211, %v7746
    %v7748 = vpop.f32.mrf.mxu0
    %v7749 = vadd.f32 %v7215, %v7748
    %7750 = vmatprep.mubr.bf16.mxu0 0
    %7751 = vmatmul.mubr.bf16.gmra.mxu0 %v7141
    %v7752 = vpop.f32.mrf.mxu0
    %v7753 = vadd.f32 %v7211, %v7752
    %v7754 = vpop.f32.mrf.mxu0
    %v7755 = vadd.f32 %v7215, %v7754
    %v7756 = vpop.f32.mrf.mxu0
    %v7757 = vadd.f32 %v7211, %v7756
    %v7758 = vpop.f32.mrf.mxu0
    %v7759 = vadd.f32 %v7215, %v7758
    %7760 = vdwg.mxu0
    %7761 = vmatprep.subr.bf16.mxu0 %v7499
    %7762 = vmatpush1.bf16.msra.mxu0 %v7498
    %7763 = vmatprep.subr.bf16.mxu0 %v7491
    %7764 = vmatpush1.bf16.msra.mxu0 %v7490
    %7765 = vmatprep.subr.bf16.mxu0 %v7483
    %7766 = vmatpush1.bf16.msra.mxu0 %v7482
    %7767 = vmatprep.subr.bf16.mxu0 %v7475
    %7768 = vmatpush1.bf16.msra.mxu0 %v7474
    %7769 = vmatprep.subr.bf16.mxu0 %v7467
    %7770 = vmatpush1.bf16.msra.mxu0 %v7466
    %7771 = vmatprep.subr.bf16.mxu0 %v7459
    %7772 = vmatpush1.bf16.msra.mxu0 %v7458
    %7773 = vmatprep.subr.bf16.mxu0 %v7451
    %7774 = vmatpush1.bf16.msra.mxu0 %v7450
    %7775 = vmatprep.subr.bf16.mxu0 %v7443
    %7776 = vmatpush1.bf16.msra.mxu0 %v7442
    %7777 = vmatprep.subr.bf16.mxu0 0
    %7778 = vmatpush2.bf16.msra.mxu0 0
    %7779 = vmatprep.subr.bf16.mxu0 0
    %7780 = vmatpush2.bf16.msra.mxu0 0
    %7781 = vmatprep.subr.bf16.mxu0 0
    %7782 = vmatpush2.bf16.msra.mxu0 0
    %7783 = vmatprep.subr.bf16.mxu0 0
    %7784 = vmatpush2.bf16.msra.mxu0 0
    %7785 = vmatprep.subr.bf16.mxu0 0
    %7786 = vmatpush2.bf16.msra.mxu0 0
    %7787 = vmatprep.subr.bf16.mxu0 0
    %7788 = vmatpush2.bf16.msra.mxu0 0
    %7789 = vmatprep.subr.bf16.mxu0 0
    %7790 = vmatpush2.bf16.msra.mxu0 0
    %7791 = vmatprep.subr.bf16.mxu0 0
    %7792 = vmatpush2.bf16.msra.mxu0 0
    %7793 = vmatprep.mubr.bf16.mxu0 0
    %7794 = vmatmul.mubr.bf16.gmra.mxu0 %v7126
    %v7795 = vpop.f32.mrf.mxu0
    %v7796 = vadd.f32 %v7219, %v7795
    %v7797 = vpop.f32.mrf.mxu0
    %v7798 = vadd.f32 %v7223, %v7797
    %v7799 = vpop.f32.mrf.mxu0
    %v7800 = vadd.f32 %v7219, %v7799
    %v7801 = vpop.f32.mrf.mxu0
    %v7802 = vadd.f32 %v7223, %v7801
    %7803 = vmatprep.mubr.bf16.mxu0 0
    %7804 = vmatmul.mubr.bf16.gmra.mxu0 %v7127
    %v7805 = vpop.f32.mrf.mxu0
    %v7806 = vadd.f32 %v7219, %v7805
    %v7807 = vpop.f32.mrf.mxu0
    %v7808 = vadd.f32 %v7223, %v7807
    %v7809 = vpop.f32.mrf.mxu0
    %v7810 = vadd.f32 %v7219, %v7809
    %v7811 = vpop.f32.mrf.mxu0
    %v7812 = vadd.f32 %v7223, %v7811
    %7813 = vmatprep.mubr.bf16.mxu0 0
    %7814 = vmatmul.mubr.bf16.gmra.mxu0 %v7128
    %v7815 = vpop.f32.mrf.mxu0
    %v7816 = vadd.f32 %v7219, %v7815
    %v7817 = vpop.f32.mrf.mxu0
    %v7818 = vadd.f32 %v7223, %v7817
    %v7819 = vpop.f32.mrf.mxu0
    %v7820 = vadd.f32 %v7219, %v7819
    %v7821 = vpop.f32.mrf.mxu0
    %v7822 = vadd.f32 %v7223, %v7821
    %7823 = vmatprep.mubr.bf16.mxu0 0
    %7824 = vmatmul.mubr.bf16.gmra.mxu0 %v7129
    %v7825 = vpop.f32.mrf.mxu0
    %v7826 = vadd.f32 %v7219, %v7825
    %v7827 = vpop.f32.mrf.mxu0
    %v7828 = vadd.f32 %v7223, %v7827
    %v7829 = vpop.f32.mrf.mxu0
    %v7830 = vadd.f32 %v7219, %v7829
    %v7831 = vpop.f32.mrf.mxu0
    %v7832 = vadd.f32 %v7223, %v7831
    %7833 = vmatprep.mubr.bf16.mxu0 0
    %7834 = vmatmul.mubr.bf16.gmra.mxu0 %v7130
    %v7835 = vpop.f32.mrf.mxu0
    %v7836 = vadd.f32 %v7219, %v7835
    %v7837 = vpop.f32.mrf.mxu0
    %v7838 = vadd.f32 %v7223, %v7837
    %v7839 = vpop.f32.mrf.mxu0
    %v7840 = vadd.f32 %v7219, %v7839
    %v7841 = vpop.f32.mrf.mxu0
    %v7842 = vadd.f32 %v7223, %v7841
    %7843 = vmatprep.mubr.bf16.mxu0 0
    %7844 = vmatmul.mubr.bf16.gmra.mxu0 %v7131
    %v7845 = vpop.f32.mrf.mxu0
    %v7846 = vadd.f32 %v7219, %v7845
    %v7847 = vpop.f32.mrf.mxu0
    %v7848 = vadd.f32 %v7223, %v7847
    %v7849 = vpop.f32.mrf.mxu0
    %v7850 = vadd.f32 %v7219, %v7849
    %v7851 = vpop.f32.mrf.mxu0
    %v7852 = vadd.f32 %v7223, %v7851
    %7853 = vmatprep.mubr.bf16.mxu0 0
    %7854 = vmatmul.mubr.bf16.gmra.mxu0 %v7132
    %v7855 = vpop.f32.mrf.mxu0
    %v7856 = vadd.f32 %v7219, %v7855
    %v7857 = vpop.f32.mrf.mxu0
    %v7858 = vadd.f32 %v7223, %v7857
    %v7859 = vpop.f32.mrf.mxu0
    %v7860 = vadd.f32 %v7219, %v7859
    %v7861 = vpop.f32.mrf.mxu0
    %v7862 = vadd.f32 %v7223, %v7861
    %7863 = vmatprep.mubr.bf16.mxu0 0
    %7864 = vmatmul.mubr.bf16.gmra.mxu0 %v7133
    %v7865 = vpop.f32.mrf.mxu0
    %v7866 = vadd.f32 %v7219, %v7865
    %v7867 = vpop.f32.mrf.mxu0
    %v7868 = vadd.f32 %v7223, %v7867
    %v7869 = vpop.f32.mrf.mxu0
    %v7870 = vadd.f32 %v7219, %v7869
    %v7871 = vpop.f32.mrf.mxu0
    %v7872 = vadd.f32 %v7223, %v7871
    %7873 = vmatprep.mubr.bf16.mxu0 0
    %7874 = vmatmul.mubr.bf16.gmra.mxu0 %v7134
    %v7875 = vpop.f32.mrf.mxu0
    %v7876 = vadd.f32 %v7219, %v7875
    %v7877 = vpop.f32.mrf.mxu0
    %v7878 = vadd.f32 %v7223, %v7877
    %v7879 = vpop.f32.mrf.mxu0
    %v7880 = vadd.f32 %v7219, %v7879
    %v7881 = vpop.f32.mrf.mxu0
    %v7882 = vadd.f32 %v7223, %v7881
    %7883 = vmatprep.mubr.bf16.mxu0 0
    %7884 = vmatmul.mubr.bf16.gmra.mxu0 %v7135
    %v7885 = vpop.f32.mrf.mxu0
    %v7886 = vadd.f32 %v7219, %v7885
    %v7887 = vpop.f32.mrf.mxu0
    %v7888 = vadd.f32 %v7223, %v7887
    %v7889 = vpop.f32.mrf.mxu0
    %v7890 = vadd.f32 %v7219, %v7889
    %v7891 = vpop.f32.mrf.mxu0
    %v7892 = vadd.f32 %v7223, %v7891
    %7893 = vmatprep.mubr.bf16.mxu0 0
    %7894 = vmatmul.mubr.bf16.gmra.mxu0 %v7136
    %v7895 = vpop.f32.mrf.mxu0
    %v7896 = vadd.f32 %v7219, %v7895
    %v7897 = vpop.f32.mrf.mxu0
    %v7898 = vadd.f32 %v7223, %v7897
    %v7899 = vpop.f32.mrf.mxu0
    %v7900 = vadd.f32 %v7219, %v7899
    %v7901 = vpop.f32.mrf.mxu0
    %v7902 = vadd.f32 %v7223, %v7901
    %7903 = vmatprep.mubr.bf16.mxu0 0
    %7904 = vmatmul.mubr.bf16.gmra.mxu0 %v7137
    %v7905 = vpop.f32.mrf.mxu0
    %v7906 = vadd.f32 %v7219, %v7905
    %v7907 = vpop.f32.mrf.mxu0
    %v7908 = vadd.f32 %v7223, %v7907
    %v7909 = vpop.f32.mrf.mxu0
    %v7910 = vadd.f32 %v7219, %v7909
    %v7911 = vpop.f32.mrf.mxu0
    %v7912 = vadd.f32 %v7223, %v7911
    %7913 = vmatprep.mubr.bf16.mxu0 0
    %7914 = vmatmul.mubr.bf16.gmra.mxu0 %v7138
    %v7915 = vpop.f32.mrf.mxu0
    %v7916 = vadd.f32 %v7219, %v7915
    %v7917 = vpop.f32.mrf.mxu0
    %v7918 = vadd.f32 %v7223, %v7917
    %v7919 = vpop.f32.mrf.mxu0
    %v7920 = vadd.f32 %v7219, %v7919
    %v7921 = vpop.f32.mrf.mxu0
    %v7922 = vadd.f32 %v7223, %v7921
    %7923 = vmatprep.mubr.bf16.mxu0 0
    %7924 = vmatmul.mubr.bf16.gmra.mxu0 %v7139
    %v7925 = vpop.f32.mrf.mxu0
    %v7926 = vadd.f32 %v7219, %v7925
    %v7927 = vpop.f32.mrf.mxu0
    %v7928 = vadd.f32 %v7223, %v7927
    %v7929 = vpop.f32.mrf.mxu0
    %v7930 = vadd.f32 %v7219, %v7929
    %v7931 = vpop.f32.mrf.mxu0
    %v7932 = vadd.f32 %v7223, %v7931
    %7933 = vmatprep.mubr.bf16.mxu0 0
    %7934 = vmatmul.mubr.bf16.gmra.mxu0 %v7140
    %v7935 = vpop.f32.mrf.mxu0
    %v7936 = vadd.f32 %v7219, %v7935
    %v7937 = vpop.f32.mrf.mxu0
    %v7938 = vadd.f32 %v7223, %v7937
    %v7939 = vpop.f32.mrf.mxu0
    %v7940 = vadd.f32 %v7219, %v7939
    %v7941 = vpop.f32.mrf.mxu0
    %v7942 = vadd.f32 %v7223, %v7941
    %7943 = vmatprep.mubr.bf16.mxu0 0
    %7944 = vmatmul.mubr.bf16.gmra.mxu0 %v7141
    %v7945 = vpop.f32.mrf.mxu0
    %v7946 = vadd.f32 %v7219, %v7945
    %v7947 = vpop.f32.mrf.mxu0
    %v7948 = vadd.f32 %v7223, %v7947
    %v7949 = vpop.f32.mrf.mxu0
    %v7950 = vadd.f32 %v7219, %v7949
    %v7951 = vpop.f32.mrf.mxu0
    %v7952 = vadd.f32 %v7223, %v7951
    %7953 = vdwg.mxu0
    %7954 = vmatprep.subr.bf16.mxu0 %v7501
    %7955 = vmatpush1.bf16.msra.mxu0 %v7500
    %7956 = vmatprep.subr.bf16.mxu0 %v7493
    %7957 = vmatpush1.bf16.msra.mxu0 %v7492
    %7958 = vmatprep.subr.bf16.mxu0 %v7485
    %7959 = vmatpush1.bf16.msra.mxu0 %v7484
    %7960 = vmatprep.subr.bf16.mxu0 %v7477
    %7961 = vmatpush1.bf16.msra.mxu0 %v7476
    %7962 = vmatprep.subr.bf16.mxu0 %v7469
    %7963 = vmatpush1.bf16.msra.mxu0 %v7468
    %7964 = vmatprep.subr.bf16.mxu0 %v7461
    %7965 = vmatpush1.bf16.msra.mxu0 %v7460
    %7966 = vmatprep.subr.bf16.mxu0 %v7453
    %7967 = vmatpush1.bf16.msra.mxu0 %v7452
    %7968 = vmatprep.subr.bf16.mxu0 %v7445
    %7969 = vmatpush1.bf16.msra.mxu0 %v7444
    %7970 = vmatprep.subr.bf16.mxu0 0
    %7971 = vmatpush2.bf16.msra.mxu0 0
    %7972 = vmatprep.subr.bf16.mxu0 0
    %7973 = vmatpush2.bf16.msra.mxu0 0
    %7974 = vmatprep.subr.bf16.mxu0 0
    %7975 = vmatpush2.bf16.msra.mxu0 0
    %7976 = vmatprep.subr.bf16.mxu0 0
    %7977 = vmatpush2.bf16.msra.mxu0 0
    %7978 = vmatprep.subr.bf16.mxu0 0
    %7979 = vmatpush2.bf16.msra.mxu0 0
    %7980 = vmatprep.subr.bf16.mxu0 0
    %7981 = vmatpush2.bf16.msra.mxu0 0
    %7982 = vmatprep.subr.bf16.mxu0 0
    %7983 = vmatpush2.bf16.msra.mxu0 0
    %7984 = vmatprep.subr.bf16.mxu0 0
    %7985 = vmatpush2.bf16.msra.mxu0 0
    %7986 = vmatprep.mubr.bf16.mxu0 0
    %7987 = vmatmul.mubr.bf16.gmra.mxu0 %v7126
    %v7988 = vpop.f32.mrf.mxu0
    %v7989 = vadd.f32 %v7227, %v7988
    %v7990 = vpop.f32.mrf.mxu0
    %v7991 = vadd.f32 %v7231, %v7990
    %v7992 = vpop.f32.mrf.mxu0
    %v7993 = vadd.f32 %v7227, %v7992
    %v7994 = vpop.f32.mrf.mxu0
    %v7995 = vadd.f32 %v7231, %v7994
    %7996 = vmatprep.mubr.bf16.mxu0 0
    %7997 = vmatmul.mubr.bf16.gmra.mxu0 %v7127
    %v7998 = vpop.f32.mrf.mxu0
    %v7999 = vadd.f32 %v7227, %v7998
    %v8000 = vpop.f32.mrf.mxu0
    %v8001 = vadd.f32 %v7231, %v8000
    %v8002 = vpop.f32.mrf.mxu0
    %v8003 = vadd.f32 %v7227, %v8002
    %v8004 = vpop.f32.mrf.mxu0
    %v8005 = vadd.f32 %v7231, %v8004
    %8006 = vmatprep.mubr.bf16.mxu0 0
    %8007 = vmatmul.mubr.bf16.gmra.mxu0 %v7128
    %v8008 = vpop.f32.mrf.mxu0
    %v8009 = vadd.f32 %v7227, %v8008
    %v8010 = vpop.f32.mrf.mxu0
    %v8011 = vadd.f32 %v7231, %v8010
    %v8012 = vpop.f32.mrf.mxu0
    %v8013 = vadd.f32 %v7227, %v8012
    %v8014 = vpop.f32.mrf.mxu0
    %v8015 = vadd.f32 %v7231, %v8014
    %8016 = vmatprep.mubr.bf16.mxu0 0
    %8017 = vmatmul.mubr.bf16.gmra.mxu0 %v7129
    %v8018 = vpop.f32.mrf.mxu0
    %v8019 = vadd.f32 %v7227, %v8018
    %v8020 = vpop.f32.mrf.mxu0
    %v8021 = vadd.f32 %v7231, %v8020
    %v8022 = vpop.f32.mrf.mxu0
    %v8023 = vadd.f32 %v7227, %v8022
    %v8024 = vpop.f32.mrf.mxu0
    %v8025 = vadd.f32 %v7231, %v8024
    %8026 = vmatprep.mubr.bf16.mxu0 0
    %8027 = vmatmul.mubr.bf16.gmra.mxu0 %v7130
    %v8028 = vpop.f32.mrf.mxu0
    %v8029 = vadd.f32 %v7227, %v8028
    %v8030 = vpop.f32.mrf.mxu0
    %v8031 = vadd.f32 %v7231, %v8030
    %v8032 = vpop.f32.mrf.mxu0
    %v8033 = vadd.f32 %v7227, %v8032
    %v8034 = vpop.f32.mrf.mxu0
    %v8035 = vadd.f32 %v7231, %v8034
    %8036 = vmatprep.mubr.bf16.mxu0 0
    %8037 = vmatmul.mubr.bf16.gmra.mxu0 %v7131
    %v8038 = vpop.f32.mrf.mxu0
    %v8039 = vadd.f32 %v7227, %v8038
    %v8040 = vpop.f32.mrf.mxu0
    %v8041 = vadd.f32 %v7231, %v8040
    %v8042 = vpop.f32.mrf.mxu0
    %v8043 = vadd.f32 %v7227, %v8042
    %v8044 = vpop.f32.mrf.mxu0
    %v8045 = vadd.f32 %v7231, %v8044
    %8046 = vmatprep.mubr.bf16.mxu0 0
    %8047 = vmatmul.mubr.bf16.gmra.mxu0 %v7132
    %v8048 = vpop.f32.mrf.mxu0
    %v8049 = vadd.f32 %v7227, %v8048
    %v8050 = vpop.f32.mrf.mxu0
    %v8051 = vadd.f32 %v7231, %v8050
    %v8052 = vpop.f32.mrf.mxu0
    %v8053 = vadd.f32 %v7227, %v8052
    %v8054 = vpop.f32.mrf.mxu0
    %v8055 = vadd.f32 %v7231, %v8054
    %8056 = vmatprep.mubr.bf16.mxu0 0
    %8057 = vmatmul.mubr.bf16.gmra.mxu0 %v7133
    %v8058 = vpop.f32.mrf.mxu0
    %v8059 = vadd.f32 %v7227, %v8058
    %v8060 = vpop.f32.mrf.mxu0
    %v8061 = vadd.f32 %v7231, %v8060
    %v8062 = vpop.f32.mrf.mxu0
    %v8063 = vadd.f32 %v7227, %v8062
    %v8064 = vpop.f32.mrf.mxu0
    %v8065 = vadd.f32 %v7231, %v8064
    %8066 = vmatprep.mubr.bf16.mxu0 0
    %8067 = vmatmul.mubr.bf16.gmra.mxu0 %v7134
    %v8068 = vpop.f32.mrf.mxu0
    %v8069 = vadd.f32 %v7227, %v8068
    %v8070 = vpop.f32.mrf.mxu0
    %v8071 = vadd.f32 %v7231, %v8070
    %v8072 = vpop.f32.mrf.mxu0
    %v8073 = vadd.f32 %v7227, %v8072
    %v8074 = vpop.f32.mrf.mxu0
    %v8075 = vadd.f32 %v7231, %v8074
    %8076 = vmatprep.mubr.bf16.mxu0 0
    %8077 = vmatmul.mubr.bf16.gmra.mxu0 %v7135
    %v8078 = vpop.f32.mrf.mxu0
    %v8079 = vadd.f32 %v7227, %v8078
    %v8080 = vpop.f32.mrf.mxu0
    %v8081 = vadd.f32 %v7231, %v8080
    %v8082 = vpop.f32.mrf.mxu0
    %v8083 = vadd.f32 %v7227, %v8082
    %v8084 = vpop.f32.mrf.mxu0
    %v8085 = vadd.f32 %v7231, %v8084
    %8086 = vmatprep.mubr.bf16.mxu0 0
    %8087 = vmatmul.mubr.bf16.gmra.mxu0 %v7136
    %v8088 = vpop.f32.mrf.mxu0
    %v8089 = vadd.f32 %v7227, %v8088
    %v8090 = vpop.f32.mrf.mxu0
    %v8091 = vadd.f32 %v7231, %v8090
    %v8092 = vpop.f32.mrf.mxu0
    %v8093 = vadd.f32 %v7227, %v8092
    %v8094 = vpop.f32.mrf.mxu0
    %v8095 = vadd.f32 %v7231, %v8094
    %8096 = vmatprep.mubr.bf16.mxu0 0
    %8097 = vmatmul.mubr.bf16.gmra.mxu0 %v7137
    %v8098 = vpop.f32.mrf.mxu0
    %v8099 = vadd.f32 %v7227, %v8098
    %v8100 = vpop.f32.mrf.mxu0
    %v8101 = vadd.f32 %v7231, %v8100
    %v8102 = vpop.f32.mrf.mxu0
    %v8103 = vadd.f32 %v7227, %v8102
    %v8104 = vpop.f32.mrf.mxu0
    %v8105 = vadd.f32 %v7231, %v8104
    %8106 = vmatprep.mubr.bf16.mxu0 0
    %8107 = vmatmul.mubr.bf16.gmra.mxu0 %v7138
    %v8108 = vpop.f32.mrf.mxu0
    %v8109 = vadd.f32 %v7227, %v8108
    %v8110 = vpop.f32.mrf.mxu0
    %v8111 = vadd.f32 %v7231, %v8110
    %v8112 = vpop.f32.mrf.mxu0
    %v8113 = vadd.f32 %v7227, %v8112
    %v8114 = vpop.f32.mrf.mxu0
    %v8115 = vadd.f32 %v7231, %v8114
    %8116 = vmatprep.mubr.bf16.mxu0 0
    %8117 = vmatmul.mubr.bf16.gmra.mxu0 %v7139
    %v8118 = vpop.f32.mrf.mxu0
    %v8119 = vadd.f32 %v7227, %v8118
    %v8120 = vpop.f32.mrf.mxu0
    %v8121 = vadd.f32 %v7231, %v8120
    %v8122 = vpop.f32.mrf.mxu0
    %v8123 = vadd.f32 %v7227, %v8122
    %v8124 = vpop.f32.mrf.mxu0
    %v8125 = vadd.f32 %v7231, %v8124
    %8126 = vmatprep.mubr.bf16.mxu0 0
    %8127 = vmatmul.mubr.bf16.gmra.mxu0 %v7140
    %v8128 = vpop.f32.mrf.mxu0
    %v8129 = vadd.f32 %v7227, %v8128
    %v8130 = vpop.f32.mrf.mxu0
    %v8131 = vadd.f32 %v7231, %v8130
    %v8132 = vpop.f32.mrf.mxu0
    %v8133 = vadd.f32 %v7227, %v8132
    %v8134 = vpop.f32.mrf.mxu0
    %v8135 = vadd.f32 %v7231, %v8134
    %8136 = vmatprep.mubr.bf16.mxu0 0
    %8137 = vmatmul.mubr.bf16.gmra.mxu0 %v7141
    %v8138 = vpop.f32.mrf.mxu0
    %v8139 = vadd.f32 %v7227, %v8138
    %v8140 = vpop.f32.mrf.mxu0
    %v8141 = vadd.f32 %v7231, %v8140
    %v8142 = vpop.f32.mrf.mxu0
    %v8143 = vadd.f32 %v7227, %v8142
    %v8144 = vpop.f32.mrf.mxu0
    %v8145 = vadd.f32 %v7231, %v8144
    %8146 = vdwg.mxu0
    %8147 = vmatprep.subr.bf16.mxu0 %v7503
    %8148 = vmatpush1.bf16.msra.mxu0 %v7502
    %8149 = vmatprep.subr.bf16.mxu0 %v7495
    %8150 = vmatpush1.bf16.msra.mxu0 %v7494
    %8151 = vmatprep.subr.bf16.mxu0 %v7487
    %8152 = vmatpush1.bf16.msra.mxu0 %v7486
    %8153 = vmatprep.subr.bf16.mxu0 %v7479
    %8154 = vmatpush1.bf16.msra.mxu0 %v7478
    %8155 = vmatprep.subr.bf16.mxu0 %v7471
    %8156 = vmatpush1.bf16.msra.mxu0 %v7470
    %8157 = vmatprep.subr.bf16.mxu0 %v7463
    %8158 = vmatpush1.bf16.msra.mxu0 %v7462
    %8159 = vmatprep.subr.bf16.mxu0 %v7455
    %8160 = vmatpush1.bf16.msra.mxu0 %v7454
    %8161 = vmatprep.subr.bf16.mxu0 %v7447
    %8162 = vmatpush1.bf16.msra.mxu0 %v7446
    %8163 = vmatprep.subr.bf16.mxu0 0
    %8164 = vmatpush2.bf16.msra.mxu0 0
    %8165 = vmatprep.subr.bf16.mxu0 0
    %8166 = vmatpush2.bf16.msra.mxu0 0
    %8167 = vmatprep.subr.bf16.mxu0 0
    %8168 = vmatpush2.bf16.msra.mxu0 0
    %8169 = vmatprep.subr.bf16.mxu0 0
    %8170 = vmatpush2.bf16.msra.mxu0 0
    %8171 = vmatprep.subr.bf16.mxu0 0
    %8172 = vmatpush2.bf16.msra.mxu0 0
    %8173 = vmatprep.subr.bf16.mxu0 0
    %8174 = vmatpush2.bf16.msra.mxu0 0
    %8175 = vmatprep.subr.bf16.mxu0 0
    %8176 = vmatpush2.bf16.msra.mxu0 0
    %8177 = vmatprep.subr.bf16.mxu0 0
    %8178 = vmatpush2.bf16.msra.mxu0 0
    %8179 = vmatprep.mubr.bf16.mxu0 0
    %8180 = vmatmul.mubr.bf16.gmra.mxu0 %v7126
    %v8181 = vpop.f32.mrf.mxu0
    %v8182 = vadd.f32 %v7235, %v8181
    %v8183 = vpop.f32.mrf.mxu0
    %v8184 = vadd.f32 %v7239, %v8183
    %v8185 = vpop.f32.mrf.mxu0
    %v8186 = vadd.f32 %v7235, %v8185
    %v8187 = vpop.f32.mrf.mxu0
    %v8188 = vadd.f32 %v7239, %v8187
    %8189 = vmatprep.mubr.bf16.mxu0 0
    %8190 = vmatmul.mubr.bf16.gmra.mxu0 %v7127
    %v8191 = vpop.f32.mrf.mxu0
    %v8192 = vadd.f32 %v7235, %v8191
    %v8193 = vpop.f32.mrf.mxu0
    %v8194 = vadd.f32 %v7239, %v8193
    %v8195 = vpop.f32.mrf.mxu0
    %v8196 = vadd.f32 %v7235, %v8195
    %v8197 = vpop.f32.mrf.mxu0
    %v8198 = vadd.f32 %v7239, %v8197
    %8199 = vmatprep.mubr.bf16.mxu0 0
    %8200 = vmatmul.mubr.bf16.gmra.mxu0 %v7128
    %v8201 = vpop.f32.mrf.mxu0
    %v8202 = vadd.f32 %v7235, %v8201
    %v8203 = vpop.f32.mrf.mxu0
    %v8204 = vadd.f32 %v7239, %v8203
    %v8205 = vpop.f32.mrf.mxu0
    %v8206 = vadd.f32 %v7235, %v8205
    %v8207 = vpop.f32.mrf.mxu0
    %v8208 = vadd.f32 %v7239, %v8207
    %8209 = vmatprep.mubr.bf16.mxu0 0
    %8210 = vmatmul.mubr.bf16.gmra.mxu0 %v7129
    %v8211 = vpop.f32.mrf.mxu0
    %v8212 = vadd.f32 %v7235, %v8211
    %v8213 = vpop.f32.mrf.mxu0
    %v8214 = vadd.f32 %v7239, %v8213
    %v8215 = vpop.f32.mrf.mxu0
    %v8216 = vadd.f32 %v7235, %v8215
    %v8217 = vpop.f32.mrf.mxu0
    %v8218 = vadd.f32 %v7239, %v8217
    %8219 = vmatprep.mubr.bf16.mxu0 0
    %8220 = vmatmul.mubr.bf16.gmra.mxu0 %v7130
    %v8221 = vpop.f32.mrf.mxu0
    %v8222 = vadd.f32 %v7235, %v8221
    %v8223 = vpop.f32.mrf.mxu0
    %v8224 = vadd.f32 %v7239, %v8223
    %v8225 = vpop.f32.mrf.mxu0
    %v8226 = vadd.f32 %v7235, %v8225
    %v8227 = vpop.f32.mrf.mxu0
    %v8228 = vadd.f32 %v7239, %v8227
    %8229 = vmatprep.mubr.bf16.mxu0 0
    %8230 = vmatmul.mubr.bf16.gmra.mxu0 %v7131
    %v8231 = vpop.f32.mrf.mxu0
    %v8232 = vadd.f32 %v7235, %v8231
    %v8233 = vpop.f32.mrf.mxu0
    %v8234 = vadd.f32 %v7239, %v8233
    %v8235 = vpop.f32.mrf.mxu0
    %v8236 = vadd.f32 %v7235, %v8235
    %v8237 = vpop.f32.mrf.mxu0
    %v8238 = vadd.f32 %v7239, %v8237
    %8239 = vmatprep.mubr.bf16.mxu0 0
    %8240 = vmatmul.mubr.bf16.gmra.mxu0 %v7132
    %v8241 = vpop.f32.mrf.mxu0
    %v8242 = vadd.f32 %v7235, %v8241
    %v8243 = vpop.f32.mrf.mxu0
    %v8244 = vadd.f32 %v7239, %v8243
    %v8245 = vpop.f32.mrf.mxu0
    %v8246 = vadd.f32 %v7235, %v8245
    %v8247 = vpop.f32.mrf.mxu0
    %v8248 = vadd.f32 %v7239, %v8247
    %8249 = vmatprep.mubr.bf16.mxu0 0
    %8250 = vmatmul.mubr.bf16.gmra.mxu0 %v7133
    %v8251 = vpop.f32.mrf.mxu0
    %v8252 = vadd.f32 %v7235, %v8251
    %v8253 = vpop.f32.mrf.mxu0
    %v8254 = vadd.f32 %v7239, %v8253
    %v8255 = vpop.f32.mrf.mxu0
    %v8256 = vadd.f32 %v7235, %v8255
    %v8257 = vpop.f32.mrf.mxu0
    %v8258 = vadd.f32 %v7239, %v8257
    %8259 = vmatprep.mubr.bf16.mxu0 0
    %8260 = vmatmul.mubr.bf16.gmra.mxu0 %v7134
    %v8261 = vpop.f32.mrf.mxu0
    %v8262 = vadd.f32 %v7235, %v8261
    %v8263 = vpop.f32.mrf.mxu0
    %v8264 = vadd.f32 %v7239, %v8263
    %v8265 = vpop.f32.mrf.mxu0
    %v8266 = vadd.f32 %v7235, %v8265
    %v8267 = vpop.f32.mrf.mxu0
    %v8268 = vadd.f32 %v7239, %v8267
    %8269 = vmatprep.mubr.bf16.mxu0 0
    %8270 = vmatmul.mubr.bf16.gmra.mxu0 %v7135
    %v8271 = vpop.f32.mrf.mxu0
    %v8272 = vadd.f32 %v7235, %v8271
    %v8273 = vpop.f32.mrf.mxu0
    %v8274 = vadd.f32 %v7239, %v8273
    %v8275 = vpop.f32.mrf.mxu0
    %v8276 = vadd.f32 %v7235, %v8275
    %v8277 = vpop.f32.mrf.mxu0
    %v8278 = vadd.f32 %v7239, %v8277
    %8279 = vmatprep.mubr.bf16.mxu0 0
    %8280 = vmatmul.mubr.bf16.gmra.mxu0 %v7136
    %v8281 = vpop.f32.mrf.mxu0
    %v8282 = vadd.f32 %v7235, %v8281
    %v8283 = vpop.f32.mrf.mxu0
    %v8284 = vadd.f32 %v7239, %v8283
    %v8285 = vpop.f32.mrf.mxu0
    %v8286 = vadd.f32 %v7235, %v8285
    %v8287 = vpop.f32.mrf.mxu0
    %v8288 = vadd.f32 %v7239, %v8287
    %8289 = vmatprep.mubr.bf16.mxu0 0
    %8290 = vmatmul.mubr.bf16.gmra.mxu0 %v7137
    %v8291 = vpop.f32.mrf.mxu0
    %v8292 = vadd.f32 %v7235, %v8291
    %v8293 = vpop.f32.mrf.mxu0
    %v8294 = vadd.f32 %v7239, %v8293
    %v8295 = vpop.f32.mrf.mxu0
    %v8296 = vadd.f32 %v7235, %v8295
    %v8297 = vpop.f32.mrf.mxu0
    %v8298 = vadd.f32 %v7239, %v8297
    %8299 = vmatprep.mubr.bf16.mxu0 0
    %8300 = vmatmul.mubr.bf16.gmra.mxu0 %v7138
    %v8301 = vpop.f32.mrf.mxu0
    %v8302 = vadd.f32 %v7235, %v8301
    %v8303 = vpop.f32.mrf.mxu0
    %v8304 = vadd.f32 %v7239, %v8303
    %v8305 = vpop.f32.mrf.mxu0
    %v8306 = vadd.f32 %v7235, %v8305
    %v8307 = vpop.f32.mrf.mxu0
    %v8308 = vadd.f32 %v7239, %v8307
    %8309 = vmatprep.mubr.bf16.mxu0 0
    %8310 = vmatmul.mubr.bf16.gmra.mxu0 %v7139
    %v8311 = vpop.f32.mrf.mxu0
    %v8312 = vadd.f32 %v7235, %v8311
    %v8313 = vpop.f32.mrf.mxu0
    %v8314 = vadd.f32 %v7239, %v8313
    %v8315 = vpop.f32.mrf.mxu0
    %v8316 = vadd.f32 %v7235, %v8315
    %v8317 = vpop.f32.mrf.mxu0
    %v8318 = vadd.f32 %v7239, %v8317
    %8319 = vmatprep.mubr.bf16.mxu0 0
    %8320 = vmatmul.mubr.bf16.gmra.mxu0 %v7140
    %v8321 = vpop.f32.mrf.mxu0
    %v8322 = vadd.f32 %v7235, %v8321
    %v8323 = vpop.f32.mrf.mxu0
    %v8324 = vadd.f32 %v7239, %v8323
    %v8325 = vpop.f32.mrf.mxu0
    %v8326 = vadd.f32 %v7235, %v8325
    %v8327 = vpop.f32.mrf.mxu0
    %v8328 = vadd.f32 %v7239, %v8327
    %8329 = vmatprep.mubr.bf16.mxu0 0
    %8330 = vmatmul.mubr.bf16.gmra.mxu0 %v7141
    %v8331 = vpop.f32.mrf.mxu0
    %v8332 = vadd.f32 %v7235, %v8331
    %v8333 = vpop.f32.mrf.mxu0
    %v8334 = vadd.f32 %v7239, %v8333
    %v8335 = vpop.f32.mrf.mxu0
    %v8336 = vadd.f32 %v7235, %v8335
    %v8337 = vpop.f32.mrf.mxu0
    %v8338 = vadd.f32 %v7239, %v8337
    %8339 = vdwg.mxu0
    %v8340 = vpack.c.bf16 %v7607, %v7603
    %v8341 = vpack.c.bf16 %v7609, %v7605
    %v8342 = vpack.c.bf16 %v7800, %v7796
    %v8343 = vpack.c.bf16 %v7802, %v7798
    %v8344 = vpack.c.bf16 %v7993, %v7989
    %v8345 = vpack.c.bf16 %v7995, %v7991
    %v8346 = vpack.c.bf16 %v8186, %v8182
    %v8347 = vpack.c.bf16 %v8188, %v8184
    %v8348 = vpack.c.bf16 %v7617, %v7613
    %v8349 = vpack.c.bf16 %v7619, %v7615
    %v8350 = vpack.c.bf16 %v7810, %v7806
    %v8351 = vpack.c.bf16 %v7812, %v7808
    %v8352 = vpack.c.bf16 %v8003, %v7999
    %v8353 = vpack.c.bf16 %v8005, %v8001
    %v8354 = vpack.c.bf16 %v8196, %v8192
    %v8355 = vpack.c.bf16 %v8198, %v8194
    %v8356 = vpack.c.bf16 %v7627, %v7623
    %v8357 = vpack.c.bf16 %v7629, %v7625
    %v8358 = vpack.c.bf16 %v7820, %v7816
    %v8359 = vpack.c.bf16 %v7822, %v7818
    %v8360 = vpack.c.bf16 %v8013, %v8009
    %v8361 = vpack.c.bf16 %v8015, %v8011
    %v8362 = vpack.c.bf16 %v8206, %v8202
    %v8363 = vpack.c.bf16 %v8208, %v8204
    %v8364 = vpack.c.bf16 %v7637, %v7633
    %v8365 = vpack.c.bf16 %v7639, %v7635
    %v8366 = vpack.c.bf16 %v7830, %v7826
    %v8367 = vpack.c.bf16 %v7832, %v7828
    %v8368 = vpack.c.bf16 %v8023, %v8019
    %v8369 = vpack.c.bf16 %v8025, %v8021
    %v8370 = vpack.c.bf16 %v8216, %v8212
    %v8371 = vpack.c.bf16 %v8218, %v8214
    %v8372 = vpack.c.bf16 %v7647, %v7643
    %v8373 = vpack.c.bf16 %v7649, %v7645
    %v8374 = vpack.c.bf16 %v7840, %v7836
    %v8375 = vpack.c.bf16 %v7842, %v7838
    %v8376 = vpack.c.bf16 %v8033, %v8029
    %v8377 = vpack.c.bf16 %v8035, %v8031
    %v8378 = vpack.c.bf16 %v8226, %v8222
    %v8379 = vpack.c.bf16 %v8228, %v8224
    %v8380 = vpack.c.bf16 %v7657, %v7653
    %v8381 = vpack.c.bf16 %v7659, %v7655
    %v8382 = vpack.c.bf16 %v7850, %v7846
    %v8383 = vpack.c.bf16 %v7852, %v7848
    %v8384 = vpack.c.bf16 %v8043, %v8039
    %v8385 = vpack.c.bf16 %v8045, %v8041
    %v8386 = vpack.c.bf16 %v8236, %v8232
    %v8387 = vpack.c.bf16 %v8238, %v8234
    %v8388 = vpack.c.bf16 %v7667, %v7663
    %v8389 = vpack.c.bf16 %v7669, %v7665
    %v8390 = vpack.c.bf16 %v7860, %v7856
    %v8391 = vpack.c.bf16 %v7862, %v7858
    %v8392 = vpack.c.bf16 %v8053, %v8049
    %v8393 = vpack.c.bf16 %v8055, %v8051
    %v8394 = vpack.c.bf16 %v8246, %v8242
    %v8395 = vpack.c.bf16 %v8248, %v8244
    %v8396 = vpack.c.bf16 %v7677, %v7673
    %v8397 = vpack.c.bf16 %v7679, %v7675
    %v8398 = vpack.c.bf16 %v7870, %v7866
    %v8399 = vpack.c.bf16 %v7872, %v7868
    %v8400 = vpack.c.bf16 %v8063, %v8059
    %v8401 = vpack.c.bf16 %v8065, %v8061
    %v8402 = vpack.c.bf16 %v8256, %v8252
    %v8403 = vpack.c.bf16 %v8258, %v8254
    %v8404 = vpack.c.bf16 %v7687, %v7683
    %v8405 = vpack.c.bf16 %v7689, %v7685
    %v8406 = vpack.c.bf16 %v7880, %v7876
    %v8407 = vpack.c.bf16 %v7882, %v7878
    %v8408 = vpack.c.bf16 %v8073, %v8069
    %v8409 = vpack.c.bf16 %v8075, %v8071
    %v8410 = vpack.c.bf16 %v8266, %v8262
    %v8411 = vpack.c.bf16 %v8268, %v8264
    %v8412 = vpack.c.bf16 %v7697, %v7693
    %v8413 = vpack.c.bf16 %v7699, %v7695
    %v8414 = vpack.c.bf16 %v7890, %v7886
    %v8415 = vpack.c.bf16 %v7892, %v7888
    %v8416 = vpack.c.bf16 %v8083, %v8079
    %v8417 = vpack.c.bf16 %v8085, %v8081
    %v8418 = vpack.c.bf16 %v8276, %v8272
    %v8419 = vpack.c.bf16 %v8278, %v8274
    %v8420 = vpack.c.bf16 %v7707, %v7703
    %v8421 = vpack.c.bf16 %v7709, %v7705
    %v8422 = vpack.c.bf16 %v7900, %v7896
    %v8423 = vpack.c.bf16 %v7902, %v7898
    %v8424 = vpack.c.bf16 %v8093, %v8089
    %v8425 = vpack.c.bf16 %v8095, %v8091
    %v8426 = vpack.c.bf16 %v8286, %v8282
    %v8427 = vpack.c.bf16 %v8288, %v8284
    %v8428 = vpack.c.bf16 %v7717, %v7713
    %v8429 = vpack.c.bf16 %v7719, %v7715
    %v8430 = vpack.c.bf16 %v7910, %v7906
    %v8431 = vpack.c.bf16 %v7912, %v7908
    %v8432 = vpack.c.bf16 %v8103, %v8099
    %v8433 = vpack.c.bf16 %v8105, %v8101
    %v8434 = vpack.c.bf16 %v8296, %v8292
    %v8435 = vpack.c.bf16 %v8298, %v8294
    %v8436 = vpack.c.bf16 %v7727, %v7723
    %v8437 = vpack.c.bf16 %v7729, %v7725
    %v8438 = vpack.c.bf16 %v7920, %v7916
    %v8439 = vpack.c.bf16 %v7922, %v7918
    %v8440 = vpack.c.bf16 %v8113, %v8109
    %v8441 = vpack.c.bf16 %v8115, %v8111
    %v8442 = vpack.c.bf16 %v8306, %v8302
    %v8443 = vpack.c.bf16 %v8308, %v8304
    %v8444 = vpack.c.bf16 %v7737, %v7733
    %v8445 = vpack.c.bf16 %v7739, %v7735
    %v8446 = vpack.c.bf16 %v7930, %v7926
    %v8447 = vpack.c.bf16 %v7932, %v7928
    %v8448 = vpack.c.bf16 %v8123, %v8119
    %v8449 = vpack.c.bf16 %v8125, %v8121
    %v8450 = vpack.c.bf16 %v8316, %v8312
    %v8451 = vpack.c.bf16 %v8318, %v8314
    %v8452 = vpack.c.bf16 %v7747, %v7743
    %v8453 = vpack.c.bf16 %v7749, %v7745
    %v8454 = vpack.c.bf16 %v7940, %v7936
    %v8455 = vpack.c.bf16 %v7942, %v7938
    %v8456 = vpack.c.bf16 %v8133, %v8129
    %v8457 = vpack.c.bf16 %v8135, %v8131
    %v8458 = vpack.c.bf16 %v8326, %v8322
    %v8459 = vpack.c.bf16 %v8328, %v8324
    %v8460 = vpack.c.bf16 %v7757, %v7753
    %v8461 = vpack.c.bf16 %v7759, %v7755
    %v8462 = vpack.c.bf16 %v7950, %v7946
    %v8463 = vpack.c.bf16 %v7952, %v7948
    %v8464 = vpack.c.bf16 %v8143, %v8139
    %v8465 = vpack.c.bf16 %v8145, %v8141
    %v8466 = vpack.c.bf16 %v8336, %v8332
    %v8467 = vpack.c.bf16 %v8338, %v8334
    %v8468 = vmax.bf16 %v8340, %v8348
    %v8469 = vmax.bf16 %v8468, %v8356
    %v8470 = vmax.bf16 %v8469, %v8364
    %v8471 = vmax.bf16 %v8470, %v8372
    %v8472 = vmax.bf16 %v8471, %v8380
    %v8473 = vmax.bf16 %v8472, %v8388
    %v8474 = vmax.bf16 %v8473, %v8396
    %v8475 = vunpack.i.l.bf16 %v8474
    %v8476 = vunpack.i.h.bf16 %v8474
    %v8477 = vmax.f32 %v8475, %v8476
    %v8478 = vrot.slane %v8477, 4
    %v8479 = vmax.f32 %v8477, %v8478
    %v8480 = vrot.slane %v8479, 2
    %v8481 = vmax.f32 %v8479, %v8480
    %v8482 = vrot.slane %v8481, 1
    %v8483 = vmax.f32 %v8481, %v8482
    %v8484 = vpack.i.bf16 %v8483, %v8483
    %v8485 = vmax.bf16 %v8341, %v8349
    %v8486 = vmax.bf16 %v8485, %v8357
    %v8487 = vmax.bf16 %v8486, %v8365
    %v8488 = vmax.bf16 %v8487, %v8373
    %v8489 = vmax.bf16 %v8488, %v8381
    %v8490 = vmax.bf16 %v8489, %v8389
    %v8491 = vmax.bf16 %v8490, %v8397
    %v8492 = vunpack.i.l.bf16 %v8491
    %v8493 = vunpack.i.h.bf16 %v8491
    %v8494 = vmax.f32 %v8492, %v8493
    %v8495 = vrot.slane %v8494, 4
    %v8496 = vmax.f32 %v8494, %v8495
    %v8497 = vrot.slane %v8496, 2
    %v8498 = vmax.f32 %v8496, %v8497
    %v8499 = vrot.slane %v8498, 1
    %v8500 = vmax.f32 %v8498, %v8499
    %v8501 = vpack.i.bf16 %v8500, %v8500
    %v8502 = vmax.bf16 %v8342, %v8350
    %v8503 = vmax.bf16 %v8502, %v8358
    %v8504 = vmax.bf16 %v8503, %v8366
    %v8505 = vmax.bf16 %v8504, %v8374
    %v8506 = vmax.bf16 %v8505, %v8382
    %v8507 = vmax.bf16 %v8506, %v8390
    %v8508 = vmax.bf16 %v8507, %v8398
    %v8509 = vunpack.i.l.bf16 %v8508
    %v8510 = vunpack.i.h.bf16 %v8508
    %v8511 = vmax.f32 %v8509, %v8510
    %v8512 = vrot.slane %v8511, 4
    %v8513 = vmax.f32 %v8511, %v8512
    %v8514 = vrot.slane %v8513, 2
    %v8515 = vmax.f32 %v8513, %v8514
    %v8516 = vrot.slane %v8515, 1
    %v8517 = vmax.f32 %v8515, %v8516
    %v8518 = vpack.i.bf16 %v8517, %v8517
    %v8519 = vmax.bf16 %v8343, %v8351
    %v8520 = vmax.bf16 %v8519, %v8359
    %v8521 = vmax.bf16 %v8520, %v8367
    %v8522 = vmax.bf16 %v8521, %v8375
    %v8523 = vmax.bf16 %v8522, %v8383
    %v8524 = vmax.bf16 %v8523, %v8391
    %v8525 = vmax.bf16 %v8524, %v8399
    %v8526 = vunpack.i.l.bf16 %v8525
    %v8527 = vunpack.i.h.bf16 %v8525
    %v8528 = vmax.f32 %v8526, %v8527
    %v8529 = vrot.slane %v8528, 4
    %v8530 = vmax.f32 %v8528, %v8529
    %v8531 = vrot.slane %v8530, 2
    %v8532 = vmax.f32 %v8530, %v8531
    %v8533 = vrot.slane %v8532, 1
    %v8534 = vmax.f32 %v8532, %v8533
    %v8535 = vpack.i.bf16 %v8534, %v8534
    %v8536 = vmax.bf16 %v8344, %v8352
    %v8537 = vmax.bf16 %v8536, %v8360
    %v8538 = vmax.bf16 %v8537, %v8368
    %v8539 = vmax.bf16 %v8538, %v8376
    %v8540 = vmax.bf16 %v8539, %v8384
    %v8541 = vmax.bf16 %v8540, %v8392
    %v8542 = vmax.bf16 %v8541, %v8400
    %v8543 = vunpack.i.l.bf16 %v8542
    %v8544 = vunpack.i.h.bf16 %v8542
    %v8545 = vmax.f32 %v8543, %v8544
    %v8546 = vrot.slane %v8545, 4
    %v8547 = vmax.f32 %v8545, %v8546
    %v8548 = vrot.slane %v8547, 2
    %v8549 = vmax.f32 %v8547, %v8548
    %v8550 = vrot.slane %v8549, 1
    %v8551 = vmax.f32 %v8549, %v8550
    %v8552 = vpack.i.bf16 %v8551, %v8551
    %v8553 = vmax.bf16 %v8345, %v8353
    %v8554 = vmax.bf16 %v8553, %v8361
    %v8555 = vmax.bf16 %v8554, %v8369
    %v8556 = vmax.bf16 %v8555, %v8377
    %v8557 = vmax.bf16 %v8556, %v8385
    %v8558 = vmax.bf16 %v8557, %v8393
    %v8559 = vmax.bf16 %v8558, %v8401
    %v8560 = vunpack.i.l.bf16 %v8559
    %v8561 = vunpack.i.h.bf16 %v8559
    %v8562 = vmax.f32 %v8560, %v8561
    %v8563 = vrot.slane %v8562, 4
    %v8564 = vmax.f32 %v8562, %v8563
    %v8565 = vrot.slane %v8564, 2
    %v8566 = vmax.f32 %v8564, %v8565
    %v8567 = vrot.slane %v8566, 1
    %v8568 = vmax.f32 %v8566, %v8567
    %v8569 = vpack.i.bf16 %v8568, %v8568
    %v8570 = vmax.bf16 %v8346, %v8354
    %v8571 = vmax.bf16 %v8570, %v8362
    %v8572 = vmax.bf16 %v8571, %v8370
    %v8573 = vmax.bf16 %v8572, %v8378
    %v8574 = vmax.bf16 %v8573, %v8386
    %v8575 = vmax.bf16 %v8574, %v8394
    %v8576 = vmax.bf16 %v8575, %v8402
    %v8577 = vunpack.i.l.bf16 %v8576
    %v8578 = vunpack.i.h.bf16 %v8576
    %v8579 = vmax.f32 %v8577, %v8578
    %v8580 = vrot.slane %v8579, 4
    %v8581 = vmax.f32 %v8579, %v8580
    %v8582 = vrot.slane %v8581, 2
    %v8583 = vmax.f32 %v8581, %v8582
    %v8584 = vrot.slane %v8583, 1
    %v8585 = vmax.f32 %v8583, %v8584
    %v8586 = vpack.i.bf16 %v8585, %v8585
    %v8587 = vmax.bf16 %v8347, %v8355
    %v8588 = vmax.bf16 %v8587, %v8363
    %v8589 = vmax.bf16 %v8588, %v8371
    %v8590 = vmax.bf16 %v8589, %v8379
    %v8591 = vmax.bf16 %v8590, %v8387
    %v8592 = vmax.bf16 %v8591, %v8395
    %v8593 = vmax.bf16 %v8592, %v8403
    %v8594 = vunpack.i.l.bf16 %v8593
    %v8595 = vunpack.i.h.bf16 %v8593
    %v8596 = vmax.f32 %v8594, %v8595
    %v8597 = vrot.slane %v8596, 4
    %v8598 = vmax.f32 %v8596, %v8597
    %v8599 = vrot.slane %v8598, 2
    %v8600 = vmax.f32 %v8598, %v8599
    %v8601 = vrot.slane %v8600, 1
    %v8602 = vmax.f32 %v8600, %v8601
    %v8603 = vpack.i.bf16 %v8602, %v8602
    %v8604 = vmax.bf16 %v8404, %v8412
    %v8605 = vmax.bf16 %v8604, %v8420
    %v8606 = vmax.bf16 %v8605, %v8428
    %v8607 = vmax.bf16 %v8606, %v8436
    %v8608 = vmax.bf16 %v8607, %v8444
    %v8609 = vmax.bf16 %v8608, %v8452
    %v8610 = vmax.bf16 %v8609, %v8460
    %v8611 = vunpack.i.l.bf16 %v8610
    %v8612 = vunpack.i.h.bf16 %v8610
    %v8613 = vmax.f32 %v8611, %v8612
    %v8614 = vrot.slane %v8613, 4
    %v8615 = vmax.f32 %v8613, %v8614
    %v8616 = vrot.slane %v8615, 2
    %v8617 = vmax.f32 %v8615, %v8616
    %v8618 = vrot.slane %v8617, 1
    %v8619 = vmax.f32 %v8617, %v8618
    %v8620 = vpack.i.bf16 %v8619, %v8619
    %v8621 = vmax.bf16 %v8405, %v8413
    %v8622 = vmax.bf16 %v8621, %v8421
    %v8623 = vmax.bf16 %v8622, %v8429
    %v8624 = vmax.bf16 %v8623, %v8437
    %v8625 = vmax.bf16 %v8624, %v8445
    %v8626 = vmax.bf16 %v8625, %v8453
    %v8627 = vmax.bf16 %v8626, %v8461
    %v8628 = vunpack.i.l.bf16 %v8627
    %v8629 = vunpack.i.h.bf16 %v8627
    %v8630 = vmax.f32 %v8628, %v8629
    %v8631 = vrot.slane %v8630, 4
    %v8632 = vmax.f32 %v8630, %v8631
    %v8633 = vrot.slane %v8632, 2
    %v8634 = vmax.f32 %v8632, %v8633
    %v8635 = vrot.slane %v8634, 1
    %v8636 = vmax.f32 %v8634, %v8635
    %v8637 = vpack.i.bf16 %v8636, %v8636
    %v8638 = vmax.bf16 %v8406, %v8414
    %v8639 = vmax.bf16 %v8638, %v8422
    %v8640 = vmax.bf16 %v8639, %v8430
    %v8641 = vmax.bf16 %v8640, %v8438
    %v8642 = vmax.bf16 %v8641, %v8446
    %v8643 = vmax.bf16 %v8642, %v8454
    %v8644 = vmax.bf16 %v8643, %v8462
    %v8645 = vunpack.i.l.bf16 %v8644
    %v8646 = vunpack.i.h.bf16 %v8644
    %v8647 = vmax.f32 %v8645, %v8646
    %v8648 = vrot.slane %v8647, 4
    %v8649 = vmax.f32 %v8647, %v8648
    %v8650 = vrot.slane %v8649, 2
    %v8651 = vmax.f32 %v8649, %v8650
    %v8652 = vrot.slane %v8651, 1
    %v8653 = vmax.f32 %v8651, %v8652
    %v8654 = vpack.i.bf16 %v8653, %v8653
    %v8655 = vmax.bf16 %v8407, %v8415
    %v8656 = vmax.bf16 %v8655, %v8423
    %v8657 = vmax.bf16 %v8656, %v8431
    %v8658 = vmax.bf16 %v8657, %v8439
    %v8659 = vmax.bf16 %v8658, %v8447
    %v8660 = vmax.bf16 %v8659, %v8455
    %v8661 = vmax.bf16 %v8660, %v8463
    %v8662 = vunpack.i.l.bf16 %v8661
    %v8663 = vunpack.i.h.bf16 %v8661
    %v8664 = vmax.f32 %v8662, %v8663
    %v8665 = vrot.slane %v8664, 4
    %v8666 = vmax.f32 %v8664, %v8665
    %v8667 = vrot.slane %v8666, 2
    %v8668 = vmax.f32 %v8666, %v8667
    %v8669 = vrot.slane %v8668, 1
    %v8670 = vmax.f32 %v8668, %v8669
    %v8671 = vpack.i.bf16 %v8670, %v8670
    %v8672 = vmax.bf16 %v8408, %v8416
    %v8673 = vmax.bf16 %v8672, %v8424
    %v8674 = vmax.bf16 %v8673, %v8432
    %v8675 = vmax.bf16 %v8674, %v8440
    %v8676 = vmax.bf16 %v8675, %v8448
    %v8677 = vmax.bf16 %v8676, %v8456
    %v8678 = vmax.bf16 %v8677, %v8464
    %v8679 = vunpack.i.l.bf16 %v8678
    %v8680 = vunpack.i.h.bf16 %v8678
    %v8681 = vmax.f32 %v8679, %v8680
    %v8682 = vrot.slane %v8681, 4
    %v8683 = vmax.f32 %v8681, %v8682
    %v8684 = vrot.slane %v8683, 2
    %v8685 = vmax.f32 %v8683, %v8684
    %v8686 = vrot.slane %v8685, 1
    %v8687 = vmax.f32 %v8685, %v8686
    %v8688 = vpack.i.bf16 %v8687, %v8687
    %v8689 = vmax.bf16 %v8409, %v8417
    %v8690 = vmax.bf16 %v8689, %v8425
    %v8691 = vmax.bf16 %v8690, %v8433
    %v8692 = vmax.bf16 %v8691, %v8441
    %v8693 = vmax.bf16 %v8692, %v8449
    %v8694 = vmax.bf16 %v8693, %v8457
    %v8695 = vmax.bf16 %v8694, %v8465
    %v8696 = vunpack.i.l.bf16 %v8695
    %v8697 = vunpack.i.h.bf16 %v8695
    %v8698 = vmax.f32 %v8696, %v8697
    %v8699 = vrot.slane %v8698, 4
    %v8700 = vmax.f32 %v8698, %v8699
    %v8701 = vrot.slane %v8700, 2
    %v8702 = vmax.f32 %v8700, %v8701
    %v8703 = vrot.slane %v8702, 1
    %v8704 = vmax.f32 %v8702, %v8703
    %v8705 = vpack.i.bf16 %v8704, %v8704
    %v8706 = vmax.bf16 %v8410, %v8418
    %v8707 = vmax.bf16 %v8706, %v8426
    %v8708 = vmax.bf16 %v8707, %v8434
    %v8709 = vmax.bf16 %v8708, %v8442
    %v8710 = vmax.bf16 %v8709, %v8450
    %v8711 = vmax.bf16 %v8710, %v8458
    %v8712 = vmax.bf16 %v8711, %v8466
    %v8713 = vunpack.i.l.bf16 %v8712
    %v8714 = vunpack.i.h.bf16 %v8712
    %v8715 = vmax.f32 %v8713, %v8714
    %v8716 = vrot.slane %v8715, 4
    %v8717 = vmax.f32 %v8715, %v8716
    %v8718 = vrot.slane %v8717, 2
    %v8719 = vmax.f32 %v8717, %v8718
    %v8720 = vrot.slane %v8719, 1
    %v8721 = vmax.f32 %v8719, %v8720
    %v8722 = vpack.i.bf16 %v8721, %v8721
    %v8723 = vmax.bf16 %v8411, %v8419
    %v8724 = vmax.bf16 %v8723, %v8427
    %v8725 = vmax.bf16 %v8724, %v8435
    %v8726 = vmax.bf16 %v8725, %v8443
    %v8727 = vmax.bf16 %v8726, %v8451
    %v8728 = vmax.bf16 %v8727, %v8459
    %v8729 = vmax.bf16 %v8728, %v8467
    %v8730 = vunpack.i.l.bf16 %v8729
    %v8731 = vunpack.i.h.bf16 %v8729
    %v8732 = vmax.f32 %v8730, %v8731
    %v8733 = vrot.slane %v8732, 4
    %v8734 = vmax.f32 %v8732, %v8733
    %v8735 = vrot.slane %v8734, 2
    %v8736 = vmax.f32 %v8734, %v8735
    %v8737 = vrot.slane %v8736, 1
    %v8738 = vmax.f32 %v8736, %v8737
    %v8739 = vpack.i.bf16 %v8738, %v8738
    %v8740 = vsel %vm3133, %v8484, %v8620
    %v8741 = vsel %vm3133, %v8501, %v8637
    %v8742 = vsel %vm3133, %v8518, %v8654
    %v8743 = vsel %vm3133, %v8535, %v8671
    %v8744 = vsel %vm3133, %v8552, %v8688
    %v8745 = vsel %vm3133, %v8569, %v8705
    %v8746 = vsel %vm3133, %v8586, %v8722
    %v8747 = vsel %vm3133, %v8603, %v8739
    %s8748 = sshll.u32 %s3143, 4
    %8749 = dma.done %s130, %s8748
    %s8750 = sshll.u32 %s3147, 4
    %8751 = dma.done %s142, %s8750
    %s8752 = smul.u32 4, 32
    %s8753 = smul.u32 %s8752, 2
    %s8754 = sshll.u32 %s8753, 4
    %8755 = dma.done %s154, %s8754
    %s8756 = smul.u32 %s8752, 6
    %s8757 = sshll.u32 %s8756, 4
    %8758 = dma.done %s260, %s8757
    %v8759 = vld [vmem:[#allocation4] sm:$0xff]
    %v8760 = vld [vmem:[#allocation4 + $0x8] sm:$0xff]
    %v8761 = vld [vmem:[#allocation4 + $0x10] sm:$0xff]
    %v8762 = vld [vmem:[#allocation4 + $0x18] sm:$0xff]
    %v8763 = vld [vmem:[#allocation4 + $0x20] sm:$0xff]
    %v8764 = vld [vmem:[#allocation4 + $0x28] sm:$0xff]
    %v8765 = vld [vmem:[#allocation4 + $0x30] sm:$0xff]
    %v8766 = vld [vmem:[#allocation4 + $0x38] sm:$0xff]
    %v8767 = vld [vmem:[#allocation4 + $0x40] sm:$0xff]
    %v8768 = vld [vmem:[#allocation4 + $0x48] sm:$0xff]
    %v8769 = vld [vmem:[#allocation4 + $0x50] sm:$0xff]
    %v8770 = vld [vmem:[#allocation4 + $0x58] sm:$0xff]
    %v8771 = vld [vmem:[#allocation4 + $0x60] sm:$0xff]
    %v8772 = vld [vmem:[#allocation4 + $0x68] sm:$0xff]
    %v8773 = vld [vmem:[#allocation4 + $0x70] sm:$0xff]
    %v8774 = vld [vmem:[#allocation4 + $0x78] sm:$0xff]
    %v8775 = vld [vmem:[#allocation4 + $0x80] sm:$0xff]
    %v8776 = vld [vmem:[#allocation4 + $0x88] sm:$0xff]
    %v8777 = vld [vmem:[#allocation4 + $0x90] sm:$0xff]
    %v8778 = vld [vmem:[#allocation4 + $0x98] sm:$0xff]
    %v8779 = vld [vmem:[#allocation4 + $0xa0] sm:$0xff]
    %v8780 = vld [vmem:[#allocation4 + $0xa8] sm:$0xff]
    %v8781 = vld [vmem:[#allocation4 + $0xb0] sm:$0xff]
    %v8782 = vld [vmem:[#allocation4 + $0xb8] sm:$0xff]
    %v8783 = vld [vmem:[#allocation4 + $0xc0] sm:$0xff]
    %v8784 = vld [vmem:[#allocation4 + $0xc8] sm:$0xff]
    %v8785 = vld [vmem:[#allocation4 + $0xd0] sm:$0xff]
    %v8786 = vld [vmem:[#allocation4 + $0xd8] sm:$0xff]
    %v8787 = vld [vmem:[#allocation4 + $0xe0] sm:$0xff]
    %v8788 = vld [vmem:[#allocation4 + $0xe8] sm:$0xff]
    %v8789 = vld [vmem:[#allocation4 + $0xf0] sm:$0xff]
    %v8790 = vld [vmem:[#allocation4 + $0xf8] sm:$0xff]
    %v8791 = vld [vmem:[#allocation4 + $0x100] sm:$0xff]
    %v8792 = vld [vmem:[#allocation4 + $0x108] sm:$0xff]
    %v8793 = vld [vmem:[#allocation4 + $0x110] sm:$0xff]
    %v8794 = vld [vmem:[#allocation4 + $0x118] sm:$0xff]
    %v8795 = vld [vmem:[#allocation4 + $0x120] sm:$0xff]
    %v8796 = vld [vmem:[#allocation4 + $0x128] sm:$0xff]
    %v8797 = vld [vmem:[#allocation4 + $0x130] sm:$0xff]
    %v8798 = vld [vmem:[#allocation4 + $0x138] sm:$0xff]
    %v8799 = vld [vmem:[#allocation4 + $0x140] sm:$0xff]
    %v8800 = vld [vmem:[#allocation4 + $0x148] sm:$0xff]
    %v8801 = vld [vmem:[#allocation4 + $0x150] sm:$0xff]
    %v8802 = vld [vmem:[#allocation4 + $0x158] sm:$0xff]
    %v8803 = vld [vmem:[#allocation4 + $0x160] sm:$0xff]
    %v8804 = vld [vmem:[#allocation4 + $0x168] sm:$0xff]
    %v8805 = vld [vmem:[#allocation4 + $0x170] sm:$0xff]
    %v8806 = vld [vmem:[#allocation4 + $0x178] sm:$0xff]
    %v8807 = vld [vmem:[#allocation4 + $0x180] sm:$0xff]
    %v8808 = vld [vmem:[#allocation4 + $0x188] sm:$0xff]
    %v8809 = vld [vmem:[#allocation4 + $0x190] sm:$0xff]
    %v8810 = vld [vmem:[#allocation4 + $0x198] sm:$0xff]
    %v8811 = vld [vmem:[#allocation4 + $0x1a0] sm:$0xff]
    %v8812 = vld [vmem:[#allocation4 + $0x1a8] sm:$0xff]
    %v8813 = vld [vmem:[#allocation4 + $0x1b0] sm:$0xff]
    %v8814 = vld [vmem:[#allocation4 + $0x1b8] sm:$0xff]
    %v8815 = vld [vmem:[#allocation4 + $0x1c0] sm:$0xff]
    %v8816 = vld [vmem:[#allocation4 + $0x1c8] sm:$0xff]
    %v8817 = vld [vmem:[#allocation4 + $0x1d0] sm:$0xff]
    %v8818 = vld [vmem:[#allocation4 + $0x1d8] sm:$0xff]
    %v8819 = vld [vmem:[#allocation4 + $0x1e0] sm:$0xff]
    %v8820 = vld [vmem:[#allocation4 + $0x1e8] sm:$0xff]
    %v8821 = vld [vmem:[#allocation4 + $0x1f0] sm:$0xff]
    %v8822 = vld [vmem:[#allocation4 + $0x1f8] sm:$0xff]
    %v8823 = vld [vmem:[#allocation4 + $0x200] sm:$0xff]
    %v8824 = vld [vmem:[#allocation4 + $0x208] sm:$0xff]
    %v8825 = vld [vmem:[#allocation4 + $0x210] sm:$0xff]
    %v8826 = vld [vmem:[#allocation4 + $0x218] sm:$0xff]
    %v8827 = vld [vmem:[#allocation4 + $0x220] sm:$0xff]
    %v8828 = vld [vmem:[#allocation4 + $0x228] sm:$0xff]
    %v8829 = vld [vmem:[#allocation4 + $0x230] sm:$0xff]
    %v8830 = vld [vmem:[#allocation4 + $0x238] sm:$0xff]
    %v8831 = vld [vmem:[#allocation4 + $0x240] sm:$0xff]
    %v8832 = vld [vmem:[#allocation4 + $0x248] sm:$0xff]
    %v8833 = vld [vmem:[#allocation4 + $0x250] sm:$0xff]
    %v8834 = vld [vmem:[#allocation4 + $0x258] sm:$0xff]
    %v8835 = vld [vmem:[#allocation4 + $0x260] sm:$0xff]
    %v8836 = vld [vmem:[#allocation4 + $0x268] sm:$0xff]
    %v8837 = vld [vmem:[#allocation4 + $0x270] sm:$0xff]
    %v8838 = vld [vmem:[#allocation4 + $0x278] sm:$0xff]
    %v8839 = vld [vmem:[#allocation4 + $0x280] sm:$0xff]
    %v8840 = vld [vmem:[#allocation4 + $0x288] sm:$0xff]
    %v8841 = vld [vmem:[#allocation4 + $0x290] sm:$0xff]
    %v8842 = vld [vmem:[#allocation4 + $0x298] sm:$0xff]
    %v8843 = vld [vmem:[#allocation4 + $0x2a0] sm:$0xff]
    %v8844 = vld [vmem:[#allocation4 + $0x2a8] sm:$0xff]
    %v8845 = vld [vmem:[#allocation4 + $0x2b0] sm:$0xff]
    %v8846 = vld [vmem:[#allocation4 + $0x2b8] sm:$0xff]
    %v8847 = vld [vmem:[#allocation4 + $0x2c0] sm:$0xff]
    %v8848 = vld [vmem:[#allocation4 + $0x2c8] sm:$0xff]
    %v8849 = vld [vmem:[#allocation4 + $0x2d0] sm:$0xff]
    %v8850 = vld [vmem:[#allocation4 + $0x2d8] sm:$0xff]
    %v8851 = vld [vmem:[#allocation4 + $0x2e0] sm:$0xff]
    %v8852 = vld [vmem:[#allocation4 + $0x2e8] sm:$0xff]
    %v8853 = vld [vmem:[#allocation4 + $0x2f0] sm:$0xff]
    %v8854 = vld [vmem:[#allocation4 + $0x2f8] sm:$0xff]
    %v8855 = vld [vmem:[#allocation4 + $0x300] sm:$0xff]
    %v8856 = vld [vmem:[#allocation4 + $0x308] sm:$0xff]
    %v8857 = vld [vmem:[#allocation4 + $0x310] sm:$0xff]
    %v8858 = vld [vmem:[#allocation4 + $0x318] sm:$0xff]
    %v8859 = vld [vmem:[#allocation4 + $0x320] sm:$0xff]
    %v8860 = vld [vmem:[#allocation4 + $0x328] sm:$0xff]
    %v8861 = vld [vmem:[#allocation4 + $0x330] sm:$0xff]
    %v8862 = vld [vmem:[#allocation4 + $0x338] sm:$0xff]
    %v8863 = vld [vmem:[#allocation4 + $0x340] sm:$0xff]
    %v8864 = vld [vmem:[#allocation4 + $0x348] sm:$0xff]
    %v8865 = vld [vmem:[#allocation4 + $0x350] sm:$0xff]
    %v8866 = vld [vmem:[#allocation4 + $0x358] sm:$0xff]
    %v8867 = vld [vmem:[#allocation4 + $0x360] sm:$0xff]
    %v8868 = vld [vmem:[#allocation4 + $0x368] sm:$0xff]
    %v8869 = vld [vmem:[#allocation4 + $0x370] sm:$0xff]
    %v8870 = vld [vmem:[#allocation4 + $0x378] sm:$0xff]
    %v8871 = vld [vmem:[#allocation4 + $0x380] sm:$0xff]
    %v8872 = vld [vmem:[#allocation4 + $0x388] sm:$0xff]
    %v8873 = vld [vmem:[#allocation4 + $0x390] sm:$0xff]
    %v8874 = vld [vmem:[#allocation4 + $0x398] sm:$0xff]
    %v8875 = vld [vmem:[#allocation4 + $0x3a0] sm:$0xff]
    %v8876 = vld [vmem:[#allocation4 + $0x3a8] sm:$0xff]
    %v8877 = vld [vmem:[#allocation4 + $0x3b0] sm:$0xff]
    %v8878 = vld [vmem:[#allocation4 + $0x3b8] sm:$0xff]
    %v8879 = vld [vmem:[#allocation4 + $0x3c0] sm:$0xff]
    %v8880 = vld [vmem:[#allocation4 + $0x3c8] sm:$0xff]
    %v8881 = vld [vmem:[#allocation4 + $0x3d0] sm:$0xff]
    %v8882 = vld [vmem:[#allocation4 + $0x3d8] sm:$0xff]
    %v8883 = vld [vmem:[#allocation4 + $0x3e0] sm:$0xff]
    %v8884 = vld [vmem:[#allocation4 + $0x3e8] sm:$0xff]
    %v8885 = vld [vmem:[#allocation4 + $0x3f0] sm:$0xff]
    %v8886 = vld [vmem:[#allocation4 + $0x3f8] sm:$0xff]
    %v8887 = vld [vmem:[#allocation4 + $0x400] sm:$0xff]
    %v8888 = vld [vmem:[#allocation4 + $0x408] sm:$0xff]
    %v8889 = vld [vmem:[#allocation4 + $0x410] sm:$0xff]
    %v8890 = vld [vmem:[#allocation4 + $0x418] sm:$0xff]
    %v8891 = vld [vmem:[#allocation4 + $0x420] sm:$0xff]
    %v8892 = vld [vmem:[#allocation4 + $0x428] sm:$0xff]
    %v8893 = vld [vmem:[#allocation4 + $0x430] sm:$0xff]
    %v8894 = vld [vmem:[#allocation4 + $0x438] sm:$0xff]
    %v8895 = vld [vmem:[#allocation4 + $0x440] sm:$0xff]
    %v8896 = vld [vmem:[#allocation4 + $0x448] sm:$0xff]
    %v8897 = vld [vmem:[#allocation4 + $0x450] sm:$0xff]
    %v8898 = vld [vmem:[#allocation4 + $0x458] sm:$0xff]
    %v8899 = vld [vmem:[#allocation4 + $0x460] sm:$0xff]
    %v8900 = vld [vmem:[#allocation4 + $0x468] sm:$0xff]
    %v8901 = vld [vmem:[#allocation4 + $0x470] sm:$0xff]
    %v8902 = vld [vmem:[#allocation4 + $0x478] sm:$0xff]
    %v8903 = vld [vmem:[#allocation4 + $0x480] sm:$0xff]
    %v8904 = vld [vmem:[#allocation4 + $0x488] sm:$0xff]
    %v8905 = vld [vmem:[#allocation4 + $0x490] sm:$0xff]
    %v8906 = vld [vmem:[#allocation4 + $0x498] sm:$0xff]
    %v8907 = vld [vmem:[#allocation4 + $0x4a0] sm:$0xff]
    %v8908 = vld [vmem:[#allocation4 + $0x4a8] sm:$0xff]
    %v8909 = vld [vmem:[#allocation4 + $0x4b0] sm:$0xff]
    %v8910 = vld [vmem:[#allocation4 + $0x4b8] sm:$0xff]
    %v8911 = vld [vmem:[#allocation4 + $0x4c0] sm:$0xff]
    %v8912 = vld [vmem:[#allocation4 + $0x4c8] sm:$0xff]
    %v8913 = vld [vmem:[#allocation4 + $0x4d0] sm:$0xff]
    %v8914 = vld [vmem:[#allocation4 + $0x4d8] sm:$0xff]
    %v8915 = vld [vmem:[#allocation4 + $0x4e0] sm:$0xff]
    %v8916 = vld [vmem:[#allocation4 + $0x4e8] sm:$0xff]
    %v8917 = vld [vmem:[#allocation4 + $0x4f0] sm:$0xff]
    %v8918 = vld [vmem:[#allocation4 + $0x4f8] sm:$0xff]
    %v8919 = vld [vmem:[#allocation4 + $0x500] sm:$0xff]
    %v8920 = vld [vmem:[#allocation4 + $0x508] sm:$0xff]
    %v8921 = vld [vmem:[#allocation4 + $0x510] sm:$0xff]
    %v8922 = vld [vmem:[#allocation4 + $0x518] sm:$0xff]
    %v8923 = vld [vmem:[#allocation4 + $0x520] sm:$0xff]
    %v8924 = vld [vmem:[#allocation4 + $0x528] sm:$0xff]
    %v8925 = vld [vmem:[#allocation4 + $0x530] sm:$0xff]
    %v8926 = vld [vmem:[#allocation4 + $0x538] sm:$0xff]
    %v8927 = vld [vmem:[#allocation4 + $0x540] sm:$0xff]
    %v8928 = vld [vmem:[#allocation4 + $0x548] sm:$0xff]
    %v8929 = vld [vmem:[#allocation4 + $0x550] sm:$0xff]
    %v8930 = vld [vmem:[#allocation4 + $0x558] sm:$0xff]
    %v8931 = vld [vmem:[#allocation4 + $0x560] sm:$0xff]
    %v8932 = vld [vmem:[#allocation4 + $0x568] sm:$0xff]
    %v8933 = vld [vmem:[#allocation4 + $0x570] sm:$0xff]
    %v8934 = vld [vmem:[#allocation4 + $0x578] sm:$0xff]
    %v8935 = vld [vmem:[#allocation4 + $0x580] sm:$0xff]
    %v8936 = vld [vmem:[#allocation4 + $0x588] sm:$0xff]
    %v8937 = vld [vmem:[#allocation4 + $0x590] sm:$0xff]
    %v8938 = vld [vmem:[#allocation4 + $0x598] sm:$0xff]
    %v8939 = vld [vmem:[#allocation4 + $0x5a0] sm:$0xff]
    %v8940 = vld [vmem:[#allocation4 + $0x5a8] sm:$0xff]
    %v8941 = vld [vmem:[#allocation4 + $0x5b0] sm:$0xff]
    %v8942 = vld [vmem:[#allocation4 + $0x5b8] sm:$0xff]
    %v8943 = vld [vmem:[#allocation4 + $0x5c0] sm:$0xff]
    %v8944 = vld [vmem:[#allocation4 + $0x5c8] sm:$0xff]
    %v8945 = vld [vmem:[#allocation4 + $0x5d0] sm:$0xff]
    %v8946 = vld [vmem:[#allocation4 + $0x5d8] sm:$0xff]
    %v8947 = vld [vmem:[#allocation4 + $0x5e0] sm:$0xff]
    %v8948 = vld [vmem:[#allocation4 + $0x5e8] sm:$0xff]
    %v8949 = vld [vmem:[#allocation4 + $0x5f0] sm:$0xff]
    %v8950 = vld [vmem:[#allocation4 + $0x5f8] sm:$0xff]
    %v8951 = vld [vmem:[#allocation4 + $0x600] sm:$0xff]
    %v8952 = vld [vmem:[#allocation4 + $0x608] sm:$0xff]
    %v8953 = vld [vmem:[#allocation4 + $0x610] sm:$0xff]
    %v8954 = vld [vmem:[#allocation4 + $0x618] sm:$0xff]
    %v8955 = vld [vmem:[#allocation4 + $0x620] sm:$0xff]
    %v8956 = vld [vmem:[#allocation4 + $0x628] sm:$0xff]
    %v8957 = vld [vmem:[#allocation4 + $0x630] sm:$0xff]
    %v8958 = vld [vmem:[#allocation4 + $0x638] sm:$0xff]
    %v8959 = vld [vmem:[#allocation4 + $0x640] sm:$0xff]
    %v8960 = vld [vmem:[#allocation4 + $0x648] sm:$0xff]
    %v8961 = vld [vmem:[#allocation4 + $0x650] sm:$0xff]
    %v8962 = vld [vmem:[#allocation4 + $0x658] sm:$0xff]
    %v8963 = vld [vmem:[#allocation4 + $0x660] sm:$0xff]
    %v8964 = vld [vmem:[#allocation4 + $0x668] sm:$0xff]
    %v8965 = vld [vmem:[#allocation4 + $0x670] sm:$0xff]
    %v8966 = vld [vmem:[#allocation4 + $0x678] sm:$0xff]
    %v8967 = vld [vmem:[#allocation4 + $0x680] sm:$0xff]
    %v8968 = vld [vmem:[#allocation4 + $0x688] sm:$0xff]
    %v8969 = vld [vmem:[#allocation4 + $0x690] sm:$0xff]
    %v8970 = vld [vmem:[#allocation4 + $0x698] sm:$0xff]
    %v8971 = vld [vmem:[#allocation4 + $0x6a0] sm:$0xff]
    %v8972 = vld [vmem:[#allocation4 + $0x6a8] sm:$0xff]
    %v8973 = vld [vmem:[#allocation4 + $0x6b0] sm:$0xff]
    %v8974 = vld [vmem:[#allocation4 + $0x6b8] sm:$0xff]
    %v8975 = vld [vmem:[#allocation4 + $0x6c0] sm:$0xff]
    %v8976 = vld [vmem:[#allocation4 + $0x6c8] sm:$0xff]
    %v8977 = vld [vmem:[#allocation4 + $0x6d0] sm:$0xff]
    %v8978 = vld [vmem:[#allocation4 + $0x6d8] sm:$0xff]
    %v8979 = vld [vmem:[#allocation4 + $0x6e0] sm:$0xff]
    %v8980 = vld [vmem:[#allocation4 + $0x6e8] sm:$0xff]
    %v8981 = vld [vmem:[#allocation4 + $0x6f0] sm:$0xff]
    %v8982 = vld [vmem:[#allocation4 + $0x6f8] sm:$0xff]
    %v8983 = vld [vmem:[#allocation4 + $0x700] sm:$0xff]
    %v8984 = vld [vmem:[#allocation4 + $0x708] sm:$0xff]
    %v8985 = vld [vmem:[#allocation4 + $0x710] sm:$0xff]
    %v8986 = vld [vmem:[#allocation4 + $0x718] sm:$0xff]
    %v8987 = vld [vmem:[#allocation4 + $0x720] sm:$0xff]
    %v8988 = vld [vmem:[#allocation4 + $0x728] sm:$0xff]
    %v8989 = vld [vmem:[#allocation4 + $0x730] sm:$0xff]
    %v8990 = vld [vmem:[#allocation4 + $0x738] sm:$0xff]
    %v8991 = vld [vmem:[#allocation4 + $0x740] sm:$0xff]
    %v8992 = vld [vmem:[#allocation4 + $0x748] sm:$0xff]
    %v8993 = vld [vmem:[#allocation4 + $0x750] sm:$0xff]
    %v8994 = vld [vmem:[#allocation4 + $0x758] sm:$0xff]
    %v8995 = vld [vmem:[#allocation4 + $0x760] sm:$0xff]
    %v8996 = vld [vmem:[#allocation4 + $0x768] sm:$0xff]
    %v8997 = vld [vmem:[#allocation4 + $0x770] sm:$0xff]
    %v8998 = vld [vmem:[#allocation4 + $0x778] sm:$0xff]
    %v8999 = vld [vmem:[#allocation4 + $0x780] sm:$0xff]
    %v9000 = vld [vmem:[#allocation4 + $0x788] sm:$0xff]
    %v9001 = vld [vmem:[#allocation4 + $0x790] sm:$0xff]
    %v9002 = vld [vmem:[#allocation4 + $0x798] sm:$0xff]
    %v9003 = vld [vmem:[#allocation4 + $0x7a0] sm:$0xff]
    %v9004 = vld [vmem:[#allocation4 + $0x7a8] sm:$0xff]
    %v9005 = vld [vmem:[#allocation4 + $0x7b0] sm:$0xff]
    %v9006 = vld [vmem:[#allocation4 + $0x7b8] sm:$0xff]
    %v9007 = vld [vmem:[#allocation4 + $0x7c0] sm:$0xff]
    %v9008 = vld [vmem:[#allocation4 + $0x7c8] sm:$0xff]
    %v9009 = vld [vmem:[#allocation4 + $0x7d0] sm:$0xff]
    %v9010 = vld [vmem:[#allocation4 + $0x7d8] sm:$0xff]
    %v9011 = vld [vmem:[#allocation4 + $0x7e0] sm:$0xff]
    %v9012 = vld [vmem:[#allocation4 + $0x7e8] sm:$0xff]
    %v9013 = vld [vmem:[#allocation4 + $0x7f0] sm:$0xff]
    %v9014 = vld [vmem:[#allocation4 + $0x7f8] sm:$0xff]
    %v9015 = vld [vmem:[%s20] sm:$0xf]
    %v9017 = vlaneseq
    %v9018 = vshrl.u32 %v9017, 7
    %v9019 = vsub.s32 0, %v9018
    %v9020 = vrot.slane %v9015, %v9019
    %v9021 = vlaneseq
    %v9022 = vshrl.u32 %v9021, 7
    %v9023 = vsub.s32 1, %v9022
    %v9024 = vrot.slane %v9015, %v9023
    %v9025 = vlaneseq
    %v9026 = vshrl.u32 %v9025, 7
    %v9027 = vsub.s32 2, %v9026
    %v9028 = vrot.slane %v9015, %v9027
    %v9029 = vlaneseq
    %v9030 = vshrl.u32 %v9029, 7
    %v9031 = vsub.s32 3, %v9030
    %v9032 = vrot.slane %v9015, %v9031
    %v9293 = vunpack.c.l.b16 %v8759
    %v9294 = vunpack.c.h.b16 %v8759
    %v9295 = vunpack.c.l.b16 %v8760
    %v9296 = vunpack.c.h.b16 %v8760
    %v9297 = vunpack.c.l.b16 %v8761
    %v9298 = vunpack.c.h.b16 %v8761
    %v9299 = vunpack.c.l.b16 %v8762
    %v9300 = vunpack.c.h.b16 %v8762
    %v9301 = vunpack.c.l.b16 %v8763
    %v9302 = vunpack.c.h.b16 %v8763
    %v9303 = vunpack.c.l.b16 %v8764
    %v9304 = vunpack.c.h.b16 %v8764
    %v9305 = vunpack.c.l.b16 %v8765
    %v9306 = vunpack.c.h.b16 %v8765
    %v9307 = vunpack.c.l.b16 %v8766
    %v9308 = vunpack.c.h.b16 %v8766
    %v9309 = vunpack.c.l.b16 %v8767
    %v9310 = vunpack.c.h.b16 %v8767
    %v9311 = vunpack.c.l.b16 %v8768
    %v9312 = vunpack.c.h.b16 %v8768
    %v9313 = vunpack.c.l.b16 %v8769
    %v9314 = vunpack.c.h.b16 %v8769
    %v9315 = vunpack.c.l.b16 %v8770
    %v9316 = vunpack.c.h.b16 %v8770
    %v9317 = vunpack.c.l.b16 %v8771
    %v9318 = vunpack.c.h.b16 %v8771
    %v9319 = vunpack.c.l.b16 %v8772
    %v9320 = vunpack.c.h.b16 %v8772
    %v9321 = vunpack.c.l.b16 %v8773
    %v9322 = vunpack.c.h.b16 %v8773
    %v9323 = vunpack.c.l.b16 %v8774
    %v9324 = vunpack.c.h.b16 %v8774
    %v9325 = vunpack.c.l.b16 %v8775
    %v9326 = vunpack.c.h.b16 %v8775
    %v9327 = vunpack.c.l.b16 %v8776
    %v9328 = vunpack.c.h.b16 %v8776
    %v9329 = vunpack.c.l.b16 %v8777
    %v9330 = vunpack.c.h.b16 %v8777
    %v9331 = vunpack.c.l.b16 %v8778
    %v9332 = vunpack.c.h.b16 %v8778
    %v9333 = vunpack.c.l.b16 %v8779
    %v9334 = vunpack.c.h.b16 %v8779
    %v9335 = vunpack.c.l.b16 %v8780
    %v9336 = vunpack.c.h.b16 %v8780
    %v9337 = vunpack.c.l.b16 %v8781
    %v9338 = vunpack.c.h.b16 %v8781
    %v9339 = vunpack.c.l.b16 %v8782
    %v9340 = vunpack.c.h.b16 %v8782
    %v9341 = vunpack.c.l.b16 %v8783
    %v9342 = vunpack.c.h.b16 %v8783
    %v9343 = vunpack.c.l.b16 %v8784
    %v9344 = vunpack.c.h.b16 %v8784
    %v9345 = vunpack.c.l.b16 %v8785
    %v9346 = vunpack.c.h.b16 %v8785
    %v9347 = vunpack.c.l.b16 %v8786
    %v9348 = vunpack.c.h.b16 %v8786
    %v9349 = vunpack.c.l.b16 %v8787
    %v9350 = vunpack.c.h.b16 %v8787
    %v9351 = vunpack.c.l.b16 %v8788
    %v9352 = vunpack.c.h.b16 %v8788
    %v9353 = vunpack.c.l.b16 %v8789
    %v9354 = vunpack.c.h.b16 %v8789
    %v9355 = vunpack.c.l.b16 %v8790
    %v9356 = vunpack.c.h.b16 %v8790
    %v9357 = vunpack.c.l.b16 %v8791
    %v9358 = vunpack.c.h.b16 %v8791
    %v9359 = vunpack.c.l.b16 %v8792
    %v9360 = vunpack.c.h.b16 %v8792
    %v9361 = vunpack.c.l.b16 %v8793
    %v9362 = vunpack.c.h.b16 %v8793
    %v9363 = vunpack.c.l.b16 %v8794
    %v9364 = vunpack.c.h.b16 %v8794
    %v9365 = vunpack.c.l.b16 %v8795
    %v9366 = vunpack.c.h.b16 %v8795
    %v9367 = vunpack.c.l.b16 %v8796
    %v9368 = vunpack.c.h.b16 %v8796
    %v9369 = vunpack.c.l.b16 %v8797
    %v9370 = vunpack.c.h.b16 %v8797
    %v9371 = vunpack.c.l.b16 %v8798
    %v9372 = vunpack.c.h.b16 %v8798
    %v9373 = vunpack.c.l.b16 %v8799
    %v9374 = vunpack.c.h.b16 %v8799
    %v9375 = vunpack.c.l.b16 %v8800
    %v9376 = vunpack.c.h.b16 %v8800
    %v9377 = vunpack.c.l.b16 %v8801
    %v9378 = vunpack.c.h.b16 %v8801
    %v9379 = vunpack.c.l.b16 %v8802
    %v9380 = vunpack.c.h.b16 %v8802
    %v9381 = vunpack.c.l.b16 %v8803
    %v9382 = vunpack.c.h.b16 %v8803
    %v9383 = vunpack.c.l.b16 %v8804
    %v9384 = vunpack.c.h.b16 %v8804
    %v9385 = vunpack.c.l.b16 %v8805
    %v9386 = vunpack.c.h.b16 %v8805
    %v9387 = vunpack.c.l.b16 %v8806
    %v9388 = vunpack.c.h.b16 %v8806
    %v9389 = vunpack.c.l.b16 %v8807
    %v9390 = vunpack.c.h.b16 %v8807
    %v9391 = vunpack.c.l.b16 %v8808
    %v9392 = vunpack.c.h.b16 %v8808
    %v9393 = vunpack.c.l.b16 %v8809
    %v9394 = vunpack.c.h.b16 %v8809
    %v9395 = vunpack.c.l.b16 %v8810
    %v9396 = vunpack.c.h.b16 %v8810
    %v9397 = vunpack.c.l.b16 %v8811
    %v9398 = vunpack.c.h.b16 %v8811
    %v9399 = vunpack.c.l.b16 %v8812
    %v9400 = vunpack.c.h.b16 %v8812
    %v9401 = vunpack.c.l.b16 %v8813
    %v9402 = vunpack.c.h.b16 %v8813
    %v9403 = vunpack.c.l.b16 %v8814
    %v9404 = vunpack.c.h.b16 %v8814
    %v9405 = vunpack.c.l.b16 %v8815
    %v9406 = vunpack.c.h.b16 %v8815
    %v9407 = vunpack.c.l.b16 %v8816
    %v9408 = vunpack.c.h.b16 %v8816
    %v9409 = vunpack.c.l.b16 %v8817
    %v9410 = vunpack.c.h.b16 %v8817
    %v9411 = vunpack.c.l.b16 %v8818
    %v9412 = vunpack.c.h.b16 %v8818
    %v9413 = vunpack.c.l.b16 %v8819
    %v9414 = vunpack.c.h.b16 %v8819
    %v9415 = vunpack.c.l.b16 %v8820
    %v9416 = vunpack.c.h.b16 %v8820
    %v9417 = vunpack.c.l.b16 %v8821
    %v9418 = vunpack.c.h.b16 %v8821
    %v9419 = vunpack.c.l.b16 %v8822
    %v9420 = vunpack.c.h.b16 %v8822
    %v9421 = vunpack.c.l.b16 %v8823
    %v9422 = vunpack.c.h.b16 %v8823
    %v9423 = vunpack.c.l.b16 %v8824
    %v9424 = vunpack.c.h.b16 %v8824
    %v9425 = vunpack.c.l.b16 %v8825
    %v9426 = vunpack.c.h.b16 %v8825
    %v9427 = vunpack.c.l.b16 %v8826
    %v9428 = vunpack.c.h.b16 %v8826
    %v9429 = vunpack.c.l.b16 %v8827
    %v9430 = vunpack.c.h.b16 %v8827
    %v9431 = vunpack.c.l.b16 %v8828
    %v9432 = vunpack.c.h.b16 %v8828
    %v9433 = vunpack.c.l.b16 %v8829
    %v9434 = vunpack.c.h.b16 %v8829
    %v9435 = vunpack.c.l.b16 %v8830
    %v9436 = vunpack.c.h.b16 %v8830
    %v9437 = vunpack.c.l.b16 %v8831
    %v9438 = vunpack.c.h.b16 %v8831
    %v9439 = vunpack.c.l.b16 %v8832
    %v9440 = vunpack.c.h.b16 %v8832
    %v9441 = vunpack.c.l.b16 %v8833
    %v9442 = vunpack.c.h.b16 %v8833
    %v9443 = vunpack.c.l.b16 %v8834
    %v9444 = vunpack.c.h.b16 %v8834
    %v9445 = vunpack.c.l.b16 %v8835
    %v9446 = vunpack.c.h.b16 %v8835
    %v9447 = vunpack.c.l.b16 %v8836
    %v9448 = vunpack.c.h.b16 %v8836
    %v9449 = vunpack.c.l.b16 %v8837
    %v9450 = vunpack.c.h.b16 %v8837
    %v9451 = vunpack.c.l.b16 %v8838
    %v9452 = vunpack.c.h.b16 %v8838
    %v9453 = vunpack.c.l.b16 %v8839
    %v9454 = vunpack.c.h.b16 %v8839
    %v9455 = vunpack.c.l.b16 %v8840
    %v9456 = vunpack.c.h.b16 %v8840
    %v9457 = vunpack.c.l.b16 %v8841
    %v9458 = vunpack.c.h.b16 %v8841
    %v9459 = vunpack.c.l.b16 %v8842
    %v9460 = vunpack.c.h.b16 %v8842
    %v9461 = vunpack.c.l.b16 %v8843
    %v9462 = vunpack.c.h.b16 %v8843
    %v9463 = vunpack.c.l.b16 %v8844
    %v9464 = vunpack.c.h.b16 %v8844
    %v9465 = vunpack.c.l.b16 %v8845
    %v9466 = vunpack.c.h.b16 %v8845
    %v9467 = vunpack.c.l.b16 %v8846
    %v9468 = vunpack.c.h.b16 %v8846
    %v9469 = vunpack.c.l.b16 %v8847
    %v9470 = vunpack.c.h.b16 %v8847
    %v9471 = vunpack.c.l.b16 %v8848
    %v9472 = vunpack.c.h.b16 %v8848
    %v9473 = vunpack.c.l.b16 %v8849
    %v9474 = vunpack.c.h.b16 %v8849
    %v9475 = vunpack.c.l.b16 %v8850
    %v9476 = vunpack.c.h.b16 %v8850
    %v9477 = vunpack.c.l.b16 %v8851
    %v9478 = vunpack.c.h.b16 %v8851
    %v9479 = vunpack.c.l.b16 %v8852
    %v9480 = vunpack.c.h.b16 %v8852
    %v9481 = vunpack.c.l.b16 %v8853
    %v9482 = vunpack.c.h.b16 %v8853
    %v9483 = vunpack.c.l.b16 %v8854
    %v9484 = vunpack.c.h.b16 %v8854
    %v9485 = vunpack.c.l.b16 %v8855
    %v9486 = vunpack.c.h.b16 %v8855
    %v9487 = vunpack.c.l.b16 %v8856
    %v9488 = vunpack.c.h.b16 %v8856
    %v9489 = vunpack.c.l.b16 %v8857
    %v9490 = vunpack.c.h.b16 %v8857
    %v9491 = vunpack.c.l.b16 %v8858
    %v9492 = vunpack.c.h.b16 %v8858
    %v9493 = vunpack.c.l.b16 %v8859
    %v9494 = vunpack.c.h.b16 %v8859
    %v9495 = vunpack.c.l.b16 %v8860
    %v9496 = vunpack.c.h.b16 %v8860
    %v9497 = vunpack.c.l.b16 %v8861
    %v9498 = vunpack.c.h.b16 %v8861
    %v9499 = vunpack.c.l.b16 %v8862
    %v9500 = vunpack.c.h.b16 %v8862
    %v9501 = vunpack.c.l.b16 %v8863
    %v9502 = vunpack.c.h.b16 %v8863
    %v9503 = vunpack.c.l.b16 %v8864
    %v9504 = vunpack.c.h.b16 %v8864
    %v9505 = vunpack.c.l.b16 %v8865
    %v9506 = vunpack.c.h.b16 %v8865
    %v9507 = vunpack.c.l.b16 %v8866
    %v9508 = vunpack.c.h.b16 %v8866
    %v9509 = vunpack.c.l.b16 %v8867
    %v9510 = vunpack.c.h.b16 %v8867
    %v9511 = vunpack.c.l.b16 %v8868
    %v9512 = vunpack.c.h.b16 %v8868
    %v9513 = vunpack.c.l.b16 %v8869
    %v9514 = vunpack.c.h.b16 %v8869
    %v9515 = vunpack.c.l.b16 %v8870
    %v9516 = vunpack.c.h.b16 %v8870
    %v9517 = vunpack.c.l.b16 %v8871
    %v9518 = vunpack.c.h.b16 %v8871
    %v9519 = vunpack.c.l.b16 %v8872
    %v9520 = vunpack.c.h.b16 %v8872
    %v9521 = vunpack.c.l.b16 %v8873
    %v9522 = vunpack.c.h.b16 %v8873
    %v9523 = vunpack.c.l.b16 %v8874
    %v9524 = vunpack.c.h.b16 %v8874
    %v9525 = vunpack.c.l.b16 %v8875
    %v9526 = vunpack.c.h.b16 %v8875
    %v9527 = vunpack.c.l.b16 %v8876
    %v9528 = vunpack.c.h.b16 %v8876
    %v9529 = vunpack.c.l.b16 %v8877
    %v9530 = vunpack.c.h.b16 %v8877
    %v9531 = vunpack.c.l.b16 %v8878
    %v9532 = vunpack.c.h.b16 %v8878
    %v9533 = vunpack.c.l.b16 %v8879
    %v9534 = vunpack.c.h.b16 %v8879
    %v9535 = vunpack.c.l.b16 %v8880
    %v9536 = vunpack.c.h.b16 %v8880
    %v9537 = vunpack.c.l.b16 %v8881
    %v9538 = vunpack.c.h.b16 %v8881
    %v9539 = vunpack.c.l.b16 %v8882
    %v9540 = vunpack.c.h.b16 %v8882
    %v9541 = vunpack.c.l.b16 %v8883
    %v9542 = vunpack.c.h.b16 %v8883
    %v9543 = vunpack.c.l.b16 %v8884
    %v9544 = vunpack.c.h.b16 %v8884
    %v9545 = vunpack.c.l.b16 %v8885
    %v9546 = vunpack.c.h.b16 %v8885
    %v9547 = vunpack.c.l.b16 %v8886
    %v9548 = vunpack.c.h.b16 %v8886
    %v9549 = vunpack.c.l.b16 %v8887
    %v9550 = vunpack.c.h.b16 %v8887
    %v9551 = vunpack.c.l.b16 %v8888
    %v9552 = vunpack.c.h.b16 %v8888
    %v9553 = vunpack.c.l.b16 %v8889
    %v9554 = vunpack.c.h.b16 %v8889
    %v9555 = vunpack.c.l.b16 %v8890
    %v9556 = vunpack.c.h.b16 %v8890
    %v9557 = vunpack.c.l.b16 %v8891
    %v9558 = vunpack.c.h.b16 %v8891
    %v9559 = vunpack.c.l.b16 %v8892
    %v9560 = vunpack.c.h.b16 %v8892
    %v9561 = vunpack.c.l.b16 %v8893
    %v9562 = vunpack.c.h.b16 %v8893
    %v9563 = vunpack.c.l.b16 %v8894
    %v9564 = vunpack.c.h.b16 %v8894
    %v9565 = vunpack.c.l.b16 %v8895
    %v9566 = vunpack.c.h.b16 %v8895
    %v9567 = vunpack.c.l.b16 %v8896
    %v9568 = vunpack.c.h.b16 %v8896
    %v9569 = vunpack.c.l.b16 %v8897
    %v9570 = vunpack.c.h.b16 %v8897
    %v9571 = vunpack.c.l.b16 %v8898
    %v9572 = vunpack.c.h.b16 %v8898
    %v9573 = vunpack.c.l.b16 %v8899
    %v9574 = vunpack.c.h.b16 %v8899
    %v9575 = vunpack.c.l.b16 %v8900
    %v9576 = vunpack.c.h.b16 %v8900
    %v9577 = vunpack.c.l.b16 %v8901
    %v9578 = vunpack.c.h.b16 %v8901
    %v9579 = vunpack.c.l.b16 %v8902
    %v9580 = vunpack.c.h.b16 %v8902
    %v9581 = vunpack.c.l.b16 %v8903
    %v9582 = vunpack.c.h.b16 %v8903
    %v9583 = vunpack.c.l.b16 %v8904
    %v9584 = vunpack.c.h.b16 %v8904
    %v9585 = vunpack.c.l.b16 %v8905
    %v9586 = vunpack.c.h.b16 %v8905
    %v9587 = vunpack.c.l.b16 %v8906
    %v9588 = vunpack.c.h.b16 %v8906
    %v9589 = vunpack.c.l.b16 %v8907
    %v9590 = vunpack.c.h.b16 %v8907
    %v9591 = vunpack.c.l.b16 %v8908
    %v9592 = vunpack.c.h.b16 %v8908
    %v9593 = vunpack.c.l.b16 %v8909
    %v9594 = vunpack.c.h.b16 %v8909
    %v9595 = vunpack.c.l.b16 %v8910
    %v9596 = vunpack.c.h.b16 %v8910
    %v9597 = vunpack.c.l.b16 %v8911
    %v9598 = vunpack.c.h.b16 %v8911
    %v9599 = vunpack.c.l.b16 %v8912
    %v9600 = vunpack.c.h.b16 %v8912
    %v9601 = vunpack.c.l.b16 %v8913
    %v9602 = vunpack.c.h.b16 %v8913
    %v9603 = vunpack.c.l.b16 %v8914
    %v9604 = vunpack.c.h.b16 %v8914
    %v9605 = vunpack.c.l.b16 %v8915
    %v9606 = vunpack.c.h.b16 %v8915
    %v9607 = vunpack.c.l.b16 %v8916
    %v9608 = vunpack.c.h.b16 %v8916
    %v9609 = vunpack.c.l.b16 %v8917
    %v9610 = vunpack.c.h.b16 %v8917
    %v9611 = vunpack.c.l.b16 %v8918
    %v9612 = vunpack.c.h.b16 %v8918
    %v9613 = vunpack.c.l.b16 %v8919
    %v9614 = vunpack.c.h.b16 %v8919
    %v9615 = vunpack.c.l.b16 %v8920
    %v9616 = vunpack.c.h.b16 %v8920
    %v9617 = vunpack.c.l.b16 %v8921
    %v9618 = vunpack.c.h.b16 %v8921
    %v9619 = vunpack.c.l.b16 %v8922
    %v9620 = vunpack.c.h.b16 %v8922
    %v9621 = vunpack.c.l.b16 %v8923
    %v9622 = vunpack.c.h.b16 %v8923
    %v9623 = vunpack.c.l.b16 %v8924
    %v9624 = vunpack.c.h.b16 %v8924
    %v9625 = vunpack.c.l.b16 %v8925
    %v9626 = vunpack.c.h.b16 %v8925
    %v9627 = vunpack.c.l.b16 %v8926
    %v9628 = vunpack.c.h.b16 %v8926
    %v9629 = vunpack.c.l.b16 %v8927
    %v9630 = vunpack.c.h.b16 %v8927
    %v9631 = vunpack.c.l.b16 %v8928
    %v9632 = vunpack.c.h.b16 %v8928
    %v9633 = vunpack.c.l.b16 %v8929
    %v9634 = vunpack.c.h.b16 %v8929
    %v9635 = vunpack.c.l.b16 %v8930
    %v9636 = vunpack.c.h.b16 %v8930
    %v9637 = vunpack.c.l.b16 %v8931
    %v9638 = vunpack.c.h.b16 %v8931
    %v9639 = vunpack.c.l.b16 %v8932
    %v9640 = vunpack.c.h.b16 %v8932
    %v9641 = vunpack.c.l.b16 %v8933
    %v9642 = vunpack.c.h.b16 %v8933
    %v9643 = vunpack.c.l.b16 %v8934
    %v9644 = vunpack.c.h.b16 %v8934
    %v9645 = vunpack.c.l.b16 %v8935
    %v9646 = vunpack.c.h.b16 %v8935
    %v9647 = vunpack.c.l.b16 %v8936
    %v9648 = vunpack.c.h.b16 %v8936
    %v9649 = vunpack.c.l.b16 %v8937
    %v9650 = vunpack.c.h.b16 %v8937
    %v9651 = vunpack.c.l.b16 %v8938
    %v9652 = vunpack.c.h.b16 %v8938
    %v9653 = vunpack.c.l.b16 %v8939
    %v9654 = vunpack.c.h.b16 %v8939
    %v9655 = vunpack.c.l.b16 %v8940
    %v9656 = vunpack.c.h.b16 %v8940
    %v9657 = vunpack.c.l.b16 %v8941
    %v9658 = vunpack.c.h.b16 %v8941
    %v9659 = vunpack.c.l.b16 %v8942
    %v9660 = vunpack.c.h.b16 %v8942
    %v9661 = vunpack.c.l.b16 %v8943
    %v9662 = vunpack.c.h.b16 %v8943
    %v9663 = vunpack.c.l.b16 %v8944
    %v9664 = vunpack.c.h.b16 %v8944
    %v9665 = vunpack.c.l.b16 %v8945
    %v9666 = vunpack.c.h.b16 %v8945
    %v9667 = vunpack.c.l.b16 %v8946
    %v9668 = vunpack.c.h.b16 %v8946
    %v9669 = vunpack.c.l.b16 %v8947
    %v9670 = vunpack.c.h.b16 %v8947
    %v9671 = vunpack.c.l.b16 %v8948
    %v9672 = vunpack.c.h.b16 %v8948
    %v9673 = vunpack.c.l.b16 %v8949
    %v9674 = vunpack.c.h.b16 %v8949
    %v9675 = vunpack.c.l.b16 %v8950
    %v9676 = vunpack.c.h.b16 %v8950
    %v9677 = vunpack.c.l.b16 %v8951
    %v9678 = vunpack.c.h.b16 %v8951
    %v9679 = vunpack.c.l.b16 %v8952
    %v9680 = vunpack.c.h.b16 %v8952
    %v9681 = vunpack.c.l.b16 %v8953
    %v9682 = vunpack.c.h.b16 %v8953
    %v9683 = vunpack.c.l.b16 %v8954
    %v9684 = vunpack.c.h.b16 %v8954
    %v9685 = vunpack.c.l.b16 %v8955
    %v9686 = vunpack.c.h.b16 %v8955
    %v9687 = vunpack.c.l.b16 %v8956
    %v9688 = vunpack.c.h.b16 %v8956
    %v9689 = vunpack.c.l.b16 %v8957
    %v9690 = vunpack.c.h.b16 %v8957
    %v9691 = vunpack.c.l.b16 %v8958
    %v9692 = vunpack.c.h.b16 %v8958
    %v9693 = vunpack.c.l.b16 %v8959
    %v9694 = vunpack.c.h.b16 %v8959
    %v9695 = vunpack.c.l.b16 %v8960
    %v9696 = vunpack.c.h.b16 %v8960
    %v9697 = vunpack.c.l.b16 %v8961
    %v9698 = vunpack.c.h.b16 %v8961
    %v9699 = vunpack.c.l.b16 %v8962
    %v9700 = vunpack.c.h.b16 %v8962
    %v9701 = vunpack.c.l.b16 %v8963
    %v9702 = vunpack.c.h.b16 %v8963
    %v9703 = vunpack.c.l.b16 %v8964
    %v9704 = vunpack.c.h.b16 %v8964
    %v9705 = vunpack.c.l.b16 %v8965
    %v9706 = vunpack.c.h.b16 %v8965
    %v9707 = vunpack.c.l.b16 %v8966
    %v9708 = vunpack.c.h.b16 %v8966
    %v9709 = vunpack.c.l.b16 %v8967
    %v9710 = vunpack.c.h.b16 %v8967
    %v9711 = vunpack.c.l.b16 %v8968
    %v9712 = vunpack.c.h.b16 %v8968
    %v9713 = vunpack.c.l.b16 %v8969
    %v9714 = vunpack.c.h.b16 %v8969
    %v9715 = vunpack.c.l.b16 %v8970
    %v9716 = vunpack.c.h.b16 %v8970
    %v9717 = vunpack.c.l.b16 %v8971
    %v9718 = vunpack.c.h.b16 %v8971
    %v9719 = vunpack.c.l.b16 %v8972
    %v9720 = vunpack.c.h.b16 %v8972
    %v9721 = vunpack.c.l.b16 %v8973
    %v9722 = vunpack.c.h.b16 %v8973
    %v9723 = vunpack.c.l.b16 %v8974
    %v9724 = vunpack.c.h.b16 %v8974
    %v9725 = vunpack.c.l.b16 %v8975
    %v9726 = vunpack.c.h.b16 %v8975
    %v9727 = vunpack.c.l.b16 %v8976
    %v9728 = vunpack.c.h.b16 %v8976
    %v9729 = vunpack.c.l.b16 %v8977
    %v9730 = vunpack.c.h.b16 %v8977
    %v9731 = vunpack.c.l.b16 %v8978
    %v9732 = vunpack.c.h.b16 %v8978
    %v9733 = vunpack.c.l.b16 %v8979
    %v9734 = vunpack.c.h.b16 %v8979
    %v9735 = vunpack.c.l.b16 %v8980
    %v9736 = vunpack.c.h.b16 %v8980
    %v9737 = vunpack.c.l.b16 %v8981
    %v9738 = vunpack.c.h.b16 %v8981
    %v9739 = vunpack.c.l.b16 %v8982
    %v9740 = vunpack.c.h.b16 %v8982
    %v9741 = vunpack.c.l.b16 %v8983
    %v9742 = vunpack.c.h.b16 %v8983
    %v9743 = vunpack.c.l.b16 %v8984
    %v9744 = vunpack.c.h.b16 %v8984
    %v9745 = vunpack.c.l.b16 %v8985
    %v9746 = vunpack.c.h.b16 %v8985
    %v9747 = vunpack.c.l.b16 %v8986
    %v9748 = vunpack.c.h.b16 %v8986
    %v9749 = vunpack.c.l.b16 %v8987
    %v9750 = vunpack.c.h.b16 %v8987
    %v9751 = vunpack.c.l.b16 %v8988
    %v9752 = vunpack.c.h.b16 %v8988
    %v9753 = vunpack.c.l.b16 %v8989
    %v9754 = vunpack.c.h.b16 %v8989
    %v9755 = vunpack.c.l.b16 %v8990
    %v9756 = vunpack.c.h.b16 %v8990
    %v9757 = vunpack.c.l.b16 %v8991
    %v9758 = vunpack.c.h.b16 %v8991
    %v9759 = vunpack.c.l.b16 %v8992
    %v9760 = vunpack.c.h.b16 %v8992
    %v9761 = vunpack.c.l.b16 %v8993
    %v9762 = vunpack.c.h.b16 %v8993
    %v9763 = vunpack.c.l.b16 %v8994
    %v9764 = vunpack.c.h.b16 %v8994
    %v9765 = vunpack.c.l.b16 %v8995
    %v9766 = vunpack.c.h.b16 %v8995
    %v9767 = vunpack.c.l.b16 %v8996
    %v9768 = vunpack.c.h.b16 %v8996
    %v9769 = vunpack.c.l.b16 %v8997
    %v9770 = vunpack.c.h.b16 %v8997
    %v9771 = vunpack.c.l.b16 %v8998
    %v9772 = vunpack.c.h.b16 %v8998
    %v9773 = vunpack.c.l.b16 %v8999
    %v9774 = vunpack.c.h.b16 %v8999
    %v9775 = vunpack.c.l.b16 %v9000
    %v9776 = vunpack.c.h.b16 %v9000
    %v9777 = vunpack.c.l.b16 %v9001
    %v9778 = vunpack.c.h.b16 %v9001
    %v9779 = vunpack.c.l.b16 %v9002
    %v9780 = vunpack.c.h.b16 %v9002
    %v9781 = vunpack.c.l.b16 %v9003
    %v9782 = vunpack.c.h.b16 %v9003
    %v9783 = vunpack.c.l.b16 %v9004
    %v9784 = vunpack.c.h.b16 %v9004
    %v9785 = vunpack.c.l.b16 %v9005
    %v9786 = vunpack.c.h.b16 %v9005
    %v9787 = vunpack.c.l.b16 %v9006
    %v9788 = vunpack.c.h.b16 %v9006
    %v9789 = vunpack.c.l.b16 %v9007
    %v9790 = vunpack.c.h.b16 %v9007
    %v9791 = vunpack.c.l.b16 %v9008
    %v9792 = vunpack.c.h.b16 %v9008
    %v9793 = vunpack.c.l.b16 %v9009
    %v9794 = vunpack.c.h.b16 %v9009
    %v9795 = vunpack.c.l.b16 %v9010
    %v9796 = vunpack.c.h.b16 %v9010
    %v9797 = vunpack.c.l.b16 %v9011
    %v9798 = vunpack.c.h.b16 %v9011
    %v9799 = vunpack.c.l.b16 %v9012
    %v9800 = vunpack.c.h.b16 %v9012
    %v9801 = vunpack.c.l.b16 %v9013
    %v9802 = vunpack.c.h.b16 %v9013
    %v9803 = vunpack.c.l.b16 %v9014
    %v9804 = vunpack.c.h.b16 %v9014
    %v9805 = vpack.c.b16 %v9297, %v9293
    %v9806 = vpack.c.b16 %v9298, %v9294
    %v9807 = vpack.c.b16 %v9299, %v9295
    %v9808 = vpack.c.b16 %v9300, %v9296
    %v9809 = vpack.c.b16 %v9305, %v9301
    %v9810 = vpack.c.b16 %v9306, %v9302
    %v9811 = vpack.c.b16 %v9307, %v9303
    %v9812 = vpack.c.b16 %v9308, %v9304
    %v9813 = vpack.c.b16 %v9313, %v9309
    %v9814 = vpack.c.b16 %v9314, %v9310
    %v9815 = vpack.c.b16 %v9315, %v9311
    %v9816 = vpack.c.b16 %v9316, %v9312
    %v9817 = vpack.c.b16 %v9321, %v9317
    %v9818 = vpack.c.b16 %v9322, %v9318
    %v9819 = vpack.c.b16 %v9323, %v9319
    %v9820 = vpack.c.b16 %v9324, %v9320
    %v9821 = vpack.c.b16 %v9329, %v9325
    %v9822 = vpack.c.b16 %v9330, %v9326
    %v9823 = vpack.c.b16 %v9331, %v9327
    %v9824 = vpack.c.b16 %v9332, %v9328
    %v9825 = vpack.c.b16 %v9337, %v9333
    %v9826 = vpack.c.b16 %v9338, %v9334
    %v9827 = vpack.c.b16 %v9339, %v9335
    %v9828 = vpack.c.b16 %v9340, %v9336
    %v9829 = vpack.c.b16 %v9345, %v9341
    %v9830 = vpack.c.b16 %v9346, %v9342
    %v9831 = vpack.c.b16 %v9347, %v9343
    %v9832 = vpack.c.b16 %v9348, %v9344
    %v9833 = vpack.c.b16 %v9353, %v9349
    %v9834 = vpack.c.b16 %v9354, %v9350
    %v9835 = vpack.c.b16 %v9355, %v9351
    %v9836 = vpack.c.b16 %v9356, %v9352
    %v9837 = vpack.c.b16 %v9361, %v9357
    %v9838 = vpack.c.b16 %v9362, %v9358
    %v9839 = vpack.c.b16 %v9363, %v9359
    %v9840 = vpack.c.b16 %v9364, %v9360
    %v9841 = vpack.c.b16 %v9369, %v9365
    %v9842 = vpack.c.b16 %v9370, %v9366
    %v9843 = vpack.c.b16 %v9371, %v9367
    %v9844 = vpack.c.b16 %v9372, %v9368
    %v9845 = vpack.c.b16 %v9377, %v9373
    %v9846 = vpack.c.b16 %v9378, %v9374
    %v9847 = vpack.c.b16 %v9379, %v9375
    %v9848 = vpack.c.b16 %v9380, %v9376
    %v9849 = vpack.c.b16 %v9385, %v9381
    %v9850 = vpack.c.b16 %v9386, %v9382
    %v9851 = vpack.c.b16 %v9387, %v9383
    %v9852 = vpack.c.b16 %v9388, %v9384
    %v9853 = vpack.c.b16 %v9393, %v9389
    %v9854 = vpack.c.b16 %v9394, %v9390
    %v9855 = vpack.c.b16 %v9395, %v9391
    %v9856 = vpack.c.b16 %v9396, %v9392
    %v9857 = vpack.c.b16 %v9401, %v9397
    %v9858 = vpack.c.b16 %v9402, %v9398
    %v9859 = vpack.c.b16 %v9403, %v9399
    %v9860 = vpack.c.b16 %v9404, %v9400
    %v9861 = vpack.c.b16 %v9409, %v9405
    %v9862 = vpack.c.b16 %v9410, %v9406
    %v9863 = vpack.c.b16 %v9411, %v9407
    %v9864 = vpack.c.b16 %v9412, %v9408
    %v9865 = vpack.c.b16 %v9417, %v9413
    %v9866 = vpack.c.b16 %v9418, %v9414
    %v9867 = vpack.c.b16 %v9419, %v9415
    %v9868 = vpack.c.b16 %v9420, %v9416
    %v9869 = vpack.c.b16 %v9425, %v9421
    %v9870 = vpack.c.b16 %v9426, %v9422
    %v9871 = vpack.c.b16 %v9427, %v9423
    %v9872 = vpack.c.b16 %v9428, %v9424
    %v9873 = vpack.c.b16 %v9433, %v9429
    %v9874 = vpack.c.b16 %v9434, %v9430
    %v9875 = vpack.c.b16 %v9435, %v9431
    %v9876 = vpack.c.b16 %v9436, %v9432
    %v9877 = vpack.c.b16 %v9441, %v9437
    %v9878 = vpack.c.b16 %v9442, %v9438
    %v9879 = vpack.c.b16 %v9443, %v9439
    %v9880 = vpack.c.b16 %v9444, %v9440
    %v9881 = vpack.c.b16 %v9449, %v9445
    %v9882 = vpack.c.b16 %v9450, %v9446
    %v9883 = vpack.c.b16 %v9451, %v9447
    %v9884 = vpack.c.b16 %v9452, %v9448
    %v9885 = vpack.c.b16 %v9457, %v9453
    %v9886 = vpack.c.b16 %v9458, %v9454
    %v9887 = vpack.c.b16 %v9459, %v9455
    %v9888 = vpack.c.b16 %v9460, %v9456
    %v9889 = vpack.c.b16 %v9465, %v9461
    %v9890 = vpack.c.b16 %v9466, %v9462
    %v9891 = vpack.c.b16 %v9467, %v9463
    %v9892 = vpack.c.b16 %v9468, %v9464
    %v9893 = vpack.c.b16 %v9473, %v9469
    %v9894 = vpack.c.b16 %v9474, %v9470
    %v9895 = vpack.c.b16 %v9475, %v9471
    %v9896 = vpack.c.b16 %v9476, %v9472
    %v9897 = vpack.c.b16 %v9481, %v9477
    %v9898 = vpack.c.b16 %v9482, %v9478
    %v9899 = vpack.c.b16 %v9483, %v9479
    %v9900 = vpack.c.b16 %v9484, %v9480
    %v9901 = vpack.c.b16 %v9489, %v9485
    %v9902 = vpack.c.b16 %v9490, %v9486
    %v9903 = vpack.c.b16 %v9491, %v9487
    %v9904 = vpack.c.b16 %v9492, %v9488
    %v9905 = vpack.c.b16 %v9497, %v9493
    %v9906 = vpack.c.b16 %v9498, %v9494
    %v9907 = vpack.c.b16 %v9499, %v9495
    %v9908 = vpack.c.b16 %v9500, %v9496
    %v9909 = vpack.c.b16 %v9505, %v9501
    %v9910 = vpack.c.b16 %v9506, %v9502
    %v9911 = vpack.c.b16 %v9507, %v9503
    %v9912 = vpack.c.b16 %v9508, %v9504
    %v9913 = vpack.c.b16 %v9513, %v9509
    %v9914 = vpack.c.b16 %v9514, %v9510
    %v9915 = vpack.c.b16 %v9515, %v9511
    %v9916 = vpack.c.b16 %v9516, %v9512
    %v9917 = vpack.c.b16 %v9521, %v9517
    %v9918 = vpack.c.b16 %v9522, %v9518
    %v9919 = vpack.c.b16 %v9523, %v9519
    %v9920 = vpack.c.b16 %v9524, %v9520
    %v9921 = vpack.c.b16 %v9529, %v9525
    %v9922 = vpack.c.b16 %v9530, %v9526
    %v9923 = vpack.c.b16 %v9531, %v9527
    %v9924 = vpack.c.b16 %v9532, %v9528
    %v9925 = vpack.c.b16 %v9537, %v9533
    %v9926 = vpack.c.b16 %v9538, %v9534
    %v9927 = vpack.c.b16 %v9539, %v9535
    %v9928 = vpack.c.b16 %v9540, %v9536
    %v9929 = vpack.c.b16 %v9545, %v9541
    %v9930 = vpack.c.b16 %v9546, %v9542
    %v9931 = vpack.c.b16 %v9547, %v9543
    %v9932 = vpack.c.b16 %v9548, %v9544
    %v9933 = vpack.c.b16 %v9553, %v9549
    %v9934 = vpack.c.b16 %v9554, %v9550
    %v9935 = vpack.c.b16 %v9555, %v9551
    %v9936 = vpack.c.b16 %v9556, %v9552
    %v9937 = vpack.c.b16 %v9561, %v9557
    %v9938 = vpack.c.b16 %v9562, %v9558
    %v9939 = vpack.c.b16 %v9563, %v9559
    %v9940 = vpack.c.b16 %v9564, %v9560
    %v9941 = vpack.c.b16 %v9569, %v9565
    %v9942 = vpack.c.b16 %v9570, %v9566
    %v9943 = vpack.c.b16 %v9571, %v9567
    %v9944 = vpack.c.b16 %v9572, %v9568
    %v9945 = vpack.c.b16 %v9577, %v9573
    %v9946 = vpack.c.b16 %v9578, %v9574
    %v9947 = vpack.c.b16 %v9579, %v9575
    %v9948 = vpack.c.b16 %v9580, %v9576
    %v9949 = vpack.c.b16 %v9585, %v9581
    %v9950 = vpack.c.b16 %v9586, %v9582
    %v9951 = vpack.c.b16 %v9587, %v9583
    %v9952 = vpack.c.b16 %v9588, %v9584
    %v9953 = vpack.c.b16 %v9593, %v9589
    %v9954 = vpack.c.b16 %v9594, %v9590
    %v9955 = vpack.c.b16 %v9595, %v9591
    %v9956 = vpack.c.b16 %v9596, %v9592
    %v9957 = vpack.c.b16 %v9601, %v9597
    %v9958 = vpack.c.b16 %v9602, %v9598
    %v9959 = vpack.c.b16 %v9603, %v9599
    %v9960 = vpack.c.b16 %v9604, %v9600
    %v9961 = vpack.c.b16 %v9609, %v9605
    %v9962 = vpack.c.b16 %v9610, %v9606
    %v9963 = vpack.c.b16 %v9611, %v9607
    %v9964 = vpack.c.b16 %v9612, %v9608
    %v9965 = vpack.c.b16 %v9617, %v9613
    %v9966 = vpack.c.b16 %v9618, %v9614
    %v9967 = vpack.c.b16 %v9619, %v9615
    %v9968 = vpack.c.b16 %v9620, %v9616
    %v9969 = vpack.c.b16 %v9625, %v9621
    %v9970 = vpack.c.b16 %v9626, %v9622
    %v9971 = vpack.c.b16 %v9627, %v9623
    %v9972 = vpack.c.b16 %v9628, %v9624
    %v9973 = vpack.c.b16 %v9633, %v9629
    %v9974 = vpack.c.b16 %v9634, %v9630
    %v9975 = vpack.c.b16 %v9635, %v9631
    %v9976 = vpack.c.b16 %v9636, %v9632
    %v9977 = vpack.c.b16 %v9641, %v9637
    %v9978 = vpack.c.b16 %v9642, %v9638
    %v9979 = vpack.c.b16 %v9643, %v9639
    %v9980 = vpack.c.b16 %v9644, %v9640
    %v9981 = vpack.c.b16 %v9649, %v9645
    %v9982 = vpack.c.b16 %v9650, %v9646
    %v9983 = vpack.c.b16 %v9651, %v9647
    %v9984 = vpack.c.b16 %v9652, %v9648
    %v9985 = vpack.c.b16 %v9657, %v9653
    %v9986 = vpack.c.b16 %v9658, %v9654
    %v9987 = vpack.c.b16 %v9659, %v9655
    %v9988 = vpack.c.b16 %v9660, %v9656
    %v9989 = vpack.c.b16 %v9665, %v9661
    %v9990 = vpack.c.b16 %v9666, %v9662
    %v9991 = vpack.c.b16 %v9667, %v9663
    %v9992 = vpack.c.b16 %v9668, %v9664
    %v9993 = vpack.c.b16 %v9673, %v9669
    %v9994 = vpack.c.b16 %v9674, %v9670
    %v9995 = vpack.c.b16 %v9675, %v9671
    %v9996 = vpack.c.b16 %v9676, %v9672
    %v9997 = vpack.c.b16 %v9681, %v9677
    %v9998 = vpack.c.b16 %v9682, %v9678
    %v9999 = vpack.c.b16 %v9683, %v9679
    %v10000 = vpack.c.b16 %v9684, %v9680
    %v10001 = vpack.c.b16 %v9689, %v9685
    %v10002 = vpack.c.b16 %v9690, %v9686
    %v10003 = vpack.c.b16 %v9691, %v9687
    %v10004 = vpack.c.b16 %v9692, %v9688
    %v10005 = vpack.c.b16 %v9697, %v9693
    %v10006 = vpack.c.b16 %v9698, %v9694
    %v10007 = vpack.c.b16 %v9699, %v9695
    %v10008 = vpack.c.b16 %v9700, %v9696
    %v10009 = vpack.c.b16 %v9705, %v9701
    %v10010 = vpack.c.b16 %v9706, %v9702
    %v10011 = vpack.c.b16 %v9707, %v9703
    %v10012 = vpack.c.b16 %v9708, %v9704
    %v10013 = vpack.c.b16 %v9713, %v9709
    %v10014 = vpack.c.b16 %v9714, %v9710
    %v10015 = vpack.c.b16 %v9715, %v9711
    %v10016 = vpack.c.b16 %v9716, %v9712
    %v10017 = vpack.c.b16 %v9721, %v9717
    %v10018 = vpack.c.b16 %v9722, %v9718
    %v10019 = vpack.c.b16 %v9723, %v9719
    %v10020 = vpack.c.b16 %v9724, %v9720
    %v10021 = vpack.c.b16 %v9729, %v9725
    %v10022 = vpack.c.b16 %v9730, %v9726
    %v10023 = vpack.c.b16 %v9731, %v9727
    %v10024 = vpack.c.b16 %v9732, %v9728
    %v10025 = vpack.c.b16 %v9737, %v9733
    %v10026 = vpack.c.b16 %v9738, %v9734
    %v10027 = vpack.c.b16 %v9739, %v9735
    %v10028 = vpack.c.b16 %v9740, %v9736
    %v10029 = vpack.c.b16 %v9745, %v9741
    %v10030 = vpack.c.b16 %v9746, %v9742
    %v10031 = vpack.c.b16 %v9747, %v9743
    %v10032 = vpack.c.b16 %v9748, %v9744
    %v10033 = vpack.c.b16 %v9753, %v9749
    %v10034 = vpack.c.b16 %v9754, %v9750
    %v10035 = vpack.c.b16 %v9755, %v9751
    %v10036 = vpack.c.b16 %v9756, %v9752
    %v10037 = vpack.c.b16 %v9761, %v9757
    %v10038 = vpack.c.b16 %v9762, %v9758
    %v10039 = vpack.c.b16 %v9763, %v9759
    %v10040 = vpack.c.b16 %v9764, %v9760
    %v10041 = vpack.c.b16 %v9769, %v9765
    %v10042 = vpack.c.b16 %v9770, %v9766
    %v10043 = vpack.c.b16 %v9771, %v9767
    %v10044 = vpack.c.b16 %v9772, %v9768
    %v10045 = vpack.c.b16 %v9777, %v9773
    %v10046 = vpack.c.b16 %v9778, %v9774
    %v10047 = vpack.c.b16 %v9779, %v9775
    %v10048 = vpack.c.b16 %v9780, %v9776
    %v10049 = vpack.c.b16 %v9785, %v9781
    %v10050 = vpack.c.b16 %v9786, %v9782
    %v10051 = vpack.c.b16 %v9787, %v9783
    %v10052 = vpack.c.b16 %v9788, %v9784
    %v10053 = vpack.c.b16 %v9793, %v9789
    %v10054 = vpack.c.b16 %v9794, %v9790
    %v10055 = vpack.c.b16 %v9795, %v9791
    %v10056 = vpack.c.b16 %v9796, %v9792
    %v10057 = vpack.c.b16 %v9801, %v9797
    %v10058 = vpack.c.b16 %v9802, %v9798
    %v10059 = vpack.c.b16 %v9803, %v9799
    %v10060 = vpack.c.b16 %v9804, %v9800
    %10317 = vmatprep.subr.bf16.mxu0 %v9834
    %10318 = vmatpush1.bf16.msra.mxu0 %v9833
    %10319 = vmatprep.subr.bf16.mxu0 %v9830
    %10320 = vmatpush1.bf16.msra.mxu0 %v9829
    %10321 = vmatprep.subr.bf16.mxu0 %v9826
    %10322 = vmatpush1.bf16.msra.mxu0 %v9825
    %10323 = vmatprep.subr.bf16.mxu0 %v9822
    %10324 = vmatpush1.bf16.msra.mxu0 %v9821
    %10325 = vmatprep.subr.bf16.mxu0 %v9818
    %10326 = vmatpush1.bf16.msra.mxu0 %v9817
    %10327 = vmatprep.subr.bf16.mxu0 %v9814
    %10328 = vmatpush1.bf16.msra.mxu0 %v9813
    %10329 = vmatprep.subr.bf16.mxu0 %v9810
    %10330 = vmatpush1.bf16.msra.mxu0 %v9809
    %10331 = vmatprep.subr.bf16.mxu0 %v9806
    %10332 = vmatpush1.bf16.msra.mxu0 %v9805
    %10333 = vmatprep.subr.bf16.mxu0 %v9866
    %10334 = vmatpush2.bf16.msra.mxu0 %v9865
    %10335 = vmatprep.subr.bf16.mxu0 %v9862
    %10336 = vmatpush2.bf16.msra.mxu0 %v9861
    %10337 = vmatprep.subr.bf16.mxu0 %v9858
    %10338 = vmatpush2.bf16.msra.mxu0 %v9857
    %10339 = vmatprep.subr.bf16.mxu0 %v9854
    %10340 = vmatpush2.bf16.msra.mxu0 %v9853
    %10341 = vmatprep.subr.bf16.mxu0 %v9850
    %10342 = vmatpush2.bf16.msra.mxu0 %v9849
    %10343 = vmatprep.subr.bf16.mxu0 %v9846
    %10344 = vmatpush2.bf16.msra.mxu0 %v9845
    %10345 = vmatprep.subr.bf16.mxu0 %v9842
    %10346 = vmatpush2.bf16.msra.mxu0 %v9841
    %10347 = vmatprep.subr.bf16.mxu0 %v9838
    %10348 = vmatpush2.bf16.msra.mxu0 %v9837
    %10349 = vmatprep.mubr.bf16.mxu0 %v8741
    %10350 = vmatmul.mubr.bf16.gmra.mxu0 %v8740
    %v10351 = vpop.f32.mrf.mxu0
    %v10352 = vadd.f32 %v9020, %v10351
    %v10353 = vpop.f32.mrf.mxu0
    %v10354 = vadd.f32 %v9024, %v10353
    %v10355 = vpop.f32.mrf.mxu0
    %v10356 = vpop.f32.mrf.mxu0
    %10357 = vdwg.mxu0
    %10358 = vmatprep.subr.bf16.mxu0 %v9898
    %10359 = vmatpush1.bf16.msra.mxu0 %v9897
    %10360 = vmatprep.subr.bf16.mxu0 %v9894
    %10361 = vmatpush1.bf16.msra.mxu0 %v9893
    %10362 = vmatprep.subr.bf16.mxu0 %v9890
    %10363 = vmatpush1.bf16.msra.mxu0 %v9889
    %10364 = vmatprep.subr.bf16.mxu0 %v9886
    %10365 = vmatpush1.bf16.msra.mxu0 %v9885
    %10366 = vmatprep.subr.bf16.mxu0 %v9882
    %10367 = vmatpush1.bf16.msra.mxu0 %v9881
    %10368 = vmatprep.subr.bf16.mxu0 %v9878
    %10369 = vmatpush1.bf16.msra.mxu0 %v9877
    %10370 = vmatprep.subr.bf16.mxu0 %v9874
    %10371 = vmatpush1.bf16.msra.mxu0 %v9873
    %10372 = vmatprep.subr.bf16.mxu0 %v9870
    %10373 = vmatpush1.bf16.msra.mxu0 %v9869
    %10374 = vmatprep.subr.bf16.mxu0 %v9930
    %10375 = vmatpush2.bf16.msra.mxu0 %v9929
    %10376 = vmatprep.subr.bf16.mxu0 %v9926
    %10377 = vmatpush2.bf16.msra.mxu0 %v9925
    %10378 = vmatprep.subr.bf16.mxu0 %v9922
    %10379 = vmatpush2.bf16.msra.mxu0 %v9921
    %10380 = vmatprep.subr.bf16.mxu0 %v9918
    %10381 = vmatpush2.bf16.msra.mxu0 %v9917
    %10382 = vmatprep.subr.bf16.mxu0 %v9914
    %10383 = vmatpush2.bf16.msra.mxu0 %v9913
    %10384 = vmatprep.subr.bf16.mxu0 %v9910
    %10385 = vmatpush2.bf16.msra.mxu0 %v9909
    %10386 = vmatprep.subr.bf16.mxu0 %v9906
    %10387 = vmatpush2.bf16.msra.mxu0 %v9905
    %10388 = vmatprep.subr.bf16.mxu0 %v9902
    %10389 = vmatpush2.bf16.msra.mxu0 %v9901
    %10390 = vmatprep.mubr.bf16.mxu0 %v8743
    %10391 = vmatmul.mubr.bf16.gmra.mxu0 %v8742
    %v10392 = vpop.f32.mrf.mxu0
    %v10393 = vadd.f32 %v10352, %v10392
    %v10394 = vpop.f32.mrf.mxu0
    %v10395 = vadd.f32 %v10354, %v10394
    %v10396 = vpop.f32.mrf.mxu0
    %v10397 = vpop.f32.mrf.mxu0
    %10398 = vdwg.mxu0
    %10399 = vmatprep.subr.bf16.mxu0 %v9962
    %10400 = vmatpush1.bf16.msra.mxu0 %v9961
    %10401 = vmatprep.subr.bf16.mxu0 %v9958
    %10402 = vmatpush1.bf16.msra.mxu0 %v9957
    %10403 = vmatprep.subr.bf16.mxu0 %v9954
    %10404 = vmatpush1.bf16.msra.mxu0 %v9953
    %10405 = vmatprep.subr.bf16.mxu0 %v9950
    %10406 = vmatpush1.bf16.msra.mxu0 %v9949
    %10407 = vmatprep.subr.bf16.mxu0 %v9946
    %10408 = vmatpush1.bf16.msra.mxu0 %v9945
    %10409 = vmatprep.subr.bf16.mxu0 %v9942
    %10410 = vmatpush1.bf16.msra.mxu0 %v9941
    %10411 = vmatprep.subr.bf16.mxu0 %v9938
    %10412 = vmatpush1.bf16.msra.mxu0 %v9937
    %10413 = vmatprep.subr.bf16.mxu0 %v9934
    %10414 = vmatpush1.bf16.msra.mxu0 %v9933
    %10415 = vmatprep.subr.bf16.mxu0 %v9994
    %10416 = vmatpush2.bf16.msra.mxu0 %v9993
    %10417 = vmatprep.subr.bf16.mxu0 %v9990
    %10418 = vmatpush2.bf16.msra.mxu0 %v9989
    %10419 = vmatprep.subr.bf16.mxu0 %v9986
    %10420 = vmatpush2.bf16.msra.mxu0 %v9985
    %10421 = vmatprep.subr.bf16.mxu0 %v9982
    %10422 = vmatpush2.bf16.msra.mxu0 %v9981
    %10423 = vmatprep.subr.bf16.mxu0 %v9978
    %10424 = vmatpush2.bf16.msra.mxu0 %v9977
    %10425 = vmatprep.subr.bf16.mxu0 %v9974
    %10426 = vmatpush2.bf16.msra.mxu0 %v9973
    %10427 = vmatprep.subr.bf16.mxu0 %v9970
    %10428 = vmatpush2.bf16.msra.mxu0 %v9969
    %10429 = vmatprep.subr.bf16.mxu0 %v9966
    %10430 = vmatpush2.bf16.msra.mxu0 %v9965
    %10431 = vmatprep.mubr.bf16.mxu0 %v8745
    %10432 = vmatmul.mubr.bf16.gmra.mxu0 %v8744
    %v10433 = vpop.f32.mrf.mxu0
    %v10434 = vadd.f32 %v10393, %v10433
    %v10435 = vpop.f32.mrf.mxu0
    %v10436 = vadd.f32 %v10395, %v10435
    %v10437 = vpop.f32.mrf.mxu0
    %v10438 = vpop.f32.mrf.mxu0
    %10439 = vdwg.mxu0
    %10440 = vmatprep.subr.bf16.mxu0 %v10026
    %10441 = vmatpush1.bf16.msra.mxu0 %v10025
    %10442 = vmatprep.subr.bf16.mxu0 %v10022
    %10443 = vmatpush1.bf16.msra.mxu0 %v10021
    %10444 = vmatprep.subr.bf16.mxu0 %v10018
    %10445 = vmatpush1.bf16.msra.mxu0 %v10017
    %10446 = vmatprep.subr.bf16.mxu0 %v10014
    %10447 = vmatpush1.bf16.msra.mxu0 %v10013
    %10448 = vmatprep.subr.bf16.mxu0 %v10010
    %10449 = vmatpush1.bf16.msra.mxu0 %v10009
    %10450 = vmatprep.subr.bf16.mxu0 %v10006
    %10451 = vmatpush1.bf16.msra.mxu0 %v10005
    %10452 = vmatprep.subr.bf16.mxu0 %v10002
    %10453 = vmatpush1.bf16.msra.mxu0 %v10001
    %10454 = vmatprep.subr.bf16.mxu0 %v9998
    %10455 = vmatpush1.bf16.msra.mxu0 %v9997
    %10456 = vmatprep.subr.bf16.mxu0 %v10058
    %10457 = vmatpush2.bf16.msra.mxu0 %v10057
    %10458 = vmatprep.subr.bf16.mxu0 %v10054
    %10459 = vmatpush2.bf16.msra.mxu0 %v10053
    %10460 = vmatprep.subr.bf16.mxu0 %v10050
    %10461 = vmatpush2.bf16.msra.mxu0 %v10049
    %10462 = vmatprep.subr.bf16.mxu0 %v10046
    %10463 = vmatpush2.bf16.msra.mxu0 %v10045
    %10464 = vmatprep.subr.bf16.mxu0 %v10042
    %10465 = vmatpush2.bf16.msra.mxu0 %v10041
    %10466 = vmatprep.subr.bf16.mxu0 %v10038
    %10467 = vmatpush2.bf16.msra.mxu0 %v10037
    %10468 = vmatprep.subr.bf16.mxu0 %v10034
    %10469 = vmatpush2.bf16.msra.mxu0 %v10033
    %10470 = vmatprep.subr.bf16.mxu0 %v10030
    %10471 = vmatpush2.bf16.msra.mxu0 %v10029
    %10472 = vmatprep.mubr.bf16.mxu0 %v8747
    %10473 = vmatmul.mubr.bf16.gmra.mxu0 %v8746
    %v10474 = vpop.f32.mrf.mxu0
    %v10475 = vadd.f32 %v10434, %v10474
    %v10476 = vpop.f32.mrf.mxu0
    %v10477 = vadd.f32 %v10436, %v10476
    %v10478 = vpop.f32.mrf.mxu0
    %v10479 = vpop.f32.mrf.mxu0
    %10480 = vdwg.mxu0
    %10481 = vmatprep.subr.bf16.mxu0 %v9836
    %10482 = vmatpush1.bf16.msra.mxu0 %v9835
    %10483 = vmatprep.subr.bf16.mxu0 %v9832
    %10484 = vmatpush1.bf16.msra.mxu0 %v9831
    %10485 = vmatprep.subr.bf16.mxu0 %v9828
    %10486 = vmatpush1.bf16.msra.mxu0 %v9827
    %10487 = vmatprep.subr.bf16.mxu0 %v9824
    %10488 = vmatpush1.bf16.msra.mxu0 %v9823
    %10489 = vmatprep.subr.bf16.mxu0 %v9820
    %10490 = vmatpush1.bf16.msra.mxu0 %v9819
    %10491 = vmatprep.subr.bf16.mxu0 %v9816
    %10492 = vmatpush1.bf16.msra.mxu0 %v9815
    %10493 = vmatprep.subr.bf16.mxu0 %v9812
    %10494 = vmatpush1.bf16.msra.mxu0 %v9811
    %10495 = vmatprep.subr.bf16.mxu0 %v9808
    %10496 = vmatpush1.bf16.msra.mxu0 %v9807
    %10497 = vmatprep.subr.bf16.mxu0 %v9868
    %10498 = vmatpush2.bf16.msra.mxu0 %v9867
    %10499 = vmatprep.subr.bf16.mxu0 %v9864
    %10500 = vmatpush2.bf16.msra.mxu0 %v9863
    %10501 = vmatprep.subr.bf16.mxu0 %v9860
    %10502 = vmatpush2.bf16.msra.mxu0 %v9859
    %10503 = vmatprep.subr.bf16.mxu0 %v9856
    %10504 = vmatpush2.bf16.msra.mxu0 %v9855
    %10505 = vmatprep.subr.bf16.mxu0 %v9852
    %10506 = vmatpush2.bf16.msra.mxu0 %v9851
    %10507 = vmatprep.subr.bf16.mxu0 %v9848
    %10508 = vmatpush2.bf16.msra.mxu0 %v9847
    %10509 = vmatprep.subr.bf16.mxu0 %v9844
    %10510 = vmatpush2.bf16.msra.mxu0 %v9843
    %10511 = vmatprep.subr.bf16.mxu0 %v9840
    %10512 = vmatpush2.bf16.msra.mxu0 %v9839
    %10513 = vmatprep.mubr.bf16.mxu0 %v8741
    %10514 = vmatmul.mubr.bf16.gmra.mxu0 %v8740
    %v10515 = vpop.f32.mrf.mxu0
    %v10516 = vadd.f32 %v9028, %v10515
    %v10517 = vpop.f32.mrf.mxu0
    %v10518 = vadd.f32 %v9032, %v10517
    %v10519 = vpop.f32.mrf.mxu0
    %v10520 = vpop.f32.mrf.mxu0
    %10521 = vdwg.mxu0
    %10522 = vmatprep.subr.bf16.mxu0 %v9900
    %10523 = vmatpush1.bf16.msra.mxu0 %v9899
    %10524 = vmatprep.subr.bf16.mxu0 %v9896
    %10525 = vmatpush1.bf16.msra.mxu0 %v9895
    %10526 = vmatprep.subr.bf16.mxu0 %v9892
    %10527 = vmatpush1.bf16.msra.mxu0 %v9891
    %10528 = vmatprep.subr.bf16.mxu0 %v9888
    %10529 = vmatpush1.bf16.msra.mxu0 %v9887
    %10530 = vmatprep.subr.bf16.mxu0 %v9884
    %10531 = vmatpush1.bf16.msra.mxu0 %v9883
    %10532 = vmatprep.subr.bf16.mxu0 %v9880
    %10533 = vmatpush1.bf16.msra.mxu0 %v9879
    %10534 = vmatprep.subr.bf16.mxu0 %v9876
    %10535 = vmatpush1.bf16.msra.mxu0 %v9875
    %10536 = vmatprep.subr.bf16.mxu0 %v9872
    %10537 = vmatpush1.bf16.msra.mxu0 %v9871
    %10538 = vmatprep.subr.bf16.mxu0 %v9932
    %10539 = vmatpush2.bf16.msra.mxu0 %v9931
    %10540 = vmatprep.subr.bf16.mxu0 %v9928
    %10541 = vmatpush2.bf16.msra.mxu0 %v9927
    %10542 = vmatprep.subr.bf16.mxu0 %v9924
    %10543 = vmatpush2.bf16.msra.mxu0 %v9923
    %10544 = vmatprep.subr.bf16.mxu0 %v9920
    %10545 = vmatpush2.bf16.msra.mxu0 %v9919
    %10546 = vmatprep.subr.bf16.mxu0 %v9916
    %10547 = vmatpush2.bf16.msra.mxu0 %v9915
    %10548 = vmatprep.subr.bf16.mxu0 %v9912
    %10549 = vmatpush2.bf16.msra.mxu0 %v9911
    %10550 = vmatprep.subr.bf16.mxu0 %v9908
    %10551 = vmatpush2.bf16.msra.mxu0 %v9907
    %10552 = vmatprep.subr.bf16.mxu0 %v9904
    %10553 = vmatpush2.bf16.msra.mxu0 %v9903
    %10554 = vmatprep.mubr.bf16.mxu0 %v8743
    %10555 = vmatmul.mubr.bf16.gmra.mxu0 %v8742
    %v10556 = vpop.f32.mrf.mxu0
    %v10557 = vadd.f32 %v10516, %v10556
    %v10558 = vpop.f32.mrf.mxu0
    %v10559 = vadd.f32 %v10518, %v10558
    %v10560 = vpop.f32.mrf.mxu0
    %v10561 = vpop.f32.mrf.mxu0
    %10562 = vdwg.mxu0
    %10563 = vmatprep.subr.bf16.mxu0 %v9964
    %10564 = vmatpush1.bf16.msra.mxu0 %v9963
    %10565 = vmatprep.subr.bf16.mxu0 %v9960
    %10566 = vmatpush1.bf16.msra.mxu0 %v9959
    %10567 = vmatprep.subr.bf16.mxu0 %v9956
    %10568 = vmatpush1.bf16.msra.mxu0 %v9955
    %10569 = vmatprep.subr.bf16.mxu0 %v9952
    %10570 = vmatpush1.bf16.msra.mxu0 %v9951
    %10571 = vmatprep.subr.bf16.mxu0 %v9948
    %10572 = vmatpush1.bf16.msra.mxu0 %v9947
    %10573 = vmatprep.subr.bf16.mxu0 %v9944
    %10574 = vmatpush1.bf16.msra.mxu0 %v9943
    %10575 = vmatprep.subr.bf16.mxu0 %v9940
    %10576 = vmatpush1.bf16.msra.mxu0 %v9939
    %10577 = vmatprep.subr.bf16.mxu0 %v9936
    %10578 = vmatpush1.bf16.msra.mxu0 %v9935
    %10579 = vmatprep.subr.bf16.mxu0 %v9996
    %10580 = vmatpush2.bf16.msra.mxu0 %v9995
    %10581 = vmatprep.subr.bf16.mxu0 %v9992
    %10582 = vmatpush2.bf16.msra.mxu0 %v9991
    %10583 = vmatprep.subr.bf16.mxu0 %v9988
    %10584 = vmatpush2.bf16.msra.mxu0 %v9987
    %10585 = vmatprep.subr.bf16.mxu0 %v9984
    %10586 = vmatpush2.bf16.msra.mxu0 %v9983
    %10587 = vmatprep.subr.bf16.mxu0 %v9980
    %10588 = vmatpush2.bf16.msra.mxu0 %v9979
    %10589 = vmatprep.subr.bf16.mxu0 %v9976
    %10590 = vmatpush2.bf16.msra.mxu0 %v9975
    %10591 = vmatprep.subr.bf16.mxu0 %v9972
    %10592 = vmatpush2.bf16.msra.mxu0 %v9971
    %10593 = vmatprep.subr.bf16.mxu0 %v9968
    %10594 = vmatpush2.bf16.msra.mxu0 %v9967
    %10595 = vmatprep.mubr.bf16.mxu0 %v8745
    %10596 = vmatmul.mubr.bf16.gmra.mxu0 %v8744
    %v10597 = vpop.f32.mrf.mxu0
    %v10598 = vadd.f32 %v10557, %v10597
    %v10599 = vpop.f32.mrf.mxu0
    %v10600 = vadd.f32 %v10559, %v10599
    %v10601 = vpop.f32.mrf.mxu0
    %v10602 = vpop.f32.mrf.mxu0
    %10603 = vdwg.mxu0
    %10604 = vmatprep.subr.bf16.mxu0 %v10028
    %10605 = vmatpush1.bf16.msra.mxu0 %v10027
    %10606 = vmatprep.subr.bf16.mxu0 %v10024
    %10607 = vmatpush1.bf16.msra.mxu0 %v10023
    %10608 = vmatprep.subr.bf16.mxu0 %v10020
    %10609 = vmatpush1.bf16.msra.mxu0 %v10019
    %10610 = vmatprep.subr.bf16.mxu0 %v10016
    %10611 = vmatpush1.bf16.msra.mxu0 %v10015
    %10612 = vmatprep.subr.bf16.mxu0 %v10012
    %10613 = vmatpush1.bf16.msra.mxu0 %v10011
    %10614 = vmatprep.subr.bf16.mxu0 %v10008
    %10615 = vmatpush1.bf16.msra.mxu0 %v10007
    %10616 = vmatprep.subr.bf16.mxu0 %v10004
    %10617 = vmatpush1.bf16.msra.mxu0 %v10003
    %10618 = vmatprep.subr.bf16.mxu0 %v10000
    %10619 = vmatpush1.bf16.msra.mxu0 %v9999
    %10620 = vmatprep.subr.bf16.mxu0 %v10060
    %10621 = vmatpush2.bf16.msra.mxu0 %v10059
    %10622 = vmatprep.subr.bf16.mxu0 %v10056
    %10623 = vmatpush2.bf16.msra.mxu0 %v10055
    %10624 = vmatprep.subr.bf16.mxu0 %v10052
    %10625 = vmatpush2.bf16.msra.mxu0 %v10051
    %10626 = vmatprep.subr.bf16.mxu0 %v10048
    %10627 = vmatpush2.bf16.msra.mxu0 %v10047
    %10628 = vmatprep.subr.bf16.mxu0 %v10044
    %10629 = vmatpush2.bf16.msra.mxu0 %v10043
    %10630 = vmatprep.subr.bf16.mxu0 %v10040
    %10631 = vmatpush2.bf16.msra.mxu0 %v10039
    %10632 = vmatprep.subr.bf16.mxu0 %v10036
    %10633 = vmatpush2.bf16.msra.mxu0 %v10035
    %10634 = vmatprep.subr.bf16.mxu0 %v10032
    %10635 = vmatpush2.bf16.msra.mxu0 %v10031
    %10636 = vmatprep.mubr.bf16.mxu0 %v8747
    %10637 = vmatmul.mubr.bf16.gmra.mxu0 %v8746
    %v10638 = vpop.f32.mrf.mxu0
    %v10639 = vadd.f32 %v10598, %v10638
    %v10640 = vpop.f32.mrf.mxu0
    %v10641 = vadd.f32 %v10600, %v10640
    %v10642 = vpop.f32.mrf.mxu0
    %v10643 = vpop.f32.mrf.mxu0
    %10644 = vdwg.mxu0
    %v10645 = vmax.f32 %v10475, 0.0
    %v10646 = vmax.f32 %v10477, 0.0
    %v10647 = vmax.f32 %v10639, 0.0
    %v10648 = vmax.f32 %v10641, 0.0
    %v10649 = vpack.c.bf16 %v10645, %v10645
    %v10650 = vpack.c.bf16 %v10646, %v10646
    %v10651 = vpack.c.bf16 %v10647, %v10647
    %v10652 = vpack.c.bf16 %v10648, %v10648
    %v10653 = vld [vmem:[#allocation5] sm:$0xff]
    %v10654 = vld [vmem:[#allocation5 + $0x8] sm:$0xff]
    %v10655 = vld [vmem:[#allocation5 + $0x10] sm:$0xff]
    %v10656 = vld [vmem:[#allocation5 + $0x18] sm:$0xff]
    %v10657 = vld [vmem:[#allocation5 + $0x20] sm:$0xff]
    %v10658 = vld [vmem:[#allocation5 + $0x28] sm:$0xff]
    %v10659 = vld [vmem:[#allocation5 + $0x30] sm:$0xff]
    %v10660 = vld [vmem:[#allocation5 + $0x38] sm:$0xff]
    %v10661 = vld [vmem:[#allocation5 + $0x40] sm:$0xff]
    %v10662 = vld [vmem:[#allocation5 + $0x48] sm:$0xff]
    %v10663 = vld [vmem:[#allocation5 + $0x50] sm:$0xff]
    %v10664 = vld [vmem:[#allocation5 + $0x58] sm:$0xff]
    %v10665 = vld [vmem:[#allocation5 + $0x60] sm:$0xff]
    %v10666 = vld [vmem:[#allocation5 + $0x68] sm:$0xff]
    %v10667 = vld [vmem:[#allocation5 + $0x70] sm:$0xff]
    %v10668 = vld [vmem:[#allocation5 + $0x78] sm:$0xff]
    %v10669 = vld [vmem:[#allocation5 + $0x80] sm:$0xff]
    %v10670 = vld [vmem:[#allocation5 + $0x88] sm:$0xff]
    %v10671 = vld [vmem:[#allocation5 + $0x90] sm:$0xff]
    %v10672 = vld [vmem:[#allocation5 + $0x98] sm:$0xff]
    %v10673 = vld [vmem:[#allocation5 + $0xa0] sm:$0xff]
    %v10674 = vld [vmem:[#allocation5 + $0xa8] sm:$0xff]
    %v10675 = vld [vmem:[#allocation5 + $0xb0] sm:$0xff]
    %v10676 = vld [vmem:[#allocation5 + $0xb8] sm:$0xff]
    %v10677 = vld [vmem:[#allocation5 + $0xc0] sm:$0xff]
    %v10678 = vld [vmem:[#allocation5 + $0xc8] sm:$0xff]
    %v10679 = vld [vmem:[#allocation5 + $0xd0] sm:$0xff]
    %v10680 = vld [vmem:[#allocation5 + $0xd8] sm:$0xff]
    %v10681 = vld [vmem:[#allocation5 + $0xe0] sm:$0xff]
    %v10682 = vld [vmem:[#allocation5 + $0xe8] sm:$0xff]
    %v10683 = vld [vmem:[#allocation5 + $0xf0] sm:$0xff]
    %v10684 = vld [vmem:[#allocation5 + $0xf8] sm:$0xff]
    %v10685 = vld [vmem:[#allocation5 + $0x100] sm:$0xff]
    %v10686 = vld [vmem:[#allocation5 + $0x108] sm:$0xff]
    %v10687 = vld [vmem:[#allocation5 + $0x110] sm:$0xff]
    %v10688 = vld [vmem:[#allocation5 + $0x118] sm:$0xff]
    %v10689 = vld [vmem:[#allocation5 + $0x120] sm:$0xff]
    %v10690 = vld [vmem:[#allocation5 + $0x128] sm:$0xff]
    %v10691 = vld [vmem:[#allocation5 + $0x130] sm:$0xff]
    %v10692 = vld [vmem:[#allocation5 + $0x138] sm:$0xff]
    %v10693 = vld [vmem:[#allocation5 + $0x140] sm:$0xff]
    %v10694 = vld [vmem:[#allocation5 + $0x148] sm:$0xff]
    %v10695 = vld [vmem:[#allocation5 + $0x150] sm:$0xff]
    %v10696 = vld [vmem:[#allocation5 + $0x158] sm:$0xff]
    %v10697 = vld [vmem:[#allocation5 + $0x160] sm:$0xff]
    %v10698 = vld [vmem:[#allocation5 + $0x168] sm:$0xff]
    %v10699 = vld [vmem:[#allocation5 + $0x170] sm:$0xff]
    %v10700 = vld [vmem:[#allocation5 + $0x178] sm:$0xff]
    %v10701 = vld [vmem:[#allocation5 + $0x180] sm:$0xff]
    %v10702 = vld [vmem:[#allocation5 + $0x188] sm:$0xff]
    %v10703 = vld [vmem:[#allocation5 + $0x190] sm:$0xff]
    %v10704 = vld [vmem:[#allocation5 + $0x198] sm:$0xff]
    %v10705 = vld [vmem:[#allocation5 + $0x1a0] sm:$0xff]
    %v10706 = vld [vmem:[#allocation5 + $0x1a8] sm:$0xff]
    %v10707 = vld [vmem:[#allocation5 + $0x1b0] sm:$0xff]
    %v10708 = vld [vmem:[#allocation5 + $0x1b8] sm:$0xff]
    %v10709 = vld [vmem:[#allocation5 + $0x1c0] sm:$0xff]
    %v10710 = vld [vmem:[#allocation5 + $0x1c8] sm:$0xff]
    %v10711 = vld [vmem:[#allocation5 + $0x1d0] sm:$0xff]
    %v10712 = vld [vmem:[#allocation5 + $0x1d8] sm:$0xff]
    %v10713 = vld [vmem:[#allocation5 + $0x1e0] sm:$0xff]
    %v10714 = vld [vmem:[#allocation5 + $0x1e8] sm:$0xff]
    %v10715 = vld [vmem:[#allocation5 + $0x1f0] sm:$0xff]
    %v10716 = vld [vmem:[#allocation5 + $0x1f8] sm:$0xff]
    %v10717 = vld [vmem:[%s22] sm:$0x3]
    %v10719 = vlaneseq
    %v10720 = vshrl.u32 %v10719, 7
    %v10721 = vsub.s32 0, %v10720
    %v10722 = vrot.slane %v10717, %v10721
    %v10723 = vlaneseq
    %v10724 = vshrl.u32 %v10723, 7
    %v10725 = vsub.s32 1, %v10724
    %v10726 = vrot.slane %v10717, %v10725
    %v10793 = vunpack.c.l.b16 %v10653
    %v10794 = vunpack.c.h.b16 %v10653
    %v10795 = vunpack.c.l.b16 %v10654
    %v10796 = vunpack.c.h.b16 %v10654
    %v10797 = vunpack.c.l.b16 %v10655
    %v10798 = vunpack.c.h.b16 %v10655
    %v10799 = vunpack.c.l.b16 %v10656
    %v10800 = vunpack.c.h.b16 %v10656
    %v10801 = vunpack.c.l.b16 %v10657
    %v10802 = vunpack.c.h.b16 %v10657
    %v10803 = vunpack.c.l.b16 %v10658
    %v10804 = vunpack.c.h.b16 %v10658
    %v10805 = vunpack.c.l.b16 %v10659
    %v10806 = vunpack.c.h.b16 %v10659
    %v10807 = vunpack.c.l.b16 %v10660
    %v10808 = vunpack.c.h.b16 %v10660
    %v10809 = vunpack.c.l.b16 %v10661
    %v10810 = vunpack.c.h.b16 %v10661
    %v10811 = vunpack.c.l.b16 %v10662
    %v10812 = vunpack.c.h.b16 %v10662
    %v10813 = vunpack.c.l.b16 %v10663
    %v10814 = vunpack.c.h.b16 %v10663
    %v10815 = vunpack.c.l.b16 %v10664
    %v10816 = vunpack.c.h.b16 %v10664
    %v10817 = vunpack.c.l.b16 %v10665
    %v10818 = vunpack.c.h.b16 %v10665
    %v10819 = vunpack.c.l.b16 %v10666
    %v10820 = vunpack.c.h.b16 %v10666
    %v10821 = vunpack.c.l.b16 %v10667
    %v10822 = vunpack.c.h.b16 %v10667
    %v10823 = vunpack.c.l.b16 %v10668
    %v10824 = vunpack.c.h.b16 %v10668
    %v10825 = vunpack.c.l.b16 %v10669
    %v10826 = vunpack.c.h.b16 %v10669
    %v10827 = vunpack.c.l.b16 %v10670
    %v10828 = vunpack.c.h.b16 %v10670
    %v10829 = vunpack.c.l.b16 %v10671
    %v10830 = vunpack.c.h.b16 %v10671
    %v10831 = vunpack.c.l.b16 %v10672
    %v10832 = vunpack.c.h.b16 %v10672
    %v10833 = vunpack.c.l.b16 %v10673
    %v10834 = vunpack.c.h.b16 %v10673
    %v10835 = vunpack.c.l.b16 %v10674
    %v10836 = vunpack.c.h.b16 %v10674
    %v10837 = vunpack.c.l.b16 %v10675
    %v10838 = vunpack.c.h.b16 %v10675
    %v10839 = vunpack.c.l.b16 %v10676
    %v10840 = vunpack.c.h.b16 %v10676
    %v10841 = vunpack.c.l.b16 %v10677
    %v10842 = vunpack.c.h.b16 %v10677
    %v10843 = vunpack.c.l.b16 %v10678
    %v10844 = vunpack.c.h.b16 %v10678
    %v10845 = vunpack.c.l.b16 %v10679
    %v10846 = vunpack.c.h.b16 %v10679
    %v10847 = vunpack.c.l.b16 %v10680
    %v10848 = vunpack.c.h.b16 %v10680
    %v10849 = vunpack.c.l.b16 %v10681
    %v10850 = vunpack.c.h.b16 %v10681
    %v10851 = vunpack.c.l.b16 %v10682
    %v10852 = vunpack.c.h.b16 %v10682
    %v10853 = vunpack.c.l.b16 %v10683
    %v10854 = vunpack.c.h.b16 %v10683
    %v10855 = vunpack.c.l.b16 %v10684
    %v10856 = vunpack.c.h.b16 %v10684
    %v10857 = vunpack.c.l.b16 %v10685
    %v10858 = vunpack.c.h.b16 %v10685
    %v10859 = vunpack.c.l.b16 %v10686
    %v10860 = vunpack.c.h.b16 %v10686
    %v10861 = vunpack.c.l.b16 %v10687
    %v10862 = vunpack.c.h.b16 %v10687
    %v10863 = vunpack.c.l.b16 %v10688
    %v10864 = vunpack.c.h.b16 %v10688
    %v10865 = vunpack.c.l.b16 %v10689
    %v10866 = vunpack.c.h.b16 %v10689
    %v10867 = vunpack.c.l.b16 %v10690
    %v10868 = vunpack.c.h.b16 %v10690
    %v10869 = vunpack.c.l.b16 %v10691
    %v10870 = vunpack.c.h.b16 %v10691
    %v10871 = vunpack.c.l.b16 %v10692
    %v10872 = vunpack.c.h.b16 %v10692
    %v10873 = vunpack.c.l.b16 %v10693
    %v10874 = vunpack.c.h.b16 %v10693
    %v10875 = vunpack.c.l.b16 %v10694
    %v10876 = vunpack.c.h.b16 %v10694
    %v10877 = vunpack.c.l.b16 %v10695
    %v10878 = vunpack.c.h.b16 %v10695
    %v10879 = vunpack.c.l.b16 %v10696
    %v10880 = vunpack.c.h.b16 %v10696
    %v10881 = vunpack.c.l.b16 %v10697
    %v10882 = vunpack.c.h.b16 %v10697
    %v10883 = vunpack.c.l.b16 %v10698
    %v10884 = vunpack.c.h.b16 %v10698
    %v10885 = vunpack.c.l.b16 %v10699
    %v10886 = vunpack.c.h.b16 %v10699
    %v10887 = vunpack.c.l.b16 %v10700
    %v10888 = vunpack.c.h.b16 %v10700
    %v10889 = vunpack.c.l.b16 %v10701
    %v10890 = vunpack.c.h.b16 %v10701
    %v10891 = vunpack.c.l.b16 %v10702
    %v10892 = vunpack.c.h.b16 %v10702
    %v10893 = vunpack.c.l.b16 %v10703
    %v10894 = vunpack.c.h.b16 %v10703
    %v10895 = vunpack.c.l.b16 %v10704
    %v10896 = vunpack.c.h.b16 %v10704
    %v10897 = vunpack.c.l.b16 %v10705
    %v10898 = vunpack.c.h.b16 %v10705
    %v10899 = vunpack.c.l.b16 %v10706
    %v10900 = vunpack.c.h.b16 %v10706
    %v10901 = vunpack.c.l.b16 %v10707
    %v10902 = vunpack.c.h.b16 %v10707
    %v10903 = vunpack.c.l.b16 %v10708
    %v10904 = vunpack.c.h.b16 %v10708
    %v10905 = vunpack.c.l.b16 %v10709
    %v10906 = vunpack.c.h.b16 %v10709
    %v10907 = vunpack.c.l.b16 %v10710
    %v10908 = vunpack.c.h.b16 %v10710
    %v10909 = vunpack.c.l.b16 %v10711
    %v10910 = vunpack.c.h.b16 %v10711
    %v10911 = vunpack.c.l.b16 %v10712
    %v10912 = vunpack.c.h.b16 %v10712
    %v10913 = vunpack.c.l.b16 %v10713
    %v10914 = vunpack.c.h.b16 %v10713
    %v10915 = vunpack.c.l.b16 %v10714
    %v10916 = vunpack.c.h.b16 %v10714
    %v10917 = vunpack.c.l.b16 %v10715
    %v10918 = vunpack.c.h.b16 %v10715
    %v10919 = vunpack.c.l.b16 %v10716
    %v10920 = vunpack.c.h.b16 %v10716
    %v10921 = vpack.c.b16 %v10795, %v10793
    %v10922 = vpack.c.b16 %v10796, %v10794
    %v10923 = vpack.c.b16 %v10799, %v10797
    %v10924 = vpack.c.b16 %v10800, %v10798
    %v10925 = vpack.c.b16 %v10803, %v10801
    %v10926 = vpack.c.b16 %v10804, %v10802
    %v10927 = vpack.c.b16 %v10807, %v10805
    %v10928 = vpack.c.b16 %v10808, %v10806
    %v10929 = vpack.c.b16 %v10811, %v10809
    %v10930 = vpack.c.b16 %v10812, %v10810
    %v10931 = vpack.c.b16 %v10815, %v10813
    %v10932 = vpack.c.b16 %v10816, %v10814
    %v10933 = vpack.c.b16 %v10819, %v10817
    %v10934 = vpack.c.b16 %v10820, %v10818
    %v10935 = vpack.c.b16 %v10823, %v10821
    %v10936 = vpack.c.b16 %v10824, %v10822
    %v10937 = vpack.c.b16 %v10827, %v10825
    %v10938 = vpack.c.b16 %v10828, %v10826
    %v10939 = vpack.c.b16 %v10831, %v10829
    %v10940 = vpack.c.b16 %v10832, %v10830
    %v10941 = vpack.c.b16 %v10835, %v10833
    %v10942 = vpack.c.b16 %v10836, %v10834
    %v10943 = vpack.c.b16 %v10839, %v10837
    %v10944 = vpack.c.b16 %v10840, %v10838
    %v10945 = vpack.c.b16 %v10843, %v10841
    %v10946 = vpack.c.b16 %v10844, %v10842
    %v10947 = vpack.c.b16 %v10847, %v10845
    %v10948 = vpack.c.b16 %v10848, %v10846
    %v10949 = vpack.c.b16 %v10851, %v10849
    %v10950 = vpack.c.b16 %v10852, %v10850
    %v10951 = vpack.c.b16 %v10855, %v10853
    %v10952 = vpack.c.b16 %v10856, %v10854
    %v10953 = vpack.c.b16 %v10859, %v10857
    %v10954 = vpack.c.b16 %v10860, %v10858
    %v10955 = vpack.c.b16 %v10863, %v10861
    %v10956 = vpack.c.b16 %v10864, %v10862
    %v10957 = vpack.c.b16 %v10867, %v10865
    %v10958 = vpack.c.b16 %v10868, %v10866
    %v10959 = vpack.c.b16 %v10871, %v10869
    %v10960 = vpack.c.b16 %v10872, %v10870
    %v10961 = vpack.c.b16 %v10875, %v10873
    %v10962 = vpack.c.b16 %v10876, %v10874
    %v10963 = vpack.c.b16 %v10879, %v10877
    %v10964 = vpack.c.b16 %v10880, %v10878
    %v10965 = vpack.c.b16 %v10883, %v10881
    %v10966 = vpack.c.b16 %v10884, %v10882
    %v10967 = vpack.c.b16 %v10887, %v10885
    %v10968 = vpack.c.b16 %v10888, %v10886
    %v10969 = vpack.c.b16 %v10891, %v10889
    %v10970 = vpack.c.b16 %v10892, %v10890
    %v10971 = vpack.c.b16 %v10895, %v10893
    %v10972 = vpack.c.b16 %v10896, %v10894
    %v10973 = vpack.c.b16 %v10899, %v10897
    %v10974 = vpack.c.b16 %v10900, %v10898
    %v10975 = vpack.c.b16 %v10903, %v10901
    %v10976 = vpack.c.b16 %v10904, %v10902
    %v10977 = vpack.c.b16 %v10907, %v10905
    %v10978 = vpack.c.b16 %v10908, %v10906
    %v10979 = vpack.c.b16 %v10911, %v10909
    %v10980 = vpack.c.b16 %v10912, %v10910
    %v10981 = vpack.c.b16 %v10915, %v10913
    %v10982 = vpack.c.b16 %v10916, %v10914
    %v10983 = vpack.c.b16 %v10919, %v10917
    %v10984 = vpack.c.b16 %v10920, %v10918
    %11049 = vmatprep.subr.bf16.mxu0 %v10936
    %11050 = vmatpush1.bf16.msra.mxu0 %v10935
    %11051 = vmatprep.subr.bf16.mxu0 %v10934
    %11052 = vmatpush1.bf16.msra.mxu0 %v10933
    %11053 = vmatprep.subr.bf16.mxu0 %v10932
    %11054 = vmatpush1.bf16.msra.mxu0 %v10931
    %11055 = vmatprep.subr.bf16.mxu0 %v10930
    %11056 = vmatpush1.bf16.msra.mxu0 %v10929
    %11057 = vmatprep.subr.bf16.mxu0 %v10928
    %11058 = vmatpush1.bf16.msra.mxu0 %v10927
    %11059 = vmatprep.subr.bf16.mxu0 %v10926
    %11060 = vmatpush1.bf16.msra.mxu0 %v10925
    %11061 = vmatprep.subr.bf16.mxu0 %v10924
    %11062 = vmatpush1.bf16.msra.mxu0 %v10923
    %11063 = vmatprep.subr.bf16.mxu0 %v10922
    %11064 = vmatpush1.bf16.msra.mxu0 %v10921
    %11065 = vmatprep.subr.bf16.mxu0 %v10952
    %11066 = vmatpush2.bf16.msra.mxu0 %v10951
    %11067 = vmatprep.subr.bf16.mxu0 %v10950
    %11068 = vmatpush2.bf16.msra.mxu0 %v10949
    %11069 = vmatprep.subr.bf16.mxu0 %v10948
    %11070 = vmatpush2.bf16.msra.mxu0 %v10947
    %11071 = vmatprep.subr.bf16.mxu0 %v10946
    %11072 = vmatpush2.bf16.msra.mxu0 %v10945
    %11073 = vmatprep.subr.bf16.mxu0 %v10944
    %11074 = vmatpush2.bf16.msra.mxu0 %v10943
    %11075 = vmatprep.subr.bf16.mxu0 %v10942
    %11076 = vmatpush2.bf16.msra.mxu0 %v10941
    %11077 = vmatprep.subr.bf16.mxu0 %v10940
    %11078 = vmatpush2.bf16.msra.mxu0 %v10939
    %11079 = vmatprep.subr.bf16.mxu0 %v10938
    %11080 = vmatpush2.bf16.msra.mxu0 %v10937
    %11081 = vmatprep.mubr.bf16.mxu0 %v10650
    %11082 = vmatmul.mubr.bf16.gmra.mxu0 %v10649
    %v11083 = vpop.f32.mrf.mxu0
    %v11084 = vadd.f32 %v10722, %v11083
    %v11085 = vpop.f32.mrf.mxu0
    %v11086 = vadd.f32 %v10726, %v11085
    %v11087 = vpop.f32.mrf.mxu0
    %v11088 = vpop.f32.mrf.mxu0
    %11089 = vdwg.mxu0
    %11090 = vmatprep.subr.bf16.mxu0 %v10968
    %11091 = vmatpush1.bf16.msra.mxu0 %v10967
    %11092 = vmatprep.subr.bf16.mxu0 %v10966
    %11093 = vmatpush1.bf16.msra.mxu0 %v10965
    %11094 = vmatprep.subr.bf16.mxu0 %v10964
    %11095 = vmatpush1.bf16.msra.mxu0 %v10963
    %11096 = vmatprep.subr.bf16.mxu0 %v10962
    %11097 = vmatpush1.bf16.msra.mxu0 %v10961
    %11098 = vmatprep.subr.bf16.mxu0 %v10960
    %11099 = vmatpush1.bf16.msra.mxu0 %v10959
    %11100 = vmatprep.subr.bf16.mxu0 %v10958
    %11101 = vmatpush1.bf16.msra.mxu0 %v10957
    %11102 = vmatprep.subr.bf16.mxu0 %v10956
    %11103 = vmatpush1.bf16.msra.mxu0 %v10955
    %11104 = vmatprep.subr.bf16.mxu0 %v10954
    %11105 = vmatpush1.bf16.msra.mxu0 %v10953
    %11106 = vmatprep.subr.bf16.mxu0 %v10984
    %11107 = vmatpush2.bf16.msra.mxu0 %v10983
    %11108 = vmatprep.subr.bf16.mxu0 %v10982
    %11109 = vmatpush2.bf16.msra.mxu0 %v10981
    %11110 = vmatprep.subr.bf16.mxu0 %v10980
    %11111 = vmatpush2.bf16.msra.mxu0 %v10979
    %11112 = vmatprep.subr.bf16.mxu0 %v10978
    %11113 = vmatpush2.bf16.msra.mxu0 %v10977
    %11114 = vmatprep.subr.bf16.mxu0 %v10976
    %11115 = vmatpush2.bf16.msra.mxu0 %v10975
    %11116 = vmatprep.subr.bf16.mxu0 %v10974
    %11117 = vmatpush2.bf16.msra.mxu0 %v10973
    %11118 = vmatprep.subr.bf16.mxu0 %v10972
    %11119 = vmatpush2.bf16.msra.mxu0 %v10971
    %11120 = vmatprep.subr.bf16.mxu0 %v10970
    %11121 = vmatpush2.bf16.msra.mxu0 %v10969
    %11122 = vmatprep.mubr.bf16.mxu0 %v10652
    %11123 = vmatmul.mubr.bf16.gmra.mxu0 %v10651
    %v11124 = vpop.f32.mrf.mxu0
    %v11125 = vadd.f32 %v11084, %v11124
    %v11126 = vpop.f32.mrf.mxu0
    %v11127 = vadd.f32 %v11086, %v11126
    %v11128 = vpop.f32.mrf.mxu0
    %v11129 = vpop.f32.mrf.mxu0
    %11130 = vdwg.mxu0
    %v11131 = vmax.f32 %v11125, 0.0
    %v11132 = vmax.f32 %v11127, 0.0
    %v11133 = vpack.c.bf16 %v11131, %v11131
    %v11134 = vpack.c.bf16 %v11132, %v11132
    %v11135 = vld [vmem:[#allocation6] sm:$0xff]
    %v11136 = vld [vmem:[#allocation6 + $0x8] sm:$0xff]
    %v11137 = vld [vmem:[#allocation6 + $0x10] sm:$0xff]
    %v11138 = vld [vmem:[#allocation6 + $0x18] sm:$0xff]
    %v11139 = vld [vmem:[#allocation6 + $0x20] sm:$0xff]
    %v11140 = vld [vmem:[#allocation6 + $0x28] sm:$0xff]
    %v11141 = vld [vmem:[#allocation6 + $0x30] sm:$0xff]
    %v11142 = vld [vmem:[#allocation6 + $0x38] sm:$0xff]
    %v11143 = vld [vmem:[#allocation6 + $0x40] sm:$0xff]
    %v11144 = vld [vmem:[#allocation6 + $0x48] sm:$0xff]
    %v11145 = vld [vmem:[#allocation6 + $0x50] sm:$0xff]
    %v11146 = vld [vmem:[#allocation6 + $0x58] sm:$0xff]
    %v11147 = vld [vmem:[#allocation6 + $0x60] sm:$0xff]
    %v11148 = vld [vmem:[#allocation6 + $0x68] sm:$0xff]
    %v11149 = vld [vmem:[#allocation6 + $0x70] sm:$0xff]
    %v11150 = vld [vmem:[#allocation6 + $0x78] sm:$0xff]
    %v11151 = vld [vmem:[#allocation6 + $0x80] sm:$0xff]
    %v11152 = vld [vmem:[#allocation6 + $0x88] sm:$0xff]
    %v11153 = vld [vmem:[#allocation6 + $0x90] sm:$0xff]
    %v11154 = vld [vmem:[#allocation6 + $0x98] sm:$0xff]
    %v11155 = vld [vmem:[#allocation6 + $0xa0] sm:$0xff]
    %v11156 = vld [vmem:[#allocation6 + $0xa8] sm:$0xff]
    %v11157 = vld [vmem:[#allocation6 + $0xb0] sm:$0xff]
    %v11158 = vld [vmem:[#allocation6 + $0xb8] sm:$0xff]
    %v11159 = vld [vmem:[#allocation6 + $0xc0] sm:$0xff]
    %v11160 = vld [vmem:[#allocation6 + $0xc8] sm:$0xff]
    %v11161 = vld [vmem:[#allocation6 + $0xd0] sm:$0xff]
    %v11162 = vld [vmem:[#allocation6 + $0xd8] sm:$0xff]
    %v11163 = vld [vmem:[#allocation6 + $0xe0] sm:$0xff]
    %v11164 = vld [vmem:[#allocation6 + $0xe8] sm:$0xff]
    %v11165 = vld [vmem:[#allocation6 + $0xf0] sm:$0xff]
    %v11166 = vld [vmem:[#allocation6 + $0xf8] sm:$0xff]
    %v11167 = vld [vmem:[%s24] sm:$0x3]
    %v11169 = vlaneseq
    %v11170 = vshrl.u32 %v11169, 7
    %v11171 = vsub.s32 0, %v11170
    %v11172 = vrot.slane %v11167, %v11171
    %v11173 = vlaneseq
    %v11174 = vshrl.u32 %v11173, 7
    %v11175 = vsub.s32 1, %v11174
    %v11176 = vrot.slane %v11167, %v11175
    %v11211 = vunpack.c.l.b16 %v11135
    %v11212 = vunpack.c.h.b16 %v11135
    %v11213 = vunpack.c.l.b16 %v11136
    %v11214 = vunpack.c.h.b16 %v11136
    %v11215 = vunpack.c.l.b16 %v11137
    %v11216 = vunpack.c.h.b16 %v11137
    %v11217 = vunpack.c.l.b16 %v11138
    %v11218 = vunpack.c.h.b16 %v11138
    %v11219 = vunpack.c.l.b16 %v11139
    %v11220 = vunpack.c.h.b16 %v11139
    %v11221 = vunpack.c.l.b16 %v11140
    %v11222 = vunpack.c.h.b16 %v11140
    %v11223 = vunpack.c.l.b16 %v11141
    %v11224 = vunpack.c.h.b16 %v11141
    %v11225 = vunpack.c.l.b16 %v11142
    %v11226 = vunpack.c.h.b16 %v11142
    %v11227 = vunpack.c.l.b16 %v11143
    %v11228 = vunpack.c.h.b16 %v11143
    %v11229 = vunpack.c.l.b16 %v11144
    %v11230 = vunpack.c.h.b16 %v11144
    %v11231 = vunpack.c.l.b16 %v11145
    %v11232 = vunpack.c.h.b16 %v11145
    %v11233 = vunpack.c.l.b16 %v11146
    %v11234 = vunpack.c.h.b16 %v11146
    %v11235 = vunpack.c.l.b16 %v11147
    %v11236 = vunpack.c.h.b16 %v11147
    %v11237 = vunpack.c.l.b16 %v11148
    %v11238 = vunpack.c.h.b16 %v11148
    %v11239 = vunpack.c.l.b16 %v11149
    %v11240 = vunpack.c.h.b16 %v11149
    %v11241 = vunpack.c.l.b16 %v11150
    %v11242 = vunpack.c.h.b16 %v11150
    %v11243 = vunpack.c.l.b16 %v11151
    %v11244 = vunpack.c.h.b16 %v11151
    %v11245 = vunpack.c.l.b16 %v11152
    %v11246 = vunpack.c.h.b16 %v11152
    %v11247 = vunpack.c.l.b16 %v11153
    %v11248 = vunpack.c.h.b16 %v11153
    %v11249 = vunpack.c.l.b16 %v11154
    %v11250 = vunpack.c.h.b16 %v11154
    %v11251 = vunpack.c.l.b16 %v11155
    %v11252 = vunpack.c.h.b16 %v11155
    %v11253 = vunpack.c.l.b16 %v11156
    %v11254 = vunpack.c.h.b16 %v11156
    %v11255 = vunpack.c.l.b16 %v11157
    %v11256 = vunpack.c.h.b16 %v11157
    %v11257 = vunpack.c.l.b16 %v11158
    %v11258 = vunpack.c.h.b16 %v11158
    %v11259 = vunpack.c.l.b16 %v11159
    %v11260 = vunpack.c.h.b16 %v11159
    %v11261 = vunpack.c.l.b16 %v11160
    %v11262 = vunpack.c.h.b16 %v11160
    %v11263 = vunpack.c.l.b16 %v11161
    %v11264 = vunpack.c.h.b16 %v11161
    %v11265 = vunpack.c.l.b16 %v11162
    %v11266 = vunpack.c.h.b16 %v11162
    %v11267 = vunpack.c.l.b16 %v11163
    %v11268 = vunpack.c.h.b16 %v11163
    %v11269 = vunpack.c.l.b16 %v11164
    %v11270 = vunpack.c.h.b16 %v11164
    %v11271 = vunpack.c.l.b16 %v11165
    %v11272 = vunpack.c.h.b16 %v11165
    %v11273 = vunpack.c.l.b16 %v11166
    %v11274 = vunpack.c.h.b16 %v11166
    %v11275 = vpack.c.b16 %v11213, %v11211
    %v11276 = vpack.c.b16 %v11214, %v11212
    %v11277 = vpack.c.b16 %v11217, %v11215
    %v11278 = vpack.c.b16 %v11218, %v11216
    %v11279 = vpack.c.b16 %v11221, %v11219
    %v11280 = vpack.c.b16 %v11222, %v11220
    %v11281 = vpack.c.b16 %v11225, %v11223
    %v11282 = vpack.c.b16 %v11226, %v11224
    %v11283 = vpack.c.b16 %v11229, %v11227
    %v11284 = vpack.c.b16 %v11230, %v11228
    %v11285 = vpack.c.b16 %v11233, %v11231
    %v11286 = vpack.c.b16 %v11234, %v11232
    %v11287 = vpack.c.b16 %v11237, %v11235
    %v11288 = vpack.c.b16 %v11238, %v11236
    %v11289 = vpack.c.b16 %v11241, %v11239
    %v11290 = vpack.c.b16 %v11242, %v11240
    %v11291 = vpack.c.b16 %v11245, %v11243
    %v11292 = vpack.c.b16 %v11246, %v11244
    %v11293 = vpack.c.b16 %v11249, %v11247
    %v11294 = vpack.c.b16 %v11250, %v11248
    %v11295 = vpack.c.b16 %v11253, %v11251
    %v11296 = vpack.c.b16 %v11254, %v11252
    %v11297 = vpack.c.b16 %v11257, %v11255
    %v11298 = vpack.c.b16 %v11258, %v11256
    %v11299 = vpack.c.b16 %v11261, %v11259
    %v11300 = vpack.c.b16 %v11262, %v11260
    %v11301 = vpack.c.b16 %v11265, %v11263
    %v11302 = vpack.c.b16 %v11266, %v11264
    %v11303 = vpack.c.b16 %v11269, %v11267
    %v11304 = vpack.c.b16 %v11270, %v11268
    %v11305 = vpack.c.b16 %v11273, %v11271
    %v11306 = vpack.c.b16 %v11274, %v11272
    %11339 = vmatprep.subr.bf16.mxu0 %v11290
    %11340 = vmatpush1.bf16.msra.mxu0 %v11289
    %11341 = vmatprep.subr.bf16.mxu0 %v11288
    %11342 = vmatpush1.bf16.msra.mxu0 %v11287
    %11343 = vmatprep.subr.bf16.mxu0 %v11286
    %11344 = vmatpush1.bf16.msra.mxu0 %v11285
    %11345 = vmatprep.subr.bf16.mxu0 %v11284
    %11346 = vmatpush1.bf16.msra.mxu0 %v11283
    %11347 = vmatprep.subr.bf16.mxu0 %v11282
    %11348 = vmatpush1.bf16.msra.mxu0 %v11281
    %11349 = vmatprep.subr.bf16.mxu0 %v11280
    %11350 = vmatpush1.bf16.msra.mxu0 %v11279
    %11351 = vmatprep.subr.bf16.mxu0 %v11278
    %11352 = vmatpush1.bf16.msra.mxu0 %v11277
    %11353 = vmatprep.subr.bf16.mxu0 %v11276
    %11354 = vmatpush1.bf16.msra.mxu0 %v11275
    %11355 = vmatprep.subr.bf16.mxu0 %v11306
    %11356 = vmatpush2.bf16.msra.mxu0 %v11305
    %11357 = vmatprep.subr.bf16.mxu0 %v11304
    %11358 = vmatpush2.bf16.msra.mxu0 %v11303
    %11359 = vmatprep.subr.bf16.mxu0 %v11302
    %11360 = vmatpush2.bf16.msra.mxu0 %v11301
    %11361 = vmatprep.subr.bf16.mxu0 %v11300
    %11362 = vmatpush2.bf16.msra.mxu0 %v11299
    %11363 = vmatprep.subr.bf16.mxu0 %v11298
    %11364 = vmatpush2.bf16.msra.mxu0 %v11297
    %11365 = vmatprep.subr.bf16.mxu0 %v11296
    %11366 = vmatpush2.bf16.msra.mxu0 %v11295
    %11367 = vmatprep.subr.bf16.mxu0 %v11294
    %11368 = vmatpush2.bf16.msra.mxu0 %v11293
    %11369 = vmatprep.subr.bf16.mxu0 %v11292
    %11370 = vmatpush2.bf16.msra.mxu0 %v11291
    %11371 = vmatprep.mubr.bf16.mxu0 %v11134
    %11372 = vmatmul.mubr.bf16.gmra.mxu0 %v11133
    %v11373 = vpop.f32.mrf.mxu0
    %v11374 = vadd.f32 %v11172, %v11373
    %v11375 = vpop.f32.mrf.mxu0
    %v11376 = vadd.f32 %v11176, %v11375
    %v11377 = vpop.f32.mrf.mxu0
    %v11378 = vpop.f32.mrf.mxu0
    %11379 = vdwg.mxu0
    %v11380 = vmax.f32 %v11374, 0.0
    %v11381 = vmax.f32 %v11376, 0.0
    %v11382 = vpack.c.bf16 %v11380, %v11380
    %v11383 = vpack.c.bf16 %v11381, %v11381
    %v11384 = vld [vmem:[#allocation7] sm:$0xff]
    %v11385 = vld [vmem:[#allocation7 + $0x8] sm:$0xff]
    %v11386 = vld [vmem:[#allocation7 + $0x10] sm:$0xff]
    %v11387 = vld [vmem:[#allocation7 + $0x18] sm:$0xff]
    %v11388 = vld [vmem:[#allocation7 + $0x20] sm:$0xff]
    %v11389 = vld [vmem:[#allocation7 + $0x28] sm:$0xff]
    %v11390 = vld [vmem:[#allocation7 + $0x30] sm:$0xff]
    %v11391 = vld [vmem:[#allocation7 + $0x38] sm:$0xff]
    %v11392 = vld [vmem:[#allocation7 + $0x40] sm:$0xff]
    %v11393 = vld [vmem:[#allocation7 + $0x48] sm:$0xff]
    %v11394 = vld [vmem:[#allocation7 + $0x50] sm:$0xff]
    %v11395 = vld [vmem:[#allocation7 + $0x58] sm:$0xff]
    %v11396 = vld [vmem:[#allocation7 + $0x60] sm:$0xff]
    %v11397 = vld [vmem:[#allocation7 + $0x68] sm:$0xff]
    %v11398 = vld [vmem:[#allocation7 + $0x70] sm:$0xff]
    %v11399 = vld [vmem:[#allocation7 + $0x78] sm:$0xff]
    %v11400 = vld [vmem:[#allocation7 + $0x80] sm:$0xff]
    %v11401 = vld [vmem:[#allocation7 + $0x88] sm:$0xff]
    %v11402 = vld [vmem:[#allocation7 + $0x90] sm:$0xff]
    %v11403 = vld [vmem:[#allocation7 + $0x98] sm:$0xff]
    %v11404 = vld [vmem:[#allocation7 + $0xa0] sm:$0xff]
    %v11405 = vld [vmem:[#allocation7 + $0xa8] sm:$0xff]
    %v11406 = vld [vmem:[#allocation7 + $0xb0] sm:$0xff]
    %v11407 = vld [vmem:[#allocation7 + $0xb8] sm:$0xff]
    %v11408 = vld [vmem:[#allocation7 + $0xc0] sm:$0xff]
    %v11409 = vld [vmem:[#allocation7 + $0xc8] sm:$0xff]
    %v11410 = vld [vmem:[#allocation7 + $0xd0] sm:$0xff]
    %v11411 = vld [vmem:[#allocation7 + $0xd8] sm:$0xff]
    %v11412 = vld [vmem:[#allocation7 + $0xe0] sm:$0xff]
    %v11413 = vld [vmem:[#allocation7 + $0xe8] sm:$0xff]
    %v11414 = vld [vmem:[#allocation7 + $0xf0] sm:$0xff]
    %v11415 = vld [vmem:[#allocation7 + $0xf8] sm:$0xff]
    %v11416 = vld [vmem:[#allocation7 + $0x100] sm:$0xff]
    %v11417 = vld [vmem:[#allocation7 + $0x108] sm:$0xff]
    %v11418 = vld [vmem:[#allocation7 + $0x110] sm:$0xff]
    %v11419 = vld [vmem:[#allocation7 + $0x118] sm:$0xff]
    %v11420 = vld [vmem:[#allocation7 + $0x120] sm:$0xff]
    %v11421 = vld [vmem:[#allocation7 + $0x128] sm:$0xff]
    %v11422 = vld [vmem:[#allocation7 + $0x130] sm:$0xff]
    %v11423 = vld [vmem:[#allocation7 + $0x138] sm:$0xff]
    %v11424 = vld [vmem:[#allocation7 + $0x140] sm:$0xff]
    %v11425 = vld [vmem:[#allocation7 + $0x148] sm:$0xff]
    %v11426 = vld [vmem:[#allocation7 + $0x150] sm:$0xff]
    %v11427 = vld [vmem:[#allocation7 + $0x158] sm:$0xff]
    %v11428 = vld [vmem:[#allocation7 + $0x160] sm:$0xff]
    %v11429 = vld [vmem:[#allocation7 + $0x168] sm:$0xff]
    %v11430 = vld [vmem:[#allocation7 + $0x170] sm:$0xff]
    %v11431 = vld [vmem:[#allocation7 + $0x178] sm:$0xff]
    %v11432 = vld [vmem:[#allocation7 + $0x180] sm:$0xff]
    %v11433 = vld [vmem:[#allocation7 + $0x188] sm:$0xff]
    %v11434 = vld [vmem:[#allocation7 + $0x190] sm:$0xff]
    %v11435 = vld [vmem:[#allocation7 + $0x198] sm:$0xff]
    %v11436 = vld [vmem:[#allocation7 + $0x1a0] sm:$0xff]
    %v11437 = vld [vmem:[#allocation7 + $0x1a8] sm:$0xff]
    %v11438 = vld [vmem:[#allocation7 + $0x1b0] sm:$0xff]
    %v11439 = vld [vmem:[#allocation7 + $0x1b8] sm:$0xff]
    %v11440 = vld [vmem:[#allocation7 + $0x1c0] sm:$0xff]
    %v11441 = vld [vmem:[#allocation7 + $0x1c8] sm:$0xff]
    %v11442 = vld [vmem:[#allocation7 + $0x1d0] sm:$0xff]
    %v11443 = vld [vmem:[#allocation7 + $0x1d8] sm:$0xff]
    %v11444 = vld [vmem:[#allocation7 + $0x1e0] sm:$0xff]
    %v11445 = vld [vmem:[#allocation7 + $0x1e8] sm:$0xff]
    %v11446 = vld [vmem:[#allocation7 + $0x1f0] sm:$0xff]
    %v11447 = vld [vmem:[#allocation7 + $0x1f8] sm:$0xff]
    %v11448 = vld [vmem:[#allocation7 + $0x200] sm:$0xff]
    %v11449 = vld [vmem:[#allocation7 + $0x208] sm:$0xff]
    %v11450 = vld [vmem:[#allocation7 + $0x210] sm:$0xff]
    %v11451 = vld [vmem:[#allocation7 + $0x218] sm:$0xff]
    %v11452 = vld [vmem:[#allocation7 + $0x220] sm:$0xff]
    %v11453 = vld [vmem:[#allocation7 + $0x228] sm:$0xff]
    %v11454 = vld [vmem:[#allocation7 + $0x230] sm:$0xff]
    %v11455 = vld [vmem:[#allocation7 + $0x238] sm:$0xff]
    %v11456 = vld [vmem:[#allocation7 + $0x240] sm:$0xff]
    %v11457 = vld [vmem:[#allocation7 + $0x248] sm:$0xff]
    %v11458 = vld [vmem:[#allocation7 + $0x250] sm:$0xff]
    %v11459 = vld [vmem:[#allocation7 + $0x258] sm:$0xff]
    %v11460 = vld [vmem:[#allocation7 + $0x260] sm:$0xff]
    %v11461 = vld [vmem:[#allocation7 + $0x268] sm:$0xff]
    %v11462 = vld [vmem:[#allocation7 + $0x270] sm:$0xff]
    %v11463 = vld [vmem:[#allocation7 + $0x278] sm:$0xff]
    %v11464 = vld [vmem:[#allocation7 + $0x280] sm:$0xff]
    %v11465 = vld [vmem:[#allocation7 + $0x288] sm:$0xff]
    %v11466 = vld [vmem:[#allocation7 + $0x290] sm:$0xff]
    %v11467 = vld [vmem:[#allocation7 + $0x298] sm:$0xff]
    %v11468 = vld [vmem:[#allocation7 + $0x2a0] sm:$0xff]
    %v11469 = vld [vmem:[#allocation7 + $0x2a8] sm:$0xff]
    %v11470 = vld [vmem:[#allocation7 + $0x2b0] sm:$0xff]
    %v11471 = vld [vmem:[#allocation7 + $0x2b8] sm:$0xff]
    %v11472 = vld [vmem:[#allocation7 + $0x2c0] sm:$0xff]
    %v11473 = vld [vmem:[#allocation7 + $0x2c8] sm:$0xff]
    %v11474 = vld [vmem:[#allocation7 + $0x2d0] sm:$0xff]
    %v11475 = vld [vmem:[#allocation7 + $0x2d8] sm:$0xff]
    %v11476 = vld [vmem:[#allocation7 + $0x2e0] sm:$0xff]
    %v11477 = vld [vmem:[#allocation7 + $0x2e8] sm:$0xff]
    %v11478 = vld [vmem:[#allocation7 + $0x2f0] sm:$0xff]
    %v11479 = vld [vmem:[#allocation7 + $0x2f8] sm:$0xff]
    %v11480 = vld [vmem:[%s26] sm:$0x3f]
    %v11482 = vlaneseq
    %v11483 = vshrl.u32 %v11482, 7
    %v11484 = vsub.s32 0, %v11483
    %v11485 = vrot.slane %v11480, %v11484
    %v11486 = vlaneseq
    %v11487 = vshrl.u32 %v11486, 7
    %v11488 = vsub.s32 1, %v11487
    %v11489 = vrot.slane %v11480, %v11488
    %v11490 = vlaneseq
    %v11491 = vshrl.u32 %v11490, 7
    %v11492 = vsub.s32 2, %v11491
    %v11493 = vrot.slane %v11480, %v11492
    %v11494 = vlaneseq
    %v11495 = vshrl.u32 %v11494, 7
    %v11496 = vsub.s32 3, %v11495
    %v11497 = vrot.slane %v11480, %v11496
    %v11498 = vlaneseq
    %v11499 = vshrl.u32 %v11498, 7
    %v11500 = vsub.s32 4, %v11499
    %v11501 = vrot.slane %v11480, %v11500
    %v11502 = vlaneseq
    %v11503 = vshrl.u32 %v11502, 7
    %v11504 = vsub.s32 5, %v11503
    %v11505 = vrot.slane %v11480, %v11504
    %v11608 = vunpack.c.l.b16 %v11384
    %v11609 = vunpack.c.h.b16 %v11384
    %v11610 = vunpack.c.l.b16 %v11385
    %v11611 = vunpack.c.h.b16 %v11385
    %v11612 = vunpack.c.l.b16 %v11386
    %v11613 = vunpack.c.h.b16 %v11386
    %v11614 = vunpack.c.l.b16 %v11387
    %v11615 = vunpack.c.h.b16 %v11387
    %v11616 = vunpack.c.l.b16 %v11388
    %v11617 = vunpack.c.h.b16 %v11388
    %v11618 = vunpack.c.l.b16 %v11389
    %v11619 = vunpack.c.h.b16 %v11389
    %v11620 = vunpack.c.l.b16 %v11390
    %v11621 = vunpack.c.h.b16 %v11390
    %v11622 = vunpack.c.l.b16 %v11391
    %v11623 = vunpack.c.h.b16 %v11391
    %v11624 = vunpack.c.l.b16 %v11392
    %v11625 = vunpack.c.h.b16 %v11392
    %v11626 = vunpack.c.l.b16 %v11393
    %v11627 = vunpack.c.h.b16 %v11393
    %v11628 = vunpack.c.l.b16 %v11394
    %v11629 = vunpack.c.h.b16 %v11394
    %v11630 = vunpack.c.l.b16 %v11395
    %v11631 = vunpack.c.h.b16 %v11395
    %v11632 = vunpack.c.l.b16 %v11396
    %v11633 = vunpack.c.h.b16 %v11396
    %v11634 = vunpack.c.l.b16 %v11397
    %v11635 = vunpack.c.h.b16 %v11397
    %v11636 = vunpack.c.l.b16 %v11398
    %v11637 = vunpack.c.h.b16 %v11398
    %v11638 = vunpack.c.l.b16 %v11399
    %v11639 = vunpack.c.h.b16 %v11399
    %v11640 = vunpack.c.l.b16 %v11400
    %v11641 = vunpack.c.h.b16 %v11400
    %v11642 = vunpack.c.l.b16 %v11401
    %v11643 = vunpack.c.h.b16 %v11401
    %v11644 = vunpack.c.l.b16 %v11402
    %v11645 = vunpack.c.h.b16 %v11402
    %v11646 = vunpack.c.l.b16 %v11403
    %v11647 = vunpack.c.h.b16 %v11403
    %v11648 = vunpack.c.l.b16 %v11404
    %v11649 = vunpack.c.h.b16 %v11404
    %v11650 = vunpack.c.l.b16 %v11405
    %v11651 = vunpack.c.h.b16 %v11405
    %v11652 = vunpack.c.l.b16 %v11406
    %v11653 = vunpack.c.h.b16 %v11406
    %v11654 = vunpack.c.l.b16 %v11407
    %v11655 = vunpack.c.h.b16 %v11407
    %v11656 = vunpack.c.l.b16 %v11408
    %v11657 = vunpack.c.h.b16 %v11408
    %v11658 = vunpack.c.l.b16 %v11409
    %v11659 = vunpack.c.h.b16 %v11409
    %v11660 = vunpack.c.l.b16 %v11410
    %v11661 = vunpack.c.h.b16 %v11410
    %v11662 = vunpack.c.l.b16 %v11411
    %v11663 = vunpack.c.h.b16 %v11411
    %v11664 = vunpack.c.l.b16 %v11412
    %v11665 = vunpack.c.h.b16 %v11412
    %v11666 = vunpack.c.l.b16 %v11413
    %v11667 = vunpack.c.h.b16 %v11413
    %v11668 = vunpack.c.l.b16 %v11414
    %v11669 = vunpack.c.h.b16 %v11414
    %v11670 = vunpack.c.l.b16 %v11415
    %v11671 = vunpack.c.h.b16 %v11415
    %v11672 = vunpack.c.l.b16 %v11416
    %v11673 = vunpack.c.h.b16 %v11416
    %v11674 = vunpack.c.l.b16 %v11417
    %v11675 = vunpack.c.h.b16 %v11417
    %v11676 = vunpack.c.l.b16 %v11418
    %v11677 = vunpack.c.h.b16 %v11418
    %v11678 = vunpack.c.l.b16 %v11419
    %v11679 = vunpack.c.h.b16 %v11419
    %v11680 = vunpack.c.l.b16 %v11420
    %v11681 = vunpack.c.h.b16 %v11420
    %v11682 = vunpack.c.l.b16 %v11421
    %v11683 = vunpack.c.h.b16 %v11421
    %v11684 = vunpack.c.l.b16 %v11422
    %v11685 = vunpack.c.h.b16 %v11422
    %v11686 = vunpack.c.l.b16 %v11423
    %v11687 = vunpack.c.h.b16 %v11423
    %v11688 = vunpack.c.l.b16 %v11424
    %v11689 = vunpack.c.h.b16 %v11424
    %v11690 = vunpack.c.l.b16 %v11425
    %v11691 = vunpack.c.h.b16 %v11425
    %v11692 = vunpack.c.l.b16 %v11426
    %v11693 = vunpack.c.h.b16 %v11426
    %v11694 = vunpack.c.l.b16 %v11427
    %v11695 = vunpack.c.h.b16 %v11427
    %v11696 = vunpack.c.l.b16 %v11428
    %v11697 = vunpack.c.h.b16 %v11428
    %v11698 = vunpack.c.l.b16 %v11429
    %v11699 = vunpack.c.h.b16 %v11429
    %v11700 = vunpack.c.l.b16 %v11430
    %v11701 = vunpack.c.h.b16 %v11430
    %v11702 = vunpack.c.l.b16 %v11431
    %v11703 = vunpack.c.h.b16 %v11431
    %v11704 = vunpack.c.l.b16 %v11432
    %v11705 = vunpack.c.h.b16 %v11432
    %v11706 = vunpack.c.l.b16 %v11433
    %v11707 = vunpack.c.h.b16 %v11433
    %v11708 = vunpack.c.l.b16 %v11434
    %v11709 = vunpack.c.h.b16 %v11434
    %v11710 = vunpack.c.l.b16 %v11435
    %v11711 = vunpack.c.h.b16 %v11435
    %v11712 = vunpack.c.l.b16 %v11436
    %v11713 = vunpack.c.h.b16 %v11436
    %v11714 = vunpack.c.l.b16 %v11437
    %v11715 = vunpack.c.h.b16 %v11437
    %v11716 = vunpack.c.l.b16 %v11438
    %v11717 = vunpack.c.h.b16 %v11438
    %v11718 = vunpack.c.l.b16 %v11439
    %v11719 = vunpack.c.h.b16 %v11439
    %v11720 = vunpack.c.l.b16 %v11440
    %v11721 = vunpack.c.h.b16 %v11440
    %v11722 = vunpack.c.l.b16 %v11441
    %v11723 = vunpack.c.h.b16 %v11441
    %v11724 = vunpack.c.l.b16 %v11442
    %v11725 = vunpack.c.h.b16 %v11442
    %v11726 = vunpack.c.l.b16 %v11443
    %v11727 = vunpack.c.h.b16 %v11443
    %v11728 = vunpack.c.l.b16 %v11444
    %v11729 = vunpack.c.h.b16 %v11444
    %v11730 = vunpack.c.l.b16 %v11445
    %v11731 = vunpack.c.h.b16 %v11445
    %v11732 = vunpack.c.l.b16 %v11446
    %v11733 = vunpack.c.h.b16 %v11446
    %v11734 = vunpack.c.l.b16 %v11447
    %v11735 = vunpack.c.h.b16 %v11447
    %v11736 = vunpack.c.l.b16 %v11448
    %v11737 = vunpack.c.h.b16 %v11448
    %v11738 = vunpack.c.l.b16 %v11449
    %v11739 = vunpack.c.h.b16 %v11449
    %v11740 = vunpack.c.l.b16 %v11450
    %v11741 = vunpack.c.h.b16 %v11450
    %v11742 = vunpack.c.l.b16 %v11451
    %v11743 = vunpack.c.h.b16 %v11451
    %v11744 = vunpack.c.l.b16 %v11452
    %v11745 = vunpack.c.h.b16 %v11452
    %v11746 = vunpack.c.l.b16 %v11453
    %v11747 = vunpack.c.h.b16 %v11453
    %v11748 = vunpack.c.l.b16 %v11454
    %v11749 = vunpack.c.h.b16 %v11454
    %v11750 = vunpack.c.l.b16 %v11455
    %v11751 = vunpack.c.h.b16 %v11455
    %v11752 = vunpack.c.l.b16 %v11456
    %v11753 = vunpack.c.h.b16 %v11456
    %v11754 = vunpack.c.l.b16 %v11457
    %v11755 = vunpack.c.h.b16 %v11457
    %v11756 = vunpack.c.l.b16 %v11458
    %v11757 = vunpack.c.h.b16 %v11458
    %v11758 = vunpack.c.l.b16 %v11459
    %v11759 = vunpack.c.h.b16 %v11459
    %v11760 = vunpack.c.l.b16 %v11460
    %v11761 = vunpack.c.h.b16 %v11460
    %v11762 = vunpack.c.l.b16 %v11461
    %v11763 = vunpack.c.h.b16 %v11461
    %v11764 = vunpack.c.l.b16 %v11462
    %v11765 = vunpack.c.h.b16 %v11462
    %v11766 = vunpack.c.l.b16 %v11463
    %v11767 = vunpack.c.h.b16 %v11463
    %v11768 = vunpack.c.l.b16 %v11464
    %v11769 = vunpack.c.h.b16 %v11464
    %v11770 = vunpack.c.l.b16 %v11465
    %v11771 = vunpack.c.h.b16 %v11465
    %v11772 = vunpack.c.l.b16 %v11466
    %v11773 = vunpack.c.h.b16 %v11466
    %v11774 = vunpack.c.l.b16 %v11467
    %v11775 = vunpack.c.h.b16 %v11467
    %v11776 = vunpack.c.l.b16 %v11468
    %v11777 = vunpack.c.h.b16 %v11468
    %v11778 = vunpack.c.l.b16 %v11469
    %v11779 = vunpack.c.h.b16 %v11469
    %v11780 = vunpack.c.l.b16 %v11470
    %v11781 = vunpack.c.h.b16 %v11470
    %v11782 = vunpack.c.l.b16 %v11471
    %v11783 = vunpack.c.h.b16 %v11471
    %v11784 = vunpack.c.l.b16 %v11472
    %v11785 = vunpack.c.h.b16 %v11472
    %v11786 = vunpack.c.l.b16 %v11473
    %v11787 = vunpack.c.h.b16 %v11473
    %v11788 = vunpack.c.l.b16 %v11474
    %v11789 = vunpack.c.h.b16 %v11474
    %v11790 = vunpack.c.l.b16 %v11475
    %v11791 = vunpack.c.h.b16 %v11475
    %v11792 = vunpack.c.l.b16 %v11476
    %v11793 = vunpack.c.h.b16 %v11476
    %v11794 = vunpack.c.l.b16 %v11477
    %v11795 = vunpack.c.h.b16 %v11477
    %v11796 = vunpack.c.l.b16 %v11478
    %v11797 = vunpack.c.h.b16 %v11478
    %v11798 = vunpack.c.l.b16 %v11479
    %v11799 = vunpack.c.h.b16 %v11479
    %v11800 = vpack.c.b16 %v11614, %v11608
    %v11801 = vpack.c.b16 %v11615, %v11609
    %v11802 = vpack.c.b16 %v11616, %v11610
    %v11803 = vpack.c.b16 %v11617, %v11611
    %v11804 = vpack.c.b16 %v11618, %v11612
    %v11805 = vpack.c.b16 %v11619, %v11613
    %v11806 = vpack.c.b16 %v11626, %v11620
    %v11807 = vpack.c.b16 %v11627, %v11621
    %v11808 = vpack.c.b16 %v11628, %v11622
    %v11809 = vpack.c.b16 %v11629, %v11623
    %v11810 = vpack.c.b16 %v11630, %v11624
    %v11811 = vpack.c.b16 %v11631, %v11625
    %v11812 = vpack.c.b16 %v11638, %v11632
    %v11813 = vpack.c.b16 %v11639, %v11633
    %v11814 = vpack.c.b16 %v11640, %v11634
    %v11815 = vpack.c.b16 %v11641, %v11635
    %v11816 = vpack.c.b16 %v11642, %v11636
    %v11817 = vpack.c.b16 %v11643, %v11637
    %v11818 = vpack.c.b16 %v11650, %v11644
    %v11819 = vpack.c.b16 %v11651, %v11645
    %v11820 = vpack.c.b16 %v11652, %v11646
    %v11821 = vpack.c.b16 %v11653, %v11647
    %v11822 = vpack.c.b16 %v11654, %v11648
    %v11823 = vpack.c.b16 %v11655, %v11649
    %v11824 = vpack.c.b16 %v11662, %v11656
    %v11825 = vpack.c.b16 %v11663, %v11657
    %v11826 = vpack.c.b16 %v11664, %v11658
    %v11827 = vpack.c.b16 %v11665, %v11659
    %v11828 = vpack.c.b16 %v11666, %v11660
    %v11829 = vpack.c.b16 %v11667, %v11661
    %v11830 = vpack.c.b16 %v11674, %v11668
    %v11831 = vpack.c.b16 %v11675, %v11669
    %v11832 = vpack.c.b16 %v11676, %v11670
    %v11833 = vpack.c.b16 %v11677, %v11671
    %v11834 = vpack.c.b16 %v11678, %v11672
    %v11835 = vpack.c.b16 %v11679, %v11673
    %v11836 = vpack.c.b16 %v11686, %v11680
    %v11837 = vpack.c.b16 %v11687, %v11681
    %v11838 = vpack.c.b16 %v11688, %v11682
    %v11839 = vpack.c.b16 %v11689, %v11683
    %v11840 = vpack.c.b16 %v11690, %v11684
    %v11841 = vpack.c.b16 %v11691, %v11685
    %v11842 = vpack.c.b16 %v11698, %v11692
    %v11843 = vpack.c.b16 %v11699, %v11693
    %v11844 = vpack.c.b16 %v11700, %v11694
    %v11845 = vpack.c.b16 %v11701, %v11695
    %v11846 = vpack.c.b16 %v11702, %v11696
    %v11847 = vpack.c.b16 %v11703, %v11697
    %v11848 = vpack.c.b16 %v11710, %v11704
    %v11849 = vpack.c.b16 %v11711, %v11705
    %v11850 = vpack.c.b16 %v11712, %v11706
    %v11851 = vpack.c.b16 %v11713, %v11707
    %v11852 = vpack.c.b16 %v11714, %v11708
    %v11853 = vpack.c.b16 %v11715, %v11709
    %v11854 = vpack.c.b16 %v11722, %v11716
    %v11855 = vpack.c.b16 %v11723, %v11717
    %v11856 = vpack.c.b16 %v11724, %v11718
    %v11857 = vpack.c.b16 %v11725, %v11719
    %v11858 = vpack.c.b16 %v11726, %v11720
    %v11859 = vpack.c.b16 %v11727, %v11721
    %v11860 = vpack.c.b16 %v11734, %v11728
    %v11861 = vpack.c.b16 %v11735, %v11729
    %v11862 = vpack.c.b16 %v11736, %v11730
    %v11863 = vpack.c.b16 %v11737, %v11731
    %v11864 = vpack.c.b16 %v11738, %v11732
    %v11865 = vpack.c.b16 %v11739, %v11733
    %v11866 = vpack.c.b16 %v11746, %v11740
    %v11867 = vpack.c.b16 %v11747, %v11741
    %v11868 = vpack.c.b16 %v11748, %v11742
    %v11869 = vpack.c.b16 %v11749, %v11743
    %v11870 = vpack.c.b16 %v11750, %v11744
    %v11871 = vpack.c.b16 %v11751, %v11745
    %v11872 = vpack.c.b16 %v11758, %v11752
    %v11873 = vpack.c.b16 %v11759, %v11753
    %v11874 = vpack.c.b16 %v11760, %v11754
    %v11875 = vpack.c.b16 %v11761, %v11755
    %v11876 = vpack.c.b16 %v11762, %v11756
    %v11877 = vpack.c.b16 %v11763, %v11757
    %v11878 = vpack.c.b16 %v11770, %v11764
    %v11879 = vpack.c.b16 %v11771, %v11765
    %v11880 = vpack.c.b16 %v11772, %v11766
    %v11881 = vpack.c.b16 %v11773, %v11767
    %v11882 = vpack.c.b16 %v11774, %v11768
    %v11883 = vpack.c.b16 %v11775, %v11769
    %v11884 = vpack.c.b16 %v11782, %v11776
    %v11885 = vpack.c.b16 %v11783, %v11777
    %v11886 = vpack.c.b16 %v11784, %v11778
    %v11887 = vpack.c.b16 %v11785, %v11779
    %v11888 = vpack.c.b16 %v11786, %v11780
    %v11889 = vpack.c.b16 %v11787, %v11781
    %v11890 = vpack.c.b16 %v11794, %v11788
    %v11891 = vpack.c.b16 %v11795, %v11789
    %v11892 = vpack.c.b16 %v11796, %v11790
    %v11893 = vpack.c.b16 %v11797, %v11791
    %v11894 = vpack.c.b16 %v11798, %v11792
    %v11895 = vpack.c.b16 %v11799, %v11793
    %11992 = vmatprep.subr.bf16.mxu0 %v11843
    %11993 = vmatpush1.bf16.msra.mxu0 %v11842
    %11994 = vmatprep.subr.bf16.mxu0 %v11837
    %11995 = vmatpush1.bf16.msra.mxu0 %v11836
    %11996 = vmatprep.subr.bf16.mxu0 %v11831
    %11997 = vmatpush1.bf16.msra.mxu0 %v11830
    %11998 = vmatprep.subr.bf16.mxu0 %v11825
    %11999 = vmatpush1.bf16.msra.mxu0 %v11824
    %12000 = vmatprep.subr.bf16.mxu0 %v11819
    %12001 = vmatpush1.bf16.msra.mxu0 %v11818
    %12002 = vmatprep.subr.bf16.mxu0 %v11813
    %12003 = vmatpush1.bf16.msra.mxu0 %v11812
    %12004 = vmatprep.subr.bf16.mxu0 %v11807
    %12005 = vmatpush1.bf16.msra.mxu0 %v11806
    %12006 = vmatprep.subr.bf16.mxu0 %v11801
    %12007 = vmatpush1.bf16.msra.mxu0 %v11800
    %12008 = vmatprep.subr.bf16.mxu0 %v11891
    %12009 = vmatpush2.bf16.msra.mxu0 %v11890
    %12010 = vmatprep.subr.bf16.mxu0 %v11885
    %12011 = vmatpush2.bf16.msra.mxu0 %v11884
    %12012 = vmatprep.subr.bf16.mxu0 %v11879
    %12013 = vmatpush2.bf16.msra.mxu0 %v11878
    %12014 = vmatprep.subr.bf16.mxu0 %v11873
    %12015 = vmatpush2.bf16.msra.mxu0 %v11872
    %12016 = vmatprep.subr.bf16.mxu0 %v11867
    %12017 = vmatpush2.bf16.msra.mxu0 %v11866
    %12018 = vmatprep.subr.bf16.mxu0 %v11861
    %12019 = vmatpush2.bf16.msra.mxu0 %v11860
    %12020 = vmatprep.subr.bf16.mxu0 %v11855
    %12021 = vmatpush2.bf16.msra.mxu0 %v11854
    %12022 = vmatprep.subr.bf16.mxu0 %v11849
    %12023 = vmatpush2.bf16.msra.mxu0 %v11848
    %12024 = vmatprep.mubr.bf16.mxu0 %v11383
    %12025 = vmatmul.mubr.bf16.gmra.mxu0 %v11382
    %v12026 = vpop.f32.mrf.mxu0
    %v12027 = vadd.f32 %v11485, %v12026
    %v12028 = vpop.f32.mrf.mxu0
    %v12029 = vadd.f32 %v11489, %v12028
    %v12030 = vpop.f32.mrf.mxu0
    %v12031 = vpop.f32.mrf.mxu0
    %12032 = vdwg.mxu0
    %12033 = vmatprep.subr.bf16.mxu0 %v11845
    %12034 = vmatpush1.bf16.msra.mxu0 %v11844
    %12035 = vmatprep.subr.bf16.mxu0 %v11839
    %12036 = vmatpush1.bf16.msra.mxu0 %v11838
    %12037 = vmatprep.subr.bf16.mxu0 %v11833
    %12038 = vmatpush1.bf16.msra.mxu0 %v11832
    %12039 = vmatprep.subr.bf16.mxu0 %v11827
    %12040 = vmatpush1.bf16.msra.mxu0 %v11826
    %12041 = vmatprep.subr.bf16.mxu0 %v11821
    %12042 = vmatpush1.bf16.msra.mxu0 %v11820
    %12043 = vmatprep.subr.bf16.mxu0 %v11815
    %12044 = vmatpush1.bf16.msra.mxu0 %v11814
    %12045 = vmatprep.subr.bf16.mxu0 %v11809
    %12046 = vmatpush1.bf16.msra.mxu0 %v11808
    %12047 = vmatprep.subr.bf16.mxu0 %v11803
    %12048 = vmatpush1.bf16.msra.mxu0 %v11802
    %12049 = vmatprep.subr.bf16.mxu0 %v11893
    %12050 = vmatpush2.bf16.msra.mxu0 %v11892
    %12051 = vmatprep.subr.bf16.mxu0 %v11887
    %12052 = vmatpush2.bf16.msra.mxu0 %v11886
    %12053 = vmatprep.subr.bf16.mxu0 %v11881
    %12054 = vmatpush2.bf16.msra.mxu0 %v11880
    %12055 = vmatprep.subr.bf16.mxu0 %v11875
    %12056 = vmatpush2.bf16.msra.mxu0 %v11874
    %12057 = vmatprep.subr.bf16.mxu0 %v11869
    %12058 = vmatpush2.bf16.msra.mxu0 %v11868
    %12059 = vmatprep.subr.bf16.mxu0 %v11863
    %12060 = vmatpush2.bf16.msra.mxu0 %v11862
    %12061 = vmatprep.subr.bf16.mxu0 %v11857
    %12062 = vmatpush2.bf16.msra.mxu0 %v11856
    %12063 = vmatprep.subr.bf16.mxu0 %v11851
    %12064 = vmatpush2.bf16.msra.mxu0 %v11850
    %12065 = vmatprep.mubr.bf16.mxu0 %v11383
    %12066 = vmatmul.mubr.bf16.gmra.mxu0 %v11382
    %v12067 = vpop.f32.mrf.mxu0
    %v12068 = vadd.f32 %v11493, %v12067
    %v12069 = vpop.f32.mrf.mxu0
    %v12070 = vadd.f32 %v11497, %v12069
    %v12071 = vpop.f32.mrf.mxu0
    %v12072 = vpop.f32.mrf.mxu0
    %12073 = vdwg.mxu0
    %12074 = vmatprep.subr.bf16.mxu0 %v11847
    %12075 = vmatpush1.bf16.msra.mxu0 %v11846
    %12076 = vmatprep.subr.bf16.mxu0 %v11841
    %12077 = vmatpush1.bf16.msra.mxu0 %v11840
    %12078 = vmatprep.subr.bf16.mxu0 %v11835
    %12079 = vmatpush1.bf16.msra.mxu0 %v11834
    %12080 = vmatprep.subr.bf16.mxu0 %v11829
    %12081 = vmatpush1.bf16.msra.mxu0 %v11828
    %12082 = vmatprep.subr.bf16.mxu0 %v11823
    %12083 = vmatpush1.bf16.msra.mxu0 %v11822
    %12084 = vmatprep.subr.bf16.mxu0 %v11817
    %12085 = vmatpush1.bf16.msra.mxu0 %v11816
    %12086 = vmatprep.subr.bf16.mxu0 %v11811
    %12087 = vmatpush1.bf16.msra.mxu0 %v11810
    %12088 = vmatprep.subr.bf16.mxu0 %v11805
    %12089 = vmatpush1.bf16.msra.mxu0 %v11804
    %12090 = vmatprep.subr.bf16.mxu0 %v11895
    %12091 = vmatpush2.bf16.msra.mxu0 %v11894
    %12092 = vmatprep.subr.bf16.mxu0 %v11889
    %12093 = vmatpush2.bf16.msra.mxu0 %v11888
    %12094 = vmatprep.subr.bf16.mxu0 %v11883
    %12095 = vmatpush2.bf16.msra.mxu0 %v11882
    %12096 = vmatprep.subr.bf16.mxu0 %v11877
    %12097 = vmatpush2.bf16.msra.mxu0 %v11876
    %12098 = vmatprep.subr.bf16.mxu0 %v11871
    %12099 = vmatpush2.bf16.msra.mxu0 %v11870
    %12100 = vmatprep.subr.bf16.mxu0 %v11865
    %12101 = vmatpush2.bf16.msra.mxu0 %v11864
    %12102 = vmatprep.subr.bf16.mxu0 %v11859
    %12103 = vmatpush2.bf16.msra.mxu0 %v11858
    %12104 = vmatprep.subr.bf16.mxu0 %v11853
    %12105 = vmatpush2.bf16.msra.mxu0 %v11852
    %12106 = vmatprep.mubr.bf16.mxu0 %v11383
    %12107 = vmatmul.mubr.bf16.gmra.mxu0 %v11382
    %v12108 = vpop.f32.mrf.mxu0
    %v12109 = vadd.f32 %v11501, %v12108
    %v12110 = vpop.f32.mrf.mxu0
    %v12111 = vadd.f32 %v11505, %v12110
    %v12112 = vpop.f32.mrf.mxu0
    %v12113 = vpop.f32.mrf.mxu0
    %12114 = vdwg.mxu0
    %v12115 = vtanh.pop %v12027
    %v12116 = vtanh.pop %v12029
    %v12117 = vtanh.pop %v12068
    %v12118 = vtanh.pop %v12070
    %v12119 = vtanh.pop %v12109
    %v12120 = vtanh.pop %v12111
    %v12127 = vcombine.low %v12115, %v12116
    %v12128 = vcombine.low %v12117, %v12118
    %v12130 = vunpack.c.l.s4 1983009808
    %v12131 = vunpack.c.0.s8 %v12130
    %v12132 = vlaneseq
    %v12133 = vshrl.u32 %v12132, 7
    %v12134 = vsub.s32 %v12131, %v12133
    %v12135 = vrot.slane %v12127, %v12134
    %v12137 = vunpack.c.l.s4 1983009808
    %v12138 = vunpack.c.0.s8 %v12137
    %v12139 = vlaneseq
    %v12140 = vshrl.u32 %v12139, 7
    %v12141 = vsub.s32 %v12138, %v12140
    %v12142 = vrot.slane %v12128, %v12141
    %v12143 = vcombine.low %v12135, %v12142
    %v12144 = vcombine.low %v12119, %v12120
    %v12146 = vunpack.c.l.s4 1983009808
    %v12147 = vunpack.c.0.s8 %v12146
    %v12148 = vlaneseq
    %v12149 = vshrl.u32 %v12148, 7
    %v12150 = vsub.s32 %v12147, %v12149
    %v12151 = vrot.slane %v12144, %v12150
    %12154 = vst [vmem:[#allocation14] sm:$0xff] %v12143
    %12155 = vst [vmem:[#allocation14 + $0x8] sm:$0xf] %v12151
    // Predicated region
    $region148: #{tpu_custom_call.1} parent=1 // pred_check
      _
    $region149: #{tpu_custom_call.1} parent=1 // pred_check_branch
      %12157 = sbr.rel (0) target = $region151
    $region150: #{tpu_custom_call.1} parent=1 // pred_region
      %s12159 = ssub.s32 192, 192
      %12160 = vsyncadd [#allocation11], %s12159
      %s12162 = sshll.u32 [#allocation14], 4
      %s12163 = int_to_ptr.vmem [resolvable:$true] %s12162
      %12165 = dma.vmem_to_hbm [thread:$0]  %s12163, 192, %s27, [#allocation11]
    $region151: #{tpu_custom_call.1} parent=1 // pred_fallthru
      _
    // Predicated region
    $region152: #{tpu_custom_call.1} parent=1 // pred_check
      _
    $region153: #{tpu_custom_call.1} parent=1 // pred_check_branch
      %12167 = sbr.rel (0) target = $region155
    $region154: #{tpu_custom_call.1} parent=1 // pred_region
      %s12169 = ssub.s32 32, 32
      %12170 = vsyncadd [#allocation16], %s12169
      %s12172 = sshll.u32 [#allocation15], 4
      %s12173 = int_to_ptr.vmem [resolvable:$true] %s12172
      %12175 = dma.vmem_to_hbm [thread:$0]  %s12173, 32, %s28, [#allocation16]
    $region155: #{tpu_custom_call.1} parent=1 // pred_fallthru
      _
    // Predicated region
    $region156: #{tpu_custom_call.1} parent=1 // pred_check
      _
    $region157: #{tpu_custom_call.1} parent=1 // pred_check_branch
      %12177 = sbr.rel (0) target = $region159
    $region158: #{tpu_custom_call.1} parent=1 // pred_region
      %12178 = dma.done [#allocation11], 192
    $region159: #{tpu_custom_call.1} parent=1 // pred_fallthru
      _
    // Predicated region
    $region160: #{tpu_custom_call.1} parent=1 // pred_check
      _
    $region161: #{tpu_custom_call.1} parent=1 // pred_check_branch
      %12180 = sbr.rel (0) target = $region163
    $region162: #{tpu_custom_call.1} parent=1 // pred_region
      %12181 = dma.done [#allocation16], 32
    $region163: #{tpu_custom_call.1} parent=1 // pred_fallthru
      _
    %12182 = vsyncpa [#allocation10], 1
    %12183 = vsyncpa [#allocation13], 1
    %12184 = vsyncpa [#allocation11], 1
    %12185 = vsyncpa [#allocation16], 1
  %12186 = vsyncmov [#allocation8]
  %s12187 = vpop.sfrf %12186
  %p12188 = scmp.eq.s32.totalorder %s12187, 0
  %p12189 = pneg %p12188
  %12191 = shalt.err (%p12189)
  %s12192 = scalar_lea.sflag [#allocation8], 1
  %12193 = vsyncmov %s12192
  %s12194 = vpop.sfrf %12193
  %p12195 = scmp.eq.s32.totalorder %s12194, 0
  %p12196 = pneg %p12195
  %12198 = shalt.err (%p12196)
  %s12199 = scalar_lea.sflag [#allocation8], 2
  %12200 = vsyncmov %s12199
  %s12201 = vpop.sfrf %12200
  %p12202 = scmp.eq.s32.totalorder %s12201, 0
  %p12203 = pneg %p12202
  %12205 = shalt.err (%p12203)
  %s12206 = scalar_lea.sflag [#allocation8], 3
  %12207 = vsyncmov %s12206
  %s12208 = vpop.sfrf %12207
  %p12209 = scmp.eq.s32.totalorder %s12208, 0
  %p12210 = pneg %p12209
  %12212 = shalt.err (%p12210)
  %s12213 = scalar_lea.sflag [#allocation8], 4
  %12214 = vsyncmov %s12213
  %s12215 = vpop.sfrf %12214
  %p12216 = scmp.eq.s32.totalorder %s12215, 0
  %p12217 = pneg %p12216
  %12219 = shalt.err (%p12217)
  %s12220 = scalar_lea.sflag [#allocation8], 5
  %12221 = vsyncmov %s12220
  %s12222 = vpop.sfrf %12221
  %p12223 = scmp.eq.s32.totalorder %s12222, 0
  %p12224 = pneg %p12223
  %12226 = shalt.err (%p12224)

</llo_original>
